<compile_context>
chip_gen: v7x
topology: tpu7x:2x2x1
jax: 0.10.0
libtpu: 0.0.40
codegen_flags: <defaults>
</compile_context>

<pallas_src>
import functools

import jax
import jax.numpy as jnp
from jax.experimental import pallas as pl
from jax.experimental.pallas import tpu as pltpu


_LANE = 128
_SUB = 8
# Well under v7x's 64 MiB physical VMEM; fine on v5e/v6e (128 MiB).
_VMEM_LIMIT = 40 * 1024 * 1024


def _round_up(x, m):
    return (x + m - 1) // m * m


def _pad2d(x, rows, cols):
    r, c = x.shape
    if r == rows and c == cols:
        return x
    return jnp.pad(x, ((0, rows - r), (0, cols - c)))


def _pick_k_tile(kp, cap=512):
    """Largest multiple of 128 that divides kp and is <= cap."""
    for t in range(min(cap, kp), 127, -128):
        if kp % t == 0:
            return t
    return 128


# ---------------------------------------------------------------------------
# Tiled matmul + bias + ReLU kernel (used by all conv layers via im2col)
# ---------------------------------------------------------------------------
def _matmul_bias_act_kernel(x_ref, w_ref, b_ref, o_ref, acc_ref, *, relu):
    @pl.when(pl.program_id(2) == 0)
    def _():
        acc_ref[...] = jnp.zeros_like(acc_ref)

    acc_ref[...] += jnp.dot(x_ref[...], w_ref[...],
                            preferred_element_type=jnp.float32)

    @pl.when(pl.program_id(2) == pl.num_programs(2) - 1)
    def _():
        out = acc_ref[...] + b_ref[...]
        if relu:
            out = jnp.maximum(out, 0.0)
        o_ref[...] = out.astype(o_ref.dtype)


def matmul_bias_act(x, w, b, *, relu):
    """y = (x @ w + b), optional ReLU. w/b may be pre-padded to lane multiples."""
    M, K = x.shape
    Kw, N = w.shape
    assert Kw >= K
    Kp = _round_up(Kw, _LANE)
    Np = _round_up(N, _LANE)
    tm = min(256, _round_up(M, _SUB))
    tn = 256 if Np % 256 == 0 else _LANE
    tk = _pick_k_tile(Kp)
    Mp = _round_up(M, tm)

    xp = _pad2d(x, Mp, Kp)
    wp = _pad2d(w, Kp, Np)
    bp = _pad2d(b.reshape(1, -1), 1, Np)

    grid = (Mp // tm, Np // tn, Kp // tk)
    out = pl.pallas_call(
        functools.partial(_matmul_bias_act_kernel, relu=relu),
        out_shape=jax.ShapeDtypeStruct((Mp, Np), jnp.float32),
        grid_spec=pltpu.PrefetchScalarGridSpec(
            num_scalar_prefetch=0,
            grid=grid,
            in_specs=[
                pl.BlockSpec((tm, tk), lambda i, j, k: (i, k)),
                pl.BlockSpec((tk, tn), lambda i, j, k: (k, j)),
                pl.BlockSpec((1, tn), lambda i, j, k: (0, j)),
            ],
            out_specs=pl.BlockSpec((tm, tn), lambda i, j, k: (i, j)),
            scratch_shapes=[pltpu.VMEM((tm, tn), jnp.float32)],
        ),
        compiler_params=pltpu.CompilerParams(
            dimension_semantics=("parallel", "parallel", "arbitrary"),
            vmem_limit_bytes=_VMEM_LIMIT,
        ),
        cost_estimate=pl.CostEstimate(
            flops=2 * Mp * Np * Kp,
            transcendentals=0,
            bytes_accessed=4 * (Mp * Kp + Kp * Np + Mp * Np),
        ),
    )(xp, wp, bp)
    return out[:M, :N]


# ---------------------------------------------------------------------------
# MaxPool2d(2,2): gridded, lane-aligned pairwise max over the 4 candidates
# ---------------------------------------------------------------------------
def _max4_kernel(a_ref, b_ref, c_ref, d_ref, o_ref):
    o_ref[...] = jnp.maximum(jnp.maximum(a_ref[...], b_ref[...]),
                             jnp.maximum(c_ref[...], d_ref[...]))


def maxpool2x2_nhwc(x):
    """x: (B, H, W, C) NHWC, C lane-dense (multiple of 128 in this model)."""
    B, H, W, C = x.shape
    oh, ow = H // 2, W // 2
    x = x[:, : 2 * oh, : 2 * ow, :]        # drop odd row/col explicitly
    M = B * oh * ow
    cands = [
        x[:, 0::2, 0::2, :], x[:, 0::2, 1::2, :],
        x[:, 1::2, 0::2, :], x[:, 1::2, 1::2, :],
    ]
    tm = min(512, _round_up(M, _SUB))
    Mp = _round_up(M, tm)
    cands = [_pad2d(c.reshape(M, C), Mp, C) for c in cands]

    spec = pl.BlockSpec((tm, C), lambda i: (i, 0))
    out = pl.pallas_call(
        _max4_kernel,
        out_shape=jax.ShapeDtypeStruct((Mp, C), jnp.float32),
        grid=(Mp // tm,),
        in_specs=[spec] * 4,
        out_specs=spec,
        compiler_params=pltpu.CompilerParams(
            dimension_semantics=("parallel",),
            vmem_limit_bytes=_VMEM_LIMIT,
        ),
    )(*cands)
    return out[:M].reshape(B, oh, ow, C)


# ---------------------------------------------------------------------------
# Fused fc1 -> ReLU -> fc2 -> ReLU -> fc3 in a single Pallas call
# ---------------------------------------------------------------------------
def _fc_fused_kernel(x_ref, w1_ref, b1_ref, w2_ref, b2_ref, w3_ref, b3_ref,
                     o_ref):
    h = jnp.dot(x_ref[...], w1_ref[...], preferred_element_type=jnp.float32)
    h = jnp.maximum(h + b1_ref[...], 0.0)
    h = jnp.dot(h, w2_ref[...], preferred_element_type=jnp.float32)
    h = jnp.maximum(h + b2_ref[...], 0.0)
    out = jnp.dot(h, w3_ref[...], preferred_element_type=jnp.float32)
    o_ref[...] = (out + b3_ref[...]).astype(o_ref.dtype)


def fc_fused(x, w1, b1, w2, b2, w3, b3, *, n_out):
    B, K1 = x.shape
    N1, N2, N3 = w1.shape[1], w2.shape[1], w3.shape[1]
    tm = min(256, _round_up(B, _SUB))
    Mp = _round_up(B, tm)
    xp = _pad2d(x, Mp, K1)

    def full(shape):
        return pl.BlockSpec(shape, lambda i: (0, 0))

    out = pl.pallas_call(
        _fc_fused_kernel,
        out_shape=jax.ShapeDtypeStruct((Mp, N3), jnp.float32),
        grid=(Mp // tm,),
        in_specs=[
            pl.BlockSpec((tm, K1), lambda i: (i, 0)),
            full(w1.shape), full((1, N1)),
            full(w2.shape), full((1, N2)),
            full(w3.shape), full((1, N3)),
        ],
        out_specs=pl.BlockSpec((tm, N3), lambda i: (i, 0)),
        compiler_params=pltpu.CompilerParams(
            dimension_semantics=("parallel",),
            vmem_limit_bytes=_VMEM_LIMIT,
        ),
        cost_estimate=pl.CostEstimate(
            flops=2 * Mp * (K1 * N1 + N1 * N2 + N2 * N3),
            transcendentals=0,
            bytes_accessed=4 * (Mp * K1 + K1 * N1 + N1 * N2 + N2 * N3 + Mp * N3),
        ),
    )(xp, w1, b1.reshape(1, -1), w2, b2.reshape(1, -1), w3, b3.reshape(1, -1))
    return out[:B, :n_out]


# ---------------------------------------------------------------------------
# Conv wrapper: NHWC im2col + tiled Pallas matmul (bias + ReLU fused)
# ---------------------------------------------------------------------------
def conv2d_bias_relu(x, w_mat, b, *, kh, kw, cin, padding):
    """x: (B,H,W,Cpad) NHWC (only first `cin` channels real);
    w_mat: (Kpad, Cout_pad) pre-transposed/padded. Returns (B,oh,ow,Cout_pad)."""
    B = x.shape[0]
    x = x[..., :cin]
    if padding:
        x = jnp.pad(x, ((0, 0), (padding, padding), (padding, padding), (0, 0)))
    _, H, W, C = x.shape
    oh, ow = H - kh + 1, W - kw + 1
    # TODO(synk): express the patch gather via a halo-reading BlockSpec index_map
    # to avoid materializing the (B*oh*ow, kh*kw*cin) im2col matrix in HBM.
    patches = [x[:, i:i + oh, j:j + ow, :] for i in range(kh) for j in range(kw)]
    p = jnp.stack(patches, axis=3).reshape(B * oh * ow, kh * kw * C)
    y = matmul_bias_act(p, w_mat, b, relu=True)      # (B*oh*ow, Cout_pad)
    return y.reshape(B, oh, ow, -1)


# ---------------------------------------------------------------------------
# Parameters: PyTorch-layout init + one-time kernel-ready preparation
# ---------------------------------------------------------------------------
def init_params(key):
    ks = jax.random.split(key, 12)

    def w(k, shape, fan_in):
        return jax.random.normal(k, shape, jnp.float32) * (1.0 / jnp.sqrt(fan_in))

    return {
        "c1_w": w(ks[0], (16, 1, 5, 5), 25), "c1_b": w(ks[1], (16,), 25),
        "c2_w": w(ks[2], (64, 16, 5, 5), 400), "c2_b": w(ks[3], (64,), 400),
        "c3_w": w(ks[4], (128, 64, 5, 5), 1600), "c3_b": w(ks[5], (128,), 1600),
        "f1_w": w(ks[6], (1024, 1152), 1152), "f1_b": w(ks[7], (1024,), 1152),
        "f2_w": w(ks[8], (84, 1024), 1024), "f2_b": w(ks[9], (84,), 1024),
        "f3_w": w(ks[10], (10, 84), 84), "f3_b": w(ks[11], (10,), 84),
    }


def _prep_conv(w, b):
    cout, cin, kh, kw = w.shape
    k = kh * kw * cin
    # rows ordered (i, j, c) to match the NHWC im2col patch ordering
    w_mat = jnp.transpose(w, (2, 3, 1, 0)).reshape(k, cout)
    kp, np_ = _round_up(k, _LANE), _round_up(cout, _LANE)
    return _pad2d(w_mat, kp, np_), _pad2d(b.reshape(1, -1), 1, np_)


def _prep_fc(w, b):
    n_out, n_in = w.shape
    kp, np_ = _round_up(n_in, _LANE), _round_up(n_out, _LANE)
    return _pad2d(w.T, kp, np_), _pad2d(b.reshape(1, -1), 1, np_)


def prepare_params(p):
    out = {}
    out["c1_w"], out["c1_b"] = _prep_conv(p["c1_w"], p["c1_b"])
    out["c2_w"], out["c2_b"] = _prep_conv(p["c2_w"], p["c2_b"])
    out["c3_w"], out["c3_b"] = _prep_conv(p["c3_w"], p["c3_b"])
    # fc1: permute the 1152 input features from PyTorch CHW-flatten order
    # to the HWC-flatten order produced by the NHWC conv stack.
    f1 = p["f1_w"].reshape(1024, 128, 3, 3)                 # (out, c, h, w)
    out["f1_w"] = jnp.transpose(f1, (2, 3, 1, 0)).reshape(1152, 1024)
    out["f1_b"] = p["f1_b"].reshape(1, -1)
    out["f2_w"], out["f2_b"] = _prep_fc(p["f2_w"], p["f2_b"])
    out["f3_w"], out["f3_b"] = _prep_fc(p["f3_w"], p["f3_b"])
    return out


# ---------------------------------------------------------------------------
# Forward pass (Dropout layers are identity in eval mode)
# ---------------------------------------------------------------------------
def cnn_forward(params, x):
    x = jnp.transpose(x, (0, 2, 3, 1))          # NCHW -> NHWC, once
    B = x.shape[0]

    # conv1: Conv(1->16, k5, pad2) + ReLU + MaxPool2
    y = conv2d_bias_relu(x, params["c1_w"], params["c1_b"],
                         kh=5, kw=5, cin=1, padding=2)
    y = maxpool2x2_nhwc(y)                      # (B, 14, 14, 128[16 real])
    # conv2: Conv(16->64, k5) + ReLU
    y = conv2d_bias_relu(y, params["c2_w"], params["c2_b"],
                         kh=5, kw=5, cin=16, padding=0)   # (B, 10, 10, 128[64])
    # conv3: Conv(64->128, k5) + ReLU + MaxPool2
    y = conv2d_bias_relu(y, params["c3_w"], params["c3_b"],
                         kh=5, kw=5, cin=64, padding=0)   # (B, 6, 6, 128)
    y = maxpool2x2_nhwc(y)                      # (B, 3, 3, 128)

    feat = y.reshape(B, 3 * 3 * 128)            # HWC flatten (fc1 weight permuted)
    # fc1 + ReLU + fc2 + ReLU + fc3, single fused Pallas call
    return fc_fused(feat, params["f1_w"], params["f1_b"],
                    params["f2_w"], params["f2_b"],
                    params["f3_w"], params["f3_b"], n_out=10)


if __name__ == "__main__":
    key = jax.random.PRNGKey(0)
    pkey, xkey = jax.random.split(key)
    params = prepare_params(init_params(pkey))
    # EMNIST digits: 1x28x28 images (required so the flatten hits 128*3*3).
    x = jax.random.normal(xkey, (2, 1, 28, 28), jnp.float32)

    out = jax.jit(cnn_forward)(params, x)
    out = jax.block_until_ready(out)
    assert out.shape == (2, 10) and out.dtype == jnp.float32
    print("KERNEL_OK")
</pallas_src>

<mosaic_0001>
module attributes {stable_mosaic.version = 11 : i64} {
  func.func @_matmul_bias_act_kernel(%arg0: i32, %arg1: i32, %arg2: i32, %arg3: memref<256x128xf32, #tpu.memory_space<vmem>>, %arg4: memref<128x128xf32, #tpu.memory_space<vmem>>, %arg5: memref<1x128xf32, #tpu.memory_space<vmem>>, %arg6: memref<256x128xf32, #tpu.memory_space<vmem>>, %arg7: memref<256x128xf32, #tpu.memory_space<vmem>>) attributes {dimension_semantics = [#tpu.dimension_semantics<parallel>, #tpu.dimension_semantics<parallel>, #tpu.dimension_semantics<arbitrary>], iteration_bounds = array<i64: 7, 1, 1>, scalar_prefetch = 0 : i64, scratch_operands = 1 : i64, tpu.core_type = #tpu.core_type<tc>, window_params = [{transform_indices = @transform_0, window_bounds = array<i64: 256, 128>}, {transform_indices = @transform_1, window_bounds = array<i64: 128, 128>}, {transform_indices = @transform_2, window_bounds = array<i64: 1, 128>}, {transform_indices = @transform_3, window_bounds = array<i64: 256, 128>}]} {
    %c0_i32 = arith.constant 0 : i32
    %0 = arith.cmpi eq, %arg2, %c0_i32 : i32
    %1 = arith.extui %0 : i1 to i32
    %c0_i32_0 = arith.constant 0 : i32
    %2 = arith.cmpi ne, %1, %c0_i32_0 : i32
    scf.if %2 {
      %cst_10 = arith.constant 0.000000e+00 : f32
      %12 = vector.broadcast %cst_10 : f32 to vector<256x128xf32>
      %c0_11 = arith.constant 0 : index
      %c0_12 = arith.constant 0 : index
      %13 = vector.load %arg7[%c0_11, %c0_12] : memref<256x128xf32, #tpu.memory_space<vmem>>, vector<256x128xf32>
      tpu.vector_store %arg7[%c0_11, %c0_12], %12 {strides = array<i32>} : memref<256x128xf32, #tpu.memory_space<vmem>>, vector<256x128xf32>,
    } else {
    }
    %c0 = arith.constant 0 : index
    %c0_1 = arith.constant 0 : index
    %3 = vector.load %arg7[%c0, %c0_1] : memref<256x128xf32, #tpu.memory_space<vmem>>, vector<256x128xf32>
    %c0_2 = arith.constant 0 : index
    %c0_3 = arith.constant 0 : index
    %4 = vector.load %arg3[%c0_2, %c0_3] : memref<256x128xf32, #tpu.memory_space<vmem>>, vector<256x128xf32>
    %c0_4 = arith.constant 0 : index
    %c0_5 = arith.constant 0 : index
    %5 = vector.load %arg4[%c0_4, %c0_5] : memref<128x128xf32, #tpu.memory_space<vmem>>, vector<128x128xf32>
    %cst = arith.constant dense<0.000000e+00> : vector<256x128xf32>
    %6 = tpu.matmul %4, %5, %cst {dimension_numbers = #tpu.dot_dimension_numbers<[1], [0], [0], [1], [0, 0, 1, 1], [], []>} : vector<256x128xf32>, vector<128x128xf32>, vector<256x128xf32> -> vector<256x128xf32>
    %7 = arith.addf %3, %6 : vector<256x128xf32>
    %c0_6 = arith.constant 0 : index
    %c0_7 = arith.constant 0 : index
    %8 = vector.load %arg7[%c0_6, %c0_7] : memref<256x128xf32, #tpu.memory_space<vmem>>, vector<256x128xf32>
    tpu.vector_store %arg7[%c0_6, %c0_7], %7 {strides = array<i32>} : memref<256x128xf32, #tpu.memory_space<vmem>>, vector<256x128xf32>,
    %c0_i32_8 = arith.constant 0 : i32
    %9 = arith.cmpi eq, %arg2, %c0_i32_8 : i32
    %10 = arith.extui %9 : i1 to i32
    %c0_i32_9 = arith.constant 0 : i32
    %11 = arith.cmpi ne, %10, %c0_i32_9 : i32
    scf.if %11 {
      %c0_10 = arith.constant 0 : index
      %c0_11 = arith.constant 0 : index
      %12 = vector.load %arg7[%c0_10, %c0_11] : memref<256x128xf32, #tpu.memory_space<vmem>>, vector<256x128xf32>
      %c0_12 = arith.constant 0 : index
      %c0_13 = arith.constant 0 : index
      %13 = vector.load %arg5[%c0_12, %c0_13] : memref<1x128xf32, #tpu.memory_space<vmem>>, vector<1x128xf32>
      %14 = vector.broadcast %13 : vector<1x128xf32> to vector<256x128xf32>
      %15 = arith.addf %12, %14 : vector<256x128xf32>
      %cst_14 = arith.constant 0.000000e+00 : f32
      %16 = vector.broadcast %cst_14 : f32 to vector<256x128xf32>
      %17 = arith.maximumf %15, %16 : vector<256x128xf32>
      %c0_15 = arith.constant 0 : index
      %c0_16 = arith.constant 0 : index
      %18 = vector.load %arg6[%c0_15, %c0_16] : memref<256x128xf32, #tpu.memory_space<vmem>>, vector<256x128xf32>
      tpu.vector_store %arg6[%c0_15, %c0_16], %17 {strides = array<i32>} : memref<256x128xf32, #tpu.memory_space<vmem>>, vector<256x128xf32>,
    } else {
    }
    return
  }
  func.func @transform_0(%arg0: i32, %arg1: i32, %arg2: i32) -> (i32, i32) {
    %c0_i32 = arith.constant 0 : i32
    return %arg0, %arg2 : i32, i32
  }
  func.func @transform_1(%arg0: i32, %arg1: i32, %arg2: i32) -> (i32, i32) {
    %c0_i32 = arith.constant 0 : i32
    return %arg2, %arg1 : i32, i32
  }
  func.func @transform_2(%arg0: i32, %arg1: i32, %arg2: i32) -> (i32, i32) {
    %c0_i32 = arith.constant 0 : i32
    %c0_i32_0 = arith.constant 0 : i32
    return %c0_i32, %arg1 : i32, i32
  }
  func.func @transform_3(%arg0: i32, %arg1: i32, %arg2: i32) -> (i32, i32) {
    %c0_i32 = arith.constant 0 : i32
    return %arg0, %arg1 : i32, i32
  }
}

module attributes {stable_mosaic.version = 11 : i64} {
  func.func @_max4_kernel(%arg0: i32, %arg1: memref<392x128xf32, #tpu.memory_space<vmem>>, %arg2: memref<392x128xf32, #tpu.memory_space<vmem>>, %arg3: memref<392x128xf32, #tpu.memory_space<vmem>>, %arg4: memref<392x128xf32, #tpu.memory_space<vmem>>, %arg5: memref<392x128xf32, #tpu.memory_space<vmem>>) attributes {dimension_semantics = [#tpu.dimension_semantics<parallel>], iteration_bounds = array<i64: 1>, scalar_prefetch = 0 : i64, scratch_operands = 0 : i64, tpu.core_type = #tpu.core_type<tc>, window_params = [{transform_indices = @transform_0, window_bounds = array<i64: 392, 128>}, {transform_indices = @transform_1, window_bounds = array<i64: 392, 128>}, {transform_indices = @transform_2, window_bounds = array<i64: 392, 128>}, {transform_indices = @transform_3, window_bounds = array<i64: 392, 128>}, {transform_indices = @transform_4, window_bounds = array<i64: 392, 128>}]} {
    %c0 = arith.constant 0 : index
    %c0_0 = arith.constant 0 : index
    %0 = vector.load %arg1[%c0, %c0_0] : memref<392x128xf32, #tpu.memory_space<vmem>>, vector<392x128xf32>
    %c0_1 = arith.constant 0 : index
    %c0_2 = arith.constant 0 : index
    %1 = vector.load %arg2[%c0_1, %c0_2] : memref<392x128xf32, #tpu.memory_space<vmem>>, vector<392x128xf32>
    %2 = arith.maximumf %0, %1 : vector<392x128xf32>
    %c0_3 = arith.constant 0 : index
    %c0_4 = arith.constant 0 : index
    %3 = vector.load %arg3[%c0_3, %c0_4] : memref<392x128xf32, #tpu.memory_space<vmem>>, vector<392x128xf32>
    %c0_5 = arith.constant 0 : index
    %c0_6 = arith.constant 0 : index
    %4 = vector.load %arg4[%c0_5, %c0_6] : memref<392x128xf32, #tpu.memory_space<vmem>>, vector<392x128xf32>
    %5 = arith.maximumf %3, %4 : vector<392x128xf32>
    %6 = arith.maximumf %2, %5 : vector<392x128xf32>
    %c0_7 = arith.constant 0 : index
    %c0_8 = arith.constant 0 : index
    %7 = vector.load %arg5[%c0_7, %c0_8] : memref<392x128xf32, #tpu.memory_space<vmem>>, vector<392x128xf32>
    tpu.vector_store %arg5[%c0_7, %c0_8], %6 {strides = array<i32>} : memref<392x128xf32, #tpu.memory_space<vmem>>, vector<392x128xf32>,
    return
  }
  func.func @transform_0(%arg0: i32) -> (i32, i32) {
    %c0_i32 = arith.constant 0 : i32
    %c0_i32_0 = arith.constant 0 : i32
    return %arg0, %c0_i32 : i32, i32
  }
  func.func @transform_1(%arg0: i32) -> (i32, i32) {
    %c0_i32 = arith.constant 0 : i32
    %c0_i32_0 = arith.constant 0 : i32
    return %arg0, %c0_i32 : i32, i32
  }
  func.func @transform_2(%arg0: i32) -> (i32, i32) {
    %c0_i32 = arith.constant 0 : i32
    %c0_i32_0 = arith.constant 0 : i32
    return %arg0, %c0_i32 : i32, i32
  }
  func.func @transform_3(%arg0: i32) -> (i32, i32) {
    %c0_i32 = arith.constant 0 : i32
    %c0_i32_0 = arith.constant 0 : i32
    return %arg0, %c0_i32 : i32, i32
  }
  func.func @transform_4(%arg0: i32) -> (i32, i32) {
    %c0_i32 = arith.constant 0 : i32
    %c0_i32_0 = arith.constant 0 : i32
    return %arg0, %c0_i32 : i32, i32
  }
}

module attributes {stable_mosaic.version = 11 : i64} {
  func.func @_matmul_bias_act_kernel(%arg0: i32, %arg1: i32, %arg2: i32, %arg3: memref<200x512xf32, #tpu.memory_space<vmem>>, %arg4: memref<512x128xf32, #tpu.memory_space<vmem>>, %arg5: memref<1x128xf32, #tpu.memory_space<vmem>>, %arg6: memref<200x128xf32, #tpu.memory_space<vmem>>, %arg7: memref<200x128xf32, #tpu.memory_space<vmem>>) attributes {dimension_semantics = [#tpu.dimension_semantics<parallel>, #tpu.dimension_semantics<parallel>, #tpu.dimension_semantics<arbitrary>], iteration_bounds = array<i64: 1, 1, 1>, scalar_prefetch = 0 : i64, scratch_operands = 1 : i64, tpu.core_type = #tpu.core_type<tc>, window_params = [{transform_indices = @transform_0, window_bounds = array<i64: 200, 512>}, {transform_indices = @transform_1, window_bounds = array<i64: 512, 128>}, {transform_indices = @transform_2, window_bounds = array<i64: 1, 128>}, {transform_indices = @transform_3, window_bounds = array<i64: 200, 128>}]} {
    %c0_i32 = arith.constant 0 : i32
    %0 = arith.cmpi eq, %arg2, %c0_i32 : i32
    %1 = arith.extui %0 : i1 to i32
    %c0_i32_0 = arith.constant 0 : i32
    %2 = arith.cmpi ne, %1, %c0_i32_0 : i32
    scf.if %2 {
      %cst_10 = arith.constant 0.000000e+00 : f32
      %12 = vector.broadcast %cst_10 : f32 to vector<200x128xf32>
      %c0_11 = arith.constant 0 : index
      %c0_12 = arith.constant 0 : index
      %13 = vector.load %arg7[%c0_11, %c0_12] : memref<200x128xf32, #tpu.memory_space<vmem>>, vector<200x128xf32>
      tpu.vector_store %arg7[%c0_11, %c0_12], %12 {strides = array<i32>} : memref<200x128xf32, #tpu.memory_space<vmem>>, vector<200x128xf32>,
    } else {
    }
    %c0 = arith.constant 0 : index
    %c0_1 = arith.constant 0 : index
    %3 = vector.load %arg7[%c0, %c0_1] : memref<200x128xf32, #tpu.memory_space<vmem>>, vector<200x128xf32>
    %c0_2 = arith.constant 0 : index
    %c0_3 = arith.constant 0 : index
    %4 = vector.load %arg3[%c0_2, %c0_3] : memref<200x512xf32, #tpu.memory_space<vmem>>, vector<200x512xf32>
    %c0_4 = arith.constant 0 : index
    %c0_5 = arith.constant 0 : index
    %5 = vector.load %arg4[%c0_4, %c0_5] : memref<512x128xf32, #tpu.memory_space<vmem>>, vector<512x128xf32>
    %cst = arith.constant dense<0.000000e+00> : vector<200x128xf32>
    %6 = tpu.matmul %4, %5, %cst {dimension_numbers = #tpu.dot_dimension_numbers<[1], [0], [0], [1], [0, 0, 1, 1], [], []>} : vector<200x512xf32>, vector<512x128xf32>, vector<200x128xf32> -> vector<200x128xf32>
    %7 = arith.addf %3, %6 : vector<200x128xf32>
    %c0_6 = arith.constant 0 : index
    %c0_7 = arith.constant 0 : index
    %8 = vector.load %arg7[%c0_6, %c0_7] : memref<200x128xf32, #tpu.memory_space<vmem>>, vector<200x128xf32>
    tpu.vector_store %arg7[%c0_6, %c0_7], %7 {strides = array<i32>} : memref<200x128xf32, #tpu.memory_space<vmem>>, vector<200x128xf32>,
    %c0_i32_8 = arith.constant 0 : i32
    %9 = arith.cmpi eq, %arg2, %c0_i32_8 : i32
    %10 = arith.extui %9 : i1 to i32
    %c0_i32_9 = arith.constant 0 : i32
    %11 = arith.cmpi ne, %10, %c0_i32_9 : i32
    scf.if %11 {
      %c0_10 = arith.constant 0 : index
      %c0_11 = arith.constant 0 : index
      %12 = vector.load %arg7[%c0_10, %c0_11] : memref<200x128xf32, #tpu.memory_space<vmem>>, vector<200x128xf32>
      %c0_12 = arith.constant 0 : index
      %c0_13 = arith.constant 0 : index
      %13 = vector.load %arg5[%c0_12, %c0_13] : memref<1x128xf32, #tpu.memory_space<vmem>>, vector<1x128xf32>
      %14 = vector.broadcast %13 : vector<1x128xf32> to vector<200x128xf32>
      %15 = arith.addf %12, %14 : vector<200x128xf32>
      %cst_14 = arith.constant 0.000000e+00 : f32
      %16 = vector.broadcast %cst_14 : f32 to vector<200x128xf32>
      %17 = arith.maximumf %15, %16 : vector<200x128xf32>
      %c0_15 = arith.constant 0 : index
      %c0_16 = arith.constant 0 : index
      %18 = vector.load %arg6[%c0_15, %c0_16] : memref<200x128xf32, #tpu.memory_space<vmem>>, vector<200x128xf32>
      tpu.vector_store %arg6[%c0_15, %c0_16], %17 {strides = array<i32>} : memref<200x128xf32, #tpu.memory_space<vmem>>, vector<200x128xf32>,
    } else {
    }
    return
  }
  func.func @transform_0(%arg0: i32, %arg1: i32, %arg2: i32) -> (i32, i32) {
    %c0_i32 = arith.constant 0 : i32
    return %arg0, %arg2 : i32, i32
  }
  func.func @transform_1(%arg0: i32, %arg1: i32, %arg2: i32) -> (i32, i32) {
    %c0_i32 = arith.constant 0 : i32
    return %arg2, %arg1 : i32, i32
  }
  func.func @transform_2(%arg0: i32, %arg1: i32, %arg2: i32) -> (i32, i32) {
    %c0_i32 = arith.constant 0 : i32
    %c0_i32_0 = arith.constant 0 : i32
    return %c0_i32, %arg1 : i32, i32
  }
  func.func @transform_3(%arg0: i32, %arg1: i32, %arg2: i32) -> (i32, i32) {
    %c0_i32 = arith.constant 0 : i32
    return %arg0, %arg1 : i32, i32
  }
}

module attributes {stable_mosaic.version = 11 : i64} {
  func.func @_matmul_bias_act_kernel(%arg0: i32, %arg1: i32, %arg2: i32, %arg3: memref<72x128xf32, #tpu.memory_space<vmem>>, %arg4: memref<128x128xf32, #tpu.memory_space<vmem>>, %arg5: memref<1x128xf32, #tpu.memory_space<vmem>>, %arg6: memref<72x128xf32, #tpu.memory_space<vmem>>, %arg7: memref<72x128xf32, #tpu.memory_space<vmem>>) attributes {dimension_semantics = [#tpu.dimension_semantics<parallel>, #tpu.dimension_semantics<parallel>, #tpu.dimension_semantics<arbitrary>], iteration_bounds = array<i64: 1, 1, 13>, scalar_prefetch = 0 : i64, scratch_operands = 1 : i64, tpu.core_type = #tpu.core_type<tc>, window_params = [{transform_indices = @transform_0, window_bounds = array<i64: 72, 128>}, {transform_indices = @transform_1, window_bounds = array<i64: 128, 128>}, {transform_indices = @transform_2, window_bounds = array<i64: 1, 128>}, {transform_indices = @transform_3, window_bounds = array<i64: 72, 128>}]} {
    %c0_i32 = arith.constant 0 : i32
    %0 = arith.cmpi eq, %arg2, %c0_i32 : i32
    %1 = arith.extui %0 : i1 to i32
    %c0_i32_0 = arith.constant 0 : i32
    %2 = arith.cmpi ne, %1, %c0_i32_0 : i32
    scf.if %2 {
      %cst_9 = arith.constant 0.000000e+00 : f32
      %12 = vector.broadcast %cst_9 : f32 to vector<72x128xf32>
      %c0_10 = arith.constant 0 : index
      %c0_11 = arith.constant 0 : index
      %13 = vector.load %arg7[%c0_10, %c0_11] : memref<72x128xf32, #tpu.memory_space<vmem>>, vector<72x128xf32>
      tpu.vector_store %arg7[%c0_10, %c0_11], %12 {strides = array<i32>} : memref<72x128xf32, #tpu.memory_space<vmem>>, vector<72x128xf32>,
    } else {
    }
    %c0 = arith.constant 0 : index
    %c0_1 = arith.constant 0 : index
    %3 = vector.load %arg7[%c0, %c0_1] : memref<72x128xf32, #tpu.memory_space<vmem>>, vector<72x128xf32>
    %c0_2 = arith.constant 0 : index
    %c0_3 = arith.constant 0 : index
    %4 = vector.load %arg3[%c0_2, %c0_3] : memref<72x128xf32, #tpu.memory_space<vmem>>, vector<72x128xf32>
    %c0_4 = arith.constant 0 : index
    %c0_5 = arith.constant 0 : index
    %5 = vector.load %arg4[%c0_4, %c0_5] : memref<128x128xf32, #tpu.memory_space<vmem>>, vector<128x128xf32>
    %cst = arith.constant dense<0.000000e+00> : vector<72x128xf32>
    %6 = tpu.matmul %4, %5, %cst {dimension_numbers = #tpu.dot_dimension_numbers<[1], [0], [0], [1], [0, 0, 1, 1], [], []>} : vector<72x128xf32>, vector<128x128xf32>, vector<72x128xf32> -> vector<72x128xf32>
    %7 = arith.addf %3, %6 : vector<72x128xf32>
    %c0_6 = arith.constant 0 : index
    %c0_7 = arith.constant 0 : index
    %8 = vector.load %arg7[%c0_6, %c0_7] : memref<72x128xf32, #tpu.memory_space<vmem>>, vector<72x128xf32>
    tpu.vector_store %arg7[%c0_6, %c0_7], %7 {strides = array<i32>} : memref<72x128xf32, #tpu.memory_space<vmem>>, vector<72x128xf32>,
    %c12_i32 = arith.constant 12 : i32
    %9 = arith.cmpi eq, %arg2, %c12_i32 : i32
    %10 = arith.extui %9 : i1 to i32
    %c0_i32_8 = arith.constant 0 : i32
    %11 = arith.cmpi ne, %10, %c0_i32_8 : i32
    scf.if %11 {
      %c0_9 = arith.constant 0 : index
      %c0_10 = arith.constant 0 : index
      %12 = vector.load %arg7[%c0_9, %c0_10] : memref<72x128xf32, #tpu.memory_space<vmem>>, vector<72x128xf32>
      %c0_11 = arith.constant 0 : index
      %c0_12 = arith.constant 0 : index
      %13 = vector.load %arg5[%c0_11, %c0_12] : memref<1x128xf32, #tpu.memory_space<vmem>>, vector<1x128xf32>
      %14 = vector.broadcast %13 : vector<1x128xf32> to vector<72x128xf32>
      %15 = arith.addf %12, %14 : vector<72x128xf32>
      %cst_13 = arith.constant 0.000000e+00 : f32
      %16 = vector.broadcast %cst_13 : f32 to vector<72x128xf32>
      %17 = arith.maximumf %15, %16 : vector<72x128xf32>
      %c0_14 = arith.constant 0 : index
      %c0_15 = arith.constant 0 : index
      %18 = vector.load %arg6[%c0_14, %c0_15] : memref<72x128xf32, #tpu.memory_space<vmem>>, vector<72x128xf32>
      tpu.vector_store %arg6[%c0_14, %c0_15], %17 {strides = array<i32>} : memref<72x128xf32, #tpu.memory_space<vmem>>, vector<72x128xf32>,
    } else {
    }
    return
  }
  func.func @transform_0(%arg0: i32, %arg1: i32, %arg2: i32) -> (i32, i32) {
    %c0_i32 = arith.constant 0 : i32
    return %arg0, %arg2 : i32, i32
  }
  func.func @transform_1(%arg0: i32, %arg1: i32, %arg2: i32) -> (i32, i32) {
    %c0_i32 = arith.constant 0 : i32
    return %arg2, %arg1 : i32, i32
  }
  func.func @transform_2(%arg0: i32, %arg1: i32, %arg2: i32) -> (i32, i32) {
    %c0_i32 = arith.constant 0 : i32
    %c0_i32_0 = arith.constant 0 : i32
    return %c0_i32, %arg1 : i32, i32
  }
  func.func @transform_3(%arg0: i32, %arg1: i32, %arg2: i32) -> (i32, i32) {
    %c0_i32 = arith.constant 0 : i32
    return %arg0, %arg1 : i32, i32
  }
}

module attributes {stable_mosaic.version = 11 : i64} {
  func.func @_max4_kernel(%arg0: i32, %arg1: memref<24x128xf32, #tpu.memory_space<vmem>>, %arg2: memref<24x128xf32, #tpu.memory_space<vmem>>, %arg3: memref<24x128xf32, #tpu.memory_space<vmem>>, %arg4: memref<24x128xf32, #tpu.memory_space<vmem>>, %arg5: memref<24x128xf32, #tpu.memory_space<vmem>>) attributes {dimension_semantics = [#tpu.dimension_semantics<parallel>], iteration_bounds = array<i64: 1>, scalar_prefetch = 0 : i64, scratch_operands = 0 : i64, tpu.core_type = #tpu.core_type<tc>, window_params = [{transform_indices = @transform_0, window_bounds = array<i64: 24, 128>}, {transform_indices = @transform_1, window_bounds = array<i64: 24, 128>}, {transform_indices = @transform_2, window_bounds = array<i64: 24, 128>}, {transform_indices = @transform_3, window_bounds = array<i64: 24, 128>}, {transform_indices = @transform_4, window_bounds = array<i64: 24, 128>}]} {
    %c0 = arith.constant 0 : index
    %c0_0 = arith.constant 0 : index
    %0 = vector.load %arg1[%c0, %c0_0] : memref<24x128xf32, #tpu.memory_space<vmem>>, vector<24x128xf32>
    %c0_1 = arith.constant 0 : index
    %c0_2 = arith.constant 0 : index
    %1 = vector.load %arg2[%c0_1, %c0_2] : memref<24x128xf32, #tpu.memory_space<vmem>>, vector<24x128xf32>
    %2 = arith.maximumf %0, %1 : vector<24x128xf32>
    %c0_3 = arith.constant 0 : index
    %c0_4 = arith.constant 0 : index
    %3 = vector.load %arg3[%c0_3, %c0_4] : memref<24x128xf32, #tpu.memory_space<vmem>>, vector<24x128xf32>
    %c0_5 = arith.constant 0 : index
    %c0_6 = arith.constant 0 : index
    %4 = vector.load %arg4[%c0_5, %c0_6] : memref<24x128xf32, #tpu.memory_space<vmem>>, vector<24x128xf32>
    %5 = arith.maximumf %3, %4 : vector<24x128xf32>
    %6 = arith.maximumf %2, %5 : vector<24x128xf32>
    %c0_7 = arith.constant 0 : index
    %c0_8 = arith.constant 0 : index
    %7 = vector.load %arg5[%c0_7, %c0_8] : memref<24x128xf32, #tpu.memory_space<vmem>>, vector<24x128xf32>
    tpu.vector_store %arg5[%c0_7, %c0_8], %6 {strides = array<i32>} : memref<24x128xf32, #tpu.memory_space<vmem>>, vector<24x128xf32>,
    return
  }
  func.func @transform_0(%arg0: i32) -> (i32, i32) {
    %c0_i32 = arith.constant 0 : i32
    %c0_i32_0 = arith.constant 0 : i32
    return %arg0, %c0_i32 : i32, i32
  }
  func.func @transform_1(%arg0: i32) -> (i32, i32) {
    %c0_i32 = arith.constant 0 : i32
    %c0_i32_0 = arith.constant 0 : i32
    return %arg0, %c0_i32 : i32, i32
  }
  func.func @transform_2(%arg0: i32) -> (i32, i32) {
    %c0_i32 = arith.constant 0 : i32
    %c0_i32_0 = arith.constant 0 : i32
    return %arg0, %c0_i32 : i32, i32
  }
  func.func @transform_3(%arg0: i32) -> (i32, i32) {
    %c0_i32 = arith.constant 0 : i32
    %c0_i32_0 = arith.constant 0 : i32
    return %arg0, %c0_i32 : i32, i32
  }
  func.func @transform_4(%arg0: i32) -> (i32, i32) {
    %c0_i32 = arith.constant 0 : i32
    %c0_i32_0 = arith.constant 0 : i32
    return %arg0, %c0_i32 : i32, i32
  }
}

module attributes {stable_mosaic.version = 11 : i64} {
  func.func @_fc_fused_kernel(%arg0: i32, %arg1: memref<8x1152xf32, #tpu.memory_space<vmem>>, %arg2: memref<1152x1024xf32, #tpu.memory_space<vmem>>, %arg3: memref<1x1024xf32, #tpu.memory_space<vmem>>, %arg4: memref<1024x128xf32, #tpu.memory_space<vmem>>, %arg5: memref<1x128xf32, #tpu.memory_space<vmem>>, %arg6: memref<128x128xf32, #tpu.memory_space<vmem>>, %arg7: memref<1x128xf32, #tpu.memory_space<vmem>>, %arg8: memref<8x128xf32, #tpu.memory_space<vmem>>) attributes {dimension_semantics = [#tpu.dimension_semantics<parallel>], iteration_bounds = array<i64: 1>, scalar_prefetch = 0 : i64, scratch_operands = 0 : i64, tpu.core_type = #tpu.core_type<tc>, window_params = [{transform_indices = @transform_0, window_bounds = array<i64: 8, 1152>}, {pipeline_mode = #tpu.pipeline_mode<synchronous>, transform_indices = @transform_1, window_bounds = array<i64: 1152, 1024>}, {pipeline_mode = #tpu.pipeline_mode<synchronous>, transform_indices = @transform_2, window_bounds = array<i64: 1, 1024>}, {pipeline_mode = #tpu.pipeline_mode<synchronous>, transform_indices = @transform_3, window_bounds = array<i64: 1024, 128>}, {pipeline_mode = #tpu.pipeline_mode<synchronous>, transform_indices = @transform_4, window_bounds = array<i64: 1, 128>}, {pipeline_mode = #tpu.pipeline_mode<synchronous>, transform_indices = @transform_5, window_bounds = array<i64: 128, 128>}, {pipeline_mode = #tpu.pipeline_mode<synchronous>, transform_indices = @transform_6, window_bounds = array<i64: 1, 128>}, {transform_indices = @transform_7, window_bounds = array<i64: 8, 128>}]} {
    %c0 = arith.constant 0 : index
    %c0_0 = arith.constant 0 : index
    %0 = vector.load %arg1[%c0, %c0_0] : memref<8x1152xf32, #tpu.memory_space<vmem>>, vector<8x1152xf32>
    %c0_1 = arith.constant 0 : index
    %c0_2 = arith.constant 0 : index
    %1 = vector.load %arg2[%c0_1, %c0_2] : memref<1152x1024xf32, #tpu.memory_space<vmem>>, vector<1152x1024xf32>
    %cst = arith.constant dense<0.000000e+00> : vector<8x1024xf32>
    %2 = tpu.matmul %0, %1, %cst {dimension_numbers = #tpu.dot_dimension_numbers<[1], [0], [0], [1], [0, 0, 1, 1], [], []>} : vector<8x1152xf32>, vector<1152x1024xf32>, vector<8x1024xf32> -> vector<8x1024xf32>
    %c0_3 = arith.constant 0 : index
    %c0_4 = arith.constant 0 : index
    %3 = vector.load %arg3[%c0_3, %c0_4] : memref<1x1024xf32, #tpu.memory_space<vmem>>, vector<1x1024xf32>
    %4 = vector.broadcast %3 : vector<1x1024xf32> to vector<8x1024xf32>
    %5 = arith.addf %2, %4 : vector<8x1024xf32>
    %cst_5 = arith.constant 0.000000e+00 : f32
    %6 = vector.broadcast %cst_5 : f32 to vector<8x1024xf32>
    %7 = arith.maximumf %5, %6 : vector<8x1024xf32>
    %c0_6 = arith.constant 0 : index
    %c0_7 = arith.constant 0 : index
    %8 = vector.load %arg4[%c0_6, %c0_7] : memref<1024x128xf32, #tpu.memory_space<vmem>>, vector<1024x128xf32>
    %cst_8 = arith.constant dense<0.000000e+00> : vector<8x128xf32>
    %9 = tpu.matmul %7, %8, %cst_8 {dimension_numbers = #tpu.dot_dimension_numbers<[1], [0], [0], [1], [0, 0, 1, 1], [], []>} : vector<8x1024xf32>, vector<1024x128xf32>, vector<8x128xf32> -> vector<8x128xf32>
    %c0_9 = arith.constant 0 : index
    %c0_10 = arith.constant 0 : index
    %10 = vector.load %arg5[%c0_9, %c0_10] : memref<1x128xf32, #tpu.memory_space<vmem>>, vector<1x128xf32>
    %11 = vector.broadcast %10 : vector<1x128xf32> to vector<8x128xf32>
    %12 = arith.addf %9, %11 : vector<8x128xf32>
    %cst_11 = arith.constant 0.000000e+00 : f32
    %13 = vector.broadcast %cst_11 : f32 to vector<8x128xf32>
    %14 = arith.maximumf %12, %13 : vector<8x128xf32>
    %c0_12 = arith.constant 0 : index
    %c0_13 = arith.constant 0 : index
    %15 = vector.load %arg6[%c0_12, %c0_13] : memref<128x128xf32, #tpu.memory_space<vmem>>, vector<128x128xf32>
    %cst_14 = arith.constant dense<0.000000e+00> : vector<8x128xf32>
    %16 = tpu.matmul %14, %15, %cst_14 {dimension_numbers = #tpu.dot_dimension_numbers<[1], [0], [0], [1], [0, 0, 1, 1], [], []>} : vector<8x128xf32>, vector<128x128xf32>, vector<8x128xf32> -> vector<8x128xf32>
    %c0_15 = arith.constant 0 : index
    %c0_16 = arith.constant 0 : index
    %17 = vector.load %arg7[%c0_15, %c0_16] : memref<1x128xf32, #tpu.memory_space<vmem>>, vector<1x128xf32>
    %18 = vector.broadcast %17 : vector<1x128xf32> to vector<8x128xf32>
    %19 = arith.addf %16, %18 : vector<8x128xf32>
    %c0_17 = arith.constant 0 : index
    %c0_18 = arith.constant 0 : index
    %20 = vector.load %arg8[%c0_17, %c0_18] : memref<8x128xf32, #tpu.memory_space<vmem>>, vector<8x128xf32>
    tpu.vector_store %arg8[%c0_17, %c0_18], %19 {strides = array<i32>} : memref<8x128xf32, #tpu.memory_space<vmem>>, vector<8x128xf32>,
    return
  }
  func.func @transform_0(%arg0: i32) -> (i32, i32) {
    %c0_i32 = arith.constant 0 : i32
    %c0_i32_0 = arith.constant 0 : i32
    return %arg0, %c0_i32 : i32, i32
  }
  func.func @transform_1(%arg0: i32) -> (i32, i32) {
    %c0_i32 = arith.constant 0 : i32
    %c0_i32_0 = arith.constant 0 : i32
    %c0_i32_1 = arith.constant 0 : i32
    return %c0_i32, %c0_i32_0 : i32, i32
  }
  func.func @transform_2(%arg0: i32) -> (i32, i32) {
    %c0_i32 = arith.constant 0 : i32
    %c0_i32_0 = arith.constant 0 : i32
    %c0_i32_1 = arith.constant 0 : i32
    return %c0_i32, %c0_i32_0 : i32, i32
  }
  func.func @transform_3(%arg0: i32) -> (i32, i32) {
    %c0_i32 = arith.constant 0 : i32
    %c0_i32_0 = arith.constant 0 : i32
    %c0_i32_1 = arith.constant 0 : i32
    return %c0_i32, %c0_i32_0 : i32, i32
  }
  func.func @transform_4(%arg0: i32) -> (i32, i32) {
    %c0_i32 = arith.constant 0 : i32
    %c0_i32_0 = arith.constant 0 : i32
    %c0_i32_1 = arith.constant 0 : i32
    return %c0_i32, %c0_i32_0 : i32, i32
  }
  func.func @transform_5(%arg0: i32) -> (i32, i32) {
    %c0_i32 = arith.constant 0 : i32
    %c0_i32_0 = arith.constant 0 : i32
    %c0_i32_1 = arith.constant 0 : i32
    return %c0_i32, %c0_i32_0 : i32, i32
  }
  func.func @transform_6(%arg0: i32) -> (i32, i32) {
    %c0_i32 = arith.constant 0 : i32
    %c0_i32_0 = arith.constant 0 : i32
    %c0_i32_1 = arith.constant 0 : i32
    return %c0_i32, %c0_i32_0 : i32, i32
  }
  func.func @transform_7(%arg0: i32) -> (i32, i32) {
    %c0_i32 = arith.constant 0 : i32
    %c0_i32_0 = arith.constant 0 : i32
    return %arg0, %c0_i32 : i32, i32
  }
}

</mosaic_0001>

<llo_original>
// kernel: cnn_forward.6
$region0: #{cnn_forward.6}
  #allocation0 [shape = 'u32[]', space=smem, size = 0x4, offset = 0x4, fixed_abs, tag = 'smem constant byte address 0x4 - core index']
  #allocation1 [shape = 'u32[144,128]{1,0:T(1,128)}', space=vmem, size = 0x12000, scoped, tag = 'internal scratch']
  #allocation2 [shape = 'f32[256,128]{1,0:T(8,128)}', space=vmem, size = 0x20000, scoped, tag = 'scratch operand']
  %s0 = inlined_call_operand.vmem [shape: f32[1792,128], index: 0, kind: input, shape index: {}]
  %s1 = inlined_call_operand.vmem [shape: f32[128,128], index: 1, kind: input, shape index: {}]
  %s2 = inlined_call_operand.vmem [shape: f32[1,128], index: 2, kind: input, shape index: {}]
  %s3 = inlined_call_operand.vmem [shape: f32[1792,128], index: 3, kind: output, shape index: {}]
  %s4 = sld [smem:[#allocation0]]
  $region53: #{cnn_forward.6} parent=0
    _
  %s6 = ssub.s32 1, %s4
  %s7 = scalar_select 0, %s6, %s4
  loop: start=0, step=1, limit=9
  $region2: #{cnn_forward.6} parent=0 // loop_pre_header
    _
  $region3: #{cnn_forward.6} parent=0 // loop_header
    %s9 = sphi 0, %s13
    %p10 = scmp.ge.s32.totalorder %s9, 9
    %s16 = sphi 0, %s35
    %s17 = sphi 0, %s31
    %s18 = sphi 0, %s27
    %s19 = sphi 0, %s16
    %s20 = sphi 0, %s17
    %s21 = sphi 0, %s18
    %s22 = sphi 0, %s19
    %s23 = sphi 0, %s20
    %s24 = sphi 0, %s21
    %s40 = sphi 0, %s42
    %s43 = sphi 0, %s40
    %s44 = sphi 0, %s43
    %s60 = sphi 0, %s44
    %s68 = sphi 0, %s70
    %s71 = sphi 0, %s68
    %s72 = sphi 0, %s71
    %s88 = sphi 0, %s72
    %s94 = sphi 0, %s96
    %s97 = sphi 0, %s94
    %s98 = sphi 0, %s97
    %s114 = sphi 0, %s98
    %s122 = sphi 0, %s124
    %s125 = sphi 0, %s122
    %s126 = sphi 0, %s125
    %s142 = sphi 0, %s126
  $region4: #{cnn_forward.6} parent=0 // loop_header_branch
    %12 = sbr.rel (%p10) target = $region8
  $region5: #{cnn_forward.6} parent=0 // loop_body
    %s14 = ssub.s32 %s9, 1
    %s15 = ssub.s32 %s9, 2
    %s25 = sadd.s32 1, %s18
    %p26 = scmp.ge.s32.totalorder %s25, 1
    %s27 = scalar_select %p26, 0, %s25
    %s28 = sadd.s32 1, %s17
    %s29 = scalar_select %p26, %s28, %s17
    %p30 = scmp.ge.s32.totalorder %s29, 1
    %s31 = scalar_select %p30, 0, %s29
    %s32 = sadd.s32 1, %s16
    %s33 = scalar_select %p30, %s32, %s16
    %p34 = scmp.ge.s32.totalorder %s33, 7
    %s35 = scalar_select %p34, 0, %s33
    %s36 = ssub.s32 %s16, %s35
    %s37 = ssub.s32 %s18, %s27
    %s38 = sor.u32 %s36, %s37
    %p39 = scmp.eq.s32.totalorder %s38, 0
    %s41 = sadd.s32 %s40, 1
    %s42 = scalar_select %p39, %s40, %s41
    %p45 = pneg %p39
    %p46 = scmp.eq.s32.totalorder %s9, 6
    %p47 = por %p45, %p46
    %p48 = scmp.ne.s32.totalorder %s40, %s43
    %p49 = scmp.eq.s32.totalorder %s9, 0
    %p50 = por %p48, %p49
    %p51 = scmp.ne.s32.totalorder %s40, %s43
    %p52 = scmp.eq.s32.totalorder %s14, 6
    %p53 = por %p51, %p52
    %p54 = scmp.ne.s32.totalorder %s43, %s44
    %p55 = scmp.eq.s32.totalorder %s14, 0
    %p56 = por %p54, %p55
    %p57 = scmp.ne.s32.totalorder %s43, %s44
    %p58 = scmp.eq.s32.totalorder %s15, 6
    %p59 = por %p57, %p58
    %p61 = scmp.ne.s32.totalorder %s44, %s60
    %p62 = scmp.eq.s32.totalorder %s15, 0
    %p63 = por %p61, %p62
    %s64 = ssub.s32 %s18, %s27
    %s65 = ssub.s32 %s17, %s31
    %s66 = sor.u32 %s64, %s65
    %p67 = scmp.eq.s32.totalorder %s66, 0
    %s69 = sadd.s32 %s68, 1
    %s70 = scalar_select %p67, %s68, %s69
    %p73 = pneg %p67
    %p74 = scmp.eq.s32.totalorder %s9, 6
    %p75 = por %p73, %p74
    %p76 = scmp.ne.s32.totalorder %s68, %s71
    %p77 = scmp.eq.s32.totalorder %s9, 0
    %p78 = por %p76, %p77
    %p79 = scmp.ne.s32.totalorder %s68, %s71
    %p80 = scmp.eq.s32.totalorder %s14, 6
    %p81 = por %p79, %p80
    %p82 = scmp.ne.s32.totalorder %s71, %s72
    %p83 = scmp.eq.s32.totalorder %s14, 0
    %p84 = por %p82, %p83
    %p85 = scmp.ne.s32.totalorder %s71, %s72
    %p86 = scmp.eq.s32.totalorder %s15, 6
    %p87 = por %p85, %p86
    %p89 = scmp.ne.s32.totalorder %s72, %s88
    %p90 = scmp.eq.s32.totalorder %s15, 0
    %p91 = por %p89, %p90
    %s92 = ssub.s32 %s17, %s31
    %p93 = scmp.eq.s32.totalorder %s92, 0
    %s95 = sadd.s32 %s94, 1
    %s96 = scalar_select %p93, %s94, %s95
    %p99 = pneg %p93
    %p100 = scmp.eq.s32.totalorder %s9, 6
    %p101 = por %p99, %p100
    %p102 = scmp.ne.s32.totalorder %s94, %s97
    %p103 = scmp.eq.s32.totalorder %s9, 0
    %p104 = por %p102, %p103
    %p105 = scmp.ne.s32.totalorder %s94, %s97
    %p106 = scmp.eq.s32.totalorder %s14, 6
    %p107 = por %p105, %p106
    %p108 = scmp.ne.s32.totalorder %s97, %s98
    %p109 = scmp.eq.s32.totalorder %s14, 0
    %p110 = por %p108, %p109
    %p111 = scmp.ne.s32.totalorder %s97, %s98
    %p112 = scmp.eq.s32.totalorder %s15, 6
    %p113 = por %p111, %p112
    %p115 = scmp.ne.s32.totalorder %s98, %s114
    %p116 = scmp.eq.s32.totalorder %s15, 0
    %p117 = por %p115, %p116
    %s118 = ssub.s32 %s16, %s35
    %s119 = ssub.s32 %s17, %s31
    %s120 = sor.u32 %s118, %s119
    %p121 = scmp.eq.s32.totalorder %s120, 0
    %s123 = sadd.s32 %s122, 1
    %s124 = scalar_select %p121, %s122, %s123
    %p127 = pneg %p121
    %p128 = scmp.eq.s32.totalorder %s9, 6
    %p129 = por %p127, %p128
    %p130 = scmp.ne.s32.totalorder %s122, %s125
    %p131 = scmp.eq.s32.totalorder %s9, 0
    %p132 = por %p130, %p131
    %p133 = scmp.ne.s32.totalorder %s122, %s125
    %p134 = scmp.eq.s32.totalorder %s14, 6
    %p135 = por %p133, %p134
    %p136 = scmp.ne.s32.totalorder %s125, %s126
    %p137 = scmp.eq.s32.totalorder %s14, 0
    %p138 = por %p136, %p137
    %p139 = scmp.ne.s32.totalorder %s125, %s126
    %p140 = scmp.eq.s32.totalorder %s15, 6
    %p141 = por %p139, %p140
    %p143 = scmp.ne.s32.totalorder %s126, %s142
    %p144 = scmp.eq.s32.totalorder %s15, 0
    %p145 = por %p143, %p144
    %p146 = scmp.le.s32.totalorder 1, %s9
    %p147 = scmp.lt.s32.totalorder %s9, 8
    %p148 = pnand %p146, %p147
    %p149 = pneg %p148
    // Predicated region
    $region9: #{cnn_forward.6} parent=5 // pred_check
      _
    $region10: #{cnn_forward.6} parent=5 // pred_check_branch
      %151 = sbr.rel (%p148) target = $region12
    $region11: #{cnn_forward.6} parent=5 // pred_region
      %s152 = ssub.s32 %s9, 1
      // Predicated region
      $region13: #{cnn_forward.6} parent=11 // pred_check
        %p153 = pneg %p84
      $region14: #{cnn_forward.6} parent=11 // pred_check_branch
        %155 = sbr.rel (%p153) target = $region16
      $region15: #{cnn_forward.6} parent=11 // pred_region
        %s156 = smul.u32 16, %s21
        %p157 = scmp.lt.s32.totalorder %s156, 15
        %s158 = scalar_select %p157, %s156, 15
        %p159 = scmp.lt.s32.totalorder %s20, 0
        %s160 = scalar_select %p159, %s20, 0
        %s161 = sadd.s32 %s160, %s158
        %s162 = smul.addr %s161, 8
        %s163 = scalar_lea.vmem %s1, %s162
        %s164 = smul.u32 16, %s21
      $region16: #{cnn_forward.6} parent=11 // pred_fallthru
        _
      // Predicated region
      $region17: #{cnn_forward.6} parent=11 // pred_check
        %p165 = pneg %p110
      $region18: #{cnn_forward.6} parent=11 // pred_check_branch
        %167 = sbr.rel (%p165) target = $region20
      $region19: #{cnn_forward.6} parent=11 // pred_region
        %p168 = scmp.lt.s32.totalorder %s20, 0
        %s169 = scalar_select %p168, %s20, 0
        %s170 = scalar_lea.vmem %s2, %s169
      $region20: #{cnn_forward.6} parent=11 // pred_fallthru
        _
    $region12: #{cnn_forward.6} parent=5 // pred_fallthru
      _
    %p171 = scmp.lt.s32.totalorder %s9, 7
    // Predicated region
    $region21: #{cnn_forward.6} parent=5 // pred_check
      %p172 = pneg %p171
    $region22: #{cnn_forward.6} parent=5 // pred_check_branch
      %174 = sbr.rel (%p172) target = $region24
    $region23: #{cnn_forward.6} parent=5 // pred_region
      // Predicated region
      $region25: #{cnn_forward.6} parent=23 // pred_check
        %p175 = pneg %p50
      $region26: #{cnn_forward.6} parent=23 // pred_check_branch
        %177 = sbr.rel (%p175) target = $region28
      $region27: #{cnn_forward.6} parent=23 // pred_region
        %s178 = smul.u32 32, %s16
        %p179 = scmp.lt.s32.totalorder %s178, 223
        %s180 = scalar_select %p179, %s178, 223
        %p181 = scmp.lt.s32.totalorder %s18, 0
        %s182 = scalar_select %p181, %s18, 0
        %s183 = sadd.s32 %s182, %s180
        %s184 = smul.addr %s183, 8
        %s185 = scalar_lea.vmem %s0, %s184
        %s186 = smul.u32 32, %s16
      $region28: #{cnn_forward.6} parent=23 // pred_fallthru
        _
    $region24: #{cnn_forward.6} parent=5 // pred_fallthru
      _
    %p187 = scmp.le.s32.totalorder 1, %s9
    %p188 = scmp.lt.s32.totalorder %s9, 8
    %p189 = pnand %p187, %p188
    %p190 = pneg %p189
    // Predicated region
    $region29: #{cnn_forward.6} parent=5 // pred_check
      _
    $region30: #{cnn_forward.6} parent=5 // pred_check_branch
      %192 = sbr.rel (%p189) target = $region32
    $region31: #{cnn_forward.6} parent=5 // pred_region
      %s193 = ssub.s32 %s9, 1
      %s194 = smul.u32 32, %s19
      %p195 = scmp.lt.s32.totalorder %s194, 223
      %s196 = scalar_select %p195, %s194, 223
      %p197 = scmp.lt.s32.totalorder %s21, 0
      %s198 = scalar_select %p197, %s21, 0
      %s199 = sadd.s32 %s198, %s196
      %s200 = smul.addr %s199, 8
      %s201 = scalar_lea.vmem %s0, %s200
      %p202 = pneg %p56
      %p203 = pneg %p53
      %s204 = smul.u32 16, %s21
      %p205 = scmp.lt.s32.totalorder %s204, 15
      %s206 = scalar_select %p205, %s204, 15
      %p207 = scmp.lt.s32.totalorder %s20, 0
      %s208 = scalar_select %p207, %s20, 0
      %s209 = sadd.s32 %s208, %s206
      %s210 = smul.addr %s209, 8
      %s211 = scalar_lea.vmem %s1, %s210
      %p212 = pneg %p84
      %p213 = pneg %p81
      %p214 = scmp.lt.s32.totalorder %s20, 0
      %s215 = scalar_select %p214, %s20, 0
      %s216 = scalar_lea.vmem %s2, %s215
      %p217 = pneg %p110
      %p218 = pneg %p107
      %p219 = pneg %p138
      %p220 = pneg %p135
      %s221 = smul.u32 32, %s19
      %p222 = scmp.lt.s32.totalorder %s221, 223
      %s223 = scalar_select %p222, %s221, 223
      %p224 = scmp.lt.s32.totalorder %s20, 0
      %s225 = scalar_select %p224, %s20, 0
      %s226 = sadd.s32 %s225, %s223
      %s227 = smul.addr %s226, 8
      %s228 = scalar_lea.vmem %s3, %s227
      %s229 = smul.u32 32, %s19
      %p230 = scmp.lt.s32.totalorder %s229, 223
      %s231 = scalar_select %p230, %s229, 223
      %p232 = scmp.lt.s32.totalorder %s21, 0
      %s233 = scalar_select %p232, %s21, 0
      %s234 = sadd.s32 %s233, %s231
      %s235 = smul.addr %s234, 8
      %s236 = scalar_lea.vmem %s0, %s235
      %s237 = smul.u32 32, %s19
      %s238 = smul.u32 16, %s21
      %p239 = scmp.lt.s32.totalorder %s238, 15
      %s240 = scalar_select %p239, %s238, 15
      %p241 = scmp.lt.s32.totalorder %s20, 0
      %s242 = scalar_select %p241, %s20, 0
      %s243 = sadd.s32 %s242, %s240
      %s244 = smul.addr %s243, 8
      %s245 = scalar_lea.vmem %s1, %s244
      %s246 = smul.u32 16, %s21
      %p247 = scmp.lt.s32.totalorder %s20, 0
      %s248 = scalar_select %p247, %s20, 0
      %s249 = scalar_lea.vmem %s2, %s248
      %s250 = smul.u32 32, %s19
      %p251 = scmp.lt.s32.totalorder %s250, 223
      %s252 = scalar_select %p251, %s250, 223
      %p253 = scmp.lt.s32.totalorder %s20, 0
      %s254 = scalar_select %p253, %s20, 0
      %s255 = sadd.s32 %s254, %s252
      %s256 = smul.addr %s255, 8
      %s257 = scalar_lea.vmem %s3, %s256
      %s258 = smul.u32 32, %s19
      %p259 = scmp.eq.s32.totalorder %s21, 0
      // Predicated region
      $region33: #{cnn_forward.6} parent=31 // pred_check
        %p260 = pneg %p259
      $region34: #{cnn_forward.6} parent=31 // pred_check_branch
        %262 = sbr.rel (%p260) target = $region36
      $region35: #{cnn_forward.6} parent=31 // pred_region
        %263 = vst [vmem:[#allocation2] sm:$0xff] 0.0
        %264 = vst [vmem:[#allocation2 + $0x8] sm:$0xff] 0.0
        %265 = vst [vmem:[#allocation2 + $0x10] sm:$0xff] 0.0
        %266 = vst [vmem:[#allocation2 + $0x18] sm:$0xff] 0.0
        %267 = vst [vmem:[#allocation2 + $0x20] sm:$0xff] 0.0
        %268 = vst [vmem:[#allocation2 + $0x28] sm:$0xff] 0.0
        %269 = vst [vmem:[#allocation2 + $0x30] sm:$0xff] 0.0
        %270 = vst [vmem:[#allocation2 + $0x38] sm:$0xff] 0.0
        %271 = vst [vmem:[#allocation2 + $0x40] sm:$0xff] 0.0
        %272 = vst [vmem:[#allocation2 + $0x48] sm:$0xff] 0.0
        %273 = vst [vmem:[#allocation2 + $0x50] sm:$0xff] 0.0
        %274 = vst [vmem:[#allocation2 + $0x58] sm:$0xff] 0.0
        %275 = vst [vmem:[#allocation2 + $0x60] sm:$0xff] 0.0
        %276 = vst [vmem:[#allocation2 + $0x68] sm:$0xff] 0.0
        %277 = vst [vmem:[#allocation2 + $0x70] sm:$0xff] 0.0
        %278 = vst [vmem:[#allocation2 + $0x78] sm:$0xff] 0.0
        %279 = vst [vmem:[#allocation2 + $0x80] sm:$0xff] 0.0
        %280 = vst [vmem:[#allocation2 + $0x88] sm:$0xff] 0.0
        %281 = vst [vmem:[#allocation2 + $0x90] sm:$0xff] 0.0
        %282 = vst [vmem:[#allocation2 + $0x98] sm:$0xff] 0.0
        %283 = vst [vmem:[#allocation2 + $0xa0] sm:$0xff] 0.0
        %284 = vst [vmem:[#allocation2 + $0xa8] sm:$0xff] 0.0
        %285 = vst [vmem:[#allocation2 + $0xb0] sm:$0xff] 0.0
        %286 = vst [vmem:[#allocation2 + $0xb8] sm:$0xff] 0.0
        %287 = vst [vmem:[#allocation2 + $0xc0] sm:$0xff] 0.0
        %288 = vst [vmem:[#allocation2 + $0xc8] sm:$0xff] 0.0
        %289 = vst [vmem:[#allocation2 + $0xd0] sm:$0xff] 0.0
        %290 = vst [vmem:[#allocation2 + $0xd8] sm:$0xff] 0.0
        %291 = vst [vmem:[#allocation2 + $0xe0] sm:$0xff] 0.0
        %292 = vst [vmem:[#allocation2 + $0xe8] sm:$0xff] 0.0
        %293 = vst [vmem:[#allocation2 + $0xf0] sm:$0xff] 0.0
        %294 = vst [vmem:[#allocation2 + $0xf8] sm:$0xff] 0.0
      $region36: #{cnn_forward.6} parent=31 // pred_fallthru
        _
      %v295 = vld [vmem:[#allocation2] sm:$0xff]
      %v296 = vld [vmem:[#allocation2 + $0x8] sm:$0xff]
      %v297 = vld [vmem:[#allocation2 + $0x10] sm:$0xff]
      %v298 = vld [vmem:[#allocation2 + $0x18] sm:$0xff]
      %v299 = vld [vmem:[#allocation2 + $0x20] sm:$0xff]
      %v300 = vld [vmem:[#allocation2 + $0x28] sm:$0xff]
      %v301 = vld [vmem:[#allocation2 + $0x30] sm:$0xff]
      %v302 = vld [vmem:[#allocation2 + $0x38] sm:$0xff]
      %v303 = vld [vmem:[#allocation2 + $0x40] sm:$0xff]
      %v304 = vld [vmem:[#allocation2 + $0x48] sm:$0xff]
      %v305 = vld [vmem:[#allocation2 + $0x50] sm:$0xff]
      %v306 = vld [vmem:[#allocation2 + $0x58] sm:$0xff]
      %v307 = vld [vmem:[#allocation2 + $0x60] sm:$0xff]
      %v308 = vld [vmem:[#allocation2 + $0x68] sm:$0xff]
      %v309 = vld [vmem:[#allocation2 + $0x70] sm:$0xff]
      %v310 = vld [vmem:[#allocation2 + $0x78] sm:$0xff]
      %v311 = vld [vmem:[#allocation2 + $0x80] sm:$0xff]
      %v312 = vld [vmem:[#allocation2 + $0x88] sm:$0xff]
      %v313 = vld [vmem:[#allocation2 + $0x90] sm:$0xff]
      %v314 = vld [vmem:[#allocation2 + $0x98] sm:$0xff]
      %v315 = vld [vmem:[#allocation2 + $0xa0] sm:$0xff]
      %v316 = vld [vmem:[#allocation2 + $0xa8] sm:$0xff]
      %v317 = vld [vmem:[#allocation2 + $0xb0] sm:$0xff]
      %v318 = vld [vmem:[#allocation2 + $0xb8] sm:$0xff]
      %v319 = vld [vmem:[#allocation2 + $0xc0] sm:$0xff]
      %v320 = vld [vmem:[#allocation2 + $0xc8] sm:$0xff]
      %v321 = vld [vmem:[#allocation2 + $0xd0] sm:$0xff]
      %v322 = vld [vmem:[#allocation2 + $0xd8] sm:$0xff]
      %v323 = vld [vmem:[#allocation2 + $0xe0] sm:$0xff]
      %v324 = vld [vmem:[#allocation2 + $0xe8] sm:$0xff]
      %v325 = vld [vmem:[#allocation2 + $0xf0] sm:$0xff]
      %v326 = vld [vmem:[#allocation2 + $0xf8] sm:$0xff]
      %v327 = vld [vmem:[%s236] sm:$0xff]
      %v328 = vld [vmem:[%s236 + $0x8] sm:$0xff]
      %v329 = vld [vmem:[%s236 + $0x10] sm:$0xff]
      %v330 = vld [vmem:[%s236 + $0x18] sm:$0xff]
      %v331 = vld [vmem:[%s236 + $0x20] sm:$0xff]
      %v332 = vld [vmem:[%s236 + $0x28] sm:$0xff]
      %v333 = vld [vmem:[%s236 + $0x30] sm:$0xff]
      %v334 = vld [vmem:[%s236 + $0x38] sm:$0xff]
      %v335 = vld [vmem:[%s236 + $0x40] sm:$0xff]
      %v336 = vld [vmem:[%s236 + $0x48] sm:$0xff]
      %v337 = vld [vmem:[%s236 + $0x50] sm:$0xff]
      %v338 = vld [vmem:[%s236 + $0x58] sm:$0xff]
      %v339 = vld [vmem:[%s236 + $0x60] sm:$0xff]
      %v340 = vld [vmem:[%s236 + $0x68] sm:$0xff]
      %v341 = vld [vmem:[%s236 + $0x70] sm:$0xff]
      %v342 = vld [vmem:[%s236 + $0x78] sm:$0xff]
      %v343 = vld [vmem:[%s236 + $0x80] sm:$0xff]
      %v344 = vld [vmem:[%s236 + $0x88] sm:$0xff]
      %v345 = vld [vmem:[%s236 + $0x90] sm:$0xff]
      %v346 = vld [vmem:[%s236 + $0x98] sm:$0xff]
      %v347 = vld [vmem:[%s236 + $0xa0] sm:$0xff]
      %v348 = vld [vmem:[%s236 + $0xa8] sm:$0xff]
      %v349 = vld [vmem:[%s236 + $0xb0] sm:$0xff]
      %v350 = vld [vmem:[%s236 + $0xb8] sm:$0xff]
      %v351 = vld [vmem:[%s236 + $0xc0] sm:$0xff]
      %v352 = vld [vmem:[%s236 + $0xc8] sm:$0xff]
      %v353 = vld [vmem:[%s236 + $0xd0] sm:$0xff]
      %v354 = vld [vmem:[%s236 + $0xd8] sm:$0xff]
      %v355 = vld [vmem:[%s236 + $0xe0] sm:$0xff]
      %v356 = vld [vmem:[%s236 + $0xe8] sm:$0xff]
      %v357 = vld [vmem:[%s236 + $0xf0] sm:$0xff]
      %v358 = vld [vmem:[%s236 + $0xf8] sm:$0xff]
      %v359 = vld [vmem:[%s245] sm:$0xff]
      %v360 = vld [vmem:[%s245 + $0x8] sm:$0xff]
      %v361 = vld [vmem:[%s245 + $0x10] sm:$0xff]
      %v362 = vld [vmem:[%s245 + $0x18] sm:$0xff]
      %v363 = vld [vmem:[%s245 + $0x20] sm:$0xff]
      %v364 = vld [vmem:[%s245 + $0x28] sm:$0xff]
      %v365 = vld [vmem:[%s245 + $0x30] sm:$0xff]
      %v366 = vld [vmem:[%s245 + $0x38] sm:$0xff]
      %v367 = vld [vmem:[%s245 + $0x40] sm:$0xff]
      %v368 = vld [vmem:[%s245 + $0x48] sm:$0xff]
      %v369 = vld [vmem:[%s245 + $0x50] sm:$0xff]
      %v370 = vld [vmem:[%s245 + $0x58] sm:$0xff]
      %v371 = vld [vmem:[%s245 + $0x60] sm:$0xff]
      %v372 = vld [vmem:[%s245 + $0x68] sm:$0xff]
      %v373 = vld [vmem:[%s245 + $0x70] sm:$0xff]
      %v374 = vld [vmem:[%s245 + $0x78] sm:$0xff]
      %375 = vmatprep.subr.mxu0 0.0
      %376 = vmatpush1.msra.mxu0 %v359
      %377 = vmatprep.subr.mxu0 0.0
      %378 = vmatpush1.msra.mxu0 %v360
      %379 = vmatprep.subr.mxu0 0.0
      %380 = vmatpush1.msra.mxu0 %v361
      %381 = vmatprep.subr.mxu0 0.0
      %382 = vmatpush1.msra.mxu0 %v362
      %383 = vmatprep.subr.mxu0 0.0
      %384 = vmatpush1.msra.mxu0 %v363
      %385 = vmatprep.subr.mxu0 0.0
      %386 = vmatpush1.msra.mxu0 %v364
      %387 = vmatprep.subr.mxu0 0.0
      %388 = vmatpush1.msra.mxu0 %v365
      %389 = vmatprep.subr.mxu0 0.0
      %390 = vmatpush1.msra.mxu0 %v366
      %391 = vmatprep.subr.mxu0 0.0
      %392 = vmatpush1.msra.mxu0 %v367
      %393 = vmatprep.subr.mxu0 0.0
      %394 = vmatpush1.msra.mxu0 %v368
      %395 = vmatprep.subr.mxu0 0.0
      %396 = vmatpush1.msra.mxu0 %v369
      %397 = vmatprep.subr.mxu0 0.0
      %398 = vmatpush1.msra.mxu0 %v370
      %399 = vmatprep.subr.mxu0 0.0
      %400 = vmatpush1.msra.mxu0 %v371
      %401 = vmatprep.subr.mxu0 0.0
      %402 = vmatpush1.msra.mxu0 %v372
      %403 = vmatprep.subr.mxu0 0.0
      %404 = vmatpush1.msra.mxu0 %v373
      %405 = vmatprep.subr.mxu0 0.0
      %406 = vmatpush1.msra.mxu0 %v374
      %407 = vmatprep.subr.mxu0 0.0
      %408 = vmatpush1.msra.mxu0 0.0
      %409 = vmatprep.subr.mxu0 0.0
      %410 = vmatpush1.msra.mxu0 0.0
      %411 = vmatprep.subr.mxu0 0.0
      %412 = vmatpush1.msra.mxu0 0.0
      %413 = vmatprep.subr.mxu0 0.0
      %414 = vmatpush1.msra.mxu0 0.0
      %415 = vmatprep.subr.mxu0 0.0
      %416 = vmatpush1.msra.mxu0 0.0
      %417 = vmatprep.subr.mxu0 0.0
      %418 = vmatpush1.msra.mxu0 0.0
      %419 = vmatprep.subr.mxu0 0.0
      %420 = vmatpush1.msra.mxu0 0.0
      %421 = vmatprep.subr.mxu0 0.0
      %422 = vmatpush1.msra.mxu0 0.0
      %423 = vmatprep.subr.mxu0 0.0
      %424 = vmatpush1.msra.mxu0 0.0
      %425 = vmatprep.subr.mxu0 0.0
      %426 = vmatpush1.msra.mxu0 0.0
      %427 = vmatprep.subr.mxu0 0.0
      %428 = vmatpush1.msra.mxu0 0.0
      %429 = vmatprep.subr.mxu0 0.0
      %430 = vmatpush1.msra.mxu0 0.0
      %431 = vmatprep.subr.mxu0 0.0
      %432 = vmatpush1.msra.mxu0 0.0
      %433 = vmatprep.subr.mxu0 0.0
      %434 = vmatpush1.msra.mxu0 0.0
      %435 = vmatprep.subr.mxu0 0.0
      %436 = vmatpush1.msra.mxu0 0.0
      %437 = vmatprep.subr.mxu0 0.0
      %438 = vmatpush1.msra.mxu0 0.0
      %439 = vmatprep.mubr.f32.mxu0 0.0
      %440 = vmatmul.mubr.f32.gmra.mrb[0].mxu0 %v327
      %v441 = vpop.f32.mrb[0].mxu0
      %v442 = vadd.f32 0.0, %v441
      %v443 = vpop.f32.mrb[0].mxu0
      %444 = vmatprep.mubr.f32.mxu0 0.0
      %445 = vmatmul.mubr.f32.gmra.mrb[0].mxu0 %v328
      %v446 = vpop.f32.mrb[0].mxu0
      %v447 = vadd.f32 0.0, %v446
      %v448 = vpop.f32.mrb[0].mxu0
      %449 = vmatprep.mubr.f32.mxu0 0.0
      %450 = vmatmul.mubr.f32.gmra.mrb[0].mxu0 %v329
      %v451 = vpop.f32.mrb[0].mxu0
      %v452 = vadd.f32 0.0, %v451
      %v453 = vpop.f32.mrb[0].mxu0
      %454 = vmatprep.mubr.f32.mxu0 0.0
      %455 = vmatmul.mubr.f32.gmra.mrb[0].mxu0 %v330
      %v456 = vpop.f32.mrb[0].mxu0
      %v457 = vadd.f32 0.0, %v456
      %v458 = vpop.f32.mrb[0].mxu0
      %459 = vmatprep.mubr.f32.mxu0 0.0
      %460 = vmatmul.mubr.f32.gmra.mrb[0].mxu0 %v331
      %v461 = vpop.f32.mrb[0].mxu0
      %v462 = vadd.f32 0.0, %v461
      %v463 = vpop.f32.mrb[0].mxu0
      %464 = vmatprep.mubr.f32.mxu0 0.0
      %465 = vmatmul.mubr.f32.gmra.mrb[0].mxu0 %v332
      %v466 = vpop.f32.mrb[0].mxu0
      %v467 = vadd.f32 0.0, %v466
      %v468 = vpop.f32.mrb[0].mxu0
      %469 = vmatprep.mubr.f32.mxu0 0.0
      %470 = vmatmul.mubr.f32.gmra.mrb[0].mxu0 %v333
      %v471 = vpop.f32.mrb[0].mxu0
      %v472 = vadd.f32 0.0, %v471
      %v473 = vpop.f32.mrb[0].mxu0
      %474 = vmatprep.mubr.f32.mxu0 0.0
      %475 = vmatmul.mubr.f32.gmra.mrb[0].mxu0 %v334
      %v476 = vpop.f32.mrb[0].mxu0
      %v477 = vadd.f32 0.0, %v476
      %v478 = vpop.f32.mrb[0].mxu0
      %479 = vmatprep.mubr.f32.mxu0 0.0
      %480 = vmatmul.mubr.f32.gmra.mrb[0].mxu0 %v335
      %v481 = vpop.f32.mrb[0].mxu0
      %v482 = vadd.f32 0.0, %v481
      %v483 = vpop.f32.mrb[0].mxu0
      %484 = vmatprep.mubr.f32.mxu0 0.0
      %485 = vmatmul.mubr.f32.gmra.mrb[0].mxu0 %v336
      %v486 = vpop.f32.mrb[0].mxu0
      %v487 = vadd.f32 0.0, %v486
      %v488 = vpop.f32.mrb[0].mxu0
      %489 = vmatprep.mubr.f32.mxu0 0.0
      %490 = vmatmul.mubr.f32.gmra.mrb[0].mxu0 %v337
      %v491 = vpop.f32.mrb[0].mxu0
      %v492 = vadd.f32 0.0, %v491
      %v493 = vpop.f32.mrb[0].mxu0
      %494 = vmatprep.mubr.f32.mxu0 0.0
      %495 = vmatmul.mubr.f32.gmra.mrb[0].mxu0 %v338
      %v496 = vpop.f32.mrb[0].mxu0
      %v497 = vadd.f32 0.0, %v496
      %v498 = vpop.f32.mrb[0].mxu0
      %499 = vmatprep.mubr.f32.mxu0 0.0
      %500 = vmatmul.mubr.f32.gmra.mrb[0].mxu0 %v339
      %v501 = vpop.f32.mrb[0].mxu0
      %v502 = vadd.f32 0.0, %v501
      %v503 = vpop.f32.mrb[0].mxu0
      %504 = vmatprep.mubr.f32.mxu0 0.0
      %505 = vmatmul.mubr.f32.gmra.mrb[0].mxu0 %v340
      %v506 = vpop.f32.mrb[0].mxu0
      %v507 = vadd.f32 0.0, %v506
      %v508 = vpop.f32.mrb[0].mxu0
      %509 = vmatprep.mubr.f32.mxu0 0.0
      %510 = vmatmul.mubr.f32.gmra.mrb[0].mxu0 %v341
      %v511 = vpop.f32.mrb[0].mxu0
      %v512 = vadd.f32 0.0, %v511
      %v513 = vpop.f32.mrb[0].mxu0
      %514 = vmatprep.mubr.f32.mxu0 0.0
      %515 = vmatmul.mubr.f32.gmra.mrb[0].mxu0 %v342
      %v516 = vpop.f32.mrb[0].mxu0
      %v517 = vadd.f32 0.0, %v516
      %v518 = vpop.f32.mrb[0].mxu0
      %519 = vmatprep.mubr.f32.mxu0 0.0
      %520 = vmatmul.mubr.f32.gmra.mrb[0].mxu0 %v343
      %v521 = vpop.f32.mrb[0].mxu0
      %v522 = vadd.f32 0.0, %v521
      %v523 = vpop.f32.mrb[0].mxu0
      %524 = vmatprep.mubr.f32.mxu0 0.0
      %525 = vmatmul.mubr.f32.gmra.mrb[0].mxu0 %v344
      %v526 = vpop.f32.mrb[0].mxu0
      %v527 = vadd.f32 0.0, %v526
      %v528 = vpop.f32.mrb[0].mxu0
      %529 = vmatprep.mubr.f32.mxu0 0.0
      %530 = vmatmul.mubr.f32.gmra.mrb[0].mxu0 %v345
      %v531 = vpop.f32.mrb[0].mxu0
      %v532 = vadd.f32 0.0, %v531
      %v533 = vpop.f32.mrb[0].mxu0
      %534 = vmatprep.mubr.f32.mxu0 0.0
      %535 = vmatmul.mubr.f32.gmra.mrb[0].mxu0 %v346
      %v536 = vpop.f32.mrb[0].mxu0
      %v537 = vadd.f32 0.0, %v536
      %v538 = vpop.f32.mrb[0].mxu0
      %539 = vmatprep.mubr.f32.mxu0 0.0
      %540 = vmatmul.mubr.f32.gmra.mrb[0].mxu0 %v347
      %v541 = vpop.f32.mrb[0].mxu0
      %v542 = vadd.f32 0.0, %v541
      %v543 = vpop.f32.mrb[0].mxu0
      %544 = vmatprep.mubr.f32.mxu0 0.0
      %545 = vmatmul.mubr.f32.gmra.mrb[0].mxu0 %v348
      %v546 = vpop.f32.mrb[0].mxu0
      %v547 = vadd.f32 0.0, %v546
      %v548 = vpop.f32.mrb[0].mxu0
      %549 = vmatprep.mubr.f32.mxu0 0.0
      %550 = vmatmul.mubr.f32.gmra.mrb[0].mxu0 %v349
      %v551 = vpop.f32.mrb[0].mxu0
      %v552 = vadd.f32 0.0, %v551
      %v553 = vpop.f32.mrb[0].mxu0
      %554 = vmatprep.mubr.f32.mxu0 0.0
      %555 = vmatmul.mubr.f32.gmra.mrb[0].mxu0 %v350
      %v556 = vpop.f32.mrb[0].mxu0
      %v557 = vadd.f32 0.0, %v556
      %v558 = vpop.f32.mrb[0].mxu0
      %559 = vmatprep.mubr.f32.mxu0 0.0
      %560 = vmatmul.mubr.f32.gmra.mrb[0].mxu0 %v351
      %v561 = vpop.f32.mrb[0].mxu0
      %v562 = vadd.f32 0.0, %v561
      %v563 = vpop.f32.mrb[0].mxu0
      %564 = vmatprep.mubr.f32.mxu0 0.0
      %565 = vmatmul.mubr.f32.gmra.mrb[0].mxu0 %v352
      %v566 = vpop.f32.mrb[0].mxu0
      %v567 = vadd.f32 0.0, %v566
      %v568 = vpop.f32.mrb[0].mxu0
      %569 = vmatprep.mubr.f32.mxu0 0.0
      %570 = vmatmul.mubr.f32.gmra.mrb[0].mxu0 %v353
      %v571 = vpop.f32.mrb[0].mxu0
      %v572 = vadd.f32 0.0, %v571
      %v573 = vpop.f32.mrb[0].mxu0
      %574 = vmatprep.mubr.f32.mxu0 0.0
      %575 = vmatmul.mubr.f32.gmra.mrb[0].mxu0 %v354
      %v576 = vpop.f32.mrb[0].mxu0
      %v577 = vadd.f32 0.0, %v576
      %v578 = vpop.f32.mrb[0].mxu0
      %579 = vmatprep.mubr.f32.mxu0 0.0
      %580 = vmatmul.mubr.f32.gmra.mrb[0].mxu0 %v355
      %v581 = vpop.f32.mrb[0].mxu0
      %v582 = vadd.f32 0.0, %v581
      %v583 = vpop.f32.mrb[0].mxu0
      %584 = vmatprep.mubr.f32.mxu0 0.0
      %585 = vmatmul.mubr.f32.gmra.mrb[0].mxu0 %v356
      %v586 = vpop.f32.mrb[0].mxu0
      %v587 = vadd.f32 0.0, %v586
      %v588 = vpop.f32.mrb[0].mxu0
      %589 = vmatprep.mubr.f32.mxu0 0.0
      %590 = vmatmul.mubr.f32.gmra.mrb[0].mxu0 %v357
      %v591 = vpop.f32.mrb[0].mxu0
      %v592 = vadd.f32 0.0, %v591
      %v593 = vpop.f32.mrb[0].mxu0
      %594 = vmatprep.mubr.f32.mxu0 0.0
      %595 = vmatmul.mubr.f32.gmra.mrb[0].mxu0 %v358
      %v596 = vpop.f32.mrb[0].mxu0
      %v597 = vadd.f32 0.0, %v596
      %v598 = vpop.f32.mrb[0].mxu0
      %599 = vdwg.mxu0
      %v600 = vadd.f32 %v295, %v442
      %v601 = vadd.f32 %v296, %v447
      %v602 = vadd.f32 %v297, %v452
      %v603 = vadd.f32 %v298, %v457
      %v604 = vadd.f32 %v299, %v462
      %v605 = vadd.f32 %v300, %v467
      %v606 = vadd.f32 %v301, %v472
      %v607 = vadd.f32 %v302, %v477
      %v608 = vadd.f32 %v303, %v482
      %v609 = vadd.f32 %v304, %v487
      %v610 = vadd.f32 %v305, %v492
      %v611 = vadd.f32 %v306, %v497
      %v612 = vadd.f32 %v307, %v502
      %v613 = vadd.f32 %v308, %v507
      %v614 = vadd.f32 %v309, %v512
      %v615 = vadd.f32 %v310, %v517
      %v616 = vadd.f32 %v311, %v522
      %v617 = vadd.f32 %v312, %v527
      %v618 = vadd.f32 %v313, %v532
      %v619 = vadd.f32 %v314, %v537
      %v620 = vadd.f32 %v315, %v542
      %v621 = vadd.f32 %v316, %v547
      %v622 = vadd.f32 %v317, %v552
      %v623 = vadd.f32 %v318, %v557
      %v624 = vadd.f32 %v319, %v562
      %v625 = vadd.f32 %v320, %v567
      %v626 = vadd.f32 %v321, %v572
      %v627 = vadd.f32 %v322, %v577
      %v628 = vadd.f32 %v323, %v582
      %v629 = vadd.f32 %v324, %v587
      %v630 = vadd.f32 %v325, %v592
      %v631 = vadd.f32 %v326, %v597
      %632 = vst [vmem:[#allocation2] sm:$0xff] %v600
      %633 = vst [vmem:[#allocation2 + $0x8] sm:$0xff] %v601
      %634 = vst [vmem:[#allocation2 + $0x10] sm:$0xff] %v602
      %635 = vst [vmem:[#allocation2 + $0x18] sm:$0xff] %v603
      %636 = vst [vmem:[#allocation2 + $0x20] sm:$0xff] %v604
      %637 = vst [vmem:[#allocation2 + $0x28] sm:$0xff] %v605
      %638 = vst [vmem:[#allocation2 + $0x30] sm:$0xff] %v606
      %639 = vst [vmem:[#allocation2 + $0x38] sm:$0xff] %v607
      %640 = vst [vmem:[#allocation2 + $0x40] sm:$0xff] %v608
      %641 = vst [vmem:[#allocation2 + $0x48] sm:$0xff] %v609
      %642 = vst [vmem:[#allocation2 + $0x50] sm:$0xff] %v610
      %643 = vst [vmem:[#allocation2 + $0x58] sm:$0xff] %v611
      %644 = vst [vmem:[#allocation2 + $0x60] sm:$0xff] %v612
      %645 = vst [vmem:[#allocation2 + $0x68] sm:$0xff] %v613
      %646 = vst [vmem:[#allocation2 + $0x70] sm:$0xff] %v614
      %647 = vst [vmem:[#allocation2 + $0x78] sm:$0xff] %v615
      %648 = vst [vmem:[#allocation2 + $0x80] sm:$0xff] %v616
      %649 = vst [vmem:[#allocation2 + $0x88] sm:$0xff] %v617
      %650 = vst [vmem:[#allocation2 + $0x90] sm:$0xff] %v618
      %651 = vst [vmem:[#allocation2 + $0x98] sm:$0xff] %v619
      %652 = vst [vmem:[#allocation2 + $0xa0] sm:$0xff] %v620
      %653 = vst [vmem:[#allocation2 + $0xa8] sm:$0xff] %v621
      %654 = vst [vmem:[#allocation2 + $0xb0] sm:$0xff] %v622
      %655 = vst [vmem:[#allocation2 + $0xb8] sm:$0xff] %v623
      %656 = vst [vmem:[#allocation2 + $0xc0] sm:$0xff] %v624
      %657 = vst [vmem:[#allocation2 + $0xc8] sm:$0xff] %v625
      %658 = vst [vmem:[#allocation2 + $0xd0] sm:$0xff] %v626
      %659 = vst [vmem:[#allocation2 + $0xd8] sm:$0xff] %v627
      %660 = vst [vmem:[#allocation2 + $0xe0] sm:$0xff] %v628
      %661 = vst [vmem:[#allocation2 + $0xe8] sm:$0xff] %v629
      %662 = vst [vmem:[#allocation2 + $0xf0] sm:$0xff] %v630
      %663 = vst [vmem:[#allocation2 + $0xf8] sm:$0xff] %v631
      // Predicated region
      $region37: #{cnn_forward.6} parent=31 // pred_check
        %p664 = pneg %p259
      $region38: #{cnn_forward.6} parent=31 // pred_check_branch
        %666 = sbr.rel (%p664) target = $region40
      $region39: #{cnn_forward.6} parent=31 // pred_region
        %v667 = vld [vmem:[#allocation2] sm:$0xff]
        %v668 = vld [vmem:[#allocation2 + $0x8] sm:$0xff]
        %v669 = vld [vmem:[#allocation2 + $0x10] sm:$0xff]
        %v670 = vld [vmem:[#allocation2 + $0x18] sm:$0xff]
        %v671 = vld [vmem:[#allocation2 + $0x20] sm:$0xff]
        %v672 = vld [vmem:[#allocation2 + $0x28] sm:$0xff]
        %v673 = vld [vmem:[#allocation2 + $0x30] sm:$0xff]
        %v674 = vld [vmem:[#allocation2 + $0x38] sm:$0xff]
        %v675 = vld [vmem:[#allocation2 + $0x40] sm:$0xff]
        %v676 = vld [vmem:[#allocation2 + $0x48] sm:$0xff]
        %v677 = vld [vmem:[#allocation2 + $0x50] sm:$0xff]
        %v678 = vld [vmem:[#allocation2 + $0x58] sm:$0xff]
        %v679 = vld [vmem:[#allocation2 + $0x60] sm:$0xff]
        %v680 = vld [vmem:[#allocation2 + $0x68] sm:$0xff]
        %v681 = vld [vmem:[#allocation2 + $0x70] sm:$0xff]
        %v682 = vld [vmem:[#allocation2 + $0x78] sm:$0xff]
        %v683 = vld [vmem:[#allocation2 + $0x80] sm:$0xff]
        %v684 = vld [vmem:[#allocation2 + $0x88] sm:$0xff]
        %v685 = vld [vmem:[#allocation2 + $0x90] sm:$0xff]
        %v686 = vld [vmem:[#allocation2 + $0x98] sm:$0xff]
        %v687 = vld [vmem:[#allocation2 + $0xa0] sm:$0xff]
        %v688 = vld [vmem:[#allocation2 + $0xa8] sm:$0xff]
        %v689 = vld [vmem:[#allocation2 + $0xb0] sm:$0xff]
        %v690 = vld [vmem:[#allocation2 + $0xb8] sm:$0xff]
        %v691 = vld [vmem:[#allocation2 + $0xc0] sm:$0xff]
        %v692 = vld [vmem:[#allocation2 + $0xc8] sm:$0xff]
        %v693 = vld [vmem:[#allocation2 + $0xd0] sm:$0xff]
        %v694 = vld [vmem:[#allocation2 + $0xd8] sm:$0xff]
        %v695 = vld [vmem:[#allocation2 + $0xe0] sm:$0xff]
        %v696 = vld [vmem:[#allocation2 + $0xe8] sm:$0xff]
        %v697 = vld [vmem:[#allocation2 + $0xf0] sm:$0xff]
        %v698 = vld [vmem:[#allocation2 + $0xf8] sm:$0xff]
        %v699 = vld [vmem:[%s249] sm:$0x1]
        %v701 = vlaneseq
        %v702 = vshrl.u32 %v701, 7
        %v703 = vsub.s32 0, %v702
        %v704 = vrot.slane %v699, %v703
        %v706 = vadd.f32 %v667, %v704
        %v707 = vadd.f32 %v668, %v704
        %v708 = vadd.f32 %v669, %v704
        %v709 = vadd.f32 %v670, %v704
        %v710 = vadd.f32 %v671, %v704
        %v711 = vadd.f32 %v672, %v704
        %v712 = vadd.f32 %v673, %v704
        %v713 = vadd.f32 %v674, %v704
        %v714 = vadd.f32 %v675, %v704
        %v715 = vadd.f32 %v676, %v704
        %v716 = vadd.f32 %v677, %v704
        %v717 = vadd.f32 %v678, %v704
        %v718 = vadd.f32 %v679, %v704
        %v719 = vadd.f32 %v680, %v704
        %v720 = vadd.f32 %v681, %v704
        %v721 = vadd.f32 %v682, %v704
        %v722 = vadd.f32 %v683, %v704
        %v723 = vadd.f32 %v684, %v704
        %v724 = vadd.f32 %v685, %v704
        %v725 = vadd.f32 %v686, %v704
        %v726 = vadd.f32 %v687, %v704
        %v727 = vadd.f32 %v688, %v704
        %v728 = vadd.f32 %v689, %v704
        %v729 = vadd.f32 %v690, %v704
        %v730 = vadd.f32 %v691, %v704
        %v731 = vadd.f32 %v692, %v704
        %v732 = vadd.f32 %v693, %v704
        %v733 = vadd.f32 %v694, %v704
        %v734 = vadd.f32 %v695, %v704
        %v735 = vadd.f32 %v696, %v704
        %v736 = vadd.f32 %v697, %v704
        %v737 = vadd.f32 %v698, %v704
        %v738 = vmax.f32 %v706, 0.0
        %v739 = vmax.f32 %v707, 0.0
        %v740 = vmax.f32 %v708, 0.0
        %v741 = vmax.f32 %v709, 0.0
        %v742 = vmax.f32 %v710, 0.0
        %v743 = vmax.f32 %v711, 0.0
        %v744 = vmax.f32 %v712, 0.0
        %v745 = vmax.f32 %v713, 0.0
        %v746 = vmax.f32 %v714, 0.0
        %v747 = vmax.f32 %v715, 0.0
        %v748 = vmax.f32 %v716, 0.0
        %v749 = vmax.f32 %v717, 0.0
        %v750 = vmax.f32 %v718, 0.0
        %v751 = vmax.f32 %v719, 0.0
        %v752 = vmax.f32 %v720, 0.0
        %v753 = vmax.f32 %v721, 0.0
        %v754 = vmax.f32 %v722, 0.0
        %v755 = vmax.f32 %v723, 0.0
        %v756 = vmax.f32 %v724, 0.0
        %v757 = vmax.f32 %v725, 0.0
        %v758 = vmax.f32 %v726, 0.0
        %v759 = vmax.f32 %v727, 0.0
        %v760 = vmax.f32 %v728, 0.0
        %v761 = vmax.f32 %v729, 0.0
        %v762 = vmax.f32 %v730, 0.0
        %v763 = vmax.f32 %v731, 0.0
        %v764 = vmax.f32 %v732, 0.0
        %v765 = vmax.f32 %v733, 0.0
        %v766 = vmax.f32 %v734, 0.0
        %v767 = vmax.f32 %v735, 0.0
        %v768 = vmax.f32 %v736, 0.0
        %v769 = vmax.f32 %v737, 0.0
        %770 = vst [vmem:[%s257] sm:$0xff] %v738
        %771 = vst [vmem:[%s257 + $0x8] sm:$0xff] %v739
        %772 = vst [vmem:[%s257 + $0x10] sm:$0xff] %v740
        %773 = vst [vmem:[%s257 + $0x18] sm:$0xff] %v741
        %774 = vst [vmem:[%s257 + $0x20] sm:$0xff] %v742
        %775 = vst [vmem:[%s257 + $0x28] sm:$0xff] %v743
        %776 = vst [vmem:[%s257 + $0x30] sm:$0xff] %v744
        %777 = vst [vmem:[%s257 + $0x38] sm:$0xff] %v745
        %778 = vst [vmem:[%s257 + $0x40] sm:$0xff] %v746
        %779 = vst [vmem:[%s257 + $0x48] sm:$0xff] %v747
        %780 = vst [vmem:[%s257 + $0x50] sm:$0xff] %v748
        %781 = vst [vmem:[%s257 + $0x58] sm:$0xff] %v749
        %782 = vst [vmem:[%s257 + $0x60] sm:$0xff] %v750
        %783 = vst [vmem:[%s257 + $0x68] sm:$0xff] %v751
        %784 = vst [vmem:[%s257 + $0x70] sm:$0xff] %v752
        %785 = vst [vmem:[%s257 + $0x78] sm:$0xff] %v753
        %786 = vst [vmem:[%s257 + $0x80] sm:$0xff] %v754
        %787 = vst [vmem:[%s257 + $0x88] sm:$0xff] %v755
        %788 = vst [vmem:[%s257 + $0x90] sm:$0xff] %v756
        %789 = vst [vmem:[%s257 + $0x98] sm:$0xff] %v757
        %790 = vst [vmem:[%s257 + $0xa0] sm:$0xff] %v758
        %791 = vst [vmem:[%s257 + $0xa8] sm:$0xff] %v759
        %792 = vst [vmem:[%s257 + $0xb0] sm:$0xff] %v760
        %793 = vst [vmem:[%s257 + $0xb8] sm:$0xff] %v761
        %794 = vst [vmem:[%s257 + $0xc0] sm:$0xff] %v762
        %795 = vst [vmem:[%s257 + $0xc8] sm:$0xff] %v763
        %796 = vst [vmem:[%s257 + $0xd0] sm:$0xff] %v764
        %797 = vst [vmem:[%s257 + $0xd8] sm:$0xff] %v765
        %798 = vst [vmem:[%s257 + $0xe0] sm:$0xff] %v766
        %799 = vst [vmem:[%s257 + $0xe8] sm:$0xff] %v767
        %800 = vst [vmem:[%s257 + $0xf0] sm:$0xff] %v768
        %801 = vst [vmem:[%s257 + $0xf8] sm:$0xff] %v769
      $region40: #{cnn_forward.6} parent=31 // pred_fallthru
        _
      %s802 = smul.u32 32, %s19
      %p803 = scmp.lt.s32.totalorder %s802, 223
      %s804 = scalar_select %p803, %s802, 223
      %p805 = scmp.lt.s32.totalorder %s20, 0
      %s806 = scalar_select %p805, %s20, 0
      %s807 = sadd.s32 %s806, %s804
      %s808 = smul.addr %s807, 8
      %s809 = scalar_lea.vmem %s3, %s808
      // Predicated region
      $region41: #{cnn_forward.6} parent=31 // pred_check
        %p810 = pneg %p135
      $region42: #{cnn_forward.6} parent=31 // pred_check_branch
        %812 = sbr.rel (%p810) target = $region44
      $region43: #{cnn_forward.6} parent=31 // pred_region
        %s813 = smul.u32 32, %s19
      $region44: #{cnn_forward.6} parent=31 // pred_fallthru
        _
    $region32: #{cnn_forward.6} parent=5 // pred_fallthru
      _
    %p814 = scmp.le.s32.totalorder 2, %s9
    // Predicated region
    $region45: #{cnn_forward.6} parent=5 // pred_check
      %p815 = pneg %p814
    $region46: #{cnn_forward.6} parent=5 // pred_check_branch
      %817 = sbr.rel (%p815) target = $region48
    $region47: #{cnn_forward.6} parent=5 // pred_region
      %s818 = ssub.s32 %s9, 2
      // Predicated region
      $region49: #{cnn_forward.6} parent=47 // pred_check
        %p819 = pneg %p141
      $region50: #{cnn_forward.6} parent=47 // pred_check_branch
        %821 = sbr.rel (%p819) target = $region52
      $region51: #{cnn_forward.6} parent=47 // pred_region
        %s822 = smul.u32 32, %s22
        %p823 = scmp.lt.s32.totalorder %s822, 223
        %s824 = scalar_select %p823, %s822, 223
        %p825 = scmp.lt.s32.totalorder %s23, 0
        %s826 = scalar_select %p825, %s23, 0
        %s827 = sadd.s32 %s826, %s824
        %s828 = smul.addr %s827, 8
        %s829 = scalar_lea.vmem %s3, %s828
      $region52: #{cnn_forward.6} parent=47 // pred_fallthru
        _
    $region48: #{cnn_forward.6} parent=5 // pred_fallthru
      _
  $region6: #{cnn_forward.6} parent=0 // loop_footer
    %s13 = sadd.s32 1, %s9
  $region7: #{cnn_forward.6} parent=0 // loop_footer_branch
    %8 = sbr.rel target = $region3
  $region8: #{cnn_forward.6} parent=0 // loop_exit
    _

// kernel: cnn_forward.7
$region0: #{cnn_forward.7}
  #allocation0 [shape = 'u32[]', space=smem, size = 0x4, offset = 0x4, fixed_abs, tag = 'smem constant byte address 0x4 - core index']
  #allocation1 [shape = 'u32[144,128]{1,0:T(1,128)}', space=vmem, size = 0x12000, scoped, tag = 'internal scratch']
  %s0 = inlined_call_operand.vmem [shape: f32[392,128], index: 0, kind: input, shape index: {}]
  %s1 = inlined_call_operand.vmem [shape: f32[392,128], index: 1, kind: input, shape index: {}]
  %s2 = inlined_call_operand.vmem [shape: f32[392,128], index: 2, kind: input, shape index: {}]
  %s3 = inlined_call_operand.vmem [shape: f32[392,128], index: 3, kind: input, shape index: {}]
  %s4 = inlined_call_operand.vmem [shape: f32[392,128], index: 4, kind: output, shape index: {}]
  %s5 = sld [smem:[#allocation0]]
  $region26: #{cnn_forward.7} parent=0
    _
  %s7 = ssub.s32 1, %s5
  %s8 = scalar_select 0, %s7, %s5
  // Predicated region
  $region2: #{cnn_forward.7} parent=0 // pred_check
    _
  $region3: #{cnn_forward.7} parent=0 // pred_check_branch
    %10 = sbr.rel (0) target = $region5
  $region4: #{cnn_forward.7} parent=0 // pred_region
    _
  $region5: #{cnn_forward.7} parent=0 // pred_fallthru
    _
  // Predicated region
  $region6: #{cnn_forward.7} parent=0 // pred_check
    _
  $region7: #{cnn_forward.7} parent=0 // pred_check_branch
    %12 = sbr.rel (0) target = $region9
  $region8: #{cnn_forward.7} parent=0 // pred_region
    _
  $region9: #{cnn_forward.7} parent=0 // pred_fallthru
    _
  // Predicated region
  $region10: #{cnn_forward.7} parent=0 // pred_check
    _
  $region11: #{cnn_forward.7} parent=0 // pred_check_branch
    %14 = sbr.rel (0) target = $region13
  $region12: #{cnn_forward.7} parent=0 // pred_region
    _
  $region13: #{cnn_forward.7} parent=0 // pred_fallthru
    _
  // Predicated region
  $region14: #{cnn_forward.7} parent=0 // pred_check
    _
  $region15: #{cnn_forward.7} parent=0 // pred_check_branch
    %16 = sbr.rel (0) target = $region17
  $region16: #{cnn_forward.7} parent=0 // pred_region
    _
  $region17: #{cnn_forward.7} parent=0 // pred_fallthru
    _
  %v17 = vld [vmem:[%s0] sm:$0xff]
  %v18 = vld [vmem:[%s0 + $0x8] sm:$0xff]
  %v19 = vld [vmem:[%s0 + $0x10] sm:$0xff]
  %v20 = vld [vmem:[%s0 + $0x18] sm:$0xff]
  %v21 = vld [vmem:[%s0 + $0x20] sm:$0xff]
  %v22 = vld [vmem:[%s0 + $0x28] sm:$0xff]
  %v23 = vld [vmem:[%s0 + $0x30] sm:$0xff]
  %v24 = vld [vmem:[%s0 + $0x38] sm:$0xff]
  %v25 = vld [vmem:[%s0 + $0x40] sm:$0xff]
  %v26 = vld [vmem:[%s0 + $0x48] sm:$0xff]
  %v27 = vld [vmem:[%s0 + $0x50] sm:$0xff]
  %v28 = vld [vmem:[%s0 + $0x58] sm:$0xff]
  %v29 = vld [vmem:[%s0 + $0x60] sm:$0xff]
  %v30 = vld [vmem:[%s0 + $0x68] sm:$0xff]
  %v31 = vld [vmem:[%s0 + $0x70] sm:$0xff]
  %v32 = vld [vmem:[%s0 + $0x78] sm:$0xff]
  %v33 = vld [vmem:[%s0 + $0x80] sm:$0xff]
  %v34 = vld [vmem:[%s0 + $0x88] sm:$0xff]
  %v35 = vld [vmem:[%s0 + $0x90] sm:$0xff]
  %v36 = vld [vmem:[%s0 + $0x98] sm:$0xff]
  %v37 = vld [vmem:[%s0 + $0xa0] sm:$0xff]
  %v38 = vld [vmem:[%s0 + $0xa8] sm:$0xff]
  %v39 = vld [vmem:[%s0 + $0xb0] sm:$0xff]
  %v40 = vld [vmem:[%s0 + $0xb8] sm:$0xff]
  %v41 = vld [vmem:[%s0 + $0xc0] sm:$0xff]
  %v42 = vld [vmem:[%s0 + $0xc8] sm:$0xff]
  %v43 = vld [vmem:[%s0 + $0xd0] sm:$0xff]
  %v44 = vld [vmem:[%s0 + $0xd8] sm:$0xff]
  %v45 = vld [vmem:[%s0 + $0xe0] sm:$0xff]
  %v46 = vld [vmem:[%s0 + $0xe8] sm:$0xff]
  %v47 = vld [vmem:[%s0 + $0xf0] sm:$0xff]
  %v48 = vld [vmem:[%s0 + $0xf8] sm:$0xff]
  %v49 = vld [vmem:[%s0 + $0x100] sm:$0xff]
  %v50 = vld [vmem:[%s0 + $0x108] sm:$0xff]
  %v51 = vld [vmem:[%s0 + $0x110] sm:$0xff]
  %v52 = vld [vmem:[%s0 + $0x118] sm:$0xff]
  %v53 = vld [vmem:[%s0 + $0x120] sm:$0xff]
  %v54 = vld [vmem:[%s0 + $0x128] sm:$0xff]
  %v55 = vld [vmem:[%s0 + $0x130] sm:$0xff]
  %v56 = vld [vmem:[%s0 + $0x138] sm:$0xff]
  %v57 = vld [vmem:[%s0 + $0x140] sm:$0xff]
  %v58 = vld [vmem:[%s0 + $0x148] sm:$0xff]
  %v59 = vld [vmem:[%s0 + $0x150] sm:$0xff]
  %v60 = vld [vmem:[%s0 + $0x158] sm:$0xff]
  %v61 = vld [vmem:[%s0 + $0x160] sm:$0xff]
  %v62 = vld [vmem:[%s0 + $0x168] sm:$0xff]
  %v63 = vld [vmem:[%s0 + $0x170] sm:$0xff]
  %v64 = vld [vmem:[%s0 + $0x178] sm:$0xff]
  %v65 = vld [vmem:[%s0 + $0x180] sm:$0xff]
  %v66 = vld [vmem:[%s1] sm:$0xff]
  %v67 = vld [vmem:[%s1 + $0x8] sm:$0xff]
  %v68 = vld [vmem:[%s1 + $0x10] sm:$0xff]
  %v69 = vld [vmem:[%s1 + $0x18] sm:$0xff]
  %v70 = vld [vmem:[%s1 + $0x20] sm:$0xff]
  %v71 = vld [vmem:[%s1 + $0x28] sm:$0xff]
  %v72 = vld [vmem:[%s1 + $0x30] sm:$0xff]
  %v73 = vld [vmem:[%s1 + $0x38] sm:$0xff]
  %v74 = vld [vmem:[%s1 + $0x40] sm:$0xff]
  %v75 = vld [vmem:[%s1 + $0x48] sm:$0xff]
  %v76 = vld [vmem:[%s1 + $0x50] sm:$0xff]
  %v77 = vld [vmem:[%s1 + $0x58] sm:$0xff]
  %v78 = vld [vmem:[%s1 + $0x60] sm:$0xff]
  %v79 = vld [vmem:[%s1 + $0x68] sm:$0xff]
  %v80 = vld [vmem:[%s1 + $0x70] sm:$0xff]
  %v81 = vld [vmem:[%s1 + $0x78] sm:$0xff]
  %v82 = vld [vmem:[%s1 + $0x80] sm:$0xff]
  %v83 = vld [vmem:[%s1 + $0x88] sm:$0xff]
  %v84 = vld [vmem:[%s1 + $0x90] sm:$0xff]
  %v85 = vld [vmem:[%s1 + $0x98] sm:$0xff]
  %v86 = vld [vmem:[%s1 + $0xa0] sm:$0xff]
  %v87 = vld [vmem:[%s1 + $0xa8] sm:$0xff]
  %v88 = vld [vmem:[%s1 + $0xb0] sm:$0xff]
  %v89 = vld [vmem:[%s1 + $0xb8] sm:$0xff]
  %v90 = vld [vmem:[%s1 + $0xc0] sm:$0xff]
  %v91 = vld [vmem:[%s1 + $0xc8] sm:$0xff]
  %v92 = vld [vmem:[%s1 + $0xd0] sm:$0xff]
  %v93 = vld [vmem:[%s1 + $0xd8] sm:$0xff]
  %v94 = vld [vmem:[%s1 + $0xe0] sm:$0xff]
  %v95 = vld [vmem:[%s1 + $0xe8] sm:$0xff]
  %v96 = vld [vmem:[%s1 + $0xf0] sm:$0xff]
  %v97 = vld [vmem:[%s1 + $0xf8] sm:$0xff]
  %v98 = vld [vmem:[%s1 + $0x100] sm:$0xff]
  %v99 = vld [vmem:[%s1 + $0x108] sm:$0xff]
  %v100 = vld [vmem:[%s1 + $0x110] sm:$0xff]
  %v101 = vld [vmem:[%s1 + $0x118] sm:$0xff]
  %v102 = vld [vmem:[%s1 + $0x120] sm:$0xff]
  %v103 = vld [vmem:[%s1 + $0x128] sm:$0xff]
  %v104 = vld [vmem:[%s1 + $0x130] sm:$0xff]
  %v105 = vld [vmem:[%s1 + $0x138] sm:$0xff]
  %v106 = vld [vmem:[%s1 + $0x140] sm:$0xff]
  %v107 = vld [vmem:[%s1 + $0x148] sm:$0xff]
  %v108 = vld [vmem:[%s1 + $0x150] sm:$0xff]
  %v109 = vld [vmem:[%s1 + $0x158] sm:$0xff]
  %v110 = vld [vmem:[%s1 + $0x160] sm:$0xff]
  %v111 = vld [vmem:[%s1 + $0x168] sm:$0xff]
  %v112 = vld [vmem:[%s1 + $0x170] sm:$0xff]
  %v113 = vld [vmem:[%s1 + $0x178] sm:$0xff]
  %v114 = vld [vmem:[%s1 + $0x180] sm:$0xff]
  %v115 = vmax.f32 %v17, %v66
  %v116 = vmax.f32 %v18, %v67
  %v117 = vmax.f32 %v19, %v68
  %v118 = vmax.f32 %v20, %v69
  %v119 = vmax.f32 %v21, %v70
  %v120 = vmax.f32 %v22, %v71
  %v121 = vmax.f32 %v23, %v72
  %v122 = vmax.f32 %v24, %v73
  %v123 = vmax.f32 %v25, %v74
  %v124 = vmax.f32 %v26, %v75
  %v125 = vmax.f32 %v27, %v76
  %v126 = vmax.f32 %v28, %v77
  %v127 = vmax.f32 %v29, %v78
  %v128 = vmax.f32 %v30, %v79
  %v129 = vmax.f32 %v31, %v80
  %v130 = vmax.f32 %v32, %v81
  %v131 = vmax.f32 %v33, %v82
  %v132 = vmax.f32 %v34, %v83
  %v133 = vmax.f32 %v35, %v84
  %v134 = vmax.f32 %v36, %v85
  %v135 = vmax.f32 %v37, %v86
  %v136 = vmax.f32 %v38, %v87
  %v137 = vmax.f32 %v39, %v88
  %v138 = vmax.f32 %v40, %v89
  %v139 = vmax.f32 %v41, %v90
  %v140 = vmax.f32 %v42, %v91
  %v141 = vmax.f32 %v43, %v92
  %v142 = vmax.f32 %v44, %v93
  %v143 = vmax.f32 %v45, %v94
  %v144 = vmax.f32 %v46, %v95
  %v145 = vmax.f32 %v47, %v96
  %v146 = vmax.f32 %v48, %v97
  %v147 = vmax.f32 %v49, %v98
  %v148 = vmax.f32 %v50, %v99
  %v149 = vmax.f32 %v51, %v100
  %v150 = vmax.f32 %v52, %v101
  %v151 = vmax.f32 %v53, %v102
  %v152 = vmax.f32 %v54, %v103
  %v153 = vmax.f32 %v55, %v104
  %v154 = vmax.f32 %v56, %v105
  %v155 = vmax.f32 %v57, %v106
  %v156 = vmax.f32 %v58, %v107
  %v157 = vmax.f32 %v59, %v108
  %v158 = vmax.f32 %v60, %v109
  %v159 = vmax.f32 %v61, %v110
  %v160 = vmax.f32 %v62, %v111
  %v161 = vmax.f32 %v63, %v112
  %v162 = vmax.f32 %v64, %v113
  %v163 = vmax.f32 %v65, %v114
  %v164 = vld [vmem:[%s2] sm:$0xff]
  %v165 = vld [vmem:[%s2 + $0x8] sm:$0xff]
  %v166 = vld [vmem:[%s2 + $0x10] sm:$0xff]
  %v167 = vld [vmem:[%s2 + $0x18] sm:$0xff]
  %v168 = vld [vmem:[%s2 + $0x20] sm:$0xff]
  %v169 = vld [vmem:[%s2 + $0x28] sm:$0xff]
  %v170 = vld [vmem:[%s2 + $0x30] sm:$0xff]
  %v171 = vld [vmem:[%s2 + $0x38] sm:$0xff]
  %v172 = vld [vmem:[%s2 + $0x40] sm:$0xff]
  %v173 = vld [vmem:[%s2 + $0x48] sm:$0xff]
  %v174 = vld [vmem:[%s2 + $0x50] sm:$0xff]
  %v175 = vld [vmem:[%s2 + $0x58] sm:$0xff]
  %v176 = vld [vmem:[%s2 + $0x60] sm:$0xff]
  %v177 = vld [vmem:[%s2 + $0x68] sm:$0xff]
  %v178 = vld [vmem:[%s2 + $0x70] sm:$0xff]
  %v179 = vld [vmem:[%s2 + $0x78] sm:$0xff]
  %v180 = vld [vmem:[%s2 + $0x80] sm:$0xff]
  %v181 = vld [vmem:[%s2 + $0x88] sm:$0xff]
  %v182 = vld [vmem:[%s2 + $0x90] sm:$0xff]
  %v183 = vld [vmem:[%s2 + $0x98] sm:$0xff]
  %v184 = vld [vmem:[%s2 + $0xa0] sm:$0xff]
  %v185 = vld [vmem:[%s2 + $0xa8] sm:$0xff]
  %v186 = vld [vmem:[%s2 + $0xb0] sm:$0xff]
  %v187 = vld [vmem:[%s2 + $0xb8] sm:$0xff]
  %v188 = vld [vmem:[%s2 + $0xc0] sm:$0xff]
  %v189 = vld [vmem:[%s2 + $0xc8] sm:$0xff]
  %v190 = vld [vmem:[%s2 + $0xd0] sm:$0xff]
  %v191 = vld [vmem:[%s2 + $0xd8] sm:$0xff]
  %v192 = vld [vmem:[%s2 + $0xe0] sm:$0xff]
  %v193 = vld [vmem:[%s2 + $0xe8] sm:$0xff]
  %v194 = vld [vmem:[%s2 + $0xf0] sm:$0xff]
  %v195 = vld [vmem:[%s2 + $0xf8] sm:$0xff]
  %v196 = vld [vmem:[%s2 + $0x100] sm:$0xff]
  %v197 = vld [vmem:[%s2 + $0x108] sm:$0xff]
  %v198 = vld [vmem:[%s2 + $0x110] sm:$0xff]
  %v199 = vld [vmem:[%s2 + $0x118] sm:$0xff]
  %v200 = vld [vmem:[%s2 + $0x120] sm:$0xff]
  %v201 = vld [vmem:[%s2 + $0x128] sm:$0xff]
  %v202 = vld [vmem:[%s2 + $0x130] sm:$0xff]
  %v203 = vld [vmem:[%s2 + $0x138] sm:$0xff]
  %v204 = vld [vmem:[%s2 + $0x140] sm:$0xff]
  %v205 = vld [vmem:[%s2 + $0x148] sm:$0xff]
  %v206 = vld [vmem:[%s2 + $0x150] sm:$0xff]
  %v207 = vld [vmem:[%s2 + $0x158] sm:$0xff]
  %v208 = vld [vmem:[%s2 + $0x160] sm:$0xff]
  %v209 = vld [vmem:[%s2 + $0x168] sm:$0xff]
  %v210 = vld [vmem:[%s2 + $0x170] sm:$0xff]
  %v211 = vld [vmem:[%s2 + $0x178] sm:$0xff]
  %v212 = vld [vmem:[%s2 + $0x180] sm:$0xff]
  %v213 = vld [vmem:[%s3] sm:$0xff]
  %v214 = vld [vmem:[%s3 + $0x8] sm:$0xff]
  %v215 = vld [vmem:[%s3 + $0x10] sm:$0xff]
  %v216 = vld [vmem:[%s3 + $0x18] sm:$0xff]
  %v217 = vld [vmem:[%s3 + $0x20] sm:$0xff]
  %v218 = vld [vmem:[%s3 + $0x28] sm:$0xff]
  %v219 = vld [vmem:[%s3 + $0x30] sm:$0xff]
  %v220 = vld [vmem:[%s3 + $0x38] sm:$0xff]
  %v221 = vld [vmem:[%s3 + $0x40] sm:$0xff]
  %v222 = vld [vmem:[%s3 + $0x48] sm:$0xff]
  %v223 = vld [vmem:[%s3 + $0x50] sm:$0xff]
  %v224 = vld [vmem:[%s3 + $0x58] sm:$0xff]
  %v225 = vld [vmem:[%s3 + $0x60] sm:$0xff]
  %v226 = vld [vmem:[%s3 + $0x68] sm:$0xff]
  %v227 = vld [vmem:[%s3 + $0x70] sm:$0xff]
  %v228 = vld [vmem:[%s3 + $0x78] sm:$0xff]
  %v229 = vld [vmem:[%s3 + $0x80] sm:$0xff]
  %v230 = vld [vmem:[%s3 + $0x88] sm:$0xff]
  %v231 = vld [vmem:[%s3 + $0x90] sm:$0xff]
  %v232 = vld [vmem:[%s3 + $0x98] sm:$0xff]
  %v233 = vld [vmem:[%s3 + $0xa0] sm:$0xff]
  %v234 = vld [vmem:[%s3 + $0xa8] sm:$0xff]
  %v235 = vld [vmem:[%s3 + $0xb0] sm:$0xff]
  %v236 = vld [vmem:[%s3 + $0xb8] sm:$0xff]
  %v237 = vld [vmem:[%s3 + $0xc0] sm:$0xff]
  %v238 = vld [vmem:[%s3 + $0xc8] sm:$0xff]
  %v239 = vld [vmem:[%s3 + $0xd0] sm:$0xff]
  %v240 = vld [vmem:[%s3 + $0xd8] sm:$0xff]
  %v241 = vld [vmem:[%s3 + $0xe0] sm:$0xff]
  %v242 = vld [vmem:[%s3 + $0xe8] sm:$0xff]
  %v243 = vld [vmem:[%s3 + $0xf0] sm:$0xff]
  %v244 = vld [vmem:[%s3 + $0xf8] sm:$0xff]
  %v245 = vld [vmem:[%s3 + $0x100] sm:$0xff]
  %v246 = vld [vmem:[%s3 + $0x108] sm:$0xff]
  %v247 = vld [vmem:[%s3 + $0x110] sm:$0xff]
  %v248 = vld [vmem:[%s3 + $0x118] sm:$0xff]
  %v249 = vld [vmem:[%s3 + $0x120] sm:$0xff]
  %v250 = vld [vmem:[%s3 + $0x128] sm:$0xff]
  %v251 = vld [vmem:[%s3 + $0x130] sm:$0xff]
  %v252 = vld [vmem:[%s3 + $0x138] sm:$0xff]
  %v253 = vld [vmem:[%s3 + $0x140] sm:$0xff]
  %v254 = vld [vmem:[%s3 + $0x148] sm:$0xff]
  %v255 = vld [vmem:[%s3 + $0x150] sm:$0xff]
  %v256 = vld [vmem:[%s3 + $0x158] sm:$0xff]
  %v257 = vld [vmem:[%s3 + $0x160] sm:$0xff]
  %v258 = vld [vmem:[%s3 + $0x168] sm:$0xff]
  %v259 = vld [vmem:[%s3 + $0x170] sm:$0xff]
  %v260 = vld [vmem:[%s3 + $0x178] sm:$0xff]
  %v261 = vld [vmem:[%s3 + $0x180] sm:$0xff]
  %v262 = vmax.f32 %v164, %v213
  %v263 = vmax.f32 %v165, %v214
  %v264 = vmax.f32 %v166, %v215
  %v265 = vmax.f32 %v167, %v216
  %v266 = vmax.f32 %v168, %v217
  %v267 = vmax.f32 %v169, %v218
  %v268 = vmax.f32 %v170, %v219
  %v269 = vmax.f32 %v171, %v220
  %v270 = vmax.f32 %v172, %v221
  %v271 = vmax.f32 %v173, %v222
  %v272 = vmax.f32 %v174, %v223
  %v273 = vmax.f32 %v175, %v224
  %v274 = vmax.f32 %v176, %v225
  %v275 = vmax.f32 %v177, %v226
  %v276 = vmax.f32 %v178, %v227
  %v277 = vmax.f32 %v179, %v228
  %v278 = vmax.f32 %v180, %v229
  %v279 = vmax.f32 %v181, %v230
  %v280 = vmax.f32 %v182, %v231
  %v281 = vmax.f32 %v183, %v232
  %v282 = vmax.f32 %v184, %v233
  %v283 = vmax.f32 %v185, %v234
  %v284 = vmax.f32 %v186, %v235
  %v285 = vmax.f32 %v187, %v236
  %v286 = vmax.f32 %v188, %v237
  %v287 = vmax.f32 %v189, %v238
  %v288 = vmax.f32 %v190, %v239
  %v289 = vmax.f32 %v191, %v240
  %v290 = vmax.f32 %v192, %v241
  %v291 = vmax.f32 %v193, %v242
  %v292 = vmax.f32 %v194, %v243
  %v293 = vmax.f32 %v195, %v244
  %v294 = vmax.f32 %v196, %v245
  %v295 = vmax.f32 %v197, %v246
  %v296 = vmax.f32 %v198, %v247
  %v297 = vmax.f32 %v199, %v248
  %v298 = vmax.f32 %v200, %v249
  %v299 = vmax.f32 %v201, %v250
  %v300 = vmax.f32 %v202, %v251
  %v301 = vmax.f32 %v203, %v252
  %v302 = vmax.f32 %v204, %v253
  %v303 = vmax.f32 %v205, %v254
  %v304 = vmax.f32 %v206, %v255
  %v305 = vmax.f32 %v207, %v256
  %v306 = vmax.f32 %v208, %v257
  %v307 = vmax.f32 %v209, %v258
  %v308 = vmax.f32 %v210, %v259
  %v309 = vmax.f32 %v211, %v260
  %v310 = vmax.f32 %v212, %v261
  %v311 = vmax.f32 %v115, %v262
  %v312 = vmax.f32 %v116, %v263
  %v313 = vmax.f32 %v117, %v264
  %v314 = vmax.f32 %v118, %v265
  %v315 = vmax.f32 %v119, %v266
  %v316 = vmax.f32 %v120, %v267
  %v317 = vmax.f32 %v121, %v268
  %v318 = vmax.f32 %v122, %v269
  %v319 = vmax.f32 %v123, %v270
  %v320 = vmax.f32 %v124, %v271
  %v321 = vmax.f32 %v125, %v272
  %v322 = vmax.f32 %v126, %v273
  %v323 = vmax.f32 %v127, %v274
  %v324 = vmax.f32 %v128, %v275
  %v325 = vmax.f32 %v129, %v276
  %v326 = vmax.f32 %v130, %v277
  %v327 = vmax.f32 %v131, %v278
  %v328 = vmax.f32 %v132, %v279
  %v329 = vmax.f32 %v133, %v280
  %v330 = vmax.f32 %v134, %v281
  %v331 = vmax.f32 %v135, %v282
  %v332 = vmax.f32 %v136, %v283
  %v333 = vmax.f32 %v137, %v284
  %v334 = vmax.f32 %v138, %v285
  %v335 = vmax.f32 %v139, %v286
  %v336 = vmax.f32 %v140, %v287
  %v337 = vmax.f32 %v141, %v288
  %v338 = vmax.f32 %v142, %v289
  %v339 = vmax.f32 %v143, %v290
  %v340 = vmax.f32 %v144, %v291
  %v341 = vmax.f32 %v145, %v292
  %v342 = vmax.f32 %v146, %v293
  %v343 = vmax.f32 %v147, %v294
  %v344 = vmax.f32 %v148, %v295
  %v345 = vmax.f32 %v149, %v296
  %v346 = vmax.f32 %v150, %v297
  %v347 = vmax.f32 %v151, %v298
  %v348 = vmax.f32 %v152, %v299
  %v349 = vmax.f32 %v153, %v300
  %v350 = vmax.f32 %v154, %v301
  %v351 = vmax.f32 %v155, %v302
  %v352 = vmax.f32 %v156, %v303
  %v353 = vmax.f32 %v157, %v304
  %v354 = vmax.f32 %v158, %v305
  %v355 = vmax.f32 %v159, %v306
  %v356 = vmax.f32 %v160, %v307
  %v357 = vmax.f32 %v161, %v308
  %v358 = vmax.f32 %v162, %v309
  %v359 = vmax.f32 %v163, %v310
  %360 = vst [vmem:[%s4] sm:$0xff] %v311
  %361 = vst [vmem:[%s4 + $0x8] sm:$0xff] %v312
  %362 = vst [vmem:[%s4 + $0x10] sm:$0xff] %v313
  %363 = vst [vmem:[%s4 + $0x18] sm:$0xff] %v314
  %364 = vst [vmem:[%s4 + $0x20] sm:$0xff] %v315
  %365 = vst [vmem:[%s4 + $0x28] sm:$0xff] %v316
  %366 = vst [vmem:[%s4 + $0x30] sm:$0xff] %v317
  %367 = vst [vmem:[%s4 + $0x38] sm:$0xff] %v318
  %368 = vst [vmem:[%s4 + $0x40] sm:$0xff] %v319
  %369 = vst [vmem:[%s4 + $0x48] sm:$0xff] %v320
  %370 = vst [vmem:[%s4 + $0x50] sm:$0xff] %v321
  %371 = vst [vmem:[%s4 + $0x58] sm:$0xff] %v322
  %372 = vst [vmem:[%s4 + $0x60] sm:$0xff] %v323
  %373 = vst [vmem:[%s4 + $0x68] sm:$0xff] %v324
  %374 = vst [vmem:[%s4 + $0x70] sm:$0xff] %v325
  %375 = vst [vmem:[%s4 + $0x78] sm:$0xff] %v326
  %376 = vst [vmem:[%s4 + $0x80] sm:$0xff] %v327
  %377 = vst [vmem:[%s4 + $0x88] sm:$0xff] %v328
  %378 = vst [vmem:[%s4 + $0x90] sm:$0xff] %v329
  %379 = vst [vmem:[%s4 + $0x98] sm:$0xff] %v330
  %380 = vst [vmem:[%s4 + $0xa0] sm:$0xff] %v331
  %381 = vst [vmem:[%s4 + $0xa8] sm:$0xff] %v332
  %382 = vst [vmem:[%s4 + $0xb0] sm:$0xff] %v333
  %383 = vst [vmem:[%s4 + $0xb8] sm:$0xff] %v334
  %384 = vst [vmem:[%s4 + $0xc0] sm:$0xff] %v335
  %385 = vst [vmem:[%s4 + $0xc8] sm:$0xff] %v336
  %386 = vst [vmem:[%s4 + $0xd0] sm:$0xff] %v337
  %387 = vst [vmem:[%s4 + $0xd8] sm:$0xff] %v338
  %388 = vst [vmem:[%s4 + $0xe0] sm:$0xff] %v339
  %389 = vst [vmem:[%s4 + $0xe8] sm:$0xff] %v340
  %390 = vst [vmem:[%s4 + $0xf0] sm:$0xff] %v341
  %391 = vst [vmem:[%s4 + $0xf8] sm:$0xff] %v342
  %392 = vst [vmem:[%s4 + $0x100] sm:$0xff] %v343
  %393 = vst [vmem:[%s4 + $0x108] sm:$0xff] %v344
  %394 = vst [vmem:[%s4 + $0x110] sm:$0xff] %v345
  %395 = vst [vmem:[%s4 + $0x118] sm:$0xff] %v346
  %396 = vst [vmem:[%s4 + $0x120] sm:$0xff] %v347
  %397 = vst [vmem:[%s4 + $0x128] sm:$0xff] %v348
  %398 = vst [vmem:[%s4 + $0x130] sm:$0xff] %v349
  %399 = vst [vmem:[%s4 + $0x138] sm:$0xff] %v350
  %400 = vst [vmem:[%s4 + $0x140] sm:$0xff] %v351
  %401 = vst [vmem:[%s4 + $0x148] sm:$0xff] %v352
  %402 = vst [vmem:[%s4 + $0x150] sm:$0xff] %v353
  %403 = vst [vmem:[%s4 + $0x158] sm:$0xff] %v354
  %404 = vst [vmem:[%s4 + $0x160] sm:$0xff] %v355
  %405 = vst [vmem:[%s4 + $0x168] sm:$0xff] %v356
  %406 = vst [vmem:[%s4 + $0x170] sm:$0xff] %v357
  %407 = vst [vmem:[%s4 + $0x178] sm:$0xff] %v358
  %408 = vst [vmem:[%s4 + $0x180] sm:$0xff] %v359
  // Predicated region
  $region18: #{cnn_forward.7} parent=0 // pred_check
    _
  $region19: #{cnn_forward.7} parent=0 // pred_check_branch
    %410 = sbr.rel (0) target = $region21
  $region20: #{cnn_forward.7} parent=0 // pred_region
    _
  $region21: #{cnn_forward.7} parent=0 // pred_fallthru
    _
  // Predicated region
  $region22: #{cnn_forward.7} parent=0 // pred_check
    _
  $region23: #{cnn_forward.7} parent=0 // pred_check_branch
    %412 = sbr.rel (0) target = $region25
  $region24: #{cnn_forward.7} parent=0 // pred_region
    _
  $region25: #{cnn_forward.7} parent=0 // pred_fallthru
    _

// kernel: cnn_forward.8
$region0: #{cnn_forward.8}
  #allocation0 [shape = 'u32[]', space=smem, size = 0x4, offset = 0x4, fixed_abs, tag = 'smem constant byte address 0x4 - core index']
  #allocation1 [shape = 'u32[144,128]{1,0:T(1,128)}', space=vmem, size = 0x12000, scoped, tag = 'internal scratch']
  #allocation2 [shape = 'f32[200,128]{1,0:T(8,128)}', space=vmem, size = 0x19000, scoped, tag = 'scratch operand']
  %s0 = inlined_call_operand.vmem [shape: f32[200,512], index: 0, kind: input, shape index: {}]
  %s1 = inlined_call_operand.vmem [shape: f32[512,128], index: 1, kind: input, shape index: {}]
  %s2 = inlined_call_operand.vmem [shape: f32[1,128], index: 2, kind: input, shape index: {}]
  %s3 = inlined_call_operand.vmem [shape: f32[200,128], index: 3, kind: output, shape index: {}]
  %s4 = sld [smem:[#allocation0]]
  $region30: #{cnn_forward.8} parent=0
    _
  %s6 = ssub.s32 1, %s4
  %s7 = scalar_select 0, %s6, %s4
  // Predicated region
  $region2: #{cnn_forward.8} parent=0 // pred_check
    _
  $region3: #{cnn_forward.8} parent=0 // pred_check_branch
    %9 = sbr.rel (0) target = $region5
  $region4: #{cnn_forward.8} parent=0 // pred_region
    _
  $region5: #{cnn_forward.8} parent=0 // pred_fallthru
    _
  // Predicated region
  $region6: #{cnn_forward.8} parent=0 // pred_check
    _
  $region7: #{cnn_forward.8} parent=0 // pred_check_branch
    %11 = sbr.rel (0) target = $region9
  $region8: #{cnn_forward.8} parent=0 // pred_region
    _
  $region9: #{cnn_forward.8} parent=0 // pred_fallthru
    _
  // Predicated region
  $region10: #{cnn_forward.8} parent=0 // pred_check
    _
  $region11: #{cnn_forward.8} parent=0 // pred_check_branch
    %13 = sbr.rel (0) target = $region13
  $region12: #{cnn_forward.8} parent=0 // pred_region
    _
  $region13: #{cnn_forward.8} parent=0 // pred_fallthru
    _
  %p14 = scmp.eq.s32.totalorder 0, 0
  // Predicated region
  $region14: #{cnn_forward.8} parent=0 // pred_check
    %p15 = pneg %p14
  $region15: #{cnn_forward.8} parent=0 // pred_check_branch
    %17 = sbr.rel (%p15) target = $region17
  $region16: #{cnn_forward.8} parent=0 // pred_region
    %18 = vst [vmem:[#allocation2] sm:$0xff] 0.0
    %19 = vst [vmem:[#allocation2 + $0x8] sm:$0xff] 0.0
    %20 = vst [vmem:[#allocation2 + $0x10] sm:$0xff] 0.0
    %21 = vst [vmem:[#allocation2 + $0x18] sm:$0xff] 0.0
    %22 = vst [vmem:[#allocation2 + $0x20] sm:$0xff] 0.0
    %23 = vst [vmem:[#allocation2 + $0x28] sm:$0xff] 0.0
    %24 = vst [vmem:[#allocation2 + $0x30] sm:$0xff] 0.0
    %25 = vst [vmem:[#allocation2 + $0x38] sm:$0xff] 0.0
    %26 = vst [vmem:[#allocation2 + $0x40] sm:$0xff] 0.0
    %27 = vst [vmem:[#allocation2 + $0x48] sm:$0xff] 0.0
    %28 = vst [vmem:[#allocation2 + $0x50] sm:$0xff] 0.0
    %29 = vst [vmem:[#allocation2 + $0x58] sm:$0xff] 0.0
    %30 = vst [vmem:[#allocation2 + $0x60] sm:$0xff] 0.0
    %31 = vst [vmem:[#allocation2 + $0x68] sm:$0xff] 0.0
    %32 = vst [vmem:[#allocation2 + $0x70] sm:$0xff] 0.0
    %33 = vst [vmem:[#allocation2 + $0x78] sm:$0xff] 0.0
    %34 = vst [vmem:[#allocation2 + $0x80] sm:$0xff] 0.0
    %35 = vst [vmem:[#allocation2 + $0x88] sm:$0xff] 0.0
    %36 = vst [vmem:[#allocation2 + $0x90] sm:$0xff] 0.0
    %37 = vst [vmem:[#allocation2 + $0x98] sm:$0xff] 0.0
    %38 = vst [vmem:[#allocation2 + $0xa0] sm:$0xff] 0.0
    %39 = vst [vmem:[#allocation2 + $0xa8] sm:$0xff] 0.0
    %40 = vst [vmem:[#allocation2 + $0xb0] sm:$0xff] 0.0
    %41 = vst [vmem:[#allocation2 + $0xb8] sm:$0xff] 0.0
    %42 = vst [vmem:[#allocation2 + $0xc0] sm:$0xff] 0.0
  $region17: #{cnn_forward.8} parent=0 // pred_fallthru
    _
  %v43 = vld [vmem:[#allocation2] sm:$0xff]
  %v44 = vld [vmem:[#allocation2 + $0x8] sm:$0xff]
  %v45 = vld [vmem:[#allocation2 + $0x10] sm:$0xff]
  %v46 = vld [vmem:[#allocation2 + $0x18] sm:$0xff]
  %v47 = vld [vmem:[#allocation2 + $0x20] sm:$0xff]
  %v48 = vld [vmem:[#allocation2 + $0x28] sm:$0xff]
  %v49 = vld [vmem:[#allocation2 + $0x30] sm:$0xff]
  %v50 = vld [vmem:[#allocation2 + $0x38] sm:$0xff]
  %v51 = vld [vmem:[#allocation2 + $0x40] sm:$0xff]
  %v52 = vld [vmem:[#allocation2 + $0x48] sm:$0xff]
  %v53 = vld [vmem:[#allocation2 + $0x50] sm:$0xff]
  %v54 = vld [vmem:[#allocation2 + $0x58] sm:$0xff]
  %v55 = vld [vmem:[#allocation2 + $0x60] sm:$0xff]
  %v56 = vld [vmem:[#allocation2 + $0x68] sm:$0xff]
  %v57 = vld [vmem:[#allocation2 + $0x70] sm:$0xff]
  %v58 = vld [vmem:[#allocation2 + $0x78] sm:$0xff]
  %v59 = vld [vmem:[#allocation2 + $0x80] sm:$0xff]
  %v60 = vld [vmem:[#allocation2 + $0x88] sm:$0xff]
  %v61 = vld [vmem:[#allocation2 + $0x90] sm:$0xff]
  %v62 = vld [vmem:[#allocation2 + $0x98] sm:$0xff]
  %v63 = vld [vmem:[#allocation2 + $0xa0] sm:$0xff]
  %v64 = vld [vmem:[#allocation2 + $0xa8] sm:$0xff]
  %v65 = vld [vmem:[#allocation2 + $0xb0] sm:$0xff]
  %v66 = vld [vmem:[#allocation2 + $0xb8] sm:$0xff]
  %v67 = vld [vmem:[#allocation2 + $0xc0] sm:$0xff]
  %v68 = vld [vmem:[%s0] sm:$0xff]
  %v69 = vld [vmem:[%s0 + $0x8] sm:$0xff]
  %v70 = vld [vmem:[%s0 + $0x10] sm:$0xff]
  %v71 = vld [vmem:[%s0 + $0x18] sm:$0xff]
  %v72 = vld [vmem:[%s0 + $0x20] sm:$0xff]
  %v73 = vld [vmem:[%s0 + $0x28] sm:$0xff]
  %v74 = vld [vmem:[%s0 + $0x30] sm:$0xff]
  %v75 = vld [vmem:[%s0 + $0x38] sm:$0xff]
  %v76 = vld [vmem:[%s0 + $0x40] sm:$0xff]
  %v77 = vld [vmem:[%s0 + $0x48] sm:$0xff]
  %v78 = vld [vmem:[%s0 + $0x50] sm:$0xff]
  %v79 = vld [vmem:[%s0 + $0x58] sm:$0xff]
  %v80 = vld [vmem:[%s0 + $0x60] sm:$0xff]
  %v81 = vld [vmem:[%s0 + $0x68] sm:$0xff]
  %v82 = vld [vmem:[%s0 + $0x70] sm:$0xff]
  %v83 = vld [vmem:[%s0 + $0x78] sm:$0xff]
  %v84 = vld [vmem:[%s0 + $0x80] sm:$0xff]
  %v85 = vld [vmem:[%s0 + $0x88] sm:$0xff]
  %v86 = vld [vmem:[%s0 + $0x90] sm:$0xff]
  %v87 = vld [vmem:[%s0 + $0x98] sm:$0xff]
  %v88 = vld [vmem:[%s0 + $0xa0] sm:$0xff]
  %v89 = vld [vmem:[%s0 + $0xa8] sm:$0xff]
  %v90 = vld [vmem:[%s0 + $0xb0] sm:$0xff]
  %v91 = vld [vmem:[%s0 + $0xb8] sm:$0xff]
  %v92 = vld [vmem:[%s0 + $0xc0] sm:$0xff]
  %v93 = vld [vmem:[%s0 + $0xc8] sm:$0xff]
  %v94 = vld [vmem:[%s0 + $0xd0] sm:$0xff]
  %v95 = vld [vmem:[%s0 + $0xd8] sm:$0xff]
  %v96 = vld [vmem:[%s0 + $0xe0] sm:$0xff]
  %v97 = vld [vmem:[%s0 + $0xe8] sm:$0xff]
  %v98 = vld [vmem:[%s0 + $0xf0] sm:$0xff]
  %v99 = vld [vmem:[%s0 + $0xf8] sm:$0xff]
  %v100 = vld [vmem:[%s0 + $0x100] sm:$0xff]
  %v101 = vld [vmem:[%s0 + $0x108] sm:$0xff]
  %v102 = vld [vmem:[%s0 + $0x110] sm:$0xff]
  %v103 = vld [vmem:[%s0 + $0x118] sm:$0xff]
  %v104 = vld [vmem:[%s0 + $0x120] sm:$0xff]
  %v105 = vld [vmem:[%s0 + $0x128] sm:$0xff]
  %v106 = vld [vmem:[%s0 + $0x130] sm:$0xff]
  %v107 = vld [vmem:[%s0 + $0x138] sm:$0xff]
  %v108 = vld [vmem:[%s0 + $0x140] sm:$0xff]
  %v109 = vld [vmem:[%s0 + $0x148] sm:$0xff]
  %v110 = vld [vmem:[%s0 + $0x150] sm:$0xff]
  %v111 = vld [vmem:[%s0 + $0x158] sm:$0xff]
  %v112 = vld [vmem:[%s0 + $0x160] sm:$0xff]
  %v113 = vld [vmem:[%s0 + $0x168] sm:$0xff]
  %v114 = vld [vmem:[%s0 + $0x170] sm:$0xff]
  %v115 = vld [vmem:[%s0 + $0x178] sm:$0xff]
  %v116 = vld [vmem:[%s0 + $0x180] sm:$0xff]
  %v117 = vld [vmem:[%s0 + $0x188] sm:$0xff]
  %v118 = vld [vmem:[%s0 + $0x190] sm:$0xff]
  %v119 = vld [vmem:[%s0 + $0x198] sm:$0xff]
  %v120 = vld [vmem:[%s0 + $0x1a0] sm:$0xff]
  %v121 = vld [vmem:[%s0 + $0x1a8] sm:$0xff]
  %v122 = vld [vmem:[%s0 + $0x1b0] sm:$0xff]
  %v123 = vld [vmem:[%s0 + $0x1b8] sm:$0xff]
  %v124 = vld [vmem:[%s0 + $0x1c0] sm:$0xff]
  %v125 = vld [vmem:[%s0 + $0x1c8] sm:$0xff]
  %v126 = vld [vmem:[%s0 + $0x1d0] sm:$0xff]
  %v127 = vld [vmem:[%s0 + $0x1d8] sm:$0xff]
  %v128 = vld [vmem:[%s0 + $0x1e0] sm:$0xff]
  %v129 = vld [vmem:[%s0 + $0x1e8] sm:$0xff]
  %v130 = vld [vmem:[%s0 + $0x1f0] sm:$0xff]
  %v131 = vld [vmem:[%s0 + $0x1f8] sm:$0xff]
  %v132 = vld [vmem:[%s0 + $0x200] sm:$0xff]
  %v133 = vld [vmem:[%s0 + $0x208] sm:$0xff]
  %v134 = vld [vmem:[%s0 + $0x210] sm:$0xff]
  %v135 = vld [vmem:[%s0 + $0x218] sm:$0xff]
  %v136 = vld [vmem:[%s0 + $0x220] sm:$0xff]
  %v137 = vld [vmem:[%s0 + $0x228] sm:$0xff]
  %v138 = vld [vmem:[%s0 + $0x230] sm:$0xff]
  %v139 = vld [vmem:[%s0 + $0x238] sm:$0xff]
  %v140 = vld [vmem:[%s0 + $0x240] sm:$0xff]
  %v141 = vld [vmem:[%s0 + $0x248] sm:$0xff]
  %v142 = vld [vmem:[%s0 + $0x250] sm:$0xff]
  %v143 = vld [vmem:[%s0 + $0x258] sm:$0xff]
  %v144 = vld [vmem:[%s0 + $0x260] sm:$0xff]
  %v145 = vld [vmem:[%s0 + $0x268] sm:$0xff]
  %v146 = vld [vmem:[%s0 + $0x270] sm:$0xff]
  %v147 = vld [vmem:[%s0 + $0x278] sm:$0xff]
  %v148 = vld [vmem:[%s0 + $0x280] sm:$0xff]
  %v149 = vld [vmem:[%s0 + $0x288] sm:$0xff]
  %v150 = vld [vmem:[%s0 + $0x290] sm:$0xff]
  %v151 = vld [vmem:[%s0 + $0x298] sm:$0xff]
  %v152 = vld [vmem:[%s0 + $0x2a0] sm:$0xff]
  %v153 = vld [vmem:[%s0 + $0x2a8] sm:$0xff]
  %v154 = vld [vmem:[%s0 + $0x2b0] sm:$0xff]
  %v155 = vld [vmem:[%s0 + $0x2b8] sm:$0xff]
  %v156 = vld [vmem:[%s0 + $0x2c0] sm:$0xff]
  %v157 = vld [vmem:[%s0 + $0x2c8] sm:$0xff]
  %v158 = vld [vmem:[%s0 + $0x2d0] sm:$0xff]
  %v159 = vld [vmem:[%s0 + $0x2d8] sm:$0xff]
  %v160 = vld [vmem:[%s0 + $0x2e0] sm:$0xff]
  %v161 = vld [vmem:[%s0 + $0x2e8] sm:$0xff]
  %v162 = vld [vmem:[%s0 + $0x2f0] sm:$0xff]
  %v163 = vld [vmem:[%s0 + $0x2f8] sm:$0xff]
  %v164 = vld [vmem:[%s0 + $0x300] sm:$0xff]
  %v165 = vld [vmem:[%s0 + $0x308] sm:$0xff]
  %v166 = vld [vmem:[%s0 + $0x310] sm:$0xff]
  %v167 = vld [vmem:[%s0 + $0x318] sm:$0xff]
  %v168 = vld [vmem:[%s1] sm:$0xff]
  %v169 = vld [vmem:[%s1 + $0x8] sm:$0xff]
  %v170 = vld [vmem:[%s1 + $0x10] sm:$0xff]
  %v171 = vld [vmem:[%s1 + $0x18] sm:$0xff]
  %v172 = vld [vmem:[%s1 + $0x20] sm:$0xff]
  %v173 = vld [vmem:[%s1 + $0x28] sm:$0xff]
  %v174 = vld [vmem:[%s1 + $0x30] sm:$0xff]
  %v175 = vld [vmem:[%s1 + $0x38] sm:$0xff]
  %v176 = vld [vmem:[%s1 + $0x40] sm:$0xff]
  %v177 = vld [vmem:[%s1 + $0x48] sm:$0xff]
  %v178 = vld [vmem:[%s1 + $0x50] sm:$0xff]
  %v179 = vld [vmem:[%s1 + $0x58] sm:$0xff]
  %v180 = vld [vmem:[%s1 + $0x60] sm:$0xff]
  %v181 = vld [vmem:[%s1 + $0x68] sm:$0xff]
  %v182 = vld [vmem:[%s1 + $0x70] sm:$0xff]
  %v183 = vld [vmem:[%s1 + $0x78] sm:$0xff]
  %v184 = vld [vmem:[%s1 + $0x80] sm:$0xff]
  %v185 = vld [vmem:[%s1 + $0x88] sm:$0xff]
  %v186 = vld [vmem:[%s1 + $0x90] sm:$0xff]
  %v187 = vld [vmem:[%s1 + $0x98] sm:$0xff]
  %v188 = vld [vmem:[%s1 + $0xa0] sm:$0xff]
  %v189 = vld [vmem:[%s1 + $0xa8] sm:$0xff]
  %v190 = vld [vmem:[%s1 + $0xb0] sm:$0xff]
  %v191 = vld [vmem:[%s1 + $0xb8] sm:$0xff]
  %v192 = vld [vmem:[%s1 + $0xc0] sm:$0xff]
  %v193 = vld [vmem:[%s1 + $0xc8] sm:$0xff]
  %v194 = vld [vmem:[%s1 + $0xd0] sm:$0xff]
  %v195 = vld [vmem:[%s1 + $0xd8] sm:$0xff]
  %v196 = vld [vmem:[%s1 + $0xe0] sm:$0xff]
  %v197 = vld [vmem:[%s1 + $0xe8] sm:$0xff]
  %v198 = vld [vmem:[%s1 + $0xf0] sm:$0xff]
  %v199 = vld [vmem:[%s1 + $0xf8] sm:$0xff]
  %v200 = vld [vmem:[%s1 + $0x100] sm:$0xff]
  %v201 = vld [vmem:[%s1 + $0x108] sm:$0xff]
  %v202 = vld [vmem:[%s1 + $0x110] sm:$0xff]
  %v203 = vld [vmem:[%s1 + $0x118] sm:$0xff]
  %v204 = vld [vmem:[%s1 + $0x120] sm:$0xff]
  %v205 = vld [vmem:[%s1 + $0x128] sm:$0xff]
  %v206 = vld [vmem:[%s1 + $0x130] sm:$0xff]
  %v207 = vld [vmem:[%s1 + $0x138] sm:$0xff]
  %v208 = vld [vmem:[%s1 + $0x140] sm:$0xff]
  %v209 = vld [vmem:[%s1 + $0x148] sm:$0xff]
  %v210 = vld [vmem:[%s1 + $0x150] sm:$0xff]
  %v211 = vld [vmem:[%s1 + $0x158] sm:$0xff]
  %v212 = vld [vmem:[%s1 + $0x160] sm:$0xff]
  %v213 = vld [vmem:[%s1 + $0x168] sm:$0xff]
  %v214 = vld [vmem:[%s1 + $0x170] sm:$0xff]
  %v215 = vld [vmem:[%s1 + $0x178] sm:$0xff]
  %v216 = vld [vmem:[%s1 + $0x180] sm:$0xff]
  %v217 = vld [vmem:[%s1 + $0x188] sm:$0xff]
  %v218 = vld [vmem:[%s1 + $0x190] sm:$0xff]
  %v219 = vld [vmem:[%s1 + $0x198] sm:$0xff]
  %v220 = vld [vmem:[%s1 + $0x1a0] sm:$0xff]
  %v221 = vld [vmem:[%s1 + $0x1a8] sm:$0xff]
  %v222 = vld [vmem:[%s1 + $0x1b0] sm:$0xff]
  %v223 = vld [vmem:[%s1 + $0x1b8] sm:$0xff]
  %v224 = vld [vmem:[%s1 + $0x1c0] sm:$0xff]
  %v225 = vld [vmem:[%s1 + $0x1c8] sm:$0xff]
  %v226 = vld [vmem:[%s1 + $0x1d0] sm:$0xff]
  %v227 = vld [vmem:[%s1 + $0x1d8] sm:$0xff]
  %v228 = vld [vmem:[%s1 + $0x1e0] sm:$0xff]
  %v229 = vld [vmem:[%s1 + $0x1e8] sm:$0xff]
  %v230 = vld [vmem:[%s1 + $0x1f0] sm:$0xff]
  %v231 = vld [vmem:[%s1 + $0x1f8] sm:$0xff]
  %232 = vmatprep.subr.mxu0 0.0
  %233 = vmatpush1.msra.mxu0 %v168
  %234 = vmatprep.subr.mxu0 0.0
  %235 = vmatpush1.msra.mxu0 %v169
  %236 = vmatprep.subr.mxu0 0.0
  %237 = vmatpush1.msra.mxu0 %v170
  %238 = vmatprep.subr.mxu0 0.0
  %239 = vmatpush1.msra.mxu0 %v171
  %240 = vmatprep.subr.mxu0 0.0
  %241 = vmatpush1.msra.mxu0 %v172
  %242 = vmatprep.subr.mxu0 0.0
  %243 = vmatpush1.msra.mxu0 %v173
  %244 = vmatprep.subr.mxu0 0.0
  %245 = vmatpush1.msra.mxu0 %v174
  %246 = vmatprep.subr.mxu0 0.0
  %247 = vmatpush1.msra.mxu0 %v175
  %248 = vmatprep.subr.mxu0 0.0
  %249 = vmatpush1.msra.mxu0 %v176
  %250 = vmatprep.subr.mxu0 0.0
  %251 = vmatpush1.msra.mxu0 %v177
  %252 = vmatprep.subr.mxu0 0.0
  %253 = vmatpush1.msra.mxu0 %v178
  %254 = vmatprep.subr.mxu0 0.0
  %255 = vmatpush1.msra.mxu0 %v179
  %256 = vmatprep.subr.mxu0 0.0
  %257 = vmatpush1.msra.mxu0 %v180
  %258 = vmatprep.subr.mxu0 0.0
  %259 = vmatpush1.msra.mxu0 %v181
  %260 = vmatprep.subr.mxu0 0.0
  %261 = vmatpush1.msra.mxu0 %v182
  %262 = vmatprep.subr.mxu0 0.0
  %263 = vmatpush1.msra.mxu0 %v183
  %264 = vmatprep.subr.mxu0 0.0
  %265 = vmatpush1.msra.mxu0 %v184
  %266 = vmatprep.subr.mxu0 0.0
  %267 = vmatpush1.msra.mxu0 %v185
  %268 = vmatprep.subr.mxu0 0.0
  %269 = vmatpush1.msra.mxu0 %v186
  %270 = vmatprep.subr.mxu0 0.0
  %271 = vmatpush1.msra.mxu0 %v187
  %272 = vmatprep.subr.mxu0 0.0
  %273 = vmatpush1.msra.mxu0 %v188
  %274 = vmatprep.subr.mxu0 0.0
  %275 = vmatpush1.msra.mxu0 %v189
  %276 = vmatprep.subr.mxu0 0.0
  %277 = vmatpush1.msra.mxu0 %v190
  %278 = vmatprep.subr.mxu0 0.0
  %279 = vmatpush1.msra.mxu0 %v191
  %280 = vmatprep.subr.mxu0 0.0
  %281 = vmatpush1.msra.mxu0 %v192
  %282 = vmatprep.subr.mxu0 0.0
  %283 = vmatpush1.msra.mxu0 %v193
  %284 = vmatprep.subr.mxu0 0.0
  %285 = vmatpush1.msra.mxu0 %v194
  %286 = vmatprep.subr.mxu0 0.0
  %287 = vmatpush1.msra.mxu0 %v195
  %288 = vmatprep.subr.mxu0 0.0
  %289 = vmatpush1.msra.mxu0 %v196
  %290 = vmatprep.subr.mxu0 0.0
  %291 = vmatpush1.msra.mxu0 %v197
  %292 = vmatprep.subr.mxu0 0.0
  %293 = vmatpush1.msra.mxu0 %v198
  %294 = vmatprep.subr.mxu0 0.0
  %295 = vmatpush1.msra.mxu0 %v199
  %296 = vmatprep.mubr.f32.mxu0 %v69
  %297 = vmatmul.mubr.f32.gmra.mrb[0].mxu0 %v68
  %v298 = vpop.f32.mrb[0].mxu0
  %v299 = vadd.f32 0.0, %v298
  %v300 = vpop.f32.mrb[0].mxu0
  %301 = vmatprep.mubr.f32.mxu0 %v73
  %302 = vmatmul.mubr.f32.gmra.mrb[0].mxu0 %v72
  %v303 = vpop.f32.mrb[0].mxu0
  %v304 = vadd.f32 0.0, %v303
  %v305 = vpop.f32.mrb[0].mxu0
  %306 = vmatprep.mubr.f32.mxu0 %v77
  %307 = vmatmul.mubr.f32.gmra.mrb[0].mxu0 %v76
  %v308 = vpop.f32.mrb[0].mxu0
  %v309 = vadd.f32 0.0, %v308
  %v310 = vpop.f32.mrb[0].mxu0
  %311 = vmatprep.mubr.f32.mxu0 %v81
  %312 = vmatmul.mubr.f32.gmra.mrb[0].mxu0 %v80
  %v313 = vpop.f32.mrb[0].mxu0
  %v314 = vadd.f32 0.0, %v313
  %v315 = vpop.f32.mrb[0].mxu0
  %316 = vmatprep.mubr.f32.mxu0 %v85
  %317 = vmatmul.mubr.f32.gmra.mrb[0].mxu0 %v84
  %v318 = vpop.f32.mrb[0].mxu0
  %v319 = vadd.f32 0.0, %v318
  %v320 = vpop.f32.mrb[0].mxu0
  %321 = vmatprep.mubr.f32.mxu0 %v89
  %322 = vmatmul.mubr.f32.gmra.mrb[0].mxu0 %v88
  %v323 = vpop.f32.mrb[0].mxu0
  %v324 = vadd.f32 0.0, %v323
  %v325 = vpop.f32.mrb[0].mxu0
  %326 = vmatprep.mubr.f32.mxu0 %v93
  %327 = vmatmul.mubr.f32.gmra.mrb[0].mxu0 %v92
  %v328 = vpop.f32.mrb[0].mxu0
  %v329 = vadd.f32 0.0, %v328
  %v330 = vpop.f32.mrb[0].mxu0
  %331 = vmatprep.mubr.f32.mxu0 %v97
  %332 = vmatmul.mubr.f32.gmra.mrb[0].mxu0 %v96
  %v333 = vpop.f32.mrb[0].mxu0
  %v334 = vadd.f32 0.0, %v333
  %v335 = vpop.f32.mrb[0].mxu0
  %336 = vmatprep.mubr.f32.mxu0 %v101
  %337 = vmatmul.mubr.f32.gmra.mrb[0].mxu0 %v100
  %v338 = vpop.f32.mrb[0].mxu0
  %v339 = vadd.f32 0.0, %v338
  %v340 = vpop.f32.mrb[0].mxu0
  %341 = vmatprep.mubr.f32.mxu0 %v105
  %342 = vmatmul.mubr.f32.gmra.mrb[0].mxu0 %v104
  %v343 = vpop.f32.mrb[0].mxu0
  %v344 = vadd.f32 0.0, %v343
  %v345 = vpop.f32.mrb[0].mxu0
  %346 = vmatprep.mubr.f32.mxu0 %v109
  %347 = vmatmul.mubr.f32.gmra.mrb[0].mxu0 %v108
  %v348 = vpop.f32.mrb[0].mxu0
  %v349 = vadd.f32 0.0, %v348
  %v350 = vpop.f32.mrb[0].mxu0
  %351 = vmatprep.mubr.f32.mxu0 %v113
  %352 = vmatmul.mubr.f32.gmra.mrb[0].mxu0 %v112
  %v353 = vpop.f32.mrb[0].mxu0
  %v354 = vadd.f32 0.0, %v353
  %v355 = vpop.f32.mrb[0].mxu0
  %356 = vmatprep.mubr.f32.mxu0 %v117
  %357 = vmatmul.mubr.f32.gmra.mrb[0].mxu0 %v116
  %v358 = vpop.f32.mrb[0].mxu0
  %v359 = vadd.f32 0.0, %v358
  %v360 = vpop.f32.mrb[0].mxu0
  %361 = vmatprep.mubr.f32.mxu0 %v121
  %362 = vmatmul.mubr.f32.gmra.mrb[0].mxu0 %v120
  %v363 = vpop.f32.mrb[0].mxu0
  %v364 = vadd.f32 0.0, %v363
  %v365 = vpop.f32.mrb[0].mxu0
  %366 = vmatprep.mubr.f32.mxu0 %v125
  %367 = vmatmul.mubr.f32.gmra.mrb[0].mxu0 %v124
  %v368 = vpop.f32.mrb[0].mxu0
  %v369 = vadd.f32 0.0, %v368
  %v370 = vpop.f32.mrb[0].mxu0
  %371 = vmatprep.mubr.f32.mxu0 %v129
  %372 = vmatmul.mubr.f32.gmra.mrb[0].mxu0 %v128
  %v373 = vpop.f32.mrb[0].mxu0
  %v374 = vadd.f32 0.0, %v373
  %v375 = vpop.f32.mrb[0].mxu0
  %376 = vmatprep.mubr.f32.mxu0 %v133
  %377 = vmatmul.mubr.f32.gmra.mrb[0].mxu0 %v132
  %v378 = vpop.f32.mrb[0].mxu0
  %v379 = vadd.f32 0.0, %v378
  %v380 = vpop.f32.mrb[0].mxu0
  %381 = vmatprep.mubr.f32.mxu0 %v137
  %382 = vmatmul.mubr.f32.gmra.mrb[0].mxu0 %v136
  %v383 = vpop.f32.mrb[0].mxu0
  %v384 = vadd.f32 0.0, %v383
  %v385 = vpop.f32.mrb[0].mxu0
  %386 = vmatprep.mubr.f32.mxu0 %v141
  %387 = vmatmul.mubr.f32.gmra.mrb[0].mxu0 %v140
  %v388 = vpop.f32.mrb[0].mxu0
  %v389 = vadd.f32 0.0, %v388
  %v390 = vpop.f32.mrb[0].mxu0
  %391 = vmatprep.mubr.f32.mxu0 %v145
  %392 = vmatmul.mubr.f32.gmra.mrb[0].mxu0 %v144
  %v393 = vpop.f32.mrb[0].mxu0
  %v394 = vadd.f32 0.0, %v393
  %v395 = vpop.f32.mrb[0].mxu0
  %396 = vmatprep.mubr.f32.mxu0 %v149
  %397 = vmatmul.mubr.f32.gmra.mrb[0].mxu0 %v148
  %v398 = vpop.f32.mrb[0].mxu0
  %v399 = vadd.f32 0.0, %v398
  %v400 = vpop.f32.mrb[0].mxu0
  %401 = vmatprep.mubr.f32.mxu0 %v153
  %402 = vmatmul.mubr.f32.gmra.mrb[0].mxu0 %v152
  %v403 = vpop.f32.mrb[0].mxu0
  %v404 = vadd.f32 0.0, %v403
  %v405 = vpop.f32.mrb[0].mxu0
  %406 = vmatprep.mubr.f32.mxu0 %v157
  %407 = vmatmul.mubr.f32.gmra.mrb[0].mxu0 %v156
  %v408 = vpop.f32.mrb[0].mxu0
  %v409 = vadd.f32 0.0, %v408
  %v410 = vpop.f32.mrb[0].mxu0
  %411 = vmatprep.mubr.f32.mxu0 %v161
  %412 = vmatmul.mubr.f32.gmra.mrb[0].mxu0 %v160
  %v413 = vpop.f32.mrb[0].mxu0
  %v414 = vadd.f32 0.0, %v413
  %v415 = vpop.f32.mrb[0].mxu0
  %416 = vmatprep.mubr.f32.mxu0 %v165
  %417 = vmatmul.mubr.f32.gmra.mrb[0].mxu0 %v164
  %v418 = vpop.f32.mrb[0].mxu0
  %v419 = vadd.f32 0.0, %v418
  %v420 = vpop.f32.mrb[0].mxu0
  %421 = vdwg.mxu0
  %422 = vmatprep.subr.mxu0 0.0
  %423 = vmatpush1.msra.mxu0 %v200
  %424 = vmatprep.subr.mxu0 0.0
  %425 = vmatpush1.msra.mxu0 %v201
  %426 = vmatprep.subr.mxu0 0.0
  %427 = vmatpush1.msra.mxu0 %v202
  %428 = vmatprep.subr.mxu0 0.0
  %429 = vmatpush1.msra.mxu0 %v203
  %430 = vmatprep.subr.mxu0 0.0
  %431 = vmatpush1.msra.mxu0 %v204
  %432 = vmatprep.subr.mxu0 0.0
  %433 = vmatpush1.msra.mxu0 %v205
  %434 = vmatprep.subr.mxu0 0.0
  %435 = vmatpush1.msra.mxu0 %v206
  %436 = vmatprep.subr.mxu0 0.0
  %437 = vmatpush1.msra.mxu0 %v207
  %438 = vmatprep.subr.mxu0 0.0
  %439 = vmatpush1.msra.mxu0 %v208
  %440 = vmatprep.subr.mxu0 0.0
  %441 = vmatpush1.msra.mxu0 %v209
  %442 = vmatprep.subr.mxu0 0.0
  %443 = vmatpush1.msra.mxu0 %v210
  %444 = vmatprep.subr.mxu0 0.0
  %445 = vmatpush1.msra.mxu0 %v211
  %446 = vmatprep.subr.mxu0 0.0
  %447 = vmatpush1.msra.mxu0 %v212
  %448 = vmatprep.subr.mxu0 0.0
  %449 = vmatpush1.msra.mxu0 %v213
  %450 = vmatprep.subr.mxu0 0.0
  %451 = vmatpush1.msra.mxu0 %v214
  %452 = vmatprep.subr.mxu0 0.0
  %453 = vmatpush1.msra.mxu0 %v215
  %454 = vmatprep.subr.mxu0 0.0
  %455 = vmatpush1.msra.mxu0 %v216
  %456 = vmatprep.subr.mxu0 0.0
  %457 = vmatpush1.msra.mxu0 %v217
  %458 = vmatprep.subr.mxu0 0.0
  %459 = vmatpush1.msra.mxu0 %v218
  %460 = vmatprep.subr.mxu0 0.0
  %461 = vmatpush1.msra.mxu0 %v219
  %462 = vmatprep.subr.mxu0 0.0
  %463 = vmatpush1.msra.mxu0 %v220
  %464 = vmatprep.subr.mxu0 0.0
  %465 = vmatpush1.msra.mxu0 %v221
  %466 = vmatprep.subr.mxu0 0.0
  %467 = vmatpush1.msra.mxu0 %v222
  %468 = vmatprep.subr.mxu0 0.0
  %469 = vmatpush1.msra.mxu0 %v223
  %470 = vmatprep.subr.mxu0 0.0
  %471 = vmatpush1.msra.mxu0 %v224
  %472 = vmatprep.subr.mxu0 0.0
  %473 = vmatpush1.msra.mxu0 %v225
  %474 = vmatprep.subr.mxu0 0.0
  %475 = vmatpush1.msra.mxu0 %v226
  %476 = vmatprep.subr.mxu0 0.0
  %477 = vmatpush1.msra.mxu0 %v227
  %478 = vmatprep.subr.mxu0 0.0
  %479 = vmatpush1.msra.mxu0 %v228
  %480 = vmatprep.subr.mxu0 0.0
  %481 = vmatpush1.msra.mxu0 %v229
  %482 = vmatprep.subr.mxu0 0.0
  %483 = vmatpush1.msra.mxu0 %v230
  %484 = vmatprep.subr.mxu0 0.0
  %485 = vmatpush1.msra.mxu0 %v231
  %486 = vmatprep.mubr.f32.mxu0 %v71
  %487 = vmatmul.mubr.f32.gmra.mrb[0].mxu0 %v70
  %v488 = vpop.f32.mrb[0].mxu0
  %v489 = vadd.f32 %v299, %v488
  %v490 = vpop.f32.mrb[0].mxu0
  %491 = vmatprep.mubr.f32.mxu0 %v75
  %492 = vmatmul.mubr.f32.gmra.mrb[0].mxu0 %v74
  %v493 = vpop.f32.mrb[0].mxu0
  %v494 = vadd.f32 %v304, %v493
  %v495 = vpop.f32.mrb[0].mxu0
  %496 = vmatprep.mubr.f32.mxu0 %v79
  %497 = vmatmul.mubr.f32.gmra.mrb[0].mxu0 %v78
  %v498 = vpop.f32.mrb[0].mxu0
  %v499 = vadd.f32 %v309, %v498
  %v500 = vpop.f32.mrb[0].mxu0
  %501 = vmatprep.mubr.f32.mxu0 %v83
  %502 = vmatmul.mubr.f32.gmra.mrb[0].mxu0 %v82
  %v503 = vpop.f32.mrb[0].mxu0
  %v504 = vadd.f32 %v314, %v503
  %v505 = vpop.f32.mrb[0].mxu0
  %506 = vmatprep.mubr.f32.mxu0 %v87
  %507 = vmatmul.mubr.f32.gmra.mrb[0].mxu0 %v86
  %v508 = vpop.f32.mrb[0].mxu0
  %v509 = vadd.f32 %v319, %v508
  %v510 = vpop.f32.mrb[0].mxu0
  %511 = vmatprep.mubr.f32.mxu0 %v91
  %512 = vmatmul.mubr.f32.gmra.mrb[0].mxu0 %v90
  %v513 = vpop.f32.mrb[0].mxu0
  %v514 = vadd.f32 %v324, %v513
  %v515 = vpop.f32.mrb[0].mxu0
  %516 = vmatprep.mubr.f32.mxu0 %v95
  %517 = vmatmul.mubr.f32.gmra.mrb[0].mxu0 %v94
  %v518 = vpop.f32.mrb[0].mxu0
  %v519 = vadd.f32 %v329, %v518
  %v520 = vpop.f32.mrb[0].mxu0
  %521 = vmatprep.mubr.f32.mxu0 %v99
  %522 = vmatmul.mubr.f32.gmra.mrb[0].mxu0 %v98
  %v523 = vpop.f32.mrb[0].mxu0
  %v524 = vadd.f32 %v334, %v523
  %v525 = vpop.f32.mrb[0].mxu0
  %526 = vmatprep.mubr.f32.mxu0 %v103
  %527 = vmatmul.mubr.f32.gmra.mrb[0].mxu0 %v102
  %v528 = vpop.f32.mrb[0].mxu0
  %v529 = vadd.f32 %v339, %v528
  %v530 = vpop.f32.mrb[0].mxu0
  %531 = vmatprep.mubr.f32.mxu0 %v107
  %532 = vmatmul.mubr.f32.gmra.mrb[0].mxu0 %v106
  %v533 = vpop.f32.mrb[0].mxu0
  %v534 = vadd.f32 %v344, %v533
  %v535 = vpop.f32.mrb[0].mxu0
  %536 = vmatprep.mubr.f32.mxu0 %v111
  %537 = vmatmul.mubr.f32.gmra.mrb[0].mxu0 %v110
  %v538 = vpop.f32.mrb[0].mxu0
  %v539 = vadd.f32 %v349, %v538
  %v540 = vpop.f32.mrb[0].mxu0
  %541 = vmatprep.mubr.f32.mxu0 %v115
  %542 = vmatmul.mubr.f32.gmra.mrb[0].mxu0 %v114
  %v543 = vpop.f32.mrb[0].mxu0
  %v544 = vadd.f32 %v354, %v543
  %v545 = vpop.f32.mrb[0].mxu0
  %546 = vmatprep.mubr.f32.mxu0 %v119
  %547 = vmatmul.mubr.f32.gmra.mrb[0].mxu0 %v118
  %v548 = vpop.f32.mrb[0].mxu0
  %v549 = vadd.f32 %v359, %v548
  %v550 = vpop.f32.mrb[0].mxu0
  %551 = vmatprep.mubr.f32.mxu0 %v123
  %552 = vmatmul.mubr.f32.gmra.mrb[0].mxu0 %v122
  %v553 = vpop.f32.mrb[0].mxu0
  %v554 = vadd.f32 %v364, %v553
  %v555 = vpop.f32.mrb[0].mxu0
  %556 = vmatprep.mubr.f32.mxu0 %v127
  %557 = vmatmul.mubr.f32.gmra.mrb[0].mxu0 %v126
  %v558 = vpop.f32.mrb[0].mxu0
  %v559 = vadd.f32 %v369, %v558
  %v560 = vpop.f32.mrb[0].mxu0
  %561 = vmatprep.mubr.f32.mxu0 %v131
  %562 = vmatmul.mubr.f32.gmra.mrb[0].mxu0 %v130
  %v563 = vpop.f32.mrb[0].mxu0
  %v564 = vadd.f32 %v374, %v563
  %v565 = vpop.f32.mrb[0].mxu0
  %566 = vmatprep.mubr.f32.mxu0 %v135
  %567 = vmatmul.mubr.f32.gmra.mrb[0].mxu0 %v134
  %v568 = vpop.f32.mrb[0].mxu0
  %v569 = vadd.f32 %v379, %v568
  %v570 = vpop.f32.mrb[0].mxu0
  %571 = vmatprep.mubr.f32.mxu0 %v139
  %572 = vmatmul.mubr.f32.gmra.mrb[0].mxu0 %v138
  %v573 = vpop.f32.mrb[0].mxu0
  %v574 = vadd.f32 %v384, %v573
  %v575 = vpop.f32.mrb[0].mxu0
  %576 = vmatprep.mubr.f32.mxu0 %v143
  %577 = vmatmul.mubr.f32.gmra.mrb[0].mxu0 %v142
  %v578 = vpop.f32.mrb[0].mxu0
  %v579 = vadd.f32 %v389, %v578
  %v580 = vpop.f32.mrb[0].mxu0
  %581 = vmatprep.mubr.f32.mxu0 %v147
  %582 = vmatmul.mubr.f32.gmra.mrb[0].mxu0 %v146
  %v583 = vpop.f32.mrb[0].mxu0
  %v584 = vadd.f32 %v394, %v583
  %v585 = vpop.f32.mrb[0].mxu0
  %586 = vmatprep.mubr.f32.mxu0 %v151
  %587 = vmatmul.mubr.f32.gmra.mrb[0].mxu0 %v150
  %v588 = vpop.f32.mrb[0].mxu0
  %v589 = vadd.f32 %v399, %v588
  %v590 = vpop.f32.mrb[0].mxu0
  %591 = vmatprep.mubr.f32.mxu0 %v155
  %592 = vmatmul.mubr.f32.gmra.mrb[0].mxu0 %v154
  %v593 = vpop.f32.mrb[0].mxu0
  %v594 = vadd.f32 %v404, %v593
  %v595 = vpop.f32.mrb[0].mxu0
  %596 = vmatprep.mubr.f32.mxu0 %v159
  %597 = vmatmul.mubr.f32.gmra.mrb[0].mxu0 %v158
  %v598 = vpop.f32.mrb[0].mxu0
  %v599 = vadd.f32 %v409, %v598
  %v600 = vpop.f32.mrb[0].mxu0
  %601 = vmatprep.mubr.f32.mxu0 %v163
  %602 = vmatmul.mubr.f32.gmra.mrb[0].mxu0 %v162
  %v603 = vpop.f32.mrb[0].mxu0
  %v604 = vadd.f32 %v414, %v603
  %v605 = vpop.f32.mrb[0].mxu0
  %606 = vmatprep.mubr.f32.mxu0 %v167
  %607 = vmatmul.mubr.f32.gmra.mrb[0].mxu0 %v166
  %v608 = vpop.f32.mrb[0].mxu0
  %v609 = vadd.f32 %v419, %v608
  %v610 = vpop.f32.mrb[0].mxu0
  %611 = vdwg.mxu0
  %v612 = vadd.f32 %v43, %v489
  %v613 = vadd.f32 %v44, %v494
  %v614 = vadd.f32 %v45, %v499
  %v615 = vadd.f32 %v46, %v504
  %v616 = vadd.f32 %v47, %v509
  %v617 = vadd.f32 %v48, %v514
  %v618 = vadd.f32 %v49, %v519
  %v619 = vadd.f32 %v50, %v524
  %v620 = vadd.f32 %v51, %v529
  %v621 = vadd.f32 %v52, %v534
  %v622 = vadd.f32 %v53, %v539
  %v623 = vadd.f32 %v54, %v544
  %v624 = vadd.f32 %v55, %v549
  %v625 = vadd.f32 %v56, %v554
  %v626 = vadd.f32 %v57, %v559
  %v627 = vadd.f32 %v58, %v564
  %v628 = vadd.f32 %v59, %v569
  %v629 = vadd.f32 %v60, %v574
  %v630 = vadd.f32 %v61, %v579
  %v631 = vadd.f32 %v62, %v584
  %v632 = vadd.f32 %v63, %v589
  %v633 = vadd.f32 %v64, %v594
  %v634 = vadd.f32 %v65, %v599
  %v635 = vadd.f32 %v66, %v604
  %v636 = vadd.f32 %v67, %v609
  %637 = vst [vmem:[#allocation2] sm:$0xff] %v612
  %638 = vst [vmem:[#allocation2 + $0x8] sm:$0xff] %v613
  %639 = vst [vmem:[#allocation2 + $0x10] sm:$0xff] %v614
  %640 = vst [vmem:[#allocation2 + $0x18] sm:$0xff] %v615
  %641 = vst [vmem:[#allocation2 + $0x20] sm:$0xff] %v616
  %642 = vst [vmem:[#allocation2 + $0x28] sm:$0xff] %v617
  %643 = vst [vmem:[#allocation2 + $0x30] sm:$0xff] %v618
  %644 = vst [vmem:[#allocation2 + $0x38] sm:$0xff] %v619
  %645 = vst [vmem:[#allocation2 + $0x40] sm:$0xff] %v620
  %646 = vst [vmem:[#allocation2 + $0x48] sm:$0xff] %v621
  %647 = vst [vmem:[#allocation2 + $0x50] sm:$0xff] %v622
  %648 = vst [vmem:[#allocation2 + $0x58] sm:$0xff] %v623
  %649 = vst [vmem:[#allocation2 + $0x60] sm:$0xff] %v624
  %650 = vst [vmem:[#allocation2 + $0x68] sm:$0xff] %v625
  %651 = vst [vmem:[#allocation2 + $0x70] sm:$0xff] %v626
  %652 = vst [vmem:[#allocation2 + $0x78] sm:$0xff] %v627
  %653 = vst [vmem:[#allocation2 + $0x80] sm:$0xff] %v628
  %654 = vst [vmem:[#allocation2 + $0x88] sm:$0xff] %v629
  %655 = vst [vmem:[#allocation2 + $0x90] sm:$0xff] %v630
  %656 = vst [vmem:[#allocation2 + $0x98] sm:$0xff] %v631
  %657 = vst [vmem:[#allocation2 + $0xa0] sm:$0xff] %v632
  %658 = vst [vmem:[#allocation2 + $0xa8] sm:$0xff] %v633
  %659 = vst [vmem:[#allocation2 + $0xb0] sm:$0xff] %v634
  %660 = vst [vmem:[#allocation2 + $0xb8] sm:$0xff] %v635
  %661 = vst [vmem:[#allocation2 + $0xc0] sm:$0xff] %v636
  // Predicated region
  $region18: #{cnn_forward.8} parent=0 // pred_check
    %p662 = pneg %p14
  $region19: #{cnn_forward.8} parent=0 // pred_check_branch
    %664 = sbr.rel (%p662) target = $region21
  $region20: #{cnn_forward.8} parent=0 // pred_region
    %v665 = vld [vmem:[#allocation2] sm:$0xff]
    %v666 = vld [vmem:[#allocation2 + $0x8] sm:$0xff]
    %v667 = vld [vmem:[#allocation2 + $0x10] sm:$0xff]
    %v668 = vld [vmem:[#allocation2 + $0x18] sm:$0xff]
    %v669 = vld [vmem:[#allocation2 + $0x20] sm:$0xff]
    %v670 = vld [vmem:[#allocation2 + $0x28] sm:$0xff]
    %v671 = vld [vmem:[#allocation2 + $0x30] sm:$0xff]
    %v672 = vld [vmem:[#allocation2 + $0x38] sm:$0xff]
    %v673 = vld [vmem:[#allocation2 + $0x40] sm:$0xff]
    %v674 = vld [vmem:[#allocation2 + $0x48] sm:$0xff]
    %v675 = vld [vmem:[#allocation2 + $0x50] sm:$0xff]
    %v676 = vld [vmem:[#allocation2 + $0x58] sm:$0xff]
    %v677 = vld [vmem:[#allocation2 + $0x60] sm:$0xff]
    %v678 = vld [vmem:[#allocation2 + $0x68] sm:$0xff]
    %v679 = vld [vmem:[#allocation2 + $0x70] sm:$0xff]
    %v680 = vld [vmem:[#allocation2 + $0x78] sm:$0xff]
    %v681 = vld [vmem:[#allocation2 + $0x80] sm:$0xff]
    %v682 = vld [vmem:[#allocation2 + $0x88] sm:$0xff]
    %v683 = vld [vmem:[#allocation2 + $0x90] sm:$0xff]
    %v684 = vld [vmem:[#allocation2 + $0x98] sm:$0xff]
    %v685 = vld [vmem:[#allocation2 + $0xa0] sm:$0xff]
    %v686 = vld [vmem:[#allocation2 + $0xa8] sm:$0xff]
    %v687 = vld [vmem:[#allocation2 + $0xb0] sm:$0xff]
    %v688 = vld [vmem:[#allocation2 + $0xb8] sm:$0xff]
    %v689 = vld [vmem:[#allocation2 + $0xc0] sm:$0xff]
    %v690 = vld [vmem:[%s2] sm:$0x1]
    %v692 = vlaneseq
    %v693 = vshrl.u32 %v692, 7
    %v694 = vsub.s32 0, %v693
    %v695 = vrot.slane %v690, %v694
    %v697 = vadd.f32 %v665, %v695
    %v698 = vadd.f32 %v666, %v695
    %v699 = vadd.f32 %v667, %v695
    %v700 = vadd.f32 %v668, %v695
    %v701 = vadd.f32 %v669, %v695
    %v702 = vadd.f32 %v670, %v695
    %v703 = vadd.f32 %v671, %v695
    %v704 = vadd.f32 %v672, %v695
    %v705 = vadd.f32 %v673, %v695
    %v706 = vadd.f32 %v674, %v695
    %v707 = vadd.f32 %v675, %v695
    %v708 = vadd.f32 %v676, %v695
    %v709 = vadd.f32 %v677, %v695
    %v710 = vadd.f32 %v678, %v695
    %v711 = vadd.f32 %v679, %v695
    %v712 = vadd.f32 %v680, %v695
    %v713 = vadd.f32 %v681, %v695
    %v714 = vadd.f32 %v682, %v695
    %v715 = vadd.f32 %v683, %v695
    %v716 = vadd.f32 %v684, %v695
    %v717 = vadd.f32 %v685, %v695
    %v718 = vadd.f32 %v686, %v695
    %v719 = vadd.f32 %v687, %v695
    %v720 = vadd.f32 %v688, %v695
    %v721 = vadd.f32 %v689, %v695
    %v722 = vmax.f32 %v697, 0.0
    %v723 = vmax.f32 %v698, 0.0
    %v724 = vmax.f32 %v699, 0.0
    %v725 = vmax.f32 %v700, 0.0
    %v726 = vmax.f32 %v701, 0.0
    %v727 = vmax.f32 %v702, 0.0
    %v728 = vmax.f32 %v703, 0.0
    %v729 = vmax.f32 %v704, 0.0
    %v730 = vmax.f32 %v705, 0.0
    %v731 = vmax.f32 %v706, 0.0
    %v732 = vmax.f32 %v707, 0.0
    %v733 = vmax.f32 %v708, 0.0
    %v734 = vmax.f32 %v709, 0.0
    %v735 = vmax.f32 %v710, 0.0
    %v736 = vmax.f32 %v711, 0.0
    %v737 = vmax.f32 %v712, 0.0
    %v738 = vmax.f32 %v713, 0.0
    %v739 = vmax.f32 %v714, 0.0
    %v740 = vmax.f32 %v715, 0.0
    %v741 = vmax.f32 %v716, 0.0
    %v742 = vmax.f32 %v717, 0.0
    %v743 = vmax.f32 %v718, 0.0
    %v744 = vmax.f32 %v719, 0.0
    %v745 = vmax.f32 %v720, 0.0
    %v746 = vmax.f32 %v721, 0.0
    %747 = vst [vmem:[%s3] sm:$0xff] %v722
    %748 = vst [vmem:[%s3 + $0x8] sm:$0xff] %v723
    %749 = vst [vmem:[%s3 + $0x10] sm:$0xff] %v724
    %750 = vst [vmem:[%s3 + $0x18] sm:$0xff] %v725
    %751 = vst [vmem:[%s3 + $0x20] sm:$0xff] %v726
    %752 = vst [vmem:[%s3 + $0x28] sm:$0xff] %v727
    %753 = vst [vmem:[%s3 + $0x30] sm:$0xff] %v728
    %754 = vst [vmem:[%s3 + $0x38] sm:$0xff] %v729
    %755 = vst [vmem:[%s3 + $0x40] sm:$0xff] %v730
    %756 = vst [vmem:[%s3 + $0x48] sm:$0xff] %v731
    %757 = vst [vmem:[%s3 + $0x50] sm:$0xff] %v732
    %758 = vst [vmem:[%s3 + $0x58] sm:$0xff] %v733
    %759 = vst [vmem:[%s3 + $0x60] sm:$0xff] %v734
    %760 = vst [vmem:[%s3 + $0x68] sm:$0xff] %v735
    %761 = vst [vmem:[%s3 + $0x70] sm:$0xff] %v736
    %762 = vst [vmem:[%s3 + $0x78] sm:$0xff] %v737
    %763 = vst [vmem:[%s3 + $0x80] sm:$0xff] %v738
    %764 = vst [vmem:[%s3 + $0x88] sm:$0xff] %v739
    %765 = vst [vmem:[%s3 + $0x90] sm:$0xff] %v740
    %766 = vst [vmem:[%s3 + $0x98] sm:$0xff] %v741
    %767 = vst [vmem:[%s3 + $0xa0] sm:$0xff] %v742
    %768 = vst [vmem:[%s3 + $0xa8] sm:$0xff] %v743
    %769 = vst [vmem:[%s3 + $0xb0] sm:$0xff] %v744
    %770 = vst [vmem:[%s3 + $0xb8] sm:$0xff] %v745
    %771 = vst [vmem:[%s3 + $0xc0] sm:$0xff] %v746
  $region21: #{cnn_forward.8} parent=0 // pred_fallthru
    _
  // Predicated region
  $region22: #{cnn_forward.8} parent=0 // pred_check
    _
  $region23: #{cnn_forward.8} parent=0 // pred_check_branch
    %773 = sbr.rel (0) target = $region25
  $region24: #{cnn_forward.8} parent=0 // pred_region
    _
  $region25: #{cnn_forward.8} parent=0 // pred_fallthru
    _
  // Predicated region
  $region26: #{cnn_forward.8} parent=0 // pred_check
    _
  $region27: #{cnn_forward.8} parent=0 // pred_check_branch
    %775 = sbr.rel (0) target = $region29
  $region28: #{cnn_forward.8} parent=0 // pred_region
    _
  $region29: #{cnn_forward.8} parent=0 // pred_fallthru
    _

// kernel: cnn_forward.9
$region0: #{cnn_forward.9}
  #allocation0 [shape = 'u32[]', space=smem, size = 0x4, offset = 0x4, fixed_abs, tag = 'smem constant byte address 0x4 - core index']
  #allocation1 [shape = 'u32[144,128]{1,0:T(1,128)}', space=vmem, size = 0x12000, scoped, tag = 'internal scratch']
  #allocation2 [shape = 'f32[72,128]{1,0:T(8,128)}', space=vmem, size = 0x9000, scoped, tag = 'scratch operand']
  %s0 = inlined_call_operand.vmem [shape: f32[72,1664], index: 0, kind: input, shape index: {}]
  %s1 = inlined_call_operand.vmem [shape: f32[1664,128], index: 1, kind: input, shape index: {}]
  %s2 = inlined_call_operand.vmem [shape: f32[1,128], index: 2, kind: input, shape index: {}]
  %s3 = inlined_call_operand.vmem [shape: f32[72,128], index: 3, kind: output, shape index: {}]
  %s4 = sld [smem:[#allocation0]]
  $region91: #{cnn_forward.9} parent=0
    _
  %s6 = ssub.s32 1, %s4
  %s7 = scalar_select 0, %s6, %s4
  $region1: #{cnn_forward.9} parent=0
    #allocation3 [shape = 'u8[73728]{0}', space=vmem, size = 0x12000, scoped, tag = 'input window, operand 0']
    loop: start=0, step=1, limit=15
    $region2: #{cnn_forward.9} parent=1 // loop_pre_header
      _
    $region3: #{cnn_forward.9} parent=1 // loop_header
      %s9 = sphi 0, %s13
      %p10 = scmp.ge.s32.totalorder %s9, 15
      %s16 = sphi 0, %s35
      %s17 = sphi 0, %s31
      %s18 = sphi 0, %s27
      %s19 = sphi 0, %s16
      %s20 = sphi 0, %s17
      %s21 = sphi 0, %s18
      %s22 = sphi 0, %s19
      %s23 = sphi 0, %s20
      %s24 = sphi 0, %s21
      %s40 = sphi 0, %s42
      %s43 = sphi 0, %s40
      %s44 = sphi 0, %s43
      %s60 = sphi 0, %s44
      %s68 = sphi 0, %s70
      %s71 = sphi 0, %s68
      %s72 = sphi 0, %s71
      %s88 = sphi 0, %s72
      %s94 = sphi 0, %s96
      %s97 = sphi 0, %s94
      %s98 = sphi 0, %s97
      %s114 = sphi 0, %s98
      %s122 = sphi 0, %s124
      %s125 = sphi 0, %s122
      %s126 = sphi 0, %s125
      %s142 = sphi 0, %s126
    $region4: #{cnn_forward.9} parent=1 // loop_header_branch
      %12 = sbr.rel (%p10) target = $region8
    $region5: #{cnn_forward.9} parent=1 // loop_body
      %s14 = ssub.s32 %s9, 1
      %s15 = ssub.s32 %s9, 2
      %s25 = sadd.s32 1, %s18
      %p26 = scmp.ge.s32.totalorder %s25, 13
      %s27 = scalar_select %p26, 0, %s25
      %s28 = sadd.s32 1, %s17
      %s29 = scalar_select %p26, %s28, %s17
      %p30 = scmp.ge.s32.totalorder %s29, 1
      %s31 = scalar_select %p30, 0, %s29
      %s32 = sadd.s32 1, %s16
      %s33 = scalar_select %p30, %s32, %s16
      %p34 = scmp.ge.s32.totalorder %s33, 1
      %s35 = scalar_select %p34, 0, %s33
      %s36 = ssub.s32 %s16, %s35
      %s37 = ssub.s32 %s18, %s27
      %s38 = sor.u32 %s36, %s37
      %p39 = scmp.eq.s32.totalorder %s38, 0
      %s41 = sadd.s32 %s40, 1
      %s42 = scalar_select %p39, %s40, %s41
      %p45 = pneg %p39
      %p46 = scmp.eq.s32.totalorder %s9, 12
      %p47 = por %p45, %p46
      %p48 = scmp.ne.s32.totalorder %s40, %s43
      %p49 = scmp.eq.s32.totalorder %s9, 0
      %p50 = por %p48, %p49
      %p51 = scmp.ne.s32.totalorder %s40, %s43
      %p52 = scmp.eq.s32.totalorder %s14, 12
      %p53 = por %p51, %p52
      %p54 = scmp.ne.s32.totalorder %s43, %s44
      %p55 = scmp.eq.s32.totalorder %s14, 0
      %p56 = por %p54, %p55
      %p57 = scmp.ne.s32.totalorder %s43, %s44
      %p58 = scmp.eq.s32.totalorder %s15, 12
      %p59 = por %p57, %p58
      %p61 = scmp.ne.s32.totalorder %s44, %s60
      %p62 = scmp.eq.s32.totalorder %s15, 0
      %p63 = por %p61, %p62
      %s64 = ssub.s32 %s18, %s27
      %s65 = ssub.s32 %s17, %s31
      %s66 = sor.u32 %s64, %s65
      %p67 = scmp.eq.s32.totalorder %s66, 0
      %s69 = sadd.s32 %s68, 1
      %s70 = scalar_select %p67, %s68, %s69
      %p73 = pneg %p67
      %p74 = scmp.eq.s32.totalorder %s9, 12
      %p75 = por %p73, %p74
      %p76 = scmp.ne.s32.totalorder %s68, %s71
      %p77 = scmp.eq.s32.totalorder %s9, 0
      %p78 = por %p76, %p77
      %p79 = scmp.ne.s32.totalorder %s68, %s71
      %p80 = scmp.eq.s32.totalorder %s14, 12
      %p81 = por %p79, %p80
      %p82 = scmp.ne.s32.totalorder %s71, %s72
      %p83 = scmp.eq.s32.totalorder %s14, 0
      %p84 = por %p82, %p83
      %p85 = scmp.ne.s32.totalorder %s71, %s72
      %p86 = scmp.eq.s32.totalorder %s15, 12
      %p87 = por %p85, %p86
      %p89 = scmp.ne.s32.totalorder %s72, %s88
      %p90 = scmp.eq.s32.totalorder %s15, 0
      %p91 = por %p89, %p90
      %s92 = ssub.s32 %s17, %s31
      %p93 = scmp.eq.s32.totalorder %s92, 0
      %s95 = sadd.s32 %s94, 1
      %s96 = scalar_select %p93, %s94, %s95
      %p99 = pneg %p93
      %p100 = scmp.eq.s32.totalorder %s9, 12
      %p101 = por %p99, %p100
      %p102 = scmp.ne.s32.totalorder %s94, %s97
      %p103 = scmp.eq.s32.totalorder %s9, 0
      %p104 = por %p102, %p103
      %p105 = scmp.ne.s32.totalorder %s94, %s97
      %p106 = scmp.eq.s32.totalorder %s14, 12
      %p107 = por %p105, %p106
      %p108 = scmp.ne.s32.totalorder %s97, %s98
      %p109 = scmp.eq.s32.totalorder %s14, 0
      %p110 = por %p108, %p109
      %p111 = scmp.ne.s32.totalorder %s97, %s98
      %p112 = scmp.eq.s32.totalorder %s15, 12
      %p113 = por %p111, %p112
      %p115 = scmp.ne.s32.totalorder %s98, %s114
      %p116 = scmp.eq.s32.totalorder %s15, 0
      %p117 = por %p115, %p116
      %s118 = ssub.s32 %s16, %s35
      %s119 = ssub.s32 %s17, %s31
      %s120 = sor.u32 %s118, %s119
      %p121 = scmp.eq.s32.totalorder %s120, 0
      %s123 = sadd.s32 %s122, 1
      %s124 = scalar_select %p121, %s122, %s123
      %p127 = pneg %p121
      %p128 = scmp.eq.s32.totalorder %s9, 12
      %p129 = por %p127, %p128
      %p130 = scmp.ne.s32.totalorder %s122, %s125
      %p131 = scmp.eq.s32.totalorder %s9, 0
      %p132 = por %p130, %p131
      %p133 = scmp.ne.s32.totalorder %s122, %s125
      %p134 = scmp.eq.s32.totalorder %s14, 12
      %p135 = por %p133, %p134
      %p136 = scmp.ne.s32.totalorder %s125, %s126
      %p137 = scmp.eq.s32.totalorder %s14, 0
      %p138 = por %p136, %p137
      %p139 = scmp.ne.s32.totalorder %s125, %s126
      %p140 = scmp.eq.s32.totalorder %s15, 12
      %p141 = por %p139, %p140
      %p143 = scmp.ne.s32.totalorder %s126, %s142
      %p144 = scmp.eq.s32.totalorder %s15, 0
      %p145 = por %p143, %p144
      %p146 = scmp.le.s32.totalorder 1, %s9
      %p147 = scmp.lt.s32.totalorder %s9, 14
      %p148 = pnand %p146, %p147
      %p149 = pneg %p148
      // Predicated region
      $region9: #{cnn_forward.9} parent=5 // pred_check
        _
      $region10: #{cnn_forward.9} parent=5 // pred_check_branch
        %151 = sbr.rel (%p148) target = $region12
      $region11: #{cnn_forward.9} parent=5 // pred_region
        %s152 = ssub.s32 %s9, 1
        // Predicated region
        $region13: #{cnn_forward.9} parent=11 // pred_check
          %p153 = pneg %p110
        $region14: #{cnn_forward.9} parent=11 // pred_check_branch
          %155 = sbr.rel (%p153) target = $region16
        $region15: #{cnn_forward.9} parent=11 // pred_region
          %p156 = scmp.lt.s32.totalorder %s20, 0
          %s157 = scalar_select %p156, %s20, 0
          %s158 = scalar_lea.vmem %s2, %s157
        $region16: #{cnn_forward.9} parent=11 // pred_fallthru
          _
      $region12: #{cnn_forward.9} parent=5 // pred_fallthru
        _
      %p159 = scmp.lt.s32.totalorder %s9, 13
      // Predicated region
      $region17: #{cnn_forward.9} parent=5 // pred_check
        %p160 = pneg %p159
      $region18: #{cnn_forward.9} parent=5 // pred_check_branch
        %162 = sbr.rel (%p160) target = $region20
      $region19: #{cnn_forward.9} parent=5 // pred_region
        // Predicated region
        $region21: #{cnn_forward.9} parent=19 // pred_check
          %p163 = pneg %p50
        $region22: #{cnn_forward.9} parent=19 // pred_check_branch
          %165 = sbr.rel (%p163) target = $region24
        $region23: #{cnn_forward.9} parent=19 // pred_region
          %s166 = sand.u32 %s40, 1
          %s167 = sand.u32 %s40, 1
          %s168 = smul.addr %s167, 72
          %s169 = scalar_lea.vmem [#allocation3], %s168
          %s170 = smul.u32 9, %s16
          %s171 = smul.addr %s170, 13
          %s172 = sadd.s32 %s18, %s171
          %s173 = smul.addr %s172, 8
          %s174 = scalar_lea.vmem %s0, %s173
          // Predicated region
          $region25: #{cnn_forward.9} parent=23 // pred_check
            _
          $region26: #{cnn_forward.9} parent=23 // pred_check_branch
            %176 = sbr.rel (0) target = $region28
          $region27: #{cnn_forward.9} parent=23 // pred_region
            // Predicated region
            $region29: #{cnn_forward.9} parent=27 // pred_check
              _
            $region30: #{cnn_forward.9} parent=27 // pred_check_branch
              %178 = sbr.rel (0) target = $region32
            $region31: #{cnn_forward.9} parent=27 // pred_region
              // Predicated region
              $region44: #{cnn_forward.9} parent=31 // pred_check
                _
              $region45: #{cnn_forward.9} parent=31 // pred_check_branch
                %209 = sbr.rel (0) target = $region47
              $region46: #{cnn_forward.9} parent=31 // pred_region
                loop: start=0, step=1, limit=1
                $region48: #{cnn_forward.9} parent=46 // loop_pre_header
                  _
                $region49: #{cnn_forward.9} parent=46 // loop_header
                  %s211 = sphi 0, %s215
                  %p212 = scmp.ge.s32.totalorder %s211, 1
                  %s216 = sphi %s174, %s174
                  %s217 = sphi %s169, %s169
                $region50: #{cnn_forward.9} parent=46 // loop_header_branch
                  %214 = sbr.rel (%p212) target = $region54
                $region51: #{cnn_forward.9} parent=46 // loop_body
                  %v218 = vld [vmem:[%s216] sm:$0xff]
                  %219 = vst [vmem:[%s217] sm:$0xff] %v218
                  %v220 = vld [vmem:[%s216 + $0x68] sm:$0xff]
                  %221 = vst [vmem:[%s217 + $0x8] sm:$0xff] %v220
                  %v222 = vld [vmem:[%s216 + $0xd0] sm:$0xff]
                  %223 = vst [vmem:[%s217 + $0x10] sm:$0xff] %v222
                  %v224 = vld [vmem:[%s216 + $0x138] sm:$0xff]
                  %225 = vst [vmem:[%s217 + $0x18] sm:$0xff] %v224
                  %v226 = vld [vmem:[%s216 + $0x1a0] sm:$0xff]
                  %227 = vst [vmem:[%s217 + $0x20] sm:$0xff] %v226
                  %v228 = vld [vmem:[%s216 + $0x208] sm:$0xff]
                  %229 = vst [vmem:[%s217 + $0x28] sm:$0xff] %v228
                  %v230 = vld [vmem:[%s216 + $0x270] sm:$0xff]
                  %231 = vst [vmem:[%s217 + $0x30] sm:$0xff] %v230
                  %v232 = vld [vmem:[%s216 + $0x2d8] sm:$0xff]
                  %233 = vst [vmem:[%s217 + $0x38] sm:$0xff] %v232
                  %v234 = vld [vmem:[%s216 + $0x340] sm:$0xff]
                  %235 = vst [vmem:[%s217 + $0x40] sm:$0xff] %v234
                $region52: #{cnn_forward.9} parent=46 // loop_footer
                  %s215 = sadd.s32 1, %s211
                $region53: #{cnn_forward.9} parent=46 // loop_footer_branch
                  %210 = sbr.rel target = $region49
                $region54: #{cnn_forward.9} parent=46 // loop_exit
                  _
              $region47: #{cnn_forward.9} parent=31 // pred_fallthru
                _
              // Predicated region
              $region55: #{cnn_forward.9} parent=31 // pred_check
                _
              $region56: #{cnn_forward.9} parent=31 // pred_check_branch
                %237 = sbr.rel target = $region58
              $region57: #{cnn_forward.9} parent=31 // pred_region
                _
              $region58: #{cnn_forward.9} parent=31 // pred_fallthru
                _
            $region32: #{cnn_forward.9} parent=27 // pred_fallthru
              _
            // Predicated region
            $region33: #{cnn_forward.9} parent=27 // pred_check
              _
            $region34: #{cnn_forward.9} parent=27 // pred_check_branch
              %180 = sbr.rel target = $region36
            $region35: #{cnn_forward.9} parent=27 // pred_region
              loop: start=0, step=1, limit=1
              $region37: #{cnn_forward.9} parent=35 // loop_pre_header
                _
              $region38: #{cnn_forward.9} parent=35 // loop_header
                %s183 = sphi 0, %s187
                %p184 = scmp.ge.s32.totalorder %s183, 1
                %s188 = sphi %s174, %s174
                %s189 = sphi %s169, %s169
              $region39: #{cnn_forward.9} parent=35 // loop_header_branch
                %186 = sbr.rel (%p184) target = $region43
              $region40: #{cnn_forward.9} parent=35 // loop_body
                %v190 = vld [vmem:[%s188] sm:$0xff]
                %191 = vst [vmem:[%s189] sm:$0xff] %v190
                %v192 = vld [vmem:[%s188 + $0x68] sm:$0xff]
                %193 = vst [vmem:[%s189 + $0x8] sm:$0xff] %v192
                %v194 = vld [vmem:[%s188 + $0xd0] sm:$0xff]
                %195 = vst [vmem:[%s189 + $0x10] sm:$0xff] %v194
                %v196 = vld [vmem:[%s188 + $0x138] sm:$0xff]
                %197 = vst [vmem:[%s189 + $0x18] sm:$0xff] %v196
                %v198 = vld [vmem:[%s188 + $0x1a0] sm:$0xff]
                %199 = vst [vmem:[%s189 + $0x20] sm:$0xff] %v198
                %v200 = vld [vmem:[%s188 + $0x208] sm:$0xff]
                %201 = vst [vmem:[%s189 + $0x28] sm:$0xff] %v200
                %v202 = vld [vmem:[%s188 + $0x270] sm:$0xff]
                %203 = vst [vmem:[%s189 + $0x30] sm:$0xff] %v202
                %v204 = vld [vmem:[%s188 + $0x2d8] sm:$0xff]
                %205 = vst [vmem:[%s189 + $0x38] sm:$0xff] %v204
                %v206 = vld [vmem:[%s188 + $0x340] sm:$0xff]
                %207 = vst [vmem:[%s189 + $0x40] sm:$0xff] %v206
              $region41: #{cnn_forward.9} parent=35 // loop_footer
                %s187 = sadd.s32 1, %s183
              $region42: #{cnn_forward.9} parent=35 // loop_footer_branch
                %182 = sbr.rel target = $region38
              $region43: #{cnn_forward.9} parent=35 // loop_exit
                _
            $region36: #{cnn_forward.9} parent=27 // pred_fallthru
              _
          $region28: #{cnn_forward.9} parent=23 // pred_fallthru
            _
          %238 = vnop
        $region24: #{cnn_forward.9} parent=19 // pred_fallthru
          _
        // Predicated region
        $region59: #{cnn_forward.9} parent=19 // pred_check
          %p239 = pneg %p78
        $region60: #{cnn_forward.9} parent=19 // pred_check_branch
          %241 = sbr.rel (%p239) target = $region62
        $region61: #{cnn_forward.9} parent=19 // pred_region
          %s242 = smul.u32 16, %s18
          %p243 = scmp.lt.s32.totalorder %s242, 207
          %s244 = scalar_select %p243, %s242, 207
          %p245 = scmp.lt.s32.totalorder %s17, 0
          %s246 = scalar_select %p245, %s17, 0
          %s247 = sadd.s32 %s246, %s244
          %s248 = smul.addr %s247, 8
          %s249 = scalar_lea.vmem %s1, %s248
          %s250 = smul.u32 16, %s18
        $region62: #{cnn_forward.9} parent=19 // pred_fallthru
          _
      $region20: #{cnn_forward.9} parent=5 // pred_fallthru
        _
      %p251 = scmp.le.s32.totalorder 1, %s9
      %p252 = scmp.lt.s32.totalorder %s9, 14
      %p253 = pnand %p251, %p252
      %p254 = pneg %p253
      // Predicated region
      $region63: #{cnn_forward.9} parent=5 // pred_check
        _
      $region64: #{cnn_forward.9} parent=5 // pred_check_branch
        %256 = sbr.rel (%p253) target = $region66
      $region65: #{cnn_forward.9} parent=5 // pred_region
        %s257 = ssub.s32 %s9, 1
        %s258 = sand.u32 %s43, 1
        %s259 = sand.u32 %s43, 1
        %s260 = smul.addr %s259, 72
        %s261 = scalar_lea.vmem [#allocation3], %s260
        // Predicated region
        $region67: #{cnn_forward.9} parent=65 // pred_check
          %p262 = pneg %p56
        $region68: #{cnn_forward.9} parent=65 // pred_check_branch
          %264 = sbr.rel (%p262) target = $region70
        $region69: #{cnn_forward.9} parent=65 // pred_region
          _
        $region70: #{cnn_forward.9} parent=65 // pred_fallthru
          _
        %s265 = sand.u32 %s43, 1
        %s266 = sand.u32 %s43, 1
        %s267 = smul.addr %s266, 72
        %s268 = scalar_lea.vmem [#allocation3], %s267
        %p269 = pneg %p56
        %p270 = pneg %p53
        %s271 = smul.u32 16, %s21
        %p272 = scmp.lt.s32.totalorder %s271, 207
        %s273 = scalar_select %p272, %s271, 207
        %p274 = scmp.lt.s32.totalorder %s20, 0
        %s275 = scalar_select %p274, %s20, 0
        %s276 = sadd.s32 %s275, %s273
        %s277 = smul.addr %s276, 8
        %s278 = scalar_lea.vmem %s1, %s277
        %p279 = pneg %p84
        %p280 = pneg %p81
        %p281 = scmp.lt.s32.totalorder %s20, 0
        %s282 = scalar_select %p281, %s20, 0
        %s283 = scalar_lea.vmem %s2, %s282
        %p284 = pneg %p110
        %p285 = pneg %p107
        %p286 = pneg %p138
        %p287 = pneg %p135
        %s288 = smul.u32 9, %s19
        %p289 = scmp.lt.s32.totalorder %s288, 8
        %s290 = scalar_select %p289, %s288, 8
        %p291 = scmp.lt.s32.totalorder %s20, 0
        %s292 = scalar_select %p291, %s20, 0
        %s293 = sadd.s32 %s292, %s290
        %s294 = smul.addr %s293, 8
        %s295 = scalar_lea.vmem %s3, %s294
        %s296 = smul.u32 9, %s19
        %s297 = smul.u32 16, %s21
        %p298 = scmp.lt.s32.totalorder %s297, 207
        %s299 = scalar_select %p298, %s297, 207
        %p300 = scmp.lt.s32.totalorder %s20, 0
        %s301 = scalar_select %p300, %s20, 0
        %s302 = sadd.s32 %s301, %s299
        %s303 = smul.addr %s302, 8
        %s304 = scalar_lea.vmem %s1, %s303
        %s305 = smul.u32 16, %s21
        %p306 = scmp.lt.s32.totalorder %s20, 0
        %s307 = scalar_select %p306, %s20, 0
        %s308 = scalar_lea.vmem %s2, %s307
        %s309 = smul.u32 9, %s19
        %p310 = scmp.lt.s32.totalorder %s309, 8
        %s311 = scalar_select %p310, %s309, 8
        %p312 = scmp.lt.s32.totalorder %s20, 0
        %s313 = scalar_select %p312, %s20, 0
        %s314 = sadd.s32 %s313, %s311
        %s315 = smul.addr %s314, 8
        %s316 = scalar_lea.vmem %s3, %s315
        %s317 = smul.u32 9, %s19
        %p318 = scmp.eq.s32.totalorder %s21, 0
        // Predicated region
        $region71: #{cnn_forward.9} parent=65 // pred_check
          %p319 = pneg %p318
        $region72: #{cnn_forward.9} parent=65 // pred_check_branch
          %321 = sbr.rel (%p319) target = $region74
        $region73: #{cnn_forward.9} parent=65 // pred_region
          %322 = vst [vmem:[#allocation2] sm:$0xff] 0.0
          %323 = vst [vmem:[#allocation2 + $0x8] sm:$0xff] 0.0
          %324 = vst [vmem:[#allocation2 + $0x10] sm:$0xff] 0.0
          %325 = vst [vmem:[#allocation2 + $0x18] sm:$0xff] 0.0
          %326 = vst [vmem:[#allocation2 + $0x20] sm:$0xff] 0.0
          %327 = vst [vmem:[#allocation2 + $0x28] sm:$0xff] 0.0
          %328 = vst [vmem:[#allocation2 + $0x30] sm:$0xff] 0.0
          %329 = vst [vmem:[#allocation2 + $0x38] sm:$0xff] 0.0
          %330 = vst [vmem:[#allocation2 + $0x40] sm:$0xff] 0.0
        $region74: #{cnn_forward.9} parent=65 // pred_fallthru
          _
        %v331 = vld [vmem:[#allocation2] sm:$0xff]
        %v332 = vld [vmem:[#allocation2 + $0x8] sm:$0xff]
        %v333 = vld [vmem:[#allocation2 + $0x10] sm:$0xff]
        %v334 = vld [vmem:[#allocation2 + $0x18] sm:$0xff]
        %v335 = vld [vmem:[#allocation2 + $0x20] sm:$0xff]
        %v336 = vld [vmem:[#allocation2 + $0x28] sm:$0xff]
        %v337 = vld [vmem:[#allocation2 + $0x30] sm:$0xff]
        %v338 = vld [vmem:[#allocation2 + $0x38] sm:$0xff]
        %v339 = vld [vmem:[#allocation2 + $0x40] sm:$0xff]
        %v340 = vld [vmem:[%s261] sm:$0xff]
        %v341 = vld [vmem:[%s261 + $0x8] sm:$0xff]
        %v342 = vld [vmem:[%s261 + $0x10] sm:$0xff]
        %v343 = vld [vmem:[%s261 + $0x18] sm:$0xff]
        %v344 = vld [vmem:[%s261 + $0x20] sm:$0xff]
        %v345 = vld [vmem:[%s261 + $0x28] sm:$0xff]
        %v346 = vld [vmem:[%s261 + $0x30] sm:$0xff]
        %v347 = vld [vmem:[%s261 + $0x38] sm:$0xff]
        %v348 = vld [vmem:[%s261 + $0x40] sm:$0xff]
        %v349 = vld [vmem:[%s304] sm:$0xff]
        %v350 = vld [vmem:[%s304 + $0x8] sm:$0xff]
        %v351 = vld [vmem:[%s304 + $0x10] sm:$0xff]
        %v352 = vld [vmem:[%s304 + $0x18] sm:$0xff]
        %v353 = vld [vmem:[%s304 + $0x20] sm:$0xff]
        %v354 = vld [vmem:[%s304 + $0x28] sm:$0xff]
        %v355 = vld [vmem:[%s304 + $0x30] sm:$0xff]
        %v356 = vld [vmem:[%s304 + $0x38] sm:$0xff]
        %v357 = vld [vmem:[%s304 + $0x40] sm:$0xff]
        %v358 = vld [vmem:[%s304 + $0x48] sm:$0xff]
        %v359 = vld [vmem:[%s304 + $0x50] sm:$0xff]
        %v360 = vld [vmem:[%s304 + $0x58] sm:$0xff]
        %v361 = vld [vmem:[%s304 + $0x60] sm:$0xff]
        %v362 = vld [vmem:[%s304 + $0x68] sm:$0xff]
        %v363 = vld [vmem:[%s304 + $0x70] sm:$0xff]
        %v364 = vld [vmem:[%s304 + $0x78] sm:$0xff]
        %365 = vmatprep.subr.mxu0 0.0
        %366 = vmatpush1.msra.mxu0 %v349
        %367 = vmatprep.subr.mxu0 0.0
        %368 = vmatpush1.msra.mxu0 %v350
        %369 = vmatprep.subr.mxu0 0.0
        %370 = vmatpush1.msra.mxu0 %v351
        %371 = vmatprep.subr.mxu0 0.0
        %372 = vmatpush1.msra.mxu0 %v352
        %373 = vmatprep.subr.mxu0 0.0
        %374 = vmatpush1.msra.mxu0 %v353
        %375 = vmatprep.subr.mxu0 0.0
        %376 = vmatpush1.msra.mxu0 %v354
        %377 = vmatprep.subr.mxu0 0.0
        %378 = vmatpush1.msra.mxu0 %v355
        %379 = vmatprep.subr.mxu0 0.0
        %380 = vmatpush1.msra.mxu0 %v356
        %381 = vmatprep.subr.mxu0 0.0
        %382 = vmatpush1.msra.mxu0 %v357
        %383 = vmatprep.subr.mxu0 0.0
        %384 = vmatpush1.msra.mxu0 %v358
        %385 = vmatprep.subr.mxu0 0.0
        %386 = vmatpush1.msra.mxu0 %v359
        %387 = vmatprep.subr.mxu0 0.0
        %388 = vmatpush1.msra.mxu0 %v360
        %389 = vmatprep.subr.mxu0 0.0
        %390 = vmatpush1.msra.mxu0 %v361
        %391 = vmatprep.subr.mxu0 0.0
        %392 = vmatpush1.msra.mxu0 %v362
        %393 = vmatprep.subr.mxu0 0.0
        %394 = vmatpush1.msra.mxu0 %v363
        %395 = vmatprep.subr.mxu0 0.0
        %396 = vmatpush1.msra.mxu0 %v364
        %397 = vmatprep.subr.mxu0 0.0
        %398 = vmatpush1.msra.mxu0 0.0
        %399 = vmatprep.subr.mxu0 0.0
        %400 = vmatpush1.msra.mxu0 0.0
        %401 = vmatprep.subr.mxu0 0.0
        %402 = vmatpush1.msra.mxu0 0.0
        %403 = vmatprep.subr.mxu0 0.0
        %404 = vmatpush1.msra.mxu0 0.0
        %405 = vmatprep.subr.mxu0 0.0
        %406 = vmatpush1.msra.mxu0 0.0
        %407 = vmatprep.subr.mxu0 0.0
        %408 = vmatpush1.msra.mxu0 0.0
        %409 = vmatprep.subr.mxu0 0.0
        %410 = vmatpush1.msra.mxu0 0.0
        %411 = vmatprep.subr.mxu0 0.0
        %412 = vmatpush1.msra.mxu0 0.0
        %413 = vmatprep.subr.mxu0 0.0
        %414 = vmatpush1.msra.mxu0 0.0
        %415 = vmatprep.subr.mxu0 0.0
        %416 = vmatpush1.msra.mxu0 0.0
        %417 = vmatprep.subr.mxu0 0.0
        %418 = vmatpush1.msra.mxu0 0.0
        %419 = vmatprep.subr.mxu0 0.0
        %420 = vmatpush1.msra.mxu0 0.0
        %421 = vmatprep.subr.mxu0 0.0
        %422 = vmatpush1.msra.mxu0 0.0
        %423 = vmatprep.subr.mxu0 0.0
        %424 = vmatpush1.msra.mxu0 0.0
        %425 = vmatprep.subr.mxu0 0.0
        %426 = vmatpush1.msra.mxu0 0.0
        %427 = vmatprep.subr.mxu0 0.0
        %428 = vmatpush1.msra.mxu0 0.0
        %429 = vmatprep.mubr.f32.mxu0 0.0
        %430 = vmatmul.mubr.f32.gmra.mrb[0].mxu0 %v340
        %v431 = vpop.f32.mrb[0].mxu0
        %v432 = vadd.f32 0.0, %v431
        %v433 = vpop.f32.mrb[0].mxu0
        %434 = vmatprep.mubr.f32.mxu0 0.0
        %435 = vmatmul.mubr.f32.gmra.mrb[0].mxu0 %v341
        %v436 = vpop.f32.mrb[0].mxu0
        %v437 = vadd.f32 0.0, %v436
        %v438 = vpop.f32.mrb[0].mxu0
        %439 = vmatprep.mubr.f32.mxu0 0.0
        %440 = vmatmul.mubr.f32.gmra.mrb[0].mxu0 %v342
        %v441 = vpop.f32.mrb[0].mxu0
        %v442 = vadd.f32 0.0, %v441
        %v443 = vpop.f32.mrb[0].mxu0
        %444 = vmatprep.mubr.f32.mxu0 0.0
        %445 = vmatmul.mubr.f32.gmra.mrb[0].mxu0 %v343
        %v446 = vpop.f32.mrb[0].mxu0
        %v447 = vadd.f32 0.0, %v446
        %v448 = vpop.f32.mrb[0].mxu0
        %449 = vmatprep.mubr.f32.mxu0 0.0
        %450 = vmatmul.mubr.f32.gmra.mrb[0].mxu0 %v344
        %v451 = vpop.f32.mrb[0].mxu0
        %v452 = vadd.f32 0.0, %v451
        %v453 = vpop.f32.mrb[0].mxu0
        %454 = vmatprep.mubr.f32.mxu0 0.0
        %455 = vmatmul.mubr.f32.gmra.mrb[0].mxu0 %v345
        %v456 = vpop.f32.mrb[0].mxu0
        %v457 = vadd.f32 0.0, %v456
        %v458 = vpop.f32.mrb[0].mxu0
        %459 = vmatprep.mubr.f32.mxu0 0.0
        %460 = vmatmul.mubr.f32.gmra.mrb[0].mxu0 %v346
        %v461 = vpop.f32.mrb[0].mxu0
        %v462 = vadd.f32 0.0, %v461
        %v463 = vpop.f32.mrb[0].mxu0
        %464 = vmatprep.mubr.f32.mxu0 0.0
        %465 = vmatmul.mubr.f32.gmra.mrb[0].mxu0 %v347
        %v466 = vpop.f32.mrb[0].mxu0
        %v467 = vadd.f32 0.0, %v466
        %v468 = vpop.f32.mrb[0].mxu0
        %469 = vmatprep.mubr.f32.mxu0 0.0
        %470 = vmatmul.mubr.f32.gmra.mrb[0].mxu0 %v348
        %v471 = vpop.f32.mrb[0].mxu0
        %v472 = vadd.f32 0.0, %v471
        %v473 = vpop.f32.mrb[0].mxu0
        %474 = vdwg.mxu0
        %v475 = vadd.f32 %v331, %v432
        %v476 = vadd.f32 %v332, %v437
        %v477 = vadd.f32 %v333, %v442
        %v478 = vadd.f32 %v334, %v447
        %v479 = vadd.f32 %v335, %v452
        %v480 = vadd.f32 %v336, %v457
        %v481 = vadd.f32 %v337, %v462
        %v482 = vadd.f32 %v338, %v467
        %v483 = vadd.f32 %v339, %v472
        %484 = vst [vmem:[#allocation2] sm:$0xff] %v475
        %485 = vst [vmem:[#allocation2 + $0x8] sm:$0xff] %v476
        %486 = vst [vmem:[#allocation2 + $0x10] sm:$0xff] %v477
        %487 = vst [vmem:[#allocation2 + $0x18] sm:$0xff] %v478
        %488 = vst [vmem:[#allocation2 + $0x20] sm:$0xff] %v479
        %489 = vst [vmem:[#allocation2 + $0x28] sm:$0xff] %v480
        %490 = vst [vmem:[#allocation2 + $0x30] sm:$0xff] %v481
        %491 = vst [vmem:[#allocation2 + $0x38] sm:$0xff] %v482
        %492 = vst [vmem:[#allocation2 + $0x40] sm:$0xff] %v483
        %p493 = scmp.eq.s32.totalorder %s21, 12
        // Predicated region
        $region75: #{cnn_forward.9} parent=65 // pred_check
          %p494 = pneg %p493
        $region76: #{cnn_forward.9} parent=65 // pred_check_branch
          %496 = sbr.rel (%p494) target = $region78
        $region77: #{cnn_forward.9} parent=65 // pred_region
          %v497 = vld [vmem:[#allocation2] sm:$0xff]
          %v498 = vld [vmem:[#allocation2 + $0x8] sm:$0xff]
          %v499 = vld [vmem:[#allocation2 + $0x10] sm:$0xff]
          %v500 = vld [vmem:[#allocation2 + $0x18] sm:$0xff]
          %v501 = vld [vmem:[#allocation2 + $0x20] sm:$0xff]
          %v502 = vld [vmem:[#allocation2 + $0x28] sm:$0xff]
          %v503 = vld [vmem:[#allocation2 + $0x30] sm:$0xff]
          %v504 = vld [vmem:[#allocation2 + $0x38] sm:$0xff]
          %v505 = vld [vmem:[#allocation2 + $0x40] sm:$0xff]
          %v506 = vld [vmem:[%s308] sm:$0x1]
          %v508 = vlaneseq
          %v509 = vshrl.u32 %v508, 7
          %v510 = vsub.s32 0, %v509
          %v511 = vrot.slane %v506, %v510
          %v513 = vadd.f32 %v497, %v511
          %v514 = vadd.f32 %v498, %v511
          %v515 = vadd.f32 %v499, %v511
          %v516 = vadd.f32 %v500, %v511
          %v517 = vadd.f32 %v501, %v511
          %v518 = vadd.f32 %v502, %v511
          %v519 = vadd.f32 %v503, %v511
          %v520 = vadd.f32 %v504, %v511
          %v521 = vadd.f32 %v505, %v511
          %v522 = vmax.f32 %v513, 0.0
          %v523 = vmax.f32 %v514, 0.0
          %v524 = vmax.f32 %v515, 0.0
          %v525 = vmax.f32 %v516, 0.0
          %v526 = vmax.f32 %v517, 0.0
          %v527 = vmax.f32 %v518, 0.0
          %v528 = vmax.f32 %v519, 0.0
          %v529 = vmax.f32 %v520, 0.0
          %v530 = vmax.f32 %v521, 0.0
          %531 = vst [vmem:[%s316] sm:$0xff] %v522
          %532 = vst [vmem:[%s316 + $0x8] sm:$0xff] %v523
          %533 = vst [vmem:[%s316 + $0x10] sm:$0xff] %v524
          %534 = vst [vmem:[%s316 + $0x18] sm:$0xff] %v525
          %535 = vst [vmem:[%s316 + $0x20] sm:$0xff] %v526
          %536 = vst [vmem:[%s316 + $0x28] sm:$0xff] %v527
          %537 = vst [vmem:[%s316 + $0x30] sm:$0xff] %v528
          %538 = vst [vmem:[%s316 + $0x38] sm:$0xff] %v529
          %539 = vst [vmem:[%s316 + $0x40] sm:$0xff] %v530
        $region78: #{cnn_forward.9} parent=65 // pred_fallthru
          _
        %s540 = smul.u32 9, %s19
        %p541 = scmp.lt.s32.totalorder %s540, 8
        %s542 = scalar_select %p541, %s540, 8
        %p543 = scmp.lt.s32.totalorder %s20, 0
        %s544 = scalar_select %p543, %s20, 0
        %s545 = sadd.s32 %s544, %s542
        %s546 = smul.addr %s545, 8
        %s547 = scalar_lea.vmem %s3, %s546
        // Predicated region
        $region79: #{cnn_forward.9} parent=65 // pred_check
          %p548 = pneg %p135
        $region80: #{cnn_forward.9} parent=65 // pred_check_branch
          %550 = sbr.rel (%p548) target = $region82
        $region81: #{cnn_forward.9} parent=65 // pred_region
          %s551 = smul.u32 9, %s19
        $region82: #{cnn_forward.9} parent=65 // pred_fallthru
          _
        // Predicated region
        $region83: #{cnn_forward.9} parent=65 // pred_check
          %p552 = pneg %p135
        $region84: #{cnn_forward.9} parent=65 // pred_check_branch
          %554 = sbr.rel (%p552) target = $region86
        $region85: #{cnn_forward.9} parent=65 // pred_region
          %s555 = smul.u32 9, %s19
          %p556 = scmp.lt.s32.totalorder %s555, 8
          %s557 = scalar_select %p556, %s555, 8
          %p558 = scmp.lt.s32.totalorder %s20, 0
          %s559 = scalar_select %p558, %s20, 0
          %s560 = sadd.s32 %s559, %s557
          %s561 = smul.addr %s560, 8
          %s562 = scalar_lea.vmem %s3, %s561
        $region86: #{cnn_forward.9} parent=65 // pred_fallthru
          _
      $region66: #{cnn_forward.9} parent=5 // pred_fallthru
        _
      %p563 = scmp.le.s32.totalorder 2, %s9
      // Predicated region
      $region87: #{cnn_forward.9} parent=5 // pred_check
        %p564 = pneg %p563
      $region88: #{cnn_forward.9} parent=5 // pred_check_branch
        %566 = sbr.rel (%p564) target = $region90
      $region89: #{cnn_forward.9} parent=5 // pred_region
        %s567 = ssub.s32 %s9, 2
      $region90: #{cnn_forward.9} parent=5 // pred_fallthru
        _
    $region6: #{cnn_forward.9} parent=1 // loop_footer
      %s13 = sadd.s32 1, %s9
    $region7: #{cnn_forward.9} parent=1 // loop_footer_branch
      %8 = sbr.rel target = $region3
    $region8: #{cnn_forward.9} parent=1 // loop_exit
      _

// kernel: cnn_forward.10
$region0: #{cnn_forward.10}
  #allocation0 [shape = 'u32[]', space=smem, size = 0x4, offset = 0x4, fixed_abs, tag = 'smem constant byte address 0x4 - core index']
  #allocation1 [shape = 'u32[144,128]{1,0:T(1,128)}', space=vmem, size = 0x12000, scoped, tag = 'internal scratch']
  %s0 = inlined_call_operand.vmem [shape: f32[24,128], index: 0, kind: input, shape index: {}]
  %s1 = inlined_call_operand.vmem [shape: f32[24,128], index: 1, kind: input, shape index: {}]
  %s2 = inlined_call_operand.vmem [shape: f32[24,128], index: 2, kind: input, shape index: {}]
  %s3 = inlined_call_operand.vmem [shape: f32[24,128], index: 3, kind: input, shape index: {}]
  %s4 = inlined_call_operand.vmem [shape: f32[24,128], index: 4, kind: output, shape index: {}]
  %s5 = sld [smem:[#allocation0]]
  $region26: #{cnn_forward.10} parent=0
    _
  %s7 = ssub.s32 1, %s5
  %s8 = scalar_select 0, %s7, %s5
  // Predicated region
  $region2: #{cnn_forward.10} parent=0 // pred_check
    _
  $region3: #{cnn_forward.10} parent=0 // pred_check_branch
    %10 = sbr.rel (0) target = $region5
  $region4: #{cnn_forward.10} parent=0 // pred_region
    _
  $region5: #{cnn_forward.10} parent=0 // pred_fallthru
    _
  // Predicated region
  $region6: #{cnn_forward.10} parent=0 // pred_check
    _
  $region7: #{cnn_forward.10} parent=0 // pred_check_branch
    %12 = sbr.rel (0) target = $region9
  $region8: #{cnn_forward.10} parent=0 // pred_region
    _
  $region9: #{cnn_forward.10} parent=0 // pred_fallthru
    _
  // Predicated region
  $region10: #{cnn_forward.10} parent=0 // pred_check
    _
  $region11: #{cnn_forward.10} parent=0 // pred_check_branch
    %14 = sbr.rel (0) target = $region13
  $region12: #{cnn_forward.10} parent=0 // pred_region
    _
  $region13: #{cnn_forward.10} parent=0 // pred_fallthru
    _
  // Predicated region
  $region14: #{cnn_forward.10} parent=0 // pred_check
    _
  $region15: #{cnn_forward.10} parent=0 // pred_check_branch
    %16 = sbr.rel (0) target = $region17
  $region16: #{cnn_forward.10} parent=0 // pred_region
    _
  $region17: #{cnn_forward.10} parent=0 // pred_fallthru
    _
  %v17 = vld [vmem:[%s0] sm:$0xff]
  %v18 = vld [vmem:[%s0 + $0x8] sm:$0xff]
  %v19 = vld [vmem:[%s0 + $0x10] sm:$0xff]
  %v20 = vld [vmem:[%s1] sm:$0xff]
  %v21 = vld [vmem:[%s1 + $0x8] sm:$0xff]
  %v22 = vld [vmem:[%s1 + $0x10] sm:$0xff]
  %v23 = vmax.f32 %v17, %v20
  %v24 = vmax.f32 %v18, %v21
  %v25 = vmax.f32 %v19, %v22
  %v26 = vld [vmem:[%s2] sm:$0xff]
  %v27 = vld [vmem:[%s2 + $0x8] sm:$0xff]
  %v28 = vld [vmem:[%s2 + $0x10] sm:$0xff]
  %v29 = vld [vmem:[%s3] sm:$0xff]
  %v30 = vld [vmem:[%s3 + $0x8] sm:$0xff]
  %v31 = vld [vmem:[%s3 + $0x10] sm:$0xff]
  %v32 = vmax.f32 %v26, %v29
  %v33 = vmax.f32 %v27, %v30
  %v34 = vmax.f32 %v28, %v31
  %v35 = vmax.f32 %v23, %v32
  %v36 = vmax.f32 %v24, %v33
  %v37 = vmax.f32 %v25, %v34
  %38 = vst [vmem:[%s4] sm:$0xff] %v35
  %39 = vst [vmem:[%s4 + $0x8] sm:$0xff] %v36
  %40 = vst [vmem:[%s4 + $0x10] sm:$0xff] %v37
  // Predicated region
  $region18: #{cnn_forward.10} parent=0 // pred_check
    _
  $region19: #{cnn_forward.10} parent=0 // pred_check_branch
    %42 = sbr.rel (0) target = $region21
  $region20: #{cnn_forward.10} parent=0 // pred_region
    _
  $region21: #{cnn_forward.10} parent=0 // pred_fallthru
    _
  // Predicated region
  $region22: #{cnn_forward.10} parent=0 // pred_check
    _
  $region23: #{cnn_forward.10} parent=0 // pred_check_branch
    %44 = sbr.rel (0) target = $region25
  $region24: #{cnn_forward.10} parent=0 // pred_region
    _
  $region25: #{cnn_forward.10} parent=0 // pred_fallthru
    _

// kernel: cnn_forward.11
$region0: #{cnn_forward.11}
  #allocation0 [shape = 'u32[]', space=smem, size = 0x4, offset = 0x4, fixed_abs, tag = 'smem constant byte address 0x4 - core index']
  #allocation1 [shape = 'u32[144,128]{1,0:T(1,128)}', space=vmem, size = 0x12000, scoped, tag = 'internal scratch']
  %s0 = inlined_call_operand.vmem [shape: f32[8,1152], index: 0, kind: input, shape index: {}]
  %s1 = inlined_call_operand.vmem [shape: f32[1152,1024], index: 1, kind: input, shape index: {}]
  %s2 = inlined_call_operand.vmem [shape: f32[1,1024], index: 2, kind: input, shape index: {}]
  %s3 = inlined_call_operand.vmem [shape: f32[1024,128], index: 3, kind: input, shape index: {}]
  %s4 = inlined_call_operand.vmem [shape: f32[1,128], index: 4, kind: input, shape index: {}]
  %s5 = inlined_call_operand.vmem [shape: f32[128,128], index: 5, kind: input, shape index: {}]
  %s6 = inlined_call_operand.vmem [shape: f32[1,128], index: 6, kind: input, shape index: {}]
  %s7 = inlined_call_operand.vmem [shape: f32[8,128], index: 7, kind: output, shape index: {}]
  %s8 = sld [smem:[#allocation0]]
  $region38: #{cnn_forward.11} parent=0
    _
  %s10 = ssub.s32 1, %s8
  %s11 = scalar_select 0, %s10, %s8
  // Predicated region
  $region2: #{cnn_forward.11} parent=0 // pred_check
    _
  $region3: #{cnn_forward.11} parent=0 // pred_check_branch
    %13 = sbr.rel (0) target = $region5
  $region4: #{cnn_forward.11} parent=0 // pred_region
    _
  $region5: #{cnn_forward.11} parent=0 // pred_fallthru
    _
  // Predicated region
  $region6: #{cnn_forward.11} parent=0 // pred_check
    _
  $region7: #{cnn_forward.11} parent=0 // pred_check_branch
    %15 = sbr.rel (0) target = $region9
  $region8: #{cnn_forward.11} parent=0 // pred_region
    _
  $region9: #{cnn_forward.11} parent=0 // pred_fallthru
    _
  // Predicated region
  $region10: #{cnn_forward.11} parent=0 // pred_check
    _
  $region11: #{cnn_forward.11} parent=0 // pred_check_branch
    %17 = sbr.rel (0) target = $region13
  $region12: #{cnn_forward.11} parent=0 // pred_region
    _
  $region13: #{cnn_forward.11} parent=0 // pred_fallthru
    _
  // Predicated region
  $region14: #{cnn_forward.11} parent=0 // pred_check
    _
  $region15: #{cnn_forward.11} parent=0 // pred_check_branch
    %19 = sbr.rel (0) target = $region17
  $region16: #{cnn_forward.11} parent=0 // pred_region
    _
  $region17: #{cnn_forward.11} parent=0 // pred_fallthru
    _
  // Predicated region
  $region18: #{cnn_forward.11} parent=0 // pred_check
    _
  $region19: #{cnn_forward.11} parent=0 // pred_check_branch
    %21 = sbr.rel (0) target = $region21
  $region20: #{cnn_forward.11} parent=0 // pred_region
    _
  $region21: #{cnn_forward.11} parent=0 // pred_fallthru
    _
  // Predicated region
  $region22: #{cnn_forward.11} parent=0 // pred_check
    _
  $region23: #{cnn_forward.11} parent=0 // pred_check_branch
    %23 = sbr.rel (0) target = $region25
  $region24: #{cnn_forward.11} parent=0 // pred_region
    _
  $region25: #{cnn_forward.11} parent=0 // pred_fallthru
    _
  // Predicated region
  $region26: #{cnn_forward.11} parent=0 // pred_check
    _
  $region27: #{cnn_forward.11} parent=0 // pred_check_branch
    %25 = sbr.rel (0) target = $region29
  $region28: #{cnn_forward.11} parent=0 // pred_region
    _
  $region29: #{cnn_forward.11} parent=0 // pred_fallthru
    _
  %v26 = vld [vmem:[%s0] sm:$0xff]
  %v27 = vld [vmem:[%s0 + $0x8] sm:$0xff]
  %v28 = vld [vmem:[%s0 + $0x10] sm:$0xff]
  %v29 = vld [vmem:[%s0 + $0x18] sm:$0xff]
  %v30 = vld [vmem:[%s0 + $0x20] sm:$0xff]
  %v31 = vld [vmem:[%s0 + $0x28] sm:$0xff]
  %v32 = vld [vmem:[%s0 + $0x30] sm:$0xff]
  %v33 = vld [vmem:[%s0 + $0x38] sm:$0xff]
  %v34 = vld [vmem:[%s0 + $0x40] sm:$0xff]
  %v35 = vld [vmem:[%s1] sm:$0xff]
  %v36 = vld [vmem:[%s1 + $0x8] sm:$0xff]
  %v37 = vld [vmem:[%s1 + $0x10] sm:$0xff]
  %v38 = vld [vmem:[%s1 + $0x18] sm:$0xff]
  %v39 = vld [vmem:[%s1 + $0x20] sm:$0xff]
  %v40 = vld [vmem:[%s1 + $0x28] sm:$0xff]
  %v41 = vld [vmem:[%s1 + $0x30] sm:$0xff]
  %v42 = vld [vmem:[%s1 + $0x38] sm:$0xff]
  %v43 = vld [vmem:[%s1 + $0x40] sm:$0xff]
  %v44 = vld [vmem:[%s1 + $0x48] sm:$0xff]
  %v45 = vld [vmem:[%s1 + $0x50] sm:$0xff]
  %v46 = vld [vmem:[%s1 + $0x58] sm:$0xff]
  %v47 = vld [vmem:[%s1 + $0x60] sm:$0xff]
  %v48 = vld [vmem:[%s1 + $0x68] sm:$0xff]
  %v49 = vld [vmem:[%s1 + $0x70] sm:$0xff]
  %v50 = vld [vmem:[%s1 + $0x78] sm:$0xff]
  %v51 = vld [vmem:[%s1 + $0x80] sm:$0xff]
  %v52 = vld [vmem:[%s1 + $0x88] sm:$0xff]
  %v53 = vld [vmem:[%s1 + $0x90] sm:$0xff]
  %v54 = vld [vmem:[%s1 + $0x98] sm:$0xff]
  %v55 = vld [vmem:[%s1 + $0xa0] sm:$0xff]
  %v56 = vld [vmem:[%s1 + $0xa8] sm:$0xff]
  %v57 = vld [vmem:[%s1 + $0xb0] sm:$0xff]
  %v58 = vld [vmem:[%s1 + $0xb8] sm:$0xff]
  %v59 = vld [vmem:[%s1 + $0xc0] sm:$0xff]
  %v60 = vld [vmem:[%s1 + $0xc8] sm:$0xff]
  %v61 = vld [vmem:[%s1 + $0xd0] sm:$0xff]
  %v62 = vld [vmem:[%s1 + $0xd8] sm:$0xff]
  %v63 = vld [vmem:[%s1 + $0xe0] sm:$0xff]
  %v64 = vld [vmem:[%s1 + $0xe8] sm:$0xff]
  %v65 = vld [vmem:[%s1 + $0xf0] sm:$0xff]
  %v66 = vld [vmem:[%s1 + $0xf8] sm:$0xff]
  %v67 = vld [vmem:[%s1 + $0x100] sm:$0xff]
  %v68 = vld [vmem:[%s1 + $0x108] sm:$0xff]
  %v69 = vld [vmem:[%s1 + $0x110] sm:$0xff]
  %v70 = vld [vmem:[%s1 + $0x118] sm:$0xff]
  %v71 = vld [vmem:[%s1 + $0x120] sm:$0xff]
  %v72 = vld [vmem:[%s1 + $0x128] sm:$0xff]
  %v73 = vld [vmem:[%s1 + $0x130] sm:$0xff]
  %v74 = vld [vmem:[%s1 + $0x138] sm:$0xff]
  %v75 = vld [vmem:[%s1 + $0x140] sm:$0xff]
  %v76 = vld [vmem:[%s1 + $0x148] sm:$0xff]
  %v77 = vld [vmem:[%s1 + $0x150] sm:$0xff]
  %v78 = vld [vmem:[%s1 + $0x158] sm:$0xff]
  %v79 = vld [vmem:[%s1 + $0x160] sm:$0xff]
  %v80 = vld [vmem:[%s1 + $0x168] sm:$0xff]
  %v81 = vld [vmem:[%s1 + $0x170] sm:$0xff]
  %v82 = vld [vmem:[%s1 + $0x178] sm:$0xff]
  %v83 = vld [vmem:[%s1 + $0x180] sm:$0xff]
  %v84 = vld [vmem:[%s1 + $0x188] sm:$0xff]
  %v85 = vld [vmem:[%s1 + $0x190] sm:$0xff]
  %v86 = vld [vmem:[%s1 + $0x198] sm:$0xff]
  %v87 = vld [vmem:[%s1 + $0x1a0] sm:$0xff]
  %v88 = vld [vmem:[%s1 + $0x1a8] sm:$0xff]
  %v89 = vld [vmem:[%s1 + $0x1b0] sm:$0xff]
  %v90 = vld [vmem:[%s1 + $0x1b8] sm:$0xff]
  %v91 = vld [vmem:[%s1 + $0x1c0] sm:$0xff]
  %v92 = vld [vmem:[%s1 + $0x1c8] sm:$0xff]
  %v93 = vld [vmem:[%s1 + $0x1d0] sm:$0xff]
  %v94 = vld [vmem:[%s1 + $0x1d8] sm:$0xff]
  %v95 = vld [vmem:[%s1 + $0x1e0] sm:$0xff]
  %v96 = vld [vmem:[%s1 + $0x1e8] sm:$0xff]
  %v97 = vld [vmem:[%s1 + $0x1f0] sm:$0xff]
  %v98 = vld [vmem:[%s1 + $0x1f8] sm:$0xff]
  %v99 = vld [vmem:[%s1 + $0x200] sm:$0xff]
  %v100 = vld [vmem:[%s1 + $0x208] sm:$0xff]
  %v101 = vld [vmem:[%s1 + $0x210] sm:$0xff]
  %v102 = vld [vmem:[%s1 + $0x218] sm:$0xff]
  %v103 = vld [vmem:[%s1 + $0x220] sm:$0xff]
  %v104 = vld [vmem:[%s1 + $0x228] sm:$0xff]
  %v105 = vld [vmem:[%s1 + $0x230] sm:$0xff]
  %v106 = vld [vmem:[%s1 + $0x238] sm:$0xff]
  %v107 = vld [vmem:[%s1 + $0x240] sm:$0xff]
  %v108 = vld [vmem:[%s1 + $0x248] sm:$0xff]
  %v109 = vld [vmem:[%s1 + $0x250] sm:$0xff]
  %v110 = vld [vmem:[%s1 + $0x258] sm:$0xff]
  %v111 = vld [vmem:[%s1 + $0x260] sm:$0xff]
  %v112 = vld [vmem:[%s1 + $0x268] sm:$0xff]
  %v113 = vld [vmem:[%s1 + $0x270] sm:$0xff]
  %v114 = vld [vmem:[%s1 + $0x278] sm:$0xff]
  %v115 = vld [vmem:[%s1 + $0x280] sm:$0xff]
  %v116 = vld [vmem:[%s1 + $0x288] sm:$0xff]
  %v117 = vld [vmem:[%s1 + $0x290] sm:$0xff]
  %v118 = vld [vmem:[%s1 + $0x298] sm:$0xff]
  %v119 = vld [vmem:[%s1 + $0x2a0] sm:$0xff]
  %v120 = vld [vmem:[%s1 + $0x2a8] sm:$0xff]
  %v121 = vld [vmem:[%s1 + $0x2b0] sm:$0xff]
  %v122 = vld [vmem:[%s1 + $0x2b8] sm:$0xff]
  %v123 = vld [vmem:[%s1 + $0x2c0] sm:$0xff]
  %v124 = vld [vmem:[%s1 + $0x2c8] sm:$0xff]
  %v125 = vld [vmem:[%s1 + $0x2d0] sm:$0xff]
  %v126 = vld [vmem:[%s1 + $0x2d8] sm:$0xff]
  %v127 = vld [vmem:[%s1 + $0x2e0] sm:$0xff]
  %v128 = vld [vmem:[%s1 + $0x2e8] sm:$0xff]
  %v129 = vld [vmem:[%s1 + $0x2f0] sm:$0xff]
  %v130 = vld [vmem:[%s1 + $0x2f8] sm:$0xff]
  %v131 = vld [vmem:[%s1 + $0x300] sm:$0xff]
  %v132 = vld [vmem:[%s1 + $0x308] sm:$0xff]
  %v133 = vld [vmem:[%s1 + $0x310] sm:$0xff]
  %v134 = vld [vmem:[%s1 + $0x318] sm:$0xff]
  %v135 = vld [vmem:[%s1 + $0x320] sm:$0xff]
  %v136 = vld [vmem:[%s1 + $0x328] sm:$0xff]
  %v137 = vld [vmem:[%s1 + $0x330] sm:$0xff]
  %v138 = vld [vmem:[%s1 + $0x338] sm:$0xff]
  %v139 = vld [vmem:[%s1 + $0x340] sm:$0xff]
  %v140 = vld [vmem:[%s1 + $0x348] sm:$0xff]
  %v141 = vld [vmem:[%s1 + $0x350] sm:$0xff]
  %v142 = vld [vmem:[%s1 + $0x358] sm:$0xff]
  %v143 = vld [vmem:[%s1 + $0x360] sm:$0xff]
  %v144 = vld [vmem:[%s1 + $0x368] sm:$0xff]
  %v145 = vld [vmem:[%s1 + $0x370] sm:$0xff]
  %v146 = vld [vmem:[%s1 + $0x378] sm:$0xff]
  %v147 = vld [vmem:[%s1 + $0x380] sm:$0xff]
  %v148 = vld [vmem:[%s1 + $0x388] sm:$0xff]
  %v149 = vld [vmem:[%s1 + $0x390] sm:$0xff]
  %v150 = vld [vmem:[%s1 + $0x398] sm:$0xff]
  %v151 = vld [vmem:[%s1 + $0x3a0] sm:$0xff]
  %v152 = vld [vmem:[%s1 + $0x3a8] sm:$0xff]
  %v153 = vld [vmem:[%s1 + $0x3b0] sm:$0xff]
  %v154 = vld [vmem:[%s1 + $0x3b8] sm:$0xff]
  %v155 = vld [vmem:[%s1 + $0x3c0] sm:$0xff]
  %v156 = vld [vmem:[%s1 + $0x3c8] sm:$0xff]
  %v157 = vld [vmem:[%s1 + $0x3d0] sm:$0xff]
  %v158 = vld [vmem:[%s1 + $0x3d8] sm:$0xff]
  %v159 = vld [vmem:[%s1 + $0x3e0] sm:$0xff]
  %v160 = vld [vmem:[%s1 + $0x3e8] sm:$0xff]
  %v161 = vld [vmem:[%s1 + $0x3f0] sm:$0xff]
  %v162 = vld [vmem:[%s1 + $0x3f8] sm:$0xff]
  %v163 = vld [vmem:[%s1 + $0x400] sm:$0xff]
  %v164 = vld [vmem:[%s1 + $0x408] sm:$0xff]
  %v165 = vld [vmem:[%s1 + $0x410] sm:$0xff]
  %v166 = vld [vmem:[%s1 + $0x418] sm:$0xff]
  %v167 = vld [vmem:[%s1 + $0x420] sm:$0xff]
  %v168 = vld [vmem:[%s1 + $0x428] sm:$0xff]
  %v169 = vld [vmem:[%s1 + $0x430] sm:$0xff]
  %v170 = vld [vmem:[%s1 + $0x438] sm:$0xff]
  %v171 = vld [vmem:[%s1 + $0x440] sm:$0xff]
  %v172 = vld [vmem:[%s1 + $0x448] sm:$0xff]
  %v173 = vld [vmem:[%s1 + $0x450] sm:$0xff]
  %v174 = vld [vmem:[%s1 + $0x458] sm:$0xff]
  %v175 = vld [vmem:[%s1 + $0x460] sm:$0xff]
  %v176 = vld [vmem:[%s1 + $0x468] sm:$0xff]
  %v177 = vld [vmem:[%s1 + $0x470] sm:$0xff]
  %v178 = vld [vmem:[%s1 + $0x478] sm:$0xff]
  %v179 = vld [vmem:[%s1 + $0x480] sm:$0xff]
  %v180 = vld [vmem:[%s1 + $0x488] sm:$0xff]
  %v181 = vld [vmem:[%s1 + $0x490] sm:$0xff]
  %v182 = vld [vmem:[%s1 + $0x498] sm:$0xff]
  %v183 = vld [vmem:[%s1 + $0x4a0] sm:$0xff]
  %v184 = vld [vmem:[%s1 + $0x4a8] sm:$0xff]
  %v185 = vld [vmem:[%s1 + $0x4b0] sm:$0xff]
  %v186 = vld [vmem:[%s1 + $0x4b8] sm:$0xff]
  %v187 = vld [vmem:[%s1 + $0x4c0] sm:$0xff]
  %v188 = vld [vmem:[%s1 + $0x4c8] sm:$0xff]
  %v189 = vld [vmem:[%s1 + $0x4d0] sm:$0xff]
  %v190 = vld [vmem:[%s1 + $0x4d8] sm:$0xff]
  %v191 = vld [vmem:[%s1 + $0x4e0] sm:$0xff]
  %v192 = vld [vmem:[%s1 + $0x4e8] sm:$0xff]
  %v193 = vld [vmem:[%s1 + $0x4f0] sm:$0xff]
  %v194 = vld [vmem:[%s1 + $0x4f8] sm:$0xff]
  %v195 = vld [vmem:[%s1 + $0x500] sm:$0xff]
  %v196 = vld [vmem:[%s1 + $0x508] sm:$0xff]
  %v197 = vld [vmem:[%s1 + $0x510] sm:$0xff]
  %v198 = vld [vmem:[%s1 + $0x518] sm:$0xff]
  %v199 = vld [vmem:[%s1 + $0x520] sm:$0xff]
  %v200 = vld [vmem:[%s1 + $0x528] sm:$0xff]
  %v201 = vld [vmem:[%s1 + $0x530] sm:$0xff]
  %v202 = vld [vmem:[%s1 + $0x538] sm:$0xff]
  %v203 = vld [vmem:[%s1 + $0x540] sm:$0xff]
  %v204 = vld [vmem:[%s1 + $0x548] sm:$0xff]
  %v205 = vld [vmem:[%s1 + $0x550] sm:$0xff]
  %v206 = vld [vmem:[%s1 + $0x558] sm:$0xff]
  %v207 = vld [vmem:[%s1 + $0x560] sm:$0xff]
  %v208 = vld [vmem:[%s1 + $0x568] sm:$0xff]
  %v209 = vld [vmem:[%s1 + $0x570] sm:$0xff]
  %v210 = vld [vmem:[%s1 + $0x578] sm:$0xff]
  %v211 = vld [vmem:[%s1 + $0x580] sm:$0xff]
  %v212 = vld [vmem:[%s1 + $0x588] sm:$0xff]
  %v213 = vld [vmem:[%s1 + $0x590] sm:$0xff]
  %v214 = vld [vmem:[%s1 + $0x598] sm:$0xff]
  %v215 = vld [vmem:[%s1 + $0x5a0] sm:$0xff]
  %v216 = vld [vmem:[%s1 + $0x5a8] sm:$0xff]
  %v217 = vld [vmem:[%s1 + $0x5b0] sm:$0xff]
  %v218 = vld [vmem:[%s1 + $0x5b8] sm:$0xff]
  %v219 = vld [vmem:[%s1 + $0x5c0] sm:$0xff]
  %v220 = vld [vmem:[%s1 + $0x5c8] sm:$0xff]
  %v221 = vld [vmem:[%s1 + $0x5d0] sm:$0xff]
  %v222 = vld [vmem:[%s1 + $0x5d8] sm:$0xff]
  %v223 = vld [vmem:[%s1 + $0x5e0] sm:$0xff]
  %v224 = vld [vmem:[%s1 + $0x5e8] sm:$0xff]
  %v225 = vld [vmem:[%s1 + $0x5f0] sm:$0xff]
  %v226 = vld [vmem:[%s1 + $0x5f8] sm:$0xff]
  %v227 = vld [vmem:[%s1 + $0x600] sm:$0xff]
  %v228 = vld [vmem:[%s1 + $0x608] sm:$0xff]
  %v229 = vld [vmem:[%s1 + $0x610] sm:$0xff]
  %v230 = vld [vmem:[%s1 + $0x618] sm:$0xff]
  %v231 = vld [vmem:[%s1 + $0x620] sm:$0xff]
  %v232 = vld [vmem:[%s1 + $0x628] sm:$0xff]
  %v233 = vld [vmem:[%s1 + $0x630] sm:$0xff]
  %v234 = vld [vmem:[%s1 + $0x638] sm:$0xff]
  %v235 = vld [vmem:[%s1 + $0x640] sm:$0xff]
  %v236 = vld [vmem:[%s1 + $0x648] sm:$0xff]
  %v237 = vld [vmem:[%s1 + $0x650] sm:$0xff]
  %v238 = vld [vmem:[%s1 + $0x658] sm:$0xff]
  %v239 = vld [vmem:[%s1 + $0x660] sm:$0xff]
  %v240 = vld [vmem:[%s1 + $0x668] sm:$0xff]
  %v241 = vld [vmem:[%s1 + $0x670] sm:$0xff]
  %v242 = vld [vmem:[%s1 + $0x678] sm:$0xff]
  %v243 = vld [vmem:[%s1 + $0x680] sm:$0xff]
  %v244 = vld [vmem:[%s1 + $0x688] sm:$0xff]
  %v245 = vld [vmem:[%s1 + $0x690] sm:$0xff]
  %v246 = vld [vmem:[%s1 + $0x698] sm:$0xff]
  %v247 = vld [vmem:[%s1 + $0x6a0] sm:$0xff]
  %v248 = vld [vmem:[%s1 + $0x6a8] sm:$0xff]
  %v249 = vld [vmem:[%s1 + $0x6b0] sm:$0xff]
  %v250 = vld [vmem:[%s1 + $0x6b8] sm:$0xff]
  %v251 = vld [vmem:[%s1 + $0x6c0] sm:$0xff]
  %v252 = vld [vmem:[%s1 + $0x6c8] sm:$0xff]
  %v253 = vld [vmem:[%s1 + $0x6d0] sm:$0xff]
  %v254 = vld [vmem:[%s1 + $0x6d8] sm:$0xff]
  %v255 = vld [vmem:[%s1 + $0x6e0] sm:$0xff]
  %v256 = vld [vmem:[%s1 + $0x6e8] sm:$0xff]
  %v257 = vld [vmem:[%s1 + $0x6f0] sm:$0xff]
  %v258 = vld [vmem:[%s1 + $0x6f8] sm:$0xff]
  %v259 = vld [vmem:[%s1 + $0x700] sm:$0xff]
  %v260 = vld [vmem:[%s1 + $0x708] sm:$0xff]
  %v261 = vld [vmem:[%s1 + $0x710] sm:$0xff]
  %v262 = vld [vmem:[%s1 + $0x718] sm:$0xff]
  %v263 = vld [vmem:[%s1 + $0x720] sm:$0xff]
  %v264 = vld [vmem:[%s1 + $0x728] sm:$0xff]
  %v265 = vld [vmem:[%s1 + $0x730] sm:$0xff]
  %v266 = vld [vmem:[%s1 + $0x738] sm:$0xff]
  %v267 = vld [vmem:[%s1 + $0x740] sm:$0xff]
  %v268 = vld [vmem:[%s1 + $0x748] sm:$0xff]
  %v269 = vld [vmem:[%s1 + $0x750] sm:$0xff]
  %v270 = vld [vmem:[%s1 + $0x758] sm:$0xff]
  %v271 = vld [vmem:[%s1 + $0x760] sm:$0xff]
  %v272 = vld [vmem:[%s1 + $0x768] sm:$0xff]
  %v273 = vld [vmem:[%s1 + $0x770] sm:$0xff]
  %v274 = vld [vmem:[%s1 + $0x778] sm:$0xff]
  %v275 = vld [vmem:[%s1 + $0x780] sm:$0xff]
  %v276 = vld [vmem:[%s1 + $0x788] sm:$0xff]
  %v277 = vld [vmem:[%s1 + $0x790] sm:$0xff]
  %v278 = vld [vmem:[%s1 + $0x798] sm:$0xff]
  %v279 = vld [vmem:[%s1 + $0x7a0] sm:$0xff]
  %v280 = vld [vmem:[%s1 + $0x7a8] sm:$0xff]
  %v281 = vld [vmem:[%s1 + $0x7b0] sm:$0xff]
  %v282 = vld [vmem:[%s1 + $0x7b8] sm:$0xff]
  %v283 = vld [vmem:[%s1 + $0x7c0] sm:$0xff]
  %v284 = vld [vmem:[%s1 + $0x7c8] sm:$0xff]
  %v285 = vld [vmem:[%s1 + $0x7d0] sm:$0xff]
  %v286 = vld [vmem:[%s1 + $0x7d8] sm:$0xff]
  %v287 = vld [vmem:[%s1 + $0x7e0] sm:$0xff]
  %v288 = vld [vmem:[%s1 + $0x7e8] sm:$0xff]
  %v289 = vld [vmem:[%s1 + $0x7f0] sm:$0xff]
  %v290 = vld [vmem:[%s1 + $0x7f8] sm:$0xff]
  %v291 = vld [vmem:[%s1 + $0x800] sm:$0xff]
  %v292 = vld [vmem:[%s1 + $0x808] sm:$0xff]
  %v293 = vld [vmem:[%s1 + $0x810] sm:$0xff]
  %v294 = vld [vmem:[%s1 + $0x818] sm:$0xff]
  %v295 = vld [vmem:[%s1 + $0x820] sm:$0xff]
  %v296 = vld [vmem:[%s1 + $0x828] sm:$0xff]
  %v297 = vld [vmem:[%s1 + $0x830] sm:$0xff]
  %v298 = vld [vmem:[%s1 + $0x838] sm:$0xff]
  %v299 = vld [vmem:[%s1 + $0x840] sm:$0xff]
  %v300 = vld [vmem:[%s1 + $0x848] sm:$0xff]
  %v301 = vld [vmem:[%s1 + $0x850] sm:$0xff]
  %v302 = vld [vmem:[%s1 + $0x858] sm:$0xff]
  %v303 = vld [vmem:[%s1 + $0x860] sm:$0xff]
  %v304 = vld [vmem:[%s1 + $0x868] sm:$0xff]
  %v305 = vld [vmem:[%s1 + $0x870] sm:$0xff]
  %v306 = vld [vmem:[%s1 + $0x878] sm:$0xff]
  %v307 = vld [vmem:[%s1 + $0x880] sm:$0xff]
  %v308 = vld [vmem:[%s1 + $0x888] sm:$0xff]
  %v309 = vld [vmem:[%s1 + $0x890] sm:$0xff]
  %v310 = vld [vmem:[%s1 + $0x898] sm:$0xff]
  %v311 = vld [vmem:[%s1 + $0x8a0] sm:$0xff]
  %v312 = vld [vmem:[%s1 + $0x8a8] sm:$0xff]
  %v313 = vld [vmem:[%s1 + $0x8b0] sm:$0xff]
  %v314 = vld [vmem:[%s1 + $0x8b8] sm:$0xff]
  %v315 = vld [vmem:[%s1 + $0x8c0] sm:$0xff]
  %v316 = vld [vmem:[%s1 + $0x8c8] sm:$0xff]
  %v317 = vld [vmem:[%s1 + $0x8d0] sm:$0xff]
  %v318 = vld [vmem:[%s1 + $0x8d8] sm:$0xff]
  %v319 = vld [vmem:[%s1 + $0x8e0] sm:$0xff]
  %v320 = vld [vmem:[%s1 + $0x8e8] sm:$0xff]
  %v321 = vld [vmem:[%s1 + $0x8f0] sm:$0xff]
  %v322 = vld [vmem:[%s1 + $0x8f8] sm:$0xff]
  %v323 = vld [vmem:[%s1 + $0x900] sm:$0xff]
  %v324 = vld [vmem:[%s1 + $0x908] sm:$0xff]
  %v325 = vld [vmem:[%s1 + $0x910] sm:$0xff]
  %v326 = vld [vmem:[%s1 + $0x918] sm:$0xff]
  %v327 = vld [vmem:[%s1 + $0x920] sm:$0xff]
  %v328 = vld [vmem:[%s1 + $0x928] sm:$0xff]
  %v329 = vld [vmem:[%s1 + $0x930] sm:$0xff]
  %v330 = vld [vmem:[%s1 + $0x938] sm:$0xff]
  %v331 = vld [vmem:[%s1 + $0x940] sm:$0xff]
  %v332 = vld [vmem:[%s1 + $0x948] sm:$0xff]
  %v333 = vld [vmem:[%s1 + $0x950] sm:$0xff]
  %v334 = vld [vmem:[%s1 + $0x958] sm:$0xff]
  %v335 = vld [vmem:[%s1 + $0x960] sm:$0xff]
  %v336 = vld [vmem:[%s1 + $0x968] sm:$0xff]
  %v337 = vld [vmem:[%s1 + $0x970] sm:$0xff]
  %v338 = vld [vmem:[%s1 + $0x978] sm:$0xff]
  %v339 = vld [vmem:[%s1 + $0x980] sm:$0xff]
  %v340 = vld [vmem:[%s1 + $0x988] sm:$0xff]
  %v341 = vld [vmem:[%s1 + $0x990] sm:$0xff]
  %v342 = vld [vmem:[%s1 + $0x998] sm:$0xff]
  %v343 = vld [vmem:[%s1 + $0x9a0] sm:$0xff]
  %v344 = vld [vmem:[%s1 + $0x9a8] sm:$0xff]
  %v345 = vld [vmem:[%s1 + $0x9b0] sm:$0xff]
  %v346 = vld [vmem:[%s1 + $0x9b8] sm:$0xff]
  %v347 = vld [vmem:[%s1 + $0x9c0] sm:$0xff]
  %v348 = vld [vmem:[%s1 + $0x9c8] sm:$0xff]
  %v349 = vld [vmem:[%s1 + $0x9d0] sm:$0xff]
  %v350 = vld [vmem:[%s1 + $0x9d8] sm:$0xff]
  %v351 = vld [vmem:[%s1 + $0x9e0] sm:$0xff]
  %v352 = vld [vmem:[%s1 + $0x9e8] sm:$0xff]
  %v353 = vld [vmem:[%s1 + $0x9f0] sm:$0xff]
  %v354 = vld [vmem:[%s1 + $0x9f8] sm:$0xff]
  %v355 = vld [vmem:[%s1 + $0xa00] sm:$0xff]
  %v356 = vld [vmem:[%s1 + $0xa08] sm:$0xff]
  %v357 = vld [vmem:[%s1 + $0xa10] sm:$0xff]
  %v358 = vld [vmem:[%s1 + $0xa18] sm:$0xff]
  %v359 = vld [vmem:[%s1 + $0xa20] sm:$0xff]
  %v360 = vld [vmem:[%s1 + $0xa28] sm:$0xff]
  %v361 = vld [vmem:[%s1 + $0xa30] sm:$0xff]
  %v362 = vld [vmem:[%s1 + $0xa38] sm:$0xff]
  %v363 = vld [vmem:[%s1 + $0xa40] sm:$0xff]
  %v364 = vld [vmem:[%s1 + $0xa48] sm:$0xff]
  %v365 = vld [vmem:[%s1 + $0xa50] sm:$0xff]
  %v366 = vld [vmem:[%s1 + $0xa58] sm:$0xff]
  %v367 = vld [vmem:[%s1 + $0xa60] sm:$0xff]
  %v368 = vld [vmem:[%s1 + $0xa68] sm:$0xff]
  %v369 = vld [vmem:[%s1 + $0xa70] sm:$0xff]
  %v370 = vld [vmem:[%s1 + $0xa78] sm:$0xff]
  %v371 = vld [vmem:[%s1 + $0xa80] sm:$0xff]
  %v372 = vld [vmem:[%s1 + $0xa88] sm:$0xff]
  %v373 = vld [vmem:[%s1 + $0xa90] sm:$0xff]
  %v374 = vld [vmem:[%s1 + $0xa98] sm:$0xff]
  %v375 = vld [vmem:[%s1 + $0xaa0] sm:$0xff]
  %v376 = vld [vmem:[%s1 + $0xaa8] sm:$0xff]
  %v377 = vld [vmem:[%s1 + $0xab0] sm:$0xff]
  %v378 = vld [vmem:[%s1 + $0xab8] sm:$0xff]
  %v379 = vld [vmem:[%s1 + $0xac0] sm:$0xff]
  %v380 = vld [vmem:[%s1 + $0xac8] sm:$0xff]
  %v381 = vld [vmem:[%s1 + $0xad0] sm:$0xff]
  %v382 = vld [vmem:[%s1 + $0xad8] sm:$0xff]
  %v383 = vld [vmem:[%s1 + $0xae0] sm:$0xff]
  %v384 = vld [vmem:[%s1 + $0xae8] sm:$0xff]
  %v385 = vld [vmem:[%s1 + $0xaf0] sm:$0xff]
  %v386 = vld [vmem:[%s1 + $0xaf8] sm:$0xff]
  %v387 = vld [vmem:[%s1 + $0xb00] sm:$0xff]
  %v388 = vld [vmem:[%s1 + $0xb08] sm:$0xff]
  %v389 = vld [vmem:[%s1 + $0xb10] sm:$0xff]
  %v390 = vld [vmem:[%s1 + $0xb18] sm:$0xff]
  %v391 = vld [vmem:[%s1 + $0xb20] sm:$0xff]
  %v392 = vld [vmem:[%s1 + $0xb28] sm:$0xff]
  %v393 = vld [vmem:[%s1 + $0xb30] sm:$0xff]
  %v394 = vld [vmem:[%s1 + $0xb38] sm:$0xff]
  %v395 = vld [vmem:[%s1 + $0xb40] sm:$0xff]
  %v396 = vld [vmem:[%s1 + $0xb48] sm:$0xff]
  %v397 = vld [vmem:[%s1 + $0xb50] sm:$0xff]
  %v398 = vld [vmem:[%s1 + $0xb58] sm:$0xff]
  %v399 = vld [vmem:[%s1 + $0xb60] sm:$0xff]
  %v400 = vld [vmem:[%s1 + $0xb68] sm:$0xff]
  %v401 = vld [vmem:[%s1 + $0xb70] sm:$0xff]
  %v402 = vld [vmem:[%s1 + $0xb78] sm:$0xff]
  %v403 = vld [vmem:[%s1 + $0xb80] sm:$0xff]
  %v404 = vld [vmem:[%s1 + $0xb88] sm:$0xff]
  %v405 = vld [vmem:[%s1 + $0xb90] sm:$0xff]
  %v406 = vld [vmem:[%s1 + $0xb98] sm:$0xff]
  %v407 = vld [vmem:[%s1 + $0xba0] sm:$0xff]
  %v408 = vld [vmem:[%s1 + $0xba8] sm:$0xff]
  %v409 = vld [vmem:[%s1 + $0xbb0] sm:$0xff]
  %v410 = vld [vmem:[%s1 + $0xbb8] sm:$0xff]
  %v411 = vld [vmem:[%s1 + $0xbc0] sm:$0xff]
  %v412 = vld [vmem:[%s1 + $0xbc8] sm:$0xff]
  %v413 = vld [vmem:[%s1 + $0xbd0] sm:$0xff]
  %v414 = vld [vmem:[%s1 + $0xbd8] sm:$0xff]
  %v415 = vld [vmem:[%s1 + $0xbe0] sm:$0xff]
  %v416 = vld [vmem:[%s1 + $0xbe8] sm:$0xff]
  %v417 = vld [vmem:[%s1 + $0xbf0] sm:$0xff]
  %v418 = vld [vmem:[%s1 + $0xbf8] sm:$0xff]
  %v419 = vld [vmem:[%s1 + $0xc00] sm:$0xff]
  %v420 = vld [vmem:[%s1 + $0xc08] sm:$0xff]
  %v421 = vld [vmem:[%s1 + $0xc10] sm:$0xff]
  %v422 = vld [vmem:[%s1 + $0xc18] sm:$0xff]
  %v423 = vld [vmem:[%s1 + $0xc20] sm:$0xff]
  %v424 = vld [vmem:[%s1 + $0xc28] sm:$0xff]
  %v425 = vld [vmem:[%s1 + $0xc30] sm:$0xff]
  %v426 = vld [vmem:[%s1 + $0xc38] sm:$0xff]
  %v427 = vld [vmem:[%s1 + $0xc40] sm:$0xff]
  %v428 = vld [vmem:[%s1 + $0xc48] sm:$0xff]
  %v429 = vld [vmem:[%s1 + $0xc50] sm:$0xff]
  %v430 = vld [vmem:[%s1 + $0xc58] sm:$0xff]
  %v431 = vld [vmem:[%s1 + $0xc60] sm:$0xff]
  %v432 = vld [vmem:[%s1 + $0xc68] sm:$0xff]
  %v433 = vld [vmem:[%s1 + $0xc70] sm:$0xff]
  %v434 = vld [vmem:[%s1 + $0xc78] sm:$0xff]
  %v435 = vld [vmem:[%s1 + $0xc80] sm:$0xff]
  %v436 = vld [vmem:[%s1 + $0xc88] sm:$0xff]
  %v437 = vld [vmem:[%s1 + $0xc90] sm:$0xff]
  %v438 = vld [vmem:[%s1 + $0xc98] sm:$0xff]
  %v439 = vld [vmem:[%s1 + $0xca0] sm:$0xff]
  %v440 = vld [vmem:[%s1 + $0xca8] sm:$0xff]
  %v441 = vld [vmem:[%s1 + $0xcb0] sm:$0xff]
  %v442 = vld [vmem:[%s1 + $0xcb8] sm:$0xff]
  %v443 = vld [vmem:[%s1 + $0xcc0] sm:$0xff]
  %v444 = vld [vmem:[%s1 + $0xcc8] sm:$0xff]
  %v445 = vld [vmem:[%s1 + $0xcd0] sm:$0xff]
  %v446 = vld [vmem:[%s1 + $0xcd8] sm:$0xff]
  %v447 = vld [vmem:[%s1 + $0xce0] sm:$0xff]
  %v448 = vld [vmem:[%s1 + $0xce8] sm:$0xff]
  %v449 = vld [vmem:[%s1 + $0xcf0] sm:$0xff]
  %v450 = vld [vmem:[%s1 + $0xcf8] sm:$0xff]
  %v451 = vld [vmem:[%s1 + $0xd00] sm:$0xff]
  %v452 = vld [vmem:[%s1 + $0xd08] sm:$0xff]
  %v453 = vld [vmem:[%s1 + $0xd10] sm:$0xff]
  %v454 = vld [vmem:[%s1 + $0xd18] sm:$0xff]
  %v455 = vld [vmem:[%s1 + $0xd20] sm:$0xff]
  %v456 = vld [vmem:[%s1 + $0xd28] sm:$0xff]
  %v457 = vld [vmem:[%s1 + $0xd30] sm:$0xff]
  %v458 = vld [vmem:[%s1 + $0xd38] sm:$0xff]
  %v459 = vld [vmem:[%s1 + $0xd40] sm:$0xff]
  %v460 = vld [vmem:[%s1 + $0xd48] sm:$0xff]
  %v461 = vld [vmem:[%s1 + $0xd50] sm:$0xff]
  %v462 = vld [vmem:[%s1 + $0xd58] sm:$0xff]
  %v463 = vld [vmem:[%s1 + $0xd60] sm:$0xff]
  %v464 = vld [vmem:[%s1 + $0xd68] sm:$0xff]
  %v465 = vld [vmem:[%s1 + $0xd70] sm:$0xff]
  %v466 = vld [vmem:[%s1 + $0xd78] sm:$0xff]
  %v467 = vld [vmem:[%s1 + $0xd80] sm:$0xff]
  %v468 = vld [vmem:[%s1 + $0xd88] sm:$0xff]
  %v469 = vld [vmem:[%s1 + $0xd90] sm:$0xff]
  %v470 = vld [vmem:[%s1 + $0xd98] sm:$0xff]
  %v471 = vld [vmem:[%s1 + $0xda0] sm:$0xff]
  %v472 = vld [vmem:[%s1 + $0xda8] sm:$0xff]
  %v473 = vld [vmem:[%s1 + $0xdb0] sm:$0xff]
  %v474 = vld [vmem:[%s1 + $0xdb8] sm:$0xff]
  %v475 = vld [vmem:[%s1 + $0xdc0] sm:$0xff]
  %v476 = vld [vmem:[%s1 + $0xdc8] sm:$0xff]
  %v477 = vld [vmem:[%s1 + $0xdd0] sm:$0xff]
  %v478 = vld [vmem:[%s1 + $0xdd8] sm:$0xff]
  %v479 = vld [vmem:[%s1 + $0xde0] sm:$0xff]
  %v480 = vld [vmem:[%s1 + $0xde8] sm:$0xff]
  %v481 = vld [vmem:[%s1 + $0xdf0] sm:$0xff]
  %v482 = vld [vmem:[%s1 + $0xdf8] sm:$0xff]
  %v483 = vld [vmem:[%s1 + $0xe00] sm:$0xff]
  %v484 = vld [vmem:[%s1 + $0xe08] sm:$0xff]
  %v485 = vld [vmem:[%s1 + $0xe10] sm:$0xff]
  %v486 = vld [vmem:[%s1 + $0xe18] sm:$0xff]
  %v487 = vld [vmem:[%s1 + $0xe20] sm:$0xff]
  %v488 = vld [vmem:[%s1 + $0xe28] sm:$0xff]
  %v489 = vld [vmem:[%s1 + $0xe30] sm:$0xff]
  %v490 = vld [vmem:[%s1 + $0xe38] sm:$0xff]
  %v491 = vld [vmem:[%s1 + $0xe40] sm:$0xff]
  %v492 = vld [vmem:[%s1 + $0xe48] sm:$0xff]
  %v493 = vld [vmem:[%s1 + $0xe50] sm:$0xff]
  %v494 = vld [vmem:[%s1 + $0xe58] sm:$0xff]
  %v495 = vld [vmem:[%s1 + $0xe60] sm:$0xff]
  %v496 = vld [vmem:[%s1 + $0xe68] sm:$0xff]
  %v497 = vld [vmem:[%s1 + $0xe70] sm:$0xff]
  %v498 = vld [vmem:[%s1 + $0xe78] sm:$0xff]
  %v499 = vld [vmem:[%s1 + $0xe80] sm:$0xff]
  %v500 = vld [vmem:[%s1 + $0xe88] sm:$0xff]
  %v501 = vld [vmem:[%s1 + $0xe90] sm:$0xff]
  %v502 = vld [vmem:[%s1 + $0xe98] sm:$0xff]
  %v503 = vld [vmem:[%s1 + $0xea0] sm:$0xff]
  %v504 = vld [vmem:[%s1 + $0xea8] sm:$0xff]
  %v505 = vld [vmem:[%s1 + $0xeb0] sm:$0xff]
  %v506 = vld [vmem:[%s1 + $0xeb8] sm:$0xff]
  %v507 = vld [vmem:[%s1 + $0xec0] sm:$0xff]
  %v508 = vld [vmem:[%s1 + $0xec8] sm:$0xff]
  %v509 = vld [vmem:[%s1 + $0xed0] sm:$0xff]
  %v510 = vld [vmem:[%s1 + $0xed8] sm:$0xff]
  %v511 = vld [vmem:[%s1 + $0xee0] sm:$0xff]
  %v512 = vld [vmem:[%s1 + $0xee8] sm:$0xff]
  %v513 = vld [vmem:[%s1 + $0xef0] sm:$0xff]
  %v514 = vld [vmem:[%s1 + $0xef8] sm:$0xff]
  %v515 = vld [vmem:[%s1 + $0xf00] sm:$0xff]
  %v516 = vld [vmem:[%s1 + $0xf08] sm:$0xff]
  %v517 = vld [vmem:[%s1 + $0xf10] sm:$0xff]
  %v518 = vld [vmem:[%s1 + $0xf18] sm:$0xff]
  %v519 = vld [vmem:[%s1 + $0xf20] sm:$0xff]
  %v520 = vld [vmem:[%s1 + $0xf28] sm:$0xff]
  %v521 = vld [vmem:[%s1 + $0xf30] sm:$0xff]
  %v522 = vld [vmem:[%s1 + $0xf38] sm:$0xff]
  %v523 = vld [vmem:[%s1 + $0xf40] sm:$0xff]
  %v524 = vld [vmem:[%s1 + $0xf48] sm:$0xff]
  %v525 = vld [vmem:[%s1 + $0xf50] sm:$0xff]
  %v526 = vld [vmem:[%s1 + $0xf58] sm:$0xff]
  %v527 = vld [vmem:[%s1 + $0xf60] sm:$0xff]
  %v528 = vld [vmem:[%s1 + $0xf68] sm:$0xff]
  %v529 = vld [vmem:[%s1 + $0xf70] sm:$0xff]
  %v530 = vld [vmem:[%s1 + $0xf78] sm:$0xff]
  %v531 = vld [vmem:[%s1 + $0xf80] sm:$0xff]
  %v532 = vld [vmem:[%s1 + $0xf88] sm:$0xff]
  %v533 = vld [vmem:[%s1 + $0xf90] sm:$0xff]
  %v534 = vld [vmem:[%s1 + $0xf98] sm:$0xff]
  %v535 = vld [vmem:[%s1 + $0xfa0] sm:$0xff]
  %v536 = vld [vmem:[%s1 + $0xfa8] sm:$0xff]
  %v537 = vld [vmem:[%s1 + $0xfb0] sm:$0xff]
  %v538 = vld [vmem:[%s1 + $0xfb8] sm:$0xff]
  %v539 = vld [vmem:[%s1 + $0xfc0] sm:$0xff]
  %v540 = vld [vmem:[%s1 + $0xfc8] sm:$0xff]
  %v541 = vld [vmem:[%s1 + $0xfd0] sm:$0xff]
  %v542 = vld [vmem:[%s1 + $0xfd8] sm:$0xff]
  %v543 = vld [vmem:[%s1 + $0xfe0] sm:$0xff]
  %v544 = vld [vmem:[%s1 + $0xfe8] sm:$0xff]
  %v545 = vld [vmem:[%s1 + $0xff0] sm:$0xff]
  %v546 = vld [vmem:[%s1 + $0xff8] sm:$0xff]
  %v547 = vld [vmem:[%s1 + $0x1000] sm:$0xff]
  %v548 = vld [vmem:[%s1 + $0x1008] sm:$0xff]
  %v549 = vld [vmem:[%s1 + $0x1010] sm:$0xff]
  %v550 = vld [vmem:[%s1 + $0x1018] sm:$0xff]
  %v551 = vld [vmem:[%s1 + $0x1020] sm:$0xff]
  %v552 = vld [vmem:[%s1 + $0x1028] sm:$0xff]
  %v553 = vld [vmem:[%s1 + $0x1030] sm:$0xff]
  %v554 = vld [vmem:[%s1 + $0x1038] sm:$0xff]
  %v555 = vld [vmem:[%s1 + $0x1040] sm:$0xff]
  %v556 = vld [vmem:[%s1 + $0x1048] sm:$0xff]
  %v557 = vld [vmem:[%s1 + $0x1050] sm:$0xff]
  %v558 = vld [vmem:[%s1 + $0x1058] sm:$0xff]
  %v559 = vld [vmem:[%s1 + $0x1060] sm:$0xff]
  %v560 = vld [vmem:[%s1 + $0x1068] sm:$0xff]
  %v561 = vld [vmem:[%s1 + $0x1070] sm:$0xff]
  %v562 = vld [vmem:[%s1 + $0x1078] sm:$0xff]
  %v563 = vld [vmem:[%s1 + $0x1080] sm:$0xff]
  %v564 = vld [vmem:[%s1 + $0x1088] sm:$0xff]
  %v565 = vld [vmem:[%s1 + $0x1090] sm:$0xff]
  %v566 = vld [vmem:[%s1 + $0x1098] sm:$0xff]
  %v567 = vld [vmem:[%s1 + $0x10a0] sm:$0xff]
  %v568 = vld [vmem:[%s1 + $0x10a8] sm:$0xff]
  %v569 = vld [vmem:[%s1 + $0x10b0] sm:$0xff]
  %v570 = vld [vmem:[%s1 + $0x10b8] sm:$0xff]
  %v571 = vld [vmem:[%s1 + $0x10c0] sm:$0xff]
  %v572 = vld [vmem:[%s1 + $0x10c8] sm:$0xff]
  %v573 = vld [vmem:[%s1 + $0x10d0] sm:$0xff]
  %v574 = vld [vmem:[%s1 + $0x10d8] sm:$0xff]
  %v575 = vld [vmem:[%s1 + $0x10e0] sm:$0xff]
  %v576 = vld [vmem:[%s1 + $0x10e8] sm:$0xff]
  %v577 = vld [vmem:[%s1 + $0x10f0] sm:$0xff]
  %v578 = vld [vmem:[%s1 + $0x10f8] sm:$0xff]
  %v579 = vld [vmem:[%s1 + $0x1100] sm:$0xff]
  %v580 = vld [vmem:[%s1 + $0x1108] sm:$0xff]
  %v581 = vld [vmem:[%s1 + $0x1110] sm:$0xff]
  %v582 = vld [vmem:[%s1 + $0x1118] sm:$0xff]
  %v583 = vld [vmem:[%s1 + $0x1120] sm:$0xff]
  %v584 = vld [vmem:[%s1 + $0x1128] sm:$0xff]
  %v585 = vld [vmem:[%s1 + $0x1130] sm:$0xff]
  %v586 = vld [vmem:[%s1 + $0x1138] sm:$0xff]
  %v587 = vld [vmem:[%s1 + $0x1140] sm:$0xff]
  %v588 = vld [vmem:[%s1 + $0x1148] sm:$0xff]
  %v589 = vld [vmem:[%s1 + $0x1150] sm:$0xff]
  %v590 = vld [vmem:[%s1 + $0x1158] sm:$0xff]
  %v591 = vld [vmem:[%s1 + $0x1160] sm:$0xff]
  %v592 = vld [vmem:[%s1 + $0x1168] sm:$0xff]
  %v593 = vld [vmem:[%s1 + $0x1170] sm:$0xff]
  %v594 = vld [vmem:[%s1 + $0x1178] sm:$0xff]
  %v595 = vld [vmem:[%s1 + $0x1180] sm:$0xff]
  %v596 = vld [vmem:[%s1 + $0x1188] sm:$0xff]
  %v597 = vld [vmem:[%s1 + $0x1190] sm:$0xff]
  %v598 = vld [vmem:[%s1 + $0x1198] sm:$0xff]
  %v599 = vld [vmem:[%s1 + $0x11a0] sm:$0xff]
  %v600 = vld [vmem:[%s1 + $0x11a8] sm:$0xff]
  %v601 = vld [vmem:[%s1 + $0x11b0] sm:$0xff]
  %v602 = vld [vmem:[%s1 + $0x11b8] sm:$0xff]
  %v603 = vld [vmem:[%s1 + $0x11c0] sm:$0xff]
  %v604 = vld [vmem:[%s1 + $0x11c8] sm:$0xff]
  %v605 = vld [vmem:[%s1 + $0x11d0] sm:$0xff]
  %v606 = vld [vmem:[%s1 + $0x11d8] sm:$0xff]
  %v607 = vld [vmem:[%s1 + $0x11e0] sm:$0xff]
  %v608 = vld [vmem:[%s1 + $0x11e8] sm:$0xff]
  %v609 = vld [vmem:[%s1 + $0x11f0] sm:$0xff]
  %v610 = vld [vmem:[%s1 + $0x11f8] sm:$0xff]
  %v611 = vld [vmem:[%s1 + $0x1200] sm:$0xff]
  %v612 = vld [vmem:[%s1 + $0x1208] sm:$0xff]
  %v613 = vld [vmem:[%s1 + $0x1210] sm:$0xff]
  %v614 = vld [vmem:[%s1 + $0x1218] sm:$0xff]
  %v615 = vld [vmem:[%s1 + $0x1220] sm:$0xff]
  %v616 = vld [vmem:[%s1 + $0x1228] sm:$0xff]
  %v617 = vld [vmem:[%s1 + $0x1230] sm:$0xff]
  %v618 = vld [vmem:[%s1 + $0x1238] sm:$0xff]
  %v619 = vld [vmem:[%s1 + $0x1240] sm:$0xff]
  %v620 = vld [vmem:[%s1 + $0x1248] sm:$0xff]
  %v621 = vld [vmem:[%s1 + $0x1250] sm:$0xff]
  %v622 = vld [vmem:[%s1 + $0x1258] sm:$0xff]
  %v623 = vld [vmem:[%s1 + $0x1260] sm:$0xff]
  %v624 = vld [vmem:[%s1 + $0x1268] sm:$0xff]
  %v625 = vld [vmem:[%s1 + $0x1270] sm:$0xff]
  %v626 = vld [vmem:[%s1 + $0x1278] sm:$0xff]
  %v627 = vld [vmem:[%s1 + $0x1280] sm:$0xff]
  %v628 = vld [vmem:[%s1 + $0x1288] sm:$0xff]
  %v629 = vld [vmem:[%s1 + $0x1290] sm:$0xff]
  %v630 = vld [vmem:[%s1 + $0x1298] sm:$0xff]
  %v631 = vld [vmem:[%s1 + $0x12a0] sm:$0xff]
  %v632 = vld [vmem:[%s1 + $0x12a8] sm:$0xff]
  %v633 = vld [vmem:[%s1 + $0x12b0] sm:$0xff]
  %v634 = vld [vmem:[%s1 + $0x12b8] sm:$0xff]
  %v635 = vld [vmem:[%s1 + $0x12c0] sm:$0xff]
  %v636 = vld [vmem:[%s1 + $0x12c8] sm:$0xff]
  %v637 = vld [vmem:[%s1 + $0x12d0] sm:$0xff]
  %v638 = vld [vmem:[%s1 + $0x12d8] sm:$0xff]
  %v639 = vld [vmem:[%s1 + $0x12e0] sm:$0xff]
  %v640 = vld [vmem:[%s1 + $0x12e8] sm:$0xff]
  %v641 = vld [vmem:[%s1 + $0x12f0] sm:$0xff]
  %v642 = vld [vmem:[%s1 + $0x12f8] sm:$0xff]
  %v643 = vld [vmem:[%s1 + $0x1300] sm:$0xff]
  %v644 = vld [vmem:[%s1 + $0x1308] sm:$0xff]
  %v645 = vld [vmem:[%s1 + $0x1310] sm:$0xff]
  %v646 = vld [vmem:[%s1 + $0x1318] sm:$0xff]
  %v647 = vld [vmem:[%s1 + $0x1320] sm:$0xff]
  %v648 = vld [vmem:[%s1 + $0x1328] sm:$0xff]
  %v649 = vld [vmem:[%s1 + $0x1330] sm:$0xff]
  %v650 = vld [vmem:[%s1 + $0x1338] sm:$0xff]
  %v651 = vld [vmem:[%s1 + $0x1340] sm:$0xff]
  %v652 = vld [vmem:[%s1 + $0x1348] sm:$0xff]
  %v653 = vld [vmem:[%s1 + $0x1350] sm:$0xff]
  %v654 = vld [vmem:[%s1 + $0x1358] sm:$0xff]
  %v655 = vld [vmem:[%s1 + $0x1360] sm:$0xff]
  %v656 = vld [vmem:[%s1 + $0x1368] sm:$0xff]
  %v657 = vld [vmem:[%s1 + $0x1370] sm:$0xff]
  %v658 = vld [vmem:[%s1 + $0x1378] sm:$0xff]
  %v659 = vld [vmem:[%s1 + $0x1380] sm:$0xff]
  %v660 = vld [vmem:[%s1 + $0x1388] sm:$0xff]
  %v661 = vld [vmem:[%s1 + $0x1390] sm:$0xff]
  %v662 = vld [vmem:[%s1 + $0x1398] sm:$0xff]
  %v663 = vld [vmem:[%s1 + $0x13a0] sm:$0xff]
  %v664 = vld [vmem:[%s1 + $0x13a8] sm:$0xff]
  %v665 = vld [vmem:[%s1 + $0x13b0] sm:$0xff]
  %v666 = vld [vmem:[%s1 + $0x13b8] sm:$0xff]
  %v667 = vld [vmem:[%s1 + $0x13c0] sm:$0xff]
  %v668 = vld [vmem:[%s1 + $0x13c8] sm:$0xff]
  %v669 = vld [vmem:[%s1 + $0x13d0] sm:$0xff]
  %v670 = vld [vmem:[%s1 + $0x13d8] sm:$0xff]
  %v671 = vld [vmem:[%s1 + $0x13e0] sm:$0xff]
  %v672 = vld [vmem:[%s1 + $0x13e8] sm:$0xff]
  %v673 = vld [vmem:[%s1 + $0x13f0] sm:$0xff]
  %v674 = vld [vmem:[%s1 + $0x13f8] sm:$0xff]
  %v675 = vld [vmem:[%s1 + $0x1400] sm:$0xff]
  %v676 = vld [vmem:[%s1 + $0x1408] sm:$0xff]
  %v677 = vld [vmem:[%s1 + $0x1410] sm:$0xff]
  %v678 = vld [vmem:[%s1 + $0x1418] sm:$0xff]
  %v679 = vld [vmem:[%s1 + $0x1420] sm:$0xff]
  %v680 = vld [vmem:[%s1 + $0x1428] sm:$0xff]
  %v681 = vld [vmem:[%s1 + $0x1430] sm:$0xff]
  %v682 = vld [vmem:[%s1 + $0x1438] sm:$0xff]
  %v683 = vld [vmem:[%s1 + $0x1440] sm:$0xff]
  %v684 = vld [vmem:[%s1 + $0x1448] sm:$0xff]
  %v685 = vld [vmem:[%s1 + $0x1450] sm:$0xff]
  %v686 = vld [vmem:[%s1 + $0x1458] sm:$0xff]
  %v687 = vld [vmem:[%s1 + $0x1460] sm:$0xff]
  %v688 = vld [vmem:[%s1 + $0x1468] sm:$0xff]
  %v689 = vld [vmem:[%s1 + $0x1470] sm:$0xff]
  %v690 = vld [vmem:[%s1 + $0x1478] sm:$0xff]
  %v691 = vld [vmem:[%s1 + $0x1480] sm:$0xff]
  %v692 = vld [vmem:[%s1 + $0x1488] sm:$0xff]
  %v693 = vld [vmem:[%s1 + $0x1490] sm:$0xff]
  %v694 = vld [vmem:[%s1 + $0x1498] sm:$0xff]
  %v695 = vld [vmem:[%s1 + $0x14a0] sm:$0xff]
  %v696 = vld [vmem:[%s1 + $0x14a8] sm:$0xff]
  %v697 = vld [vmem:[%s1 + $0x14b0] sm:$0xff]
  %v698 = vld [vmem:[%s1 + $0x14b8] sm:$0xff]
  %v699 = vld [vmem:[%s1 + $0x14c0] sm:$0xff]
  %v700 = vld [vmem:[%s1 + $0x14c8] sm:$0xff]
  %v701 = vld [vmem:[%s1 + $0x14d0] sm:$0xff]
  %v702 = vld [vmem:[%s1 + $0x14d8] sm:$0xff]
  %v703 = vld [vmem:[%s1 + $0x14e0] sm:$0xff]
  %v704 = vld [vmem:[%s1 + $0x14e8] sm:$0xff]
  %v705 = vld [vmem:[%s1 + $0x14f0] sm:$0xff]
  %v706 = vld [vmem:[%s1 + $0x14f8] sm:$0xff]
  %v707 = vld [vmem:[%s1 + $0x1500] sm:$0xff]
  %v708 = vld [vmem:[%s1 + $0x1508] sm:$0xff]
  %v709 = vld [vmem:[%s1 + $0x1510] sm:$0xff]
  %v710 = vld [vmem:[%s1 + $0x1518] sm:$0xff]
  %v711 = vld [vmem:[%s1 + $0x1520] sm:$0xff]
  %v712 = vld [vmem:[%s1 + $0x1528] sm:$0xff]
  %v713 = vld [vmem:[%s1 + $0x1530] sm:$0xff]
  %v714 = vld [vmem:[%s1 + $0x1538] sm:$0xff]
  %v715 = vld [vmem:[%s1 + $0x1540] sm:$0xff]
  %v716 = vld [vmem:[%s1 + $0x1548] sm:$0xff]
  %v717 = vld [vmem:[%s1 + $0x1550] sm:$0xff]
  %v718 = vld [vmem:[%s1 + $0x1558] sm:$0xff]
  %v719 = vld [vmem:[%s1 + $0x1560] sm:$0xff]
  %v720 = vld [vmem:[%s1 + $0x1568] sm:$0xff]
  %v721 = vld [vmem:[%s1 + $0x1570] sm:$0xff]
  %v722 = vld [vmem:[%s1 + $0x1578] sm:$0xff]
  %v723 = vld [vmem:[%s1 + $0x1580] sm:$0xff]
  %v724 = vld [vmem:[%s1 + $0x1588] sm:$0xff]
  %v725 = vld [vmem:[%s1 + $0x1590] sm:$0xff]
  %v726 = vld [vmem:[%s1 + $0x1598] sm:$0xff]
  %v727 = vld [vmem:[%s1 + $0x15a0] sm:$0xff]
  %v728 = vld [vmem:[%s1 + $0x15a8] sm:$0xff]
  %v729 = vld [vmem:[%s1 + $0x15b0] sm:$0xff]
  %v730 = vld [vmem:[%s1 + $0x15b8] sm:$0xff]
  %v731 = vld [vmem:[%s1 + $0x15c0] sm:$0xff]
  %v732 = vld [vmem:[%s1 + $0x15c8] sm:$0xff]
  %v733 = vld [vmem:[%s1 + $0x15d0] sm:$0xff]
  %v734 = vld [vmem:[%s1 + $0x15d8] sm:$0xff]
  %v735 = vld [vmem:[%s1 + $0x15e0] sm:$0xff]
  %v736 = vld [vmem:[%s1 + $0x15e8] sm:$0xff]
  %v737 = vld [vmem:[%s1 + $0x15f0] sm:$0xff]
  %v738 = vld [vmem:[%s1 + $0x15f8] sm:$0xff]
  %v739 = vld [vmem:[%s1 + $0x1600] sm:$0xff]
  %v740 = vld [vmem:[%s1 + $0x1608] sm:$0xff]
  %v741 = vld [vmem:[%s1 + $0x1610] sm:$0xff]
  %v742 = vld [vmem:[%s1 + $0x1618] sm:$0xff]
  %v743 = vld [vmem:[%s1 + $0x1620] sm:$0xff]
  %v744 = vld [vmem:[%s1 + $0x1628] sm:$0xff]
  %v745 = vld [vmem:[%s1 + $0x1630] sm:$0xff]
  %v746 = vld [vmem:[%s1 + $0x1638] sm:$0xff]
  %v747 = vld [vmem:[%s1 + $0x1640] sm:$0xff]
  %v748 = vld [vmem:[%s1 + $0x1648] sm:$0xff]
  %v749 = vld [vmem:[%s1 + $0x1650] sm:$0xff]
  %v750 = vld [vmem:[%s1 + $0x1658] sm:$0xff]
  %v751 = vld [vmem:[%s1 + $0x1660] sm:$0xff]
  %v752 = vld [vmem:[%s1 + $0x1668] sm:$0xff]
  %v753 = vld [vmem:[%s1 + $0x1670] sm:$0xff]
  %v754 = vld [vmem:[%s1 + $0x1678] sm:$0xff]
  %v755 = vld [vmem:[%s1 + $0x1680] sm:$0xff]
  %v756 = vld [vmem:[%s1 + $0x1688] sm:$0xff]
  %v757 = vld [vmem:[%s1 + $0x1690] sm:$0xff]
  %v758 = vld [vmem:[%s1 + $0x1698] sm:$0xff]
  %v759 = vld [vmem:[%s1 + $0x16a0] sm:$0xff]
  %v760 = vld [vmem:[%s1 + $0x16a8] sm:$0xff]
  %v761 = vld [vmem:[%s1 + $0x16b0] sm:$0xff]
  %v762 = vld [vmem:[%s1 + $0x16b8] sm:$0xff]
  %v763 = vld [vmem:[%s1 + $0x16c0] sm:$0xff]
  %v764 = vld [vmem:[%s1 + $0x16c8] sm:$0xff]
  %v765 = vld [vmem:[%s1 + $0x16d0] sm:$0xff]
  %v766 = vld [vmem:[%s1 + $0x16d8] sm:$0xff]
  %v767 = vld [vmem:[%s1 + $0x16e0] sm:$0xff]
  %v768 = vld [vmem:[%s1 + $0x16e8] sm:$0xff]
  %v769 = vld [vmem:[%s1 + $0x16f0] sm:$0xff]
  %v770 = vld [vmem:[%s1 + $0x16f8] sm:$0xff]
  %v771 = vld [vmem:[%s1 + $0x1700] sm:$0xff]
  %v772 = vld [vmem:[%s1 + $0x1708] sm:$0xff]
  %v773 = vld [vmem:[%s1 + $0x1710] sm:$0xff]
  %v774 = vld [vmem:[%s1 + $0x1718] sm:$0xff]
  %v775 = vld [vmem:[%s1 + $0x1720] sm:$0xff]
  %v776 = vld [vmem:[%s1 + $0x1728] sm:$0xff]
  %v777 = vld [vmem:[%s1 + $0x1730] sm:$0xff]
  %v778 = vld [vmem:[%s1 + $0x1738] sm:$0xff]
  %v779 = vld [vmem:[%s1 + $0x1740] sm:$0xff]
  %v780 = vld [vmem:[%s1 + $0x1748] sm:$0xff]
  %v781 = vld [vmem:[%s1 + $0x1750] sm:$0xff]
  %v782 = vld [vmem:[%s1 + $0x1758] sm:$0xff]
  %v783 = vld [vmem:[%s1 + $0x1760] sm:$0xff]
  %v784 = vld [vmem:[%s1 + $0x1768] sm:$0xff]
  %v785 = vld [vmem:[%s1 + $0x1770] sm:$0xff]
  %v786 = vld [vmem:[%s1 + $0x1778] sm:$0xff]
  %v787 = vld [vmem:[%s1 + $0x1780] sm:$0xff]
  %v788 = vld [vmem:[%s1 + $0x1788] sm:$0xff]
  %v789 = vld [vmem:[%s1 + $0x1790] sm:$0xff]
  %v790 = vld [vmem:[%s1 + $0x1798] sm:$0xff]
  %v791 = vld [vmem:[%s1 + $0x17a0] sm:$0xff]
  %v792 = vld [vmem:[%s1 + $0x17a8] sm:$0xff]
  %v793 = vld [vmem:[%s1 + $0x17b0] sm:$0xff]
  %v794 = vld [vmem:[%s1 + $0x17b8] sm:$0xff]
  %v795 = vld [vmem:[%s1 + $0x17c0] sm:$0xff]
  %v796 = vld [vmem:[%s1 + $0x17c8] sm:$0xff]
  %v797 = vld [vmem:[%s1 + $0x17d0] sm:$0xff]
  %v798 = vld [vmem:[%s1 + $0x17d8] sm:$0xff]
  %v799 = vld [vmem:[%s1 + $0x17e0] sm:$0xff]
  %v800 = vld [vmem:[%s1 + $0x17e8] sm:$0xff]
  %v801 = vld [vmem:[%s1 + $0x17f0] sm:$0xff]
  %v802 = vld [vmem:[%s1 + $0x17f8] sm:$0xff]
  %v803 = vld [vmem:[%s1 + $0x1800] sm:$0xff]
  %v804 = vld [vmem:[%s1 + $0x1808] sm:$0xff]
  %v805 = vld [vmem:[%s1 + $0x1810] sm:$0xff]
  %v806 = vld [vmem:[%s1 + $0x1818] sm:$0xff]
  %v807 = vld [vmem:[%s1 + $0x1820] sm:$0xff]
  %v808 = vld [vmem:[%s1 + $0x1828] sm:$0xff]
  %v809 = vld [vmem:[%s1 + $0x1830] sm:$0xff]
  %v810 = vld [vmem:[%s1 + $0x1838] sm:$0xff]
  %v811 = vld [vmem:[%s1 + $0x1840] sm:$0xff]
  %v812 = vld [vmem:[%s1 + $0x1848] sm:$0xff]
  %v813 = vld [vmem:[%s1 + $0x1850] sm:$0xff]
  %v814 = vld [vmem:[%s1 + $0x1858] sm:$0xff]
  %v815 = vld [vmem:[%s1 + $0x1860] sm:$0xff]
  %v816 = vld [vmem:[%s1 + $0x1868] sm:$0xff]
  %v817 = vld [vmem:[%s1 + $0x1870] sm:$0xff]
  %v818 = vld [vmem:[%s1 + $0x1878] sm:$0xff]
  %v819 = vld [vmem:[%s1 + $0x1880] sm:$0xff]
  %v820 = vld [vmem:[%s1 + $0x1888] sm:$0xff]
  %v821 = vld [vmem:[%s1 + $0x1890] sm:$0xff]
  %v822 = vld [vmem:[%s1 + $0x1898] sm:$0xff]
  %v823 = vld [vmem:[%s1 + $0x18a0] sm:$0xff]
  %v824 = vld [vmem:[%s1 + $0x18a8] sm:$0xff]
  %v825 = vld [vmem:[%s1 + $0x18b0] sm:$0xff]
  %v826 = vld [vmem:[%s1 + $0x18b8] sm:$0xff]
  %v827 = vld [vmem:[%s1 + $0x18c0] sm:$0xff]
  %v828 = vld [vmem:[%s1 + $0x18c8] sm:$0xff]
  %v829 = vld [vmem:[%s1 + $0x18d0] sm:$0xff]
  %v830 = vld [vmem:[%s1 + $0x18d8] sm:$0xff]
  %v831 = vld [vmem:[%s1 + $0x18e0] sm:$0xff]
  %v832 = vld [vmem:[%s1 + $0x18e8] sm:$0xff]
  %v833 = vld [vmem:[%s1 + $0x18f0] sm:$0xff]
  %v834 = vld [vmem:[%s1 + $0x18f8] sm:$0xff]
  %v835 = vld [vmem:[%s1 + $0x1900] sm:$0xff]
  %v836 = vld [vmem:[%s1 + $0x1908] sm:$0xff]
  %v837 = vld [vmem:[%s1 + $0x1910] sm:$0xff]
  %v838 = vld [vmem:[%s1 + $0x1918] sm:$0xff]
  %v839 = vld [vmem:[%s1 + $0x1920] sm:$0xff]
  %v840 = vld [vmem:[%s1 + $0x1928] sm:$0xff]
  %v841 = vld [vmem:[%s1 + $0x1930] sm:$0xff]
  %v842 = vld [vmem:[%s1 + $0x1938] sm:$0xff]
  %v843 = vld [vmem:[%s1 + $0x1940] sm:$0xff]
  %v844 = vld [vmem:[%s1 + $0x1948] sm:$0xff]
  %v845 = vld [vmem:[%s1 + $0x1950] sm:$0xff]
  %v846 = vld [vmem:[%s1 + $0x1958] sm:$0xff]
  %v847 = vld [vmem:[%s1 + $0x1960] sm:$0xff]
  %v848 = vld [vmem:[%s1 + $0x1968] sm:$0xff]
  %v849 = vld [vmem:[%s1 + $0x1970] sm:$0xff]
  %v850 = vld [vmem:[%s1 + $0x1978] sm:$0xff]
  %v851 = vld [vmem:[%s1 + $0x1980] sm:$0xff]
  %v852 = vld [vmem:[%s1 + $0x1988] sm:$0xff]
  %v853 = vld [vmem:[%s1 + $0x1990] sm:$0xff]
  %v854 = vld [vmem:[%s1 + $0x1998] sm:$0xff]
  %v855 = vld [vmem:[%s1 + $0x19a0] sm:$0xff]
  %v856 = vld [vmem:[%s1 + $0x19a8] sm:$0xff]
  %v857 = vld [vmem:[%s1 + $0x19b0] sm:$0xff]
  %v858 = vld [vmem:[%s1 + $0x19b8] sm:$0xff]
  %v859 = vld [vmem:[%s1 + $0x19c0] sm:$0xff]
  %v860 = vld [vmem:[%s1 + $0x19c8] sm:$0xff]
  %v861 = vld [vmem:[%s1 + $0x19d0] sm:$0xff]
  %v862 = vld [vmem:[%s1 + $0x19d8] sm:$0xff]
  %v863 = vld [vmem:[%s1 + $0x19e0] sm:$0xff]
  %v864 = vld [vmem:[%s1 + $0x19e8] sm:$0xff]
  %v865 = vld [vmem:[%s1 + $0x19f0] sm:$0xff]
  %v866 = vld [vmem:[%s1 + $0x19f8] sm:$0xff]
  %v867 = vld [vmem:[%s1 + $0x1a00] sm:$0xff]
  %v868 = vld [vmem:[%s1 + $0x1a08] sm:$0xff]
  %v869 = vld [vmem:[%s1 + $0x1a10] sm:$0xff]
  %v870 = vld [vmem:[%s1 + $0x1a18] sm:$0xff]
  %v871 = vld [vmem:[%s1 + $0x1a20] sm:$0xff]
  %v872 = vld [vmem:[%s1 + $0x1a28] sm:$0xff]
  %v873 = vld [vmem:[%s1 + $0x1a30] sm:$0xff]
  %v874 = vld [vmem:[%s1 + $0x1a38] sm:$0xff]
  %v875 = vld [vmem:[%s1 + $0x1a40] sm:$0xff]
  %v876 = vld [vmem:[%s1 + $0x1a48] sm:$0xff]
  %v877 = vld [vmem:[%s1 + $0x1a50] sm:$0xff]
  %v878 = vld [vmem:[%s1 + $0x1a58] sm:$0xff]
  %v879 = vld [vmem:[%s1 + $0x1a60] sm:$0xff]
  %v880 = vld [vmem:[%s1 + $0x1a68] sm:$0xff]
  %v881 = vld [vmem:[%s1 + $0x1a70] sm:$0xff]
  %v882 = vld [vmem:[%s1 + $0x1a78] sm:$0xff]
  %v883 = vld [vmem:[%s1 + $0x1a80] sm:$0xff]
  %v884 = vld [vmem:[%s1 + $0x1a88] sm:$0xff]
  %v885 = vld [vmem:[%s1 + $0x1a90] sm:$0xff]
  %v886 = vld [vmem:[%s1 + $0x1a98] sm:$0xff]
  %v887 = vld [vmem:[%s1 + $0x1aa0] sm:$0xff]
  %v888 = vld [vmem:[%s1 + $0x1aa8] sm:$0xff]
  %v889 = vld [vmem:[%s1 + $0x1ab0] sm:$0xff]
  %v890 = vld [vmem:[%s1 + $0x1ab8] sm:$0xff]
  %v891 = vld [vmem:[%s1 + $0x1ac0] sm:$0xff]
  %v892 = vld [vmem:[%s1 + $0x1ac8] sm:$0xff]
  %v893 = vld [vmem:[%s1 + $0x1ad0] sm:$0xff]
  %v894 = vld [vmem:[%s1 + $0x1ad8] sm:$0xff]
  %v895 = vld [vmem:[%s1 + $0x1ae0] sm:$0xff]
  %v896 = vld [vmem:[%s1 + $0x1ae8] sm:$0xff]
  %v897 = vld [vmem:[%s1 + $0x1af0] sm:$0xff]
  %v898 = vld [vmem:[%s1 + $0x1af8] sm:$0xff]
  %v899 = vld [vmem:[%s1 + $0x1b00] sm:$0xff]
  %v900 = vld [vmem:[%s1 + $0x1b08] sm:$0xff]
  %v901 = vld [vmem:[%s1 + $0x1b10] sm:$0xff]
  %v902 = vld [vmem:[%s1 + $0x1b18] sm:$0xff]
  %v903 = vld [vmem:[%s1 + $0x1b20] sm:$0xff]
  %v904 = vld [vmem:[%s1 + $0x1b28] sm:$0xff]
  %v905 = vld [vmem:[%s1 + $0x1b30] sm:$0xff]
  %v906 = vld [vmem:[%s1 + $0x1b38] sm:$0xff]
  %v907 = vld [vmem:[%s1 + $0x1b40] sm:$0xff]
  %v908 = vld [vmem:[%s1 + $0x1b48] sm:$0xff]
  %v909 = vld [vmem:[%s1 + $0x1b50] sm:$0xff]
  %v910 = vld [vmem:[%s1 + $0x1b58] sm:$0xff]
  %v911 = vld [vmem:[%s1 + $0x1b60] sm:$0xff]
  %v912 = vld [vmem:[%s1 + $0x1b68] sm:$0xff]
  %v913 = vld [vmem:[%s1 + $0x1b70] sm:$0xff]
  %v914 = vld [vmem:[%s1 + $0x1b78] sm:$0xff]
  %v915 = vld [vmem:[%s1 + $0x1b80] sm:$0xff]
  %v916 = vld [vmem:[%s1 + $0x1b88] sm:$0xff]
  %v917 = vld [vmem:[%s1 + $0x1b90] sm:$0xff]
  %v918 = vld [vmem:[%s1 + $0x1b98] sm:$0xff]
  %v919 = vld [vmem:[%s1 + $0x1ba0] sm:$0xff]
  %v920 = vld [vmem:[%s1 + $0x1ba8] sm:$0xff]
  %v921 = vld [vmem:[%s1 + $0x1bb0] sm:$0xff]
  %v922 = vld [vmem:[%s1 + $0x1bb8] sm:$0xff]
  %v923 = vld [vmem:[%s1 + $0x1bc0] sm:$0xff]
  %v924 = vld [vmem:[%s1 + $0x1bc8] sm:$0xff]
  %v925 = vld [vmem:[%s1 + $0x1bd0] sm:$0xff]
  %v926 = vld [vmem:[%s1 + $0x1bd8] sm:$0xff]
  %v927 = vld [vmem:[%s1 + $0x1be0] sm:$0xff]
  %v928 = vld [vmem:[%s1 + $0x1be8] sm:$0xff]
  %v929 = vld [vmem:[%s1 + $0x1bf0] sm:$0xff]
  %v930 = vld [vmem:[%s1 + $0x1bf8] sm:$0xff]
  %v931 = vld [vmem:[%s1 + $0x1c00] sm:$0xff]
  %v932 = vld [vmem:[%s1 + $0x1c08] sm:$0xff]
  %v933 = vld [vmem:[%s1 + $0x1c10] sm:$0xff]
  %v934 = vld [vmem:[%s1 + $0x1c18] sm:$0xff]
  %v935 = vld [vmem:[%s1 + $0x1c20] sm:$0xff]
  %v936 = vld [vmem:[%s1 + $0x1c28] sm:$0xff]
  %v937 = vld [vmem:[%s1 + $0x1c30] sm:$0xff]
  %v938 = vld [vmem:[%s1 + $0x1c38] sm:$0xff]
  %v939 = vld [vmem:[%s1 + $0x1c40] sm:$0xff]
  %v940 = vld [vmem:[%s1 + $0x1c48] sm:$0xff]
  %v941 = vld [vmem:[%s1 + $0x1c50] sm:$0xff]
  %v942 = vld [vmem:[%s1 + $0x1c58] sm:$0xff]
  %v943 = vld [vmem:[%s1 + $0x1c60] sm:$0xff]
  %v944 = vld [vmem:[%s1 + $0x1c68] sm:$0xff]
  %v945 = vld [vmem:[%s1 + $0x1c70] sm:$0xff]
  %v946 = vld [vmem:[%s1 + $0x1c78] sm:$0xff]
  %v947 = vld [vmem:[%s1 + $0x1c80] sm:$0xff]
  %v948 = vld [vmem:[%s1 + $0x1c88] sm:$0xff]
  %v949 = vld [vmem:[%s1 + $0x1c90] sm:$0xff]
  %v950 = vld [vmem:[%s1 + $0x1c98] sm:$0xff]
  %v951 = vld [vmem:[%s1 + $0x1ca0] sm:$0xff]
  %v952 = vld [vmem:[%s1 + $0x1ca8] sm:$0xff]
  %v953 = vld [vmem:[%s1 + $0x1cb0] sm:$0xff]
  %v954 = vld [vmem:[%s1 + $0x1cb8] sm:$0xff]
  %v955 = vld [vmem:[%s1 + $0x1cc0] sm:$0xff]
  %v956 = vld [vmem:[%s1 + $0x1cc8] sm:$0xff]
  %v957 = vld [vmem:[%s1 + $0x1cd0] sm:$0xff]
  %v958 = vld [vmem:[%s1 + $0x1cd8] sm:$0xff]
  %v959 = vld [vmem:[%s1 + $0x1ce0] sm:$0xff]
  %v960 = vld [vmem:[%s1 + $0x1ce8] sm:$0xff]
  %v961 = vld [vmem:[%s1 + $0x1cf0] sm:$0xff]
  %v962 = vld [vmem:[%s1 + $0x1cf8] sm:$0xff]
  %v963 = vld [vmem:[%s1 + $0x1d00] sm:$0xff]
  %v964 = vld [vmem:[%s1 + $0x1d08] sm:$0xff]
  %v965 = vld [vmem:[%s1 + $0x1d10] sm:$0xff]
  %v966 = vld [vmem:[%s1 + $0x1d18] sm:$0xff]
  %v967 = vld [vmem:[%s1 + $0x1d20] sm:$0xff]
  %v968 = vld [vmem:[%s1 + $0x1d28] sm:$0xff]
  %v969 = vld [vmem:[%s1 + $0x1d30] sm:$0xff]
  %v970 = vld [vmem:[%s1 + $0x1d38] sm:$0xff]
  %v971 = vld [vmem:[%s1 + $0x1d40] sm:$0xff]
  %v972 = vld [vmem:[%s1 + $0x1d48] sm:$0xff]
  %v973 = vld [vmem:[%s1 + $0x1d50] sm:$0xff]
  %v974 = vld [vmem:[%s1 + $0x1d58] sm:$0xff]
  %v975 = vld [vmem:[%s1 + $0x1d60] sm:$0xff]
  %v976 = vld [vmem:[%s1 + $0x1d68] sm:$0xff]
  %v977 = vld [vmem:[%s1 + $0x1d70] sm:$0xff]
  %v978 = vld [vmem:[%s1 + $0x1d78] sm:$0xff]
  %v979 = vld [vmem:[%s1 + $0x1d80] sm:$0xff]
  %v980 = vld [vmem:[%s1 + $0x1d88] sm:$0xff]
  %v981 = vld [vmem:[%s1 + $0x1d90] sm:$0xff]
  %v982 = vld [vmem:[%s1 + $0x1d98] sm:$0xff]
  %v983 = vld [vmem:[%s1 + $0x1da0] sm:$0xff]
  %v984 = vld [vmem:[%s1 + $0x1da8] sm:$0xff]
  %v985 = vld [vmem:[%s1 + $0x1db0] sm:$0xff]
  %v986 = vld [vmem:[%s1 + $0x1db8] sm:$0xff]
  %v987 = vld [vmem:[%s1 + $0x1dc0] sm:$0xff]
  %v988 = vld [vmem:[%s1 + $0x1dc8] sm:$0xff]
  %v989 = vld [vmem:[%s1 + $0x1dd0] sm:$0xff]
  %v990 = vld [vmem:[%s1 + $0x1dd8] sm:$0xff]
  %v991 = vld [vmem:[%s1 + $0x1de0] sm:$0xff]
  %v992 = vld [vmem:[%s1 + $0x1de8] sm:$0xff]
  %v993 = vld [vmem:[%s1 + $0x1df0] sm:$0xff]
  %v994 = vld [vmem:[%s1 + $0x1df8] sm:$0xff]
  %v995 = vld [vmem:[%s1 + $0x1e00] sm:$0xff]
  %v996 = vld [vmem:[%s1 + $0x1e08] sm:$0xff]
  %v997 = vld [vmem:[%s1 + $0x1e10] sm:$0xff]
  %v998 = vld [vmem:[%s1 + $0x1e18] sm:$0xff]
  %v999 = vld [vmem:[%s1 + $0x1e20] sm:$0xff]
  %v1000 = vld [vmem:[%s1 + $0x1e28] sm:$0xff]
  %v1001 = vld [vmem:[%s1 + $0x1e30] sm:$0xff]
  %v1002 = vld [vmem:[%s1 + $0x1e38] sm:$0xff]
  %v1003 = vld [vmem:[%s1 + $0x1e40] sm:$0xff]
  %v1004 = vld [vmem:[%s1 + $0x1e48] sm:$0xff]
  %v1005 = vld [vmem:[%s1 + $0x1e50] sm:$0xff]
  %v1006 = vld [vmem:[%s1 + $0x1e58] sm:$0xff]
  %v1007 = vld [vmem:[%s1 + $0x1e60] sm:$0xff]
  %v1008 = vld [vmem:[%s1 + $0x1e68] sm:$0xff]
  %v1009 = vld [vmem:[%s1 + $0x1e70] sm:$0xff]
  %v1010 = vld [vmem:[%s1 + $0x1e78] sm:$0xff]
  %v1011 = vld [vmem:[%s1 + $0x1e80] sm:$0xff]
  %v1012 = vld [vmem:[%s1 + $0x1e88] sm:$0xff]
  %v1013 = vld [vmem:[%s1 + $0x1e90] sm:$0xff]
  %v1014 = vld [vmem:[%s1 + $0x1e98] sm:$0xff]
  %v1015 = vld [vmem:[%s1 + $0x1ea0] sm:$0xff]
  %v1016 = vld [vmem:[%s1 + $0x1ea8] sm:$0xff]
  %v1017 = vld [vmem:[%s1 + $0x1eb0] sm:$0xff]
  %v1018 = vld [vmem:[%s1 + $0x1eb8] sm:$0xff]
  %v1019 = vld [vmem:[%s1 + $0x1ec0] sm:$0xff]
  %v1020 = vld [vmem:[%s1 + $0x1ec8] sm:$0xff]
  %v1021 = vld [vmem:[%s1 + $0x1ed0] sm:$0xff]
  %v1022 = vld [vmem:[%s1 + $0x1ed8] sm:$0xff]
  %v1023 = vld [vmem:[%s1 + $0x1ee0] sm:$0xff]
  %v1024 = vld [vmem:[%s1 + $0x1ee8] sm:$0xff]
  %v1025 = vld [vmem:[%s1 + $0x1ef0] sm:$0xff]
  %v1026 = vld [vmem:[%s1 + $0x1ef8] sm:$0xff]
  %v1027 = vld [vmem:[%s1 + $0x1f00] sm:$0xff]
  %v1028 = vld [vmem:[%s1 + $0x1f08] sm:$0xff]
  %v1029 = vld [vmem:[%s1 + $0x1f10] sm:$0xff]
  %v1030 = vld [vmem:[%s1 + $0x1f18] sm:$0xff]
  %v1031 = vld [vmem:[%s1 + $0x1f20] sm:$0xff]
  %v1032 = vld [vmem:[%s1 + $0x1f28] sm:$0xff]
  %v1033 = vld [vmem:[%s1 + $0x1f30] sm:$0xff]
  %v1034 = vld [vmem:[%s1 + $0x1f38] sm:$0xff]
  %v1035 = vld [vmem:[%s1 + $0x1f40] sm:$0xff]
  %v1036 = vld [vmem:[%s1 + $0x1f48] sm:$0xff]
  %v1037 = vld [vmem:[%s1 + $0x1f50] sm:$0xff]
  %v1038 = vld [vmem:[%s1 + $0x1f58] sm:$0xff]
  %v1039 = vld [vmem:[%s1 + $0x1f60] sm:$0xff]
  %v1040 = vld [vmem:[%s1 + $0x1f68] sm:$0xff]
  %v1041 = vld [vmem:[%s1 + $0x1f70] sm:$0xff]
  %v1042 = vld [vmem:[%s1 + $0x1f78] sm:$0xff]
  %v1043 = vld [vmem:[%s1 + $0x1f80] sm:$0xff]
  %v1044 = vld [vmem:[%s1 + $0x1f88] sm:$0xff]
  %v1045 = vld [vmem:[%s1 + $0x1f90] sm:$0xff]
  %v1046 = vld [vmem:[%s1 + $0x1f98] sm:$0xff]
  %v1047 = vld [vmem:[%s1 + $0x1fa0] sm:$0xff]
  %v1048 = vld [vmem:[%s1 + $0x1fa8] sm:$0xff]
  %v1049 = vld [vmem:[%s1 + $0x1fb0] sm:$0xff]
  %v1050 = vld [vmem:[%s1 + $0x1fb8] sm:$0xff]
  %v1051 = vld [vmem:[%s1 + $0x1fc0] sm:$0xff]
  %v1052 = vld [vmem:[%s1 + $0x1fc8] sm:$0xff]
  %v1053 = vld [vmem:[%s1 + $0x1fd0] sm:$0xff]
  %v1054 = vld [vmem:[%s1 + $0x1fd8] sm:$0xff]
  %v1055 = vld [vmem:[%s1 + $0x1fe0] sm:$0xff]
  %v1056 = vld [vmem:[%s1 + $0x1fe8] sm:$0xff]
  %v1057 = vld [vmem:[%s1 + $0x1ff0] sm:$0xff]
  %v1058 = vld [vmem:[%s1 + $0x1ff8] sm:$0xff]
  %v1059 = vld [vmem:[%s1 + $0x2000] sm:$0xff]
  %v1060 = vld [vmem:[%s1 + $0x2008] sm:$0xff]
  %v1061 = vld [vmem:[%s1 + $0x2010] sm:$0xff]
  %v1062 = vld [vmem:[%s1 + $0x2018] sm:$0xff]
  %v1063 = vld [vmem:[%s1 + $0x2020] sm:$0xff]
  %v1064 = vld [vmem:[%s1 + $0x2028] sm:$0xff]
  %v1065 = vld [vmem:[%s1 + $0x2030] sm:$0xff]
  %v1066 = vld [vmem:[%s1 + $0x2038] sm:$0xff]
  %v1067 = vld [vmem:[%s1 + $0x2040] sm:$0xff]
  %v1068 = vld [vmem:[%s1 + $0x2048] sm:$0xff]
  %v1069 = vld [vmem:[%s1 + $0x2050] sm:$0xff]
  %v1070 = vld [vmem:[%s1 + $0x2058] sm:$0xff]
  %v1071 = vld [vmem:[%s1 + $0x2060] sm:$0xff]
  %v1072 = vld [vmem:[%s1 + $0x2068] sm:$0xff]
  %v1073 = vld [vmem:[%s1 + $0x2070] sm:$0xff]
  %v1074 = vld [vmem:[%s1 + $0x2078] sm:$0xff]
  %v1075 = vld [vmem:[%s1 + $0x2080] sm:$0xff]
  %v1076 = vld [vmem:[%s1 + $0x2088] sm:$0xff]
  %v1077 = vld [vmem:[%s1 + $0x2090] sm:$0xff]
  %v1078 = vld [vmem:[%s1 + $0x2098] sm:$0xff]
  %v1079 = vld [vmem:[%s1 + $0x20a0] sm:$0xff]
  %v1080 = vld [vmem:[%s1 + $0x20a8] sm:$0xff]
  %v1081 = vld [vmem:[%s1 + $0x20b0] sm:$0xff]
  %v1082 = vld [vmem:[%s1 + $0x20b8] sm:$0xff]
  %v1083 = vld [vmem:[%s1 + $0x20c0] sm:$0xff]
  %v1084 = vld [vmem:[%s1 + $0x20c8] sm:$0xff]
  %v1085 = vld [vmem:[%s1 + $0x20d0] sm:$0xff]
  %v1086 = vld [vmem:[%s1 + $0x20d8] sm:$0xff]
  %v1087 = vld [vmem:[%s1 + $0x20e0] sm:$0xff]
  %v1088 = vld [vmem:[%s1 + $0x20e8] sm:$0xff]
  %v1089 = vld [vmem:[%s1 + $0x20f0] sm:$0xff]
  %v1090 = vld [vmem:[%s1 + $0x20f8] sm:$0xff]
  %v1091 = vld [vmem:[%s1 + $0x2100] sm:$0xff]
  %v1092 = vld [vmem:[%s1 + $0x2108] sm:$0xff]
  %v1093 = vld [vmem:[%s1 + $0x2110] sm:$0xff]
  %v1094 = vld [vmem:[%s1 + $0x2118] sm:$0xff]
  %v1095 = vld [vmem:[%s1 + $0x2120] sm:$0xff]
  %v1096 = vld [vmem:[%s1 + $0x2128] sm:$0xff]
  %v1097 = vld [vmem:[%s1 + $0x2130] sm:$0xff]
  %v1098 = vld [vmem:[%s1 + $0x2138] sm:$0xff]
  %v1099 = vld [vmem:[%s1 + $0x2140] sm:$0xff]
  %v1100 = vld [vmem:[%s1 + $0x2148] sm:$0xff]
  %v1101 = vld [vmem:[%s1 + $0x2150] sm:$0xff]
  %v1102 = vld [vmem:[%s1 + $0x2158] sm:$0xff]
  %v1103 = vld [vmem:[%s1 + $0x2160] sm:$0xff]
  %v1104 = vld [vmem:[%s1 + $0x2168] sm:$0xff]
  %v1105 = vld [vmem:[%s1 + $0x2170] sm:$0xff]
  %v1106 = vld [vmem:[%s1 + $0x2178] sm:$0xff]
  %v1107 = vld [vmem:[%s1 + $0x2180] sm:$0xff]
  %v1108 = vld [vmem:[%s1 + $0x2188] sm:$0xff]
  %v1109 = vld [vmem:[%s1 + $0x2190] sm:$0xff]
  %v1110 = vld [vmem:[%s1 + $0x2198] sm:$0xff]
  %v1111 = vld [vmem:[%s1 + $0x21a0] sm:$0xff]
  %v1112 = vld [vmem:[%s1 + $0x21a8] sm:$0xff]
  %v1113 = vld [vmem:[%s1 + $0x21b0] sm:$0xff]
  %v1114 = vld [vmem:[%s1 + $0x21b8] sm:$0xff]
  %v1115 = vld [vmem:[%s1 + $0x21c0] sm:$0xff]
  %v1116 = vld [vmem:[%s1 + $0x21c8] sm:$0xff]
  %v1117 = vld [vmem:[%s1 + $0x21d0] sm:$0xff]
  %v1118 = vld [vmem:[%s1 + $0x21d8] sm:$0xff]
  %v1119 = vld [vmem:[%s1 + $0x21e0] sm:$0xff]
  %v1120 = vld [vmem:[%s1 + $0x21e8] sm:$0xff]
  %v1121 = vld [vmem:[%s1 + $0x21f0] sm:$0xff]
  %v1122 = vld [vmem:[%s1 + $0x21f8] sm:$0xff]
  %v1123 = vld [vmem:[%s1 + $0x2200] sm:$0xff]
  %v1124 = vld [vmem:[%s1 + $0x2208] sm:$0xff]
  %v1125 = vld [vmem:[%s1 + $0x2210] sm:$0xff]
  %v1126 = vld [vmem:[%s1 + $0x2218] sm:$0xff]
  %v1127 = vld [vmem:[%s1 + $0x2220] sm:$0xff]
  %v1128 = vld [vmem:[%s1 + $0x2228] sm:$0xff]
  %v1129 = vld [vmem:[%s1 + $0x2230] sm:$0xff]
  %v1130 = vld [vmem:[%s1 + $0x2238] sm:$0xff]
  %v1131 = vld [vmem:[%s1 + $0x2240] sm:$0xff]
  %v1132 = vld [vmem:[%s1 + $0x2248] sm:$0xff]
  %v1133 = vld [vmem:[%s1 + $0x2250] sm:$0xff]
  %v1134 = vld [vmem:[%s1 + $0x2258] sm:$0xff]
  %v1135 = vld [vmem:[%s1 + $0x2260] sm:$0xff]
  %v1136 = vld [vmem:[%s1 + $0x2268] sm:$0xff]
  %v1137 = vld [vmem:[%s1 + $0x2270] sm:$0xff]
  %v1138 = vld [vmem:[%s1 + $0x2278] sm:$0xff]
  %v1139 = vld [vmem:[%s1 + $0x2280] sm:$0xff]
  %v1140 = vld [vmem:[%s1 + $0x2288] sm:$0xff]
  %v1141 = vld [vmem:[%s1 + $0x2290] sm:$0xff]
  %v1142 = vld [vmem:[%s1 + $0x2298] sm:$0xff]
  %v1143 = vld [vmem:[%s1 + $0x22a0] sm:$0xff]
  %v1144 = vld [vmem:[%s1 + $0x22a8] sm:$0xff]
  %v1145 = vld [vmem:[%s1 + $0x22b0] sm:$0xff]
  %v1146 = vld [vmem:[%s1 + $0x22b8] sm:$0xff]
  %v1147 = vld [vmem:[%s1 + $0x22c0] sm:$0xff]
  %v1148 = vld [vmem:[%s1 + $0x22c8] sm:$0xff]
  %v1149 = vld [vmem:[%s1 + $0x22d0] sm:$0xff]
  %v1150 = vld [vmem:[%s1 + $0x22d8] sm:$0xff]
  %v1151 = vld [vmem:[%s1 + $0x22e0] sm:$0xff]
  %v1152 = vld [vmem:[%s1 + $0x22e8] sm:$0xff]
  %v1153 = vld [vmem:[%s1 + $0x22f0] sm:$0xff]
  %v1154 = vld [vmem:[%s1 + $0x22f8] sm:$0xff]
  %v1155 = vld [vmem:[%s1 + $0x2300] sm:$0xff]
  %v1156 = vld [vmem:[%s1 + $0x2308] sm:$0xff]
  %v1157 = vld [vmem:[%s1 + $0x2310] sm:$0xff]
  %v1158 = vld [vmem:[%s1 + $0x2318] sm:$0xff]
  %v1159 = vld [vmem:[%s1 + $0x2320] sm:$0xff]
  %v1160 = vld [vmem:[%s1 + $0x2328] sm:$0xff]
  %v1161 = vld [vmem:[%s1 + $0x2330] sm:$0xff]
  %v1162 = vld [vmem:[%s1 + $0x2338] sm:$0xff]
  %v1163 = vld [vmem:[%s1 + $0x2340] sm:$0xff]
  %v1164 = vld [vmem:[%s1 + $0x2348] sm:$0xff]
  %v1165 = vld [vmem:[%s1 + $0x2350] sm:$0xff]
  %v1166 = vld [vmem:[%s1 + $0x2358] sm:$0xff]
  %v1167 = vld [vmem:[%s1 + $0x2360] sm:$0xff]
  %v1168 = vld [vmem:[%s1 + $0x2368] sm:$0xff]
  %v1169 = vld [vmem:[%s1 + $0x2370] sm:$0xff]
  %v1170 = vld [vmem:[%s1 + $0x2378] sm:$0xff]
  %v1171 = vld [vmem:[%s1 + $0x2380] sm:$0xff]
  %v1172 = vld [vmem:[%s1 + $0x2388] sm:$0xff]
  %v1173 = vld [vmem:[%s1 + $0x2390] sm:$0xff]
  %v1174 = vld [vmem:[%s1 + $0x2398] sm:$0xff]
  %v1175 = vld [vmem:[%s1 + $0x23a0] sm:$0xff]
  %v1176 = vld [vmem:[%s1 + $0x23a8] sm:$0xff]
  %v1177 = vld [vmem:[%s1 + $0x23b0] sm:$0xff]
  %v1178 = vld [vmem:[%s1 + $0x23b8] sm:$0xff]
  %v1179 = vld [vmem:[%s1 + $0x23c0] sm:$0xff]
  %v1180 = vld [vmem:[%s1 + $0x23c8] sm:$0xff]
  %v1181 = vld [vmem:[%s1 + $0x23d0] sm:$0xff]
  %v1182 = vld [vmem:[%s1 + $0x23d8] sm:$0xff]
  %v1183 = vld [vmem:[%s1 + $0x23e0] sm:$0xff]
  %v1184 = vld [vmem:[%s1 + $0x23e8] sm:$0xff]
  %v1185 = vld [vmem:[%s1 + $0x23f0] sm:$0xff]
  %v1186 = vld [vmem:[%s1 + $0x23f8] sm:$0xff]
  %v1187 = vld [vmem:[%s2] sm:$0xff]
  %v1189 = vlaneseq
  %v1190 = vshrl.u32 %v1189, 7
  %v1191 = vsub.s32 0, %v1190
  %v1192 = vrot.slane %v1187, %v1191
  %v1193 = vlaneseq
  %v1194 = vshrl.u32 %v1193, 7
  %v1195 = vsub.s32 1, %v1194
  %v1196 = vrot.slane %v1187, %v1195
  %v1197 = vlaneseq
  %v1198 = vshrl.u32 %v1197, 7
  %v1199 = vsub.s32 2, %v1198
  %v1200 = vrot.slane %v1187, %v1199
  %v1201 = vlaneseq
  %v1202 = vshrl.u32 %v1201, 7
  %v1203 = vsub.s32 3, %v1202
  %v1204 = vrot.slane %v1187, %v1203
  %v1205 = vlaneseq
  %v1206 = vshrl.u32 %v1205, 7
  %v1207 = vsub.s32 4, %v1206
  %v1208 = vrot.slane %v1187, %v1207
  %v1209 = vlaneseq
  %v1210 = vshrl.u32 %v1209, 7
  %v1211 = vsub.s32 5, %v1210
  %v1212 = vrot.slane %v1187, %v1211
  %v1213 = vlaneseq
  %v1214 = vshrl.u32 %v1213, 7
  %v1215 = vsub.s32 6, %v1214
  %v1216 = vrot.slane %v1187, %v1215
  %v1217 = vlaneseq
  %v1218 = vshrl.u32 %v1217, 7
  %v1219 = vsub.s32 7, %v1218
  %v1220 = vrot.slane %v1187, %v1219
  %1229 = vmatprep.subr.mxu0 %v36
  %1230 = vmatpush1.msra.mxu0 %v35
  %1231 = vmatprep.subr.mxu0 %v44
  %1232 = vmatpush1.msra.mxu0 %v43
  %1233 = vmatprep.subr.mxu0 %v52
  %1234 = vmatpush1.msra.mxu0 %v51
  %1235 = vmatprep.subr.mxu0 %v60
  %1236 = vmatpush1.msra.mxu0 %v59
  %1237 = vmatprep.subr.mxu0 %v68
  %1238 = vmatpush1.msra.mxu0 %v67
  %1239 = vmatprep.subr.mxu0 %v76
  %1240 = vmatpush1.msra.mxu0 %v75
  %1241 = vmatprep.subr.mxu0 %v84
  %1242 = vmatpush1.msra.mxu0 %v83
  %1243 = vmatprep.subr.mxu0 %v92
  %1244 = vmatpush1.msra.mxu0 %v91
  %1245 = vmatprep.subr.mxu0 %v100
  %1246 = vmatpush1.msra.mxu0 %v99
  %1247 = vmatprep.subr.mxu0 %v108
  %1248 = vmatpush1.msra.mxu0 %v107
  %1249 = vmatprep.subr.mxu0 %v116
  %1250 = vmatpush1.msra.mxu0 %v115
  %1251 = vmatprep.subr.mxu0 %v124
  %1252 = vmatpush1.msra.mxu0 %v123
  %1253 = vmatprep.subr.mxu0 %v132
  %1254 = vmatpush1.msra.mxu0 %v131
  %1255 = vmatprep.subr.mxu0 %v140
  %1256 = vmatpush1.msra.mxu0 %v139
  %1257 = vmatprep.subr.mxu0 %v148
  %1258 = vmatpush1.msra.mxu0 %v147
  %1259 = vmatprep.subr.mxu0 %v156
  %1260 = vmatpush1.msra.mxu0 %v155
  %1261 = vmatprep.subr.mxu0 %v164
  %1262 = vmatpush1.msra.mxu0 %v163
  %1263 = vmatprep.subr.mxu0 %v172
  %1264 = vmatpush1.msra.mxu0 %v171
  %1265 = vmatprep.subr.mxu0 %v180
  %1266 = vmatpush1.msra.mxu0 %v179
  %1267 = vmatprep.subr.mxu0 %v188
  %1268 = vmatpush1.msra.mxu0 %v187
  %1269 = vmatprep.subr.mxu0 %v196
  %1270 = vmatpush1.msra.mxu0 %v195
  %1271 = vmatprep.subr.mxu0 %v204
  %1272 = vmatpush1.msra.mxu0 %v203
  %1273 = vmatprep.subr.mxu0 %v212
  %1274 = vmatpush1.msra.mxu0 %v211
  %1275 = vmatprep.subr.mxu0 %v220
  %1276 = vmatpush1.msra.mxu0 %v219
  %1277 = vmatprep.subr.mxu0 %v228
  %1278 = vmatpush1.msra.mxu0 %v227
  %1279 = vmatprep.subr.mxu0 %v236
  %1280 = vmatpush1.msra.mxu0 %v235
  %1281 = vmatprep.subr.mxu0 %v244
  %1282 = vmatpush1.msra.mxu0 %v243
  %1283 = vmatprep.subr.mxu0 %v252
  %1284 = vmatpush1.msra.mxu0 %v251
  %1285 = vmatprep.subr.mxu0 %v260
  %1286 = vmatpush1.msra.mxu0 %v259
  %1287 = vmatprep.subr.mxu0 %v268
  %1288 = vmatpush1.msra.mxu0 %v267
  %1289 = vmatprep.subr.mxu0 %v276
  %1290 = vmatpush1.msra.mxu0 %v275
  %1291 = vmatprep.subr.mxu0 %v284
  %1292 = vmatpush1.msra.mxu0 %v283
  %1293 = vmatprep.mubr.f32.mxu0 %v27
  %1294 = vmatmul.mubr.f32.gmra.mrb[0].mxu0 %v26
  %v1295 = vpop.f32.mrb[0].mxu0
  %v1296 = vadd.f32 %v1192, %v1295
  %v1297 = vpop.f32.mrb[0].mxu0
  %v1298 = vadd.f32 %v1196, %v1297
  %1299 = vdwg.mxu0
  %1300 = vmatprep.subr.mxu0 %v292
  %1301 = vmatpush1.msra.mxu0 %v291
  %1302 = vmatprep.subr.mxu0 %v300
  %1303 = vmatpush1.msra.mxu0 %v299
  %1304 = vmatprep.subr.mxu0 %v308
  %1305 = vmatpush1.msra.mxu0 %v307
  %1306 = vmatprep.subr.mxu0 %v316
  %1307 = vmatpush1.msra.mxu0 %v315
  %1308 = vmatprep.subr.mxu0 %v324
  %1309 = vmatpush1.msra.mxu0 %v323
  %1310 = vmatprep.subr.mxu0 %v332
  %1311 = vmatpush1.msra.mxu0 %v331
  %1312 = vmatprep.subr.mxu0 %v340
  %1313 = vmatpush1.msra.mxu0 %v339
  %1314 = vmatprep.subr.mxu0 %v348
  %1315 = vmatpush1.msra.mxu0 %v347
  %1316 = vmatprep.subr.mxu0 %v356
  %1317 = vmatpush1.msra.mxu0 %v355
  %1318 = vmatprep.subr.mxu0 %v364
  %1319 = vmatpush1.msra.mxu0 %v363
  %1320 = vmatprep.subr.mxu0 %v372
  %1321 = vmatpush1.msra.mxu0 %v371
  %1322 = vmatprep.subr.mxu0 %v380
  %1323 = vmatpush1.msra.mxu0 %v379
  %1324 = vmatprep.subr.mxu0 %v388
  %1325 = vmatpush1.msra.mxu0 %v387
  %1326 = vmatprep.subr.mxu0 %v396
  %1327 = vmatpush1.msra.mxu0 %v395
  %1328 = vmatprep.subr.mxu0 %v404
  %1329 = vmatpush1.msra.mxu0 %v403
  %1330 = vmatprep.subr.mxu0 %v412
  %1331 = vmatpush1.msra.mxu0 %v411
  %1332 = vmatprep.subr.mxu0 %v420
  %1333 = vmatpush1.msra.mxu0 %v419
  %1334 = vmatprep.subr.mxu0 %v428
  %1335 = vmatpush1.msra.mxu0 %v427
  %1336 = vmatprep.subr.mxu0 %v436
  %1337 = vmatpush1.msra.mxu0 %v435
  %1338 = vmatprep.subr.mxu0 %v444
  %1339 = vmatpush1.msra.mxu0 %v443
  %1340 = vmatprep.subr.mxu0 %v452
  %1341 = vmatpush1.msra.mxu0 %v451
  %1342 = vmatprep.subr.mxu0 %v460
  %1343 = vmatpush1.msra.mxu0 %v459
  %1344 = vmatprep.subr.mxu0 %v468
  %1345 = vmatpush1.msra.mxu0 %v467
  %1346 = vmatprep.subr.mxu0 %v476
  %1347 = vmatpush1.msra.mxu0 %v475
  %1348 = vmatprep.subr.mxu0 %v484
  %1349 = vmatpush1.msra.mxu0 %v483
  %1350 = vmatprep.subr.mxu0 %v492
  %1351 = vmatpush1.msra.mxu0 %v491
  %1352 = vmatprep.subr.mxu0 %v500
  %1353 = vmatpush1.msra.mxu0 %v499
  %1354 = vmatprep.subr.mxu0 %v508
  %1355 = vmatpush1.msra.mxu0 %v507
  %1356 = vmatprep.subr.mxu0 %v516
  %1357 = vmatpush1.msra.mxu0 %v515
  %1358 = vmatprep.subr.mxu0 %v524
  %1359 = vmatpush1.msra.mxu0 %v523
  %1360 = vmatprep.subr.mxu0 %v532
  %1361 = vmatpush1.msra.mxu0 %v531
  %1362 = vmatprep.subr.mxu0 %v540
  %1363 = vmatpush1.msra.mxu0 %v539
  %1364 = vmatprep.mubr.f32.mxu0 %v29
  %1365 = vmatmul.mubr.f32.gmra.mrb[0].mxu0 %v28
  %v1366 = vpop.f32.mrb[0].mxu0
  %v1367 = vadd.f32 %v1296, %v1366
  %v1368 = vpop.f32.mrb[0].mxu0
  %v1369 = vadd.f32 %v1298, %v1368
  %1370 = vdwg.mxu0
  %1371 = vmatprep.subr.mxu0 %v548
  %1372 = vmatpush1.msra.mxu0 %v547
  %1373 = vmatprep.subr.mxu0 %v556
  %1374 = vmatpush1.msra.mxu0 %v555
  %1375 = vmatprep.subr.mxu0 %v564
  %1376 = vmatpush1.msra.mxu0 %v563
  %1377 = vmatprep.subr.mxu0 %v572
  %1378 = vmatpush1.msra.mxu0 %v571
  %1379 = vmatprep.subr.mxu0 %v580
  %1380 = vmatpush1.msra.mxu0 %v579
  %1381 = vmatprep.subr.mxu0 %v588
  %1382 = vmatpush1.msra.mxu0 %v587
  %1383 = vmatprep.subr.mxu0 %v596
  %1384 = vmatpush1.msra.mxu0 %v595
  %1385 = vmatprep.subr.mxu0 %v604
  %1386 = vmatpush1.msra.mxu0 %v603
  %1387 = vmatprep.subr.mxu0 %v612
  %1388 = vmatpush1.msra.mxu0 %v611
  %1389 = vmatprep.subr.mxu0 %v620
  %1390 = vmatpush1.msra.mxu0 %v619
  %1391 = vmatprep.subr.mxu0 %v628
  %1392 = vmatpush1.msra.mxu0 %v627
  %1393 = vmatprep.subr.mxu0 %v636
  %1394 = vmatpush1.msra.mxu0 %v635
  %1395 = vmatprep.subr.mxu0 %v644
  %1396 = vmatpush1.msra.mxu0 %v643
  %1397 = vmatprep.subr.mxu0 %v652
  %1398 = vmatpush1.msra.mxu0 %v651
  %1399 = vmatprep.subr.mxu0 %v660
  %1400 = vmatpush1.msra.mxu0 %v659
  %1401 = vmatprep.subr.mxu0 %v668
  %1402 = vmatpush1.msra.mxu0 %v667
  %1403 = vmatprep.subr.mxu0 %v676
  %1404 = vmatpush1.msra.mxu0 %v675
  %1405 = vmatprep.subr.mxu0 %v684
  %1406 = vmatpush1.msra.mxu0 %v683
  %1407 = vmatprep.subr.mxu0 %v692
  %1408 = vmatpush1.msra.mxu0 %v691
  %1409 = vmatprep.subr.mxu0 %v700
  %1410 = vmatpush1.msra.mxu0 %v699
  %1411 = vmatprep.subr.mxu0 %v708
  %1412 = vmatpush1.msra.mxu0 %v707
  %1413 = vmatprep.subr.mxu0 %v716
  %1414 = vmatpush1.msra.mxu0 %v715
  %1415 = vmatprep.subr.mxu0 %v724
  %1416 = vmatpush1.msra.mxu0 %v723
  %1417 = vmatprep.subr.mxu0 %v732
  %1418 = vmatpush1.msra.mxu0 %v731
  %1419 = vmatprep.subr.mxu0 %v740
  %1420 = vmatpush1.msra.mxu0 %v739
  %1421 = vmatprep.subr.mxu0 %v748
  %1422 = vmatpush1.msra.mxu0 %v747
  %1423 = vmatprep.subr.mxu0 %v756
  %1424 = vmatpush1.msra.mxu0 %v755
  %1425 = vmatprep.subr.mxu0 %v764
  %1426 = vmatpush1.msra.mxu0 %v763
  %1427 = vmatprep.subr.mxu0 %v772
  %1428 = vmatpush1.msra.mxu0 %v771
  %1429 = vmatprep.subr.mxu0 %v780
  %1430 = vmatpush1.msra.mxu0 %v779
  %1431 = vmatprep.subr.mxu0 %v788
  %1432 = vmatpush1.msra.mxu0 %v787
  %1433 = vmatprep.subr.mxu0 %v796
  %1434 = vmatpush1.msra.mxu0 %v795
  %1435 = vmatprep.mubr.f32.mxu0 %v31
  %1436 = vmatmul.mubr.f32.gmra.mrb[0].mxu0 %v30
  %v1437 = vpop.f32.mrb[0].mxu0
  %v1438 = vadd.f32 %v1367, %v1437
  %v1439 = vpop.f32.mrb[0].mxu0
  %v1440 = vadd.f32 %v1369, %v1439
  %1441 = vdwg.mxu0
  %1442 = vmatprep.subr.mxu0 %v804
  %1443 = vmatpush1.msra.mxu0 %v803
  %1444 = vmatprep.subr.mxu0 %v812
  %1445 = vmatpush1.msra.mxu0 %v811
  %1446 = vmatprep.subr.mxu0 %v820
  %1447 = vmatpush1.msra.mxu0 %v819
  %1448 = vmatprep.subr.mxu0 %v828
  %1449 = vmatpush1.msra.mxu0 %v827
  %1450 = vmatprep.subr.mxu0 %v836
  %1451 = vmatpush1.msra.mxu0 %v835
  %1452 = vmatprep.subr.mxu0 %v844
  %1453 = vmatpush1.msra.mxu0 %v843
  %1454 = vmatprep.subr.mxu0 %v852
  %1455 = vmatpush1.msra.mxu0 %v851
  %1456 = vmatprep.subr.mxu0 %v860
  %1457 = vmatpush1.msra.mxu0 %v859
  %1458 = vmatprep.subr.mxu0 %v868
  %1459 = vmatpush1.msra.mxu0 %v867
  %1460 = vmatprep.subr.mxu0 %v876
  %1461 = vmatpush1.msra.mxu0 %v875
  %1462 = vmatprep.subr.mxu0 %v884
  %1463 = vmatpush1.msra.mxu0 %v883
  %1464 = vmatprep.subr.mxu0 %v892
  %1465 = vmatpush1.msra.mxu0 %v891
  %1466 = vmatprep.subr.mxu0 %v900
  %1467 = vmatpush1.msra.mxu0 %v899
  %1468 = vmatprep.subr.mxu0 %v908
  %1469 = vmatpush1.msra.mxu0 %v907
  %1470 = vmatprep.subr.mxu0 %v916
  %1471 = vmatpush1.msra.mxu0 %v915
  %1472 = vmatprep.subr.mxu0 %v924
  %1473 = vmatpush1.msra.mxu0 %v923
  %1474 = vmatprep.subr.mxu0 %v932
  %1475 = vmatpush1.msra.mxu0 %v931
  %1476 = vmatprep.subr.mxu0 %v940
  %1477 = vmatpush1.msra.mxu0 %v939
  %1478 = vmatprep.subr.mxu0 %v948
  %1479 = vmatpush1.msra.mxu0 %v947
  %1480 = vmatprep.subr.mxu0 %v956
  %1481 = vmatpush1.msra.mxu0 %v955
  %1482 = vmatprep.subr.mxu0 %v964
  %1483 = vmatpush1.msra.mxu0 %v963
  %1484 = vmatprep.subr.mxu0 %v972
  %1485 = vmatpush1.msra.mxu0 %v971
  %1486 = vmatprep.subr.mxu0 %v980
  %1487 = vmatpush1.msra.mxu0 %v979
  %1488 = vmatprep.subr.mxu0 %v988
  %1489 = vmatpush1.msra.mxu0 %v987
  %1490 = vmatprep.subr.mxu0 %v996
  %1491 = vmatpush1.msra.mxu0 %v995
  %1492 = vmatprep.subr.mxu0 %v1004
  %1493 = vmatpush1.msra.mxu0 %v1003
  %1494 = vmatprep.subr.mxu0 %v1012
  %1495 = vmatpush1.msra.mxu0 %v1011
  %1496 = vmatprep.subr.mxu0 %v1020
  %1497 = vmatpush1.msra.mxu0 %v1019
  %1498 = vmatprep.subr.mxu0 %v1028
  %1499 = vmatpush1.msra.mxu0 %v1027
  %1500 = vmatprep.subr.mxu0 %v1036
  %1501 = vmatpush1.msra.mxu0 %v1035
  %1502 = vmatprep.subr.mxu0 %v1044
  %1503 = vmatpush1.msra.mxu0 %v1043
  %1504 = vmatprep.subr.mxu0 %v1052
  %1505 = vmatpush1.msra.mxu0 %v1051
  %1506 = vmatprep.mubr.f32.mxu0 %v33
  %1507 = vmatmul.mubr.f32.gmra.mrb[0].mxu0 %v32
  %v1508 = vpop.f32.mrb[0].mxu0
  %v1509 = vadd.f32 %v1438, %v1508
  %v1510 = vpop.f32.mrb[0].mxu0
  %v1511 = vadd.f32 %v1440, %v1510
  %1512 = vdwg.mxu0
  %1513 = vmatprep.subr.mxu0 %v1060
  %1514 = vmatpush1.msra.mxu0 %v1059
  %1515 = vmatprep.subr.mxu0 %v1068
  %1516 = vmatpush1.msra.mxu0 %v1067
  %1517 = vmatprep.subr.mxu0 %v1076
  %1518 = vmatpush1.msra.mxu0 %v1075
  %1519 = vmatprep.subr.mxu0 %v1084
  %1520 = vmatpush1.msra.mxu0 %v1083
  %1521 = vmatprep.subr.mxu0 %v1092
  %1522 = vmatpush1.msra.mxu0 %v1091
  %1523 = vmatprep.subr.mxu0 %v1100
  %1524 = vmatpush1.msra.mxu0 %v1099
  %1525 = vmatprep.subr.mxu0 %v1108
  %1526 = vmatpush1.msra.mxu0 %v1107
  %1527 = vmatprep.subr.mxu0 %v1116
  %1528 = vmatpush1.msra.mxu0 %v1115
  %1529 = vmatprep.subr.mxu0 %v1124
  %1530 = vmatpush1.msra.mxu0 %v1123
  %1531 = vmatprep.subr.mxu0 %v1132
  %1532 = vmatpush1.msra.mxu0 %v1131
  %1533 = vmatprep.subr.mxu0 %v1140
  %1534 = vmatpush1.msra.mxu0 %v1139
  %1535 = vmatprep.subr.mxu0 %v1148
  %1536 = vmatpush1.msra.mxu0 %v1147
  %1537 = vmatprep.subr.mxu0 %v1156
  %1538 = vmatpush1.msra.mxu0 %v1155
  %1539 = vmatprep.subr.mxu0 %v1164
  %1540 = vmatpush1.msra.mxu0 %v1163
  %1541 = vmatprep.subr.mxu0 %v1172
  %1542 = vmatpush1.msra.mxu0 %v1171
  %1543 = vmatprep.subr.mxu0 %v1180
  %1544 = vmatpush1.msra.mxu0 %v1179
  %1545 = vmatprep.subr.mxu0 0.0
  %1546 = vmatpush1.msra.mxu0 0.0
  %1547 = vmatprep.subr.mxu0 0.0
  %1548 = vmatpush1.msra.mxu0 0.0
  %1549 = vmatprep.subr.mxu0 0.0
  %1550 = vmatpush1.msra.mxu0 0.0
  %1551 = vmatprep.subr.mxu0 0.0
  %1552 = vmatpush1.msra.mxu0 0.0
  %1553 = vmatprep.subr.mxu0 0.0
  %1554 = vmatpush1.msra.mxu0 0.0
  %1555 = vmatprep.subr.mxu0 0.0
  %1556 = vmatpush1.msra.mxu0 0.0
  %1557 = vmatprep.subr.mxu0 0.0
  %1558 = vmatpush1.msra.mxu0 0.0
  %1559 = vmatprep.subr.mxu0 0.0
  %1560 = vmatpush1.msra.mxu0 0.0
  %1561 = vmatprep.subr.mxu0 0.0
  %1562 = vmatpush1.msra.mxu0 0.0
  %1563 = vmatprep.subr.mxu0 0.0
  %1564 = vmatpush1.msra.mxu0 0.0
  %1565 = vmatprep.subr.mxu0 0.0
  %1566 = vmatpush1.msra.mxu0 0.0
  %1567 = vmatprep.subr.mxu0 0.0
  %1568 = vmatpush1.msra.mxu0 0.0
  %1569 = vmatprep.subr.mxu0 0.0
  %1570 = vmatpush1.msra.mxu0 0.0
  %1571 = vmatprep.subr.mxu0 0.0
  %1572 = vmatpush1.msra.mxu0 0.0
  %1573 = vmatprep.subr.mxu0 0.0
  %1574 = vmatpush1.msra.mxu0 0.0
  %1575 = vmatprep.subr.mxu0 0.0
  %1576 = vmatpush1.msra.mxu0 0.0
  %1577 = vmatprep.mubr.f32.mxu0 0.0
  %1578 = vmatmul.mubr.f32.gmra.mrb[0].mxu0 %v34
  %v1579 = vpop.f32.mrb[0].mxu0
  %v1580 = vadd.f32 %v1509, %v1579
  %v1581 = vpop.f32.mrb[0].mxu0
  %v1582 = vadd.f32 %v1511, %v1581
  %1583 = vdwg.mxu0
  %1584 = vmatprep.subr.mxu0 %v38
  %1585 = vmatpush1.msra.mxu0 %v37
  %1586 = vmatprep.subr.mxu0 %v46
  %1587 = vmatpush1.msra.mxu0 %v45
  %1588 = vmatprep.subr.mxu0 %v54
  %1589 = vmatpush1.msra.mxu0 %v53
  %1590 = vmatprep.subr.mxu0 %v62
  %1591 = vmatpush1.msra.mxu0 %v61
  %1592 = vmatprep.subr.mxu0 %v70
  %1593 = vmatpush1.msra.mxu0 %v69
  %1594 = vmatprep.subr.mxu0 %v78
  %1595 = vmatpush1.msra.mxu0 %v77
  %1596 = vmatprep.subr.mxu0 %v86
  %1597 = vmatpush1.msra.mxu0 %v85
  %1598 = vmatprep.subr.mxu0 %v94
  %1599 = vmatpush1.msra.mxu0 %v93
  %1600 = vmatprep.subr.mxu0 %v102
  %1601 = vmatpush1.msra.mxu0 %v101
  %1602 = vmatprep.subr.mxu0 %v110
  %1603 = vmatpush1.msra.mxu0 %v109
  %1604 = vmatprep.subr.mxu0 %v118
  %1605 = vmatpush1.msra.mxu0 %v117
  %1606 = vmatprep.subr.mxu0 %v126
  %1607 = vmatpush1.msra.mxu0 %v125
  %1608 = vmatprep.subr.mxu0 %v134
  %1609 = vmatpush1.msra.mxu0 %v133
  %1610 = vmatprep.subr.mxu0 %v142
  %1611 = vmatpush1.msra.mxu0 %v141
  %1612 = vmatprep.subr.mxu0 %v150
  %1613 = vmatpush1.msra.mxu0 %v149
  %1614 = vmatprep.subr.mxu0 %v158
  %1615 = vmatpush1.msra.mxu0 %v157
  %1616 = vmatprep.subr.mxu0 %v166
  %1617 = vmatpush1.msra.mxu0 %v165
  %1618 = vmatprep.subr.mxu0 %v174
  %1619 = vmatpush1.msra.mxu0 %v173
  %1620 = vmatprep.subr.mxu0 %v182
  %1621 = vmatpush1.msra.mxu0 %v181
  %1622 = vmatprep.subr.mxu0 %v190
  %1623 = vmatpush1.msra.mxu0 %v189
  %1624 = vmatprep.subr.mxu0 %v198
  %1625 = vmatpush1.msra.mxu0 %v197
  %1626 = vmatprep.subr.mxu0 %v206
  %1627 = vmatpush1.msra.mxu0 %v205
  %1628 = vmatprep.subr.mxu0 %v214
  %1629 = vmatpush1.msra.mxu0 %v213
  %1630 = vmatprep.subr.mxu0 %v222
  %1631 = vmatpush1.msra.mxu0 %v221
  %1632 = vmatprep.subr.mxu0 %v230
  %1633 = vmatpush1.msra.mxu0 %v229
  %1634 = vmatprep.subr.mxu0 %v238
  %1635 = vmatpush1.msra.mxu0 %v237
  %1636 = vmatprep.subr.mxu0 %v246
  %1637 = vmatpush1.msra.mxu0 %v245
  %1638 = vmatprep.subr.mxu0 %v254
  %1639 = vmatpush1.msra.mxu0 %v253
  %1640 = vmatprep.subr.mxu0 %v262
  %1641 = vmatpush1.msra.mxu0 %v261
  %1642 = vmatprep.subr.mxu0 %v270
  %1643 = vmatpush1.msra.mxu0 %v269
  %1644 = vmatprep.subr.mxu0 %v278
  %1645 = vmatpush1.msra.mxu0 %v277
  %1646 = vmatprep.subr.mxu0 %v286
  %1647 = vmatpush1.msra.mxu0 %v285
  %1648 = vmatprep.mubr.f32.mxu0 %v27
  %1649 = vmatmul.mubr.f32.gmra.mrb[0].mxu0 %v26
  %v1650 = vpop.f32.mrb[0].mxu0
  %v1651 = vadd.f32 %v1200, %v1650
  %v1652 = vpop.f32.mrb[0].mxu0
  %v1653 = vadd.f32 %v1204, %v1652
  %1654 = vdwg.mxu0
  %1655 = vmatprep.subr.mxu0 %v294
  %1656 = vmatpush1.msra.mxu0 %v293
  %1657 = vmatprep.subr.mxu0 %v302
  %1658 = vmatpush1.msra.mxu0 %v301
  %1659 = vmatprep.subr.mxu0 %v310
  %1660 = vmatpush1.msra.mxu0 %v309
  %1661 = vmatprep.subr.mxu0 %v318
  %1662 = vmatpush1.msra.mxu0 %v317
  %1663 = vmatprep.subr.mxu0 %v326
  %1664 = vmatpush1.msra.mxu0 %v325
  %1665 = vmatprep.subr.mxu0 %v334
  %1666 = vmatpush1.msra.mxu0 %v333
  %1667 = vmatprep.subr.mxu0 %v342
  %1668 = vmatpush1.msra.mxu0 %v341
  %1669 = vmatprep.subr.mxu0 %v350
  %1670 = vmatpush1.msra.mxu0 %v349
  %1671 = vmatprep.subr.mxu0 %v358
  %1672 = vmatpush1.msra.mxu0 %v357
  %1673 = vmatprep.subr.mxu0 %v366
  %1674 = vmatpush1.msra.mxu0 %v365
  %1675 = vmatprep.subr.mxu0 %v374
  %1676 = vmatpush1.msra.mxu0 %v373
  %1677 = vmatprep.subr.mxu0 %v382
  %1678 = vmatpush1.msra.mxu0 %v381
  %1679 = vmatprep.subr.mxu0 %v390
  %1680 = vmatpush1.msra.mxu0 %v389
  %1681 = vmatprep.subr.mxu0 %v398
  %1682 = vmatpush1.msra.mxu0 %v397
  %1683 = vmatprep.subr.mxu0 %v406
  %1684 = vmatpush1.msra.mxu0 %v405
  %1685 = vmatprep.subr.mxu0 %v414
  %1686 = vmatpush1.msra.mxu0 %v413
  %1687 = vmatprep.subr.mxu0 %v422
  %1688 = vmatpush1.msra.mxu0 %v421
  %1689 = vmatprep.subr.mxu0 %v430
  %1690 = vmatpush1.msra.mxu0 %v429
  %1691 = vmatprep.subr.mxu0 %v438
  %1692 = vmatpush1.msra.mxu0 %v437
  %1693 = vmatprep.subr.mxu0 %v446
  %1694 = vmatpush1.msra.mxu0 %v445
  %1695 = vmatprep.subr.mxu0 %v454
  %1696 = vmatpush1.msra.mxu0 %v453
  %1697 = vmatprep.subr.mxu0 %v462
  %1698 = vmatpush1.msra.mxu0 %v461
  %1699 = vmatprep.subr.mxu0 %v470
  %1700 = vmatpush1.msra.mxu0 %v469
  %1701 = vmatprep.subr.mxu0 %v478
  %1702 = vmatpush1.msra.mxu0 %v477
  %1703 = vmatprep.subr.mxu0 %v486
  %1704 = vmatpush1.msra.mxu0 %v485
  %1705 = vmatprep.subr.mxu0 %v494
  %1706 = vmatpush1.msra.mxu0 %v493
  %1707 = vmatprep.subr.mxu0 %v502
  %1708 = vmatpush1.msra.mxu0 %v501
  %1709 = vmatprep.subr.mxu0 %v510
  %1710 = vmatpush1.msra.mxu0 %v509
  %1711 = vmatprep.subr.mxu0 %v518
  %1712 = vmatpush1.msra.mxu0 %v517
  %1713 = vmatprep.subr.mxu0 %v526
  %1714 = vmatpush1.msra.mxu0 %v525
  %1715 = vmatprep.subr.mxu0 %v534
  %1716 = vmatpush1.msra.mxu0 %v533
  %1717 = vmatprep.subr.mxu0 %v542
  %1718 = vmatpush1.msra.mxu0 %v541
  %1719 = vmatprep.mubr.f32.mxu0 %v29
  %1720 = vmatmul.mubr.f32.gmra.mrb[0].mxu0 %v28
  %v1721 = vpop.f32.mrb[0].mxu0
  %v1722 = vadd.f32 %v1651, %v1721
  %v1723 = vpop.f32.mrb[0].mxu0
  %v1724 = vadd.f32 %v1653, %v1723
  %1725 = vdwg.mxu0
  %1726 = vmatprep.subr.mxu0 %v550
  %1727 = vmatpush1.msra.mxu0 %v549
  %1728 = vmatprep.subr.mxu0 %v558
  %1729 = vmatpush1.msra.mxu0 %v557
  %1730 = vmatprep.subr.mxu0 %v566
  %1731 = vmatpush1.msra.mxu0 %v565
  %1732 = vmatprep.subr.mxu0 %v574
  %1733 = vmatpush1.msra.mxu0 %v573
  %1734 = vmatprep.subr.mxu0 %v582
  %1735 = vmatpush1.msra.mxu0 %v581
  %1736 = vmatprep.subr.mxu0 %v590
  %1737 = vmatpush1.msra.mxu0 %v589
  %1738 = vmatprep.subr.mxu0 %v598
  %1739 = vmatpush1.msra.mxu0 %v597
  %1740 = vmatprep.subr.mxu0 %v606
  %1741 = vmatpush1.msra.mxu0 %v605
  %1742 = vmatprep.subr.mxu0 %v614
  %1743 = vmatpush1.msra.mxu0 %v613
  %1744 = vmatprep.subr.mxu0 %v622
  %1745 = vmatpush1.msra.mxu0 %v621
  %1746 = vmatprep.subr.mxu0 %v630
  %1747 = vmatpush1.msra.mxu0 %v629
  %1748 = vmatprep.subr.mxu0 %v638
  %1749 = vmatpush1.msra.mxu0 %v637
  %1750 = vmatprep.subr.mxu0 %v646
  %1751 = vmatpush1.msra.mxu0 %v645
  %1752 = vmatprep.subr.mxu0 %v654
  %1753 = vmatpush1.msra.mxu0 %v653
  %1754 = vmatprep.subr.mxu0 %v662
  %1755 = vmatpush1.msra.mxu0 %v661
  %1756 = vmatprep.subr.mxu0 %v670
  %1757 = vmatpush1.msra.mxu0 %v669
  %1758 = vmatprep.subr.mxu0 %v678
  %1759 = vmatpush1.msra.mxu0 %v677
  %1760 = vmatprep.subr.mxu0 %v686
  %1761 = vmatpush1.msra.mxu0 %v685
  %1762 = vmatprep.subr.mxu0 %v694
  %1763 = vmatpush1.msra.mxu0 %v693
  %1764 = vmatprep.subr.mxu0 %v702
  %1765 = vmatpush1.msra.mxu0 %v701
  %1766 = vmatprep.subr.mxu0 %v710
  %1767 = vmatpush1.msra.mxu0 %v709
  %1768 = vmatprep.subr.mxu0 %v718
  %1769 = vmatpush1.msra.mxu0 %v717
  %1770 = vmatprep.subr.mxu0 %v726
  %1771 = vmatpush1.msra.mxu0 %v725
  %1772 = vmatprep.subr.mxu0 %v734
  %1773 = vmatpush1.msra.mxu0 %v733
  %1774 = vmatprep.subr.mxu0 %v742
  %1775 = vmatpush1.msra.mxu0 %v741
  %1776 = vmatprep.subr.mxu0 %v750
  %1777 = vmatpush1.msra.mxu0 %v749
  %1778 = vmatprep.subr.mxu0 %v758
  %1779 = vmatpush1.msra.mxu0 %v757
  %1780 = vmatprep.subr.mxu0 %v766
  %1781 = vmatpush1.msra.mxu0 %v765
  %1782 = vmatprep.subr.mxu0 %v774
  %1783 = vmatpush1.msra.mxu0 %v773
  %1784 = vmatprep.subr.mxu0 %v782
  %1785 = vmatpush1.msra.mxu0 %v781
  %1786 = vmatprep.subr.mxu0 %v790
  %1787 = vmatpush1.msra.mxu0 %v789
  %1788 = vmatprep.subr.mxu0 %v798
  %1789 = vmatpush1.msra.mxu0 %v797
  %1790 = vmatprep.mubr.f32.mxu0 %v31
  %1791 = vmatmul.mubr.f32.gmra.mrb[0].mxu0 %v30
  %v1792 = vpop.f32.mrb[0].mxu0
  %v1793 = vadd.f32 %v1722, %v1792
  %v1794 = vpop.f32.mrb[0].mxu0
  %v1795 = vadd.f32 %v1724, %v1794
  %1796 = vdwg.mxu0
  %1797 = vmatprep.subr.mxu0 %v806
  %1798 = vmatpush1.msra.mxu0 %v805
  %1799 = vmatprep.subr.mxu0 %v814
  %1800 = vmatpush1.msra.mxu0 %v813
  %1801 = vmatprep.subr.mxu0 %v822
  %1802 = vmatpush1.msra.mxu0 %v821
  %1803 = vmatprep.subr.mxu0 %v830
  %1804 = vmatpush1.msra.mxu0 %v829
  %1805 = vmatprep.subr.mxu0 %v838
  %1806 = vmatpush1.msra.mxu0 %v837
  %1807 = vmatprep.subr.mxu0 %v846
  %1808 = vmatpush1.msra.mxu0 %v845
  %1809 = vmatprep.subr.mxu0 %v854
  %1810 = vmatpush1.msra.mxu0 %v853
  %1811 = vmatprep.subr.mxu0 %v862
  %1812 = vmatpush1.msra.mxu0 %v861
  %1813 = vmatprep.subr.mxu0 %v870
  %1814 = vmatpush1.msra.mxu0 %v869
  %1815 = vmatprep.subr.mxu0 %v878
  %1816 = vmatpush1.msra.mxu0 %v877
  %1817 = vmatprep.subr.mxu0 %v886
  %1818 = vmatpush1.msra.mxu0 %v885
  %1819 = vmatprep.subr.mxu0 %v894
  %1820 = vmatpush1.msra.mxu0 %v893
  %1821 = vmatprep.subr.mxu0 %v902
  %1822 = vmatpush1.msra.mxu0 %v901
  %1823 = vmatprep.subr.mxu0 %v910
  %1824 = vmatpush1.msra.mxu0 %v909
  %1825 = vmatprep.subr.mxu0 %v918
  %1826 = vmatpush1.msra.mxu0 %v917
  %1827 = vmatprep.subr.mxu0 %v926
  %1828 = vmatpush1.msra.mxu0 %v925
  %1829 = vmatprep.subr.mxu0 %v934
  %1830 = vmatpush1.msra.mxu0 %v933
  %1831 = vmatprep.subr.mxu0 %v942
  %1832 = vmatpush1.msra.mxu0 %v941
  %1833 = vmatprep.subr.mxu0 %v950
  %1834 = vmatpush1.msra.mxu0 %v949
  %1835 = vmatprep.subr.mxu0 %v958
  %1836 = vmatpush1.msra.mxu0 %v957
  %1837 = vmatprep.subr.mxu0 %v966
  %1838 = vmatpush1.msra.mxu0 %v965
  %1839 = vmatprep.subr.mxu0 %v974
  %1840 = vmatpush1.msra.mxu0 %v973
  %1841 = vmatprep.subr.mxu0 %v982
  %1842 = vmatpush1.msra.mxu0 %v981
  %1843 = vmatprep.subr.mxu0 %v990
  %1844 = vmatpush1.msra.mxu0 %v989
  %1845 = vmatprep.subr.mxu0 %v998
  %1846 = vmatpush1.msra.mxu0 %v997
  %1847 = vmatprep.subr.mxu0 %v1006
  %1848 = vmatpush1.msra.mxu0 %v1005
  %1849 = vmatprep.subr.mxu0 %v1014
  %1850 = vmatpush1.msra.mxu0 %v1013
  %1851 = vmatprep.subr.mxu0 %v1022
  %1852 = vmatpush1.msra.mxu0 %v1021
  %1853 = vmatprep.subr.mxu0 %v1030
  %1854 = vmatpush1.msra.mxu0 %v1029
  %1855 = vmatprep.subr.mxu0 %v1038
  %1856 = vmatpush1.msra.mxu0 %v1037
  %1857 = vmatprep.subr.mxu0 %v1046
  %1858 = vmatpush1.msra.mxu0 %v1045
  %1859 = vmatprep.subr.mxu0 %v1054
  %1860 = vmatpush1.msra.mxu0 %v1053
  %1861 = vmatprep.mubr.f32.mxu0 %v33
  %1862 = vmatmul.mubr.f32.gmra.mrb[0].mxu0 %v32
  %v1863 = vpop.f32.mrb[0].mxu0
  %v1864 = vadd.f32 %v1793, %v1863
  %v1865 = vpop.f32.mrb[0].mxu0
  %v1866 = vadd.f32 %v1795, %v1865
  %1867 = vdwg.mxu0
  %1868 = vmatprep.subr.mxu0 %v1062
  %1869 = vmatpush1.msra.mxu0 %v1061
  %1870 = vmatprep.subr.mxu0 %v1070
  %1871 = vmatpush1.msra.mxu0 %v1069
  %1872 = vmatprep.subr.mxu0 %v1078
  %1873 = vmatpush1.msra.mxu0 %v1077
  %1874 = vmatprep.subr.mxu0 %v1086
  %1875 = vmatpush1.msra.mxu0 %v1085
  %1876 = vmatprep.subr.mxu0 %v1094
  %1877 = vmatpush1.msra.mxu0 %v1093
  %1878 = vmatprep.subr.mxu0 %v1102
  %1879 = vmatpush1.msra.mxu0 %v1101
  %1880 = vmatprep.subr.mxu0 %v1110
  %1881 = vmatpush1.msra.mxu0 %v1109
  %1882 = vmatprep.subr.mxu0 %v1118
  %1883 = vmatpush1.msra.mxu0 %v1117
  %1884 = vmatprep.subr.mxu0 %v1126
  %1885 = vmatpush1.msra.mxu0 %v1125
  %1886 = vmatprep.subr.mxu0 %v1134
  %1887 = vmatpush1.msra.mxu0 %v1133
  %1888 = vmatprep.subr.mxu0 %v1142
  %1889 = vmatpush1.msra.mxu0 %v1141
  %1890 = vmatprep.subr.mxu0 %v1150
  %1891 = vmatpush1.msra.mxu0 %v1149
  %1892 = vmatprep.subr.mxu0 %v1158
  %1893 = vmatpush1.msra.mxu0 %v1157
  %1894 = vmatprep.subr.mxu0 %v1166
  %1895 = vmatpush1.msra.mxu0 %v1165
  %1896 = vmatprep.subr.mxu0 %v1174
  %1897 = vmatpush1.msra.mxu0 %v1173
  %1898 = vmatprep.subr.mxu0 %v1182
  %1899 = vmatpush1.msra.mxu0 %v1181
  %1900 = vmatprep.subr.mxu0 0.0
  %1901 = vmatpush1.msra.mxu0 0.0
  %1902 = vmatprep.subr.mxu0 0.0
  %1903 = vmatpush1.msra.mxu0 0.0
  %1904 = vmatprep.subr.mxu0 0.0
  %1905 = vmatpush1.msra.mxu0 0.0
  %1906 = vmatprep.subr.mxu0 0.0
  %1907 = vmatpush1.msra.mxu0 0.0
  %1908 = vmatprep.subr.mxu0 0.0
  %1909 = vmatpush1.msra.mxu0 0.0
  %1910 = vmatprep.subr.mxu0 0.0
  %1911 = vmatpush1.msra.mxu0 0.0
  %1912 = vmatprep.subr.mxu0 0.0
  %1913 = vmatpush1.msra.mxu0 0.0
  %1914 = vmatprep.subr.mxu0 0.0
  %1915 = vmatpush1.msra.mxu0 0.0
  %1916 = vmatprep.subr.mxu0 0.0
  %1917 = vmatpush1.msra.mxu0 0.0
  %1918 = vmatprep.subr.mxu0 0.0
  %1919 = vmatpush1.msra.mxu0 0.0
  %1920 = vmatprep.subr.mxu0 0.0
  %1921 = vmatpush1.msra.mxu0 0.0
  %1922 = vmatprep.subr.mxu0 0.0
  %1923 = vmatpush1.msra.mxu0 0.0
  %1924 = vmatprep.subr.mxu0 0.0
  %1925 = vmatpush1.msra.mxu0 0.0
  %1926 = vmatprep.subr.mxu0 0.0
  %1927 = vmatpush1.msra.mxu0 0.0
  %1928 = vmatprep.subr.mxu0 0.0
  %1929 = vmatpush1.msra.mxu0 0.0
  %1930 = vmatprep.subr.mxu0 0.0
  %1931 = vmatpush1.msra.mxu0 0.0
  %1932 = vmatprep.mubr.f32.mxu0 0.0
  %1933 = vmatmul.mubr.f32.gmra.mrb[0].mxu0 %v34
  %v1934 = vpop.f32.mrb[0].mxu0
  %v1935 = vadd.f32 %v1864, %v1934
  %v1936 = vpop.f32.mrb[0].mxu0
  %v1937 = vadd.f32 %v1866, %v1936
  %1938 = vdwg.mxu0
  %1939 = vmatprep.subr.mxu0 %v40
  %1940 = vmatpush1.msra.mxu0 %v39
  %1941 = vmatprep.subr.mxu0 %v48
  %1942 = vmatpush1.msra.mxu0 %v47
  %1943 = vmatprep.subr.mxu0 %v56
  %1944 = vmatpush1.msra.mxu0 %v55
  %1945 = vmatprep.subr.mxu0 %v64
  %1946 = vmatpush1.msra.mxu0 %v63
  %1947 = vmatprep.subr.mxu0 %v72
  %1948 = vmatpush1.msra.mxu0 %v71
  %1949 = vmatprep.subr.mxu0 %v80
  %1950 = vmatpush1.msra.mxu0 %v79
  %1951 = vmatprep.subr.mxu0 %v88
  %1952 = vmatpush1.msra.mxu0 %v87
  %1953 = vmatprep.subr.mxu0 %v96
  %1954 = vmatpush1.msra.mxu0 %v95
  %1955 = vmatprep.subr.mxu0 %v104
  %1956 = vmatpush1.msra.mxu0 %v103
  %1957 = vmatprep.subr.mxu0 %v112
  %1958 = vmatpush1.msra.mxu0 %v111
  %1959 = vmatprep.subr.mxu0 %v120
  %1960 = vmatpush1.msra.mxu0 %v119
  %1961 = vmatprep.subr.mxu0 %v128
  %1962 = vmatpush1.msra.mxu0 %v127
  %1963 = vmatprep.subr.mxu0 %v136
  %1964 = vmatpush1.msra.mxu0 %v135
  %1965 = vmatprep.subr.mxu0 %v144
  %1966 = vmatpush1.msra.mxu0 %v143
  %1967 = vmatprep.subr.mxu0 %v152
  %1968 = vmatpush1.msra.mxu0 %v151
  %1969 = vmatprep.subr.mxu0 %v160
  %1970 = vmatpush1.msra.mxu0 %v159
  %1971 = vmatprep.subr.mxu0 %v168
  %1972 = vmatpush1.msra.mxu0 %v167
  %1973 = vmatprep.subr.mxu0 %v176
  %1974 = vmatpush1.msra.mxu0 %v175
  %1975 = vmatprep.subr.mxu0 %v184
  %1976 = vmatpush1.msra.mxu0 %v183
  %1977 = vmatprep.subr.mxu0 %v192
  %1978 = vmatpush1.msra.mxu0 %v191
  %1979 = vmatprep.subr.mxu0 %v200
  %1980 = vmatpush1.msra.mxu0 %v199
  %1981 = vmatprep.subr.mxu0 %v208
  %1982 = vmatpush1.msra.mxu0 %v207
  %1983 = vmatprep.subr.mxu0 %v216
  %1984 = vmatpush1.msra.mxu0 %v215
  %1985 = vmatprep.subr.mxu0 %v224
  %1986 = vmatpush1.msra.mxu0 %v223
  %1987 = vmatprep.subr.mxu0 %v232
  %1988 = vmatpush1.msra.mxu0 %v231
  %1989 = vmatprep.subr.mxu0 %v240
  %1990 = vmatpush1.msra.mxu0 %v239
  %1991 = vmatprep.subr.mxu0 %v248
  %1992 = vmatpush1.msra.mxu0 %v247
  %1993 = vmatprep.subr.mxu0 %v256
  %1994 = vmatpush1.msra.mxu0 %v255
  %1995 = vmatprep.subr.mxu0 %v264
  %1996 = vmatpush1.msra.mxu0 %v263
  %1997 = vmatprep.subr.mxu0 %v272
  %1998 = vmatpush1.msra.mxu0 %v271
  %1999 = vmatprep.subr.mxu0 %v280
  %2000 = vmatpush1.msra.mxu0 %v279
  %2001 = vmatprep.subr.mxu0 %v288
  %2002 = vmatpush1.msra.mxu0 %v287
  %2003 = vmatprep.mubr.f32.mxu0 %v27
  %2004 = vmatmul.mubr.f32.gmra.mrb[0].mxu0 %v26
  %v2005 = vpop.f32.mrb[0].mxu0
  %v2006 = vadd.f32 %v1208, %v2005
  %v2007 = vpop.f32.mrb[0].mxu0
  %v2008 = vadd.f32 %v1212, %v2007
  %2009 = vdwg.mxu0
  %2010 = vmatprep.subr.mxu0 %v296
  %2011 = vmatpush1.msra.mxu0 %v295
  %2012 = vmatprep.subr.mxu0 %v304
  %2013 = vmatpush1.msra.mxu0 %v303
  %2014 = vmatprep.subr.mxu0 %v312
  %2015 = vmatpush1.msra.mxu0 %v311
  %2016 = vmatprep.subr.mxu0 %v320
  %2017 = vmatpush1.msra.mxu0 %v319
  %2018 = vmatprep.subr.mxu0 %v328
  %2019 = vmatpush1.msra.mxu0 %v327
  %2020 = vmatprep.subr.mxu0 %v336
  %2021 = vmatpush1.msra.mxu0 %v335
  %2022 = vmatprep.subr.mxu0 %v344
  %2023 = vmatpush1.msra.mxu0 %v343
  %2024 = vmatprep.subr.mxu0 %v352
  %2025 = vmatpush1.msra.mxu0 %v351
  %2026 = vmatprep.subr.mxu0 %v360
  %2027 = vmatpush1.msra.mxu0 %v359
  %2028 = vmatprep.subr.mxu0 %v368
  %2029 = vmatpush1.msra.mxu0 %v367
  %2030 = vmatprep.subr.mxu0 %v376
  %2031 = vmatpush1.msra.mxu0 %v375
  %2032 = vmatprep.subr.mxu0 %v384
  %2033 = vmatpush1.msra.mxu0 %v383
  %2034 = vmatprep.subr.mxu0 %v392
  %2035 = vmatpush1.msra.mxu0 %v391
  %2036 = vmatprep.subr.mxu0 %v400
  %2037 = vmatpush1.msra.mxu0 %v399
  %2038 = vmatprep.subr.mxu0 %v408
  %2039 = vmatpush1.msra.mxu0 %v407
  %2040 = vmatprep.subr.mxu0 %v416
  %2041 = vmatpush1.msra.mxu0 %v415
  %2042 = vmatprep.subr.mxu0 %v424
  %2043 = vmatpush1.msra.mxu0 %v423
  %2044 = vmatprep.subr.mxu0 %v432
  %2045 = vmatpush1.msra.mxu0 %v431
  %2046 = vmatprep.subr.mxu0 %v440
  %2047 = vmatpush1.msra.mxu0 %v439
  %2048 = vmatprep.subr.mxu0 %v448
  %2049 = vmatpush1.msra.mxu0 %v447
  %2050 = vmatprep.subr.mxu0 %v456
  %2051 = vmatpush1.msra.mxu0 %v455
  %2052 = vmatprep.subr.mxu0 %v464
  %2053 = vmatpush1.msra.mxu0 %v463
  %2054 = vmatprep.subr.mxu0 %v472
  %2055 = vmatpush1.msra.mxu0 %v471
  %2056 = vmatprep.subr.mxu0 %v480
  %2057 = vmatpush1.msra.mxu0 %v479
  %2058 = vmatprep.subr.mxu0 %v488
  %2059 = vmatpush1.msra.mxu0 %v487
  %2060 = vmatprep.subr.mxu0 %v496
  %2061 = vmatpush1.msra.mxu0 %v495
  %2062 = vmatprep.subr.mxu0 %v504
  %2063 = vmatpush1.msra.mxu0 %v503
  %2064 = vmatprep.subr.mxu0 %v512
  %2065 = vmatpush1.msra.mxu0 %v511
  %2066 = vmatprep.subr.mxu0 %v520
  %2067 = vmatpush1.msra.mxu0 %v519
  %2068 = vmatprep.subr.mxu0 %v528
  %2069 = vmatpush1.msra.mxu0 %v527
  %2070 = vmatprep.subr.mxu0 %v536
  %2071 = vmatpush1.msra.mxu0 %v535
  %2072 = vmatprep.subr.mxu0 %v544
  %2073 = vmatpush1.msra.mxu0 %v543
  %2074 = vmatprep.mubr.f32.mxu0 %v29
  %2075 = vmatmul.mubr.f32.gmra.mrb[0].mxu0 %v28
  %v2076 = vpop.f32.mrb[0].mxu0
  %v2077 = vadd.f32 %v2006, %v2076
  %v2078 = vpop.f32.mrb[0].mxu0
  %v2079 = vadd.f32 %v2008, %v2078
  %2080 = vdwg.mxu0
  %2081 = vmatprep.subr.mxu0 %v552
  %2082 = vmatpush1.msra.mxu0 %v551
  %2083 = vmatprep.subr.mxu0 %v560
  %2084 = vmatpush1.msra.mxu0 %v559
  %2085 = vmatprep.subr.mxu0 %v568
  %2086 = vmatpush1.msra.mxu0 %v567
  %2087 = vmatprep.subr.mxu0 %v576
  %2088 = vmatpush1.msra.mxu0 %v575
  %2089 = vmatprep.subr.mxu0 %v584
  %2090 = vmatpush1.msra.mxu0 %v583
  %2091 = vmatprep.subr.mxu0 %v592
  %2092 = vmatpush1.msra.mxu0 %v591
  %2093 = vmatprep.subr.mxu0 %v600
  %2094 = vmatpush1.msra.mxu0 %v599
  %2095 = vmatprep.subr.mxu0 %v608
  %2096 = vmatpush1.msra.mxu0 %v607
  %2097 = vmatprep.subr.mxu0 %v616
  %2098 = vmatpush1.msra.mxu0 %v615
  %2099 = vmatprep.subr.mxu0 %v624
  %2100 = vmatpush1.msra.mxu0 %v623
  %2101 = vmatprep.subr.mxu0 %v632
  %2102 = vmatpush1.msra.mxu0 %v631
  %2103 = vmatprep.subr.mxu0 %v640
  %2104 = vmatpush1.msra.mxu0 %v639
  %2105 = vmatprep.subr.mxu0 %v648
  %2106 = vmatpush1.msra.mxu0 %v647
  %2107 = vmatprep.subr.mxu0 %v656
  %2108 = vmatpush1.msra.mxu0 %v655
  %2109 = vmatprep.subr.mxu0 %v664
  %2110 = vmatpush1.msra.mxu0 %v663
  %2111 = vmatprep.subr.mxu0 %v672
  %2112 = vmatpush1.msra.mxu0 %v671
  %2113 = vmatprep.subr.mxu0 %v680
  %2114 = vmatpush1.msra.mxu0 %v679
  %2115 = vmatprep.subr.mxu0 %v688
  %2116 = vmatpush1.msra.mxu0 %v687
  %2117 = vmatprep.subr.mxu0 %v696
  %2118 = vmatpush1.msra.mxu0 %v695
  %2119 = vmatprep.subr.mxu0 %v704
  %2120 = vmatpush1.msra.mxu0 %v703
  %2121 = vmatprep.subr.mxu0 %v712
  %2122 = vmatpush1.msra.mxu0 %v711
  %2123 = vmatprep.subr.mxu0 %v720
  %2124 = vmatpush1.msra.mxu0 %v719
  %2125 = vmatprep.subr.mxu0 %v728
  %2126 = vmatpush1.msra.mxu0 %v727
  %2127 = vmatprep.subr.mxu0 %v736
  %2128 = vmatpush1.msra.mxu0 %v735
  %2129 = vmatprep.subr.mxu0 %v744
  %2130 = vmatpush1.msra.mxu0 %v743
  %2131 = vmatprep.subr.mxu0 %v752
  %2132 = vmatpush1.msra.mxu0 %v751
  %2133 = vmatprep.subr.mxu0 %v760
  %2134 = vmatpush1.msra.mxu0 %v759
  %2135 = vmatprep.subr.mxu0 %v768
  %2136 = vmatpush1.msra.mxu0 %v767
  %2137 = vmatprep.subr.mxu0 %v776
  %2138 = vmatpush1.msra.mxu0 %v775
  %2139 = vmatprep.subr.mxu0 %v784
  %2140 = vmatpush1.msra.mxu0 %v783
  %2141 = vmatprep.subr.mxu0 %v792
  %2142 = vmatpush1.msra.mxu0 %v791
  %2143 = vmatprep.subr.mxu0 %v800
  %2144 = vmatpush1.msra.mxu0 %v799
  %2145 = vmatprep.mubr.f32.mxu0 %v31
  %2146 = vmatmul.mubr.f32.gmra.mrb[0].mxu0 %v30
  %v2147 = vpop.f32.mrb[0].mxu0
  %v2148 = vadd.f32 %v2077, %v2147
  %v2149 = vpop.f32.mrb[0].mxu0
  %v2150 = vadd.f32 %v2079, %v2149
  %2151 = vdwg.mxu0
  %2152 = vmatprep.subr.mxu0 %v808
  %2153 = vmatpush1.msra.mxu0 %v807
  %2154 = vmatprep.subr.mxu0 %v816
  %2155 = vmatpush1.msra.mxu0 %v815
  %2156 = vmatprep.subr.mxu0 %v824
  %2157 = vmatpush1.msra.mxu0 %v823
  %2158 = vmatprep.subr.mxu0 %v832
  %2159 = vmatpush1.msra.mxu0 %v831
  %2160 = vmatprep.subr.mxu0 %v840
  %2161 = vmatpush1.msra.mxu0 %v839
  %2162 = vmatprep.subr.mxu0 %v848
  %2163 = vmatpush1.msra.mxu0 %v847
  %2164 = vmatprep.subr.mxu0 %v856
  %2165 = vmatpush1.msra.mxu0 %v855
  %2166 = vmatprep.subr.mxu0 %v864
  %2167 = vmatpush1.msra.mxu0 %v863
  %2168 = vmatprep.subr.mxu0 %v872
  %2169 = vmatpush1.msra.mxu0 %v871
  %2170 = vmatprep.subr.mxu0 %v880
  %2171 = vmatpush1.msra.mxu0 %v879
  %2172 = vmatprep.subr.mxu0 %v888
  %2173 = vmatpush1.msra.mxu0 %v887
  %2174 = vmatprep.subr.mxu0 %v896
  %2175 = vmatpush1.msra.mxu0 %v895
  %2176 = vmatprep.subr.mxu0 %v904
  %2177 = vmatpush1.msra.mxu0 %v903
  %2178 = vmatprep.subr.mxu0 %v912
  %2179 = vmatpush1.msra.mxu0 %v911
  %2180 = vmatprep.subr.mxu0 %v920
  %2181 = vmatpush1.msra.mxu0 %v919
  %2182 = vmatprep.subr.mxu0 %v928
  %2183 = vmatpush1.msra.mxu0 %v927
  %2184 = vmatprep.subr.mxu0 %v936
  %2185 = vmatpush1.msra.mxu0 %v935
  %2186 = vmatprep.subr.mxu0 %v944
  %2187 = vmatpush1.msra.mxu0 %v943
  %2188 = vmatprep.subr.mxu0 %v952
  %2189 = vmatpush1.msra.mxu0 %v951
  %2190 = vmatprep.subr.mxu0 %v960
  %2191 = vmatpush1.msra.mxu0 %v959
  %2192 = vmatprep.subr.mxu0 %v968
  %2193 = vmatpush1.msra.mxu0 %v967
  %2194 = vmatprep.subr.mxu0 %v976
  %2195 = vmatpush1.msra.mxu0 %v975
  %2196 = vmatprep.subr.mxu0 %v984
  %2197 = vmatpush1.msra.mxu0 %v983
  %2198 = vmatprep.subr.mxu0 %v992
  %2199 = vmatpush1.msra.mxu0 %v991
  %2200 = vmatprep.subr.mxu0 %v1000
  %2201 = vmatpush1.msra.mxu0 %v999
  %2202 = vmatprep.subr.mxu0 %v1008
  %2203 = vmatpush1.msra.mxu0 %v1007
  %2204 = vmatprep.subr.mxu0 %v1016
  %2205 = vmatpush1.msra.mxu0 %v1015
  %2206 = vmatprep.subr.mxu0 %v1024
  %2207 = vmatpush1.msra.mxu0 %v1023
  %2208 = vmatprep.subr.mxu0 %v1032
  %2209 = vmatpush1.msra.mxu0 %v1031
  %2210 = vmatprep.subr.mxu0 %v1040
  %2211 = vmatpush1.msra.mxu0 %v1039
  %2212 = vmatprep.subr.mxu0 %v1048
  %2213 = vmatpush1.msra.mxu0 %v1047
  %2214 = vmatprep.subr.mxu0 %v1056
  %2215 = vmatpush1.msra.mxu0 %v1055
  %2216 = vmatprep.mubr.f32.mxu0 %v33
  %2217 = vmatmul.mubr.f32.gmra.mrb[0].mxu0 %v32
  %v2218 = vpop.f32.mrb[0].mxu0
  %v2219 = vadd.f32 %v2148, %v2218
  %v2220 = vpop.f32.mrb[0].mxu0
  %v2221 = vadd.f32 %v2150, %v2220
  %2222 = vdwg.mxu0
  %2223 = vmatprep.subr.mxu0 %v1064
  %2224 = vmatpush1.msra.mxu0 %v1063
  %2225 = vmatprep.subr.mxu0 %v1072
  %2226 = vmatpush1.msra.mxu0 %v1071
  %2227 = vmatprep.subr.mxu0 %v1080
  %2228 = vmatpush1.msra.mxu0 %v1079
  %2229 = vmatprep.subr.mxu0 %v1088
  %2230 = vmatpush1.msra.mxu0 %v1087
  %2231 = vmatprep.subr.mxu0 %v1096
  %2232 = vmatpush1.msra.mxu0 %v1095
  %2233 = vmatprep.subr.mxu0 %v1104
  %2234 = vmatpush1.msra.mxu0 %v1103
  %2235 = vmatprep.subr.mxu0 %v1112
  %2236 = vmatpush1.msra.mxu0 %v1111
  %2237 = vmatprep.subr.mxu0 %v1120
  %2238 = vmatpush1.msra.mxu0 %v1119
  %2239 = vmatprep.subr.mxu0 %v1128
  %2240 = vmatpush1.msra.mxu0 %v1127
  %2241 = vmatprep.subr.mxu0 %v1136
  %2242 = vmatpush1.msra.mxu0 %v1135
  %2243 = vmatprep.subr.mxu0 %v1144
  %2244 = vmatpush1.msra.mxu0 %v1143
  %2245 = vmatprep.subr.mxu0 %v1152
  %2246 = vmatpush1.msra.mxu0 %v1151
  %2247 = vmatprep.subr.mxu0 %v1160
  %2248 = vmatpush1.msra.mxu0 %v1159
  %2249 = vmatprep.subr.mxu0 %v1168
  %2250 = vmatpush1.msra.mxu0 %v1167
  %2251 = vmatprep.subr.mxu0 %v1176
  %2252 = vmatpush1.msra.mxu0 %v1175
  %2253 = vmatprep.subr.mxu0 %v1184
  %2254 = vmatpush1.msra.mxu0 %v1183
  %2255 = vmatprep.subr.mxu0 0.0
  %2256 = vmatpush1.msra.mxu0 0.0
  %2257 = vmatprep.subr.mxu0 0.0
  %2258 = vmatpush1.msra.mxu0 0.0
  %2259 = vmatprep.subr.mxu0 0.0
  %2260 = vmatpush1.msra.mxu0 0.0
  %2261 = vmatprep.subr.mxu0 0.0
  %2262 = vmatpush1.msra.mxu0 0.0
  %2263 = vmatprep.subr.mxu0 0.0
  %2264 = vmatpush1.msra.mxu0 0.0
  %2265 = vmatprep.subr.mxu0 0.0
  %2266 = vmatpush1.msra.mxu0 0.0
  %2267 = vmatprep.subr.mxu0 0.0
  %2268 = vmatpush1.msra.mxu0 0.0
  %2269 = vmatprep.subr.mxu0 0.0
  %2270 = vmatpush1.msra.mxu0 0.0
  %2271 = vmatprep.subr.mxu0 0.0
  %2272 = vmatpush1.msra.mxu0 0.0
  %2273 = vmatprep.subr.mxu0 0.0
  %2274 = vmatpush1.msra.mxu0 0.0
  %2275 = vmatprep.subr.mxu0 0.0
  %2276 = vmatpush1.msra.mxu0 0.0
  %2277 = vmatprep.subr.mxu0 0.0
  %2278 = vmatpush1.msra.mxu0 0.0
  %2279 = vmatprep.subr.mxu0 0.0
  %2280 = vmatpush1.msra.mxu0 0.0
  %2281 = vmatprep.subr.mxu0 0.0
  %2282 = vmatpush1.msra.mxu0 0.0
  %2283 = vmatprep.subr.mxu0 0.0
  %2284 = vmatpush1.msra.mxu0 0.0
  %2285 = vmatprep.subr.mxu0 0.0
  %2286 = vmatpush1.msra.mxu0 0.0
  %2287 = vmatprep.mubr.f32.mxu0 0.0
  %2288 = vmatmul.mubr.f32.gmra.mrb[0].mxu0 %v34
  %v2289 = vpop.f32.mrb[0].mxu0
  %v2290 = vadd.f32 %v2219, %v2289
  %v2291 = vpop.f32.mrb[0].mxu0
  %v2292 = vadd.f32 %v2221, %v2291
  %2293 = vdwg.mxu0
  %2294 = vmatprep.subr.mxu0 %v42
  %2295 = vmatpush1.msra.mxu0 %v41
  %2296 = vmatprep.subr.mxu0 %v50
  %2297 = vmatpush1.msra.mxu0 %v49
  %2298 = vmatprep.subr.mxu0 %v58
  %2299 = vmatpush1.msra.mxu0 %v57
  %2300 = vmatprep.subr.mxu0 %v66
  %2301 = vmatpush1.msra.mxu0 %v65
  %2302 = vmatprep.subr.mxu0 %v74
  %2303 = vmatpush1.msra.mxu0 %v73
  %2304 = vmatprep.subr.mxu0 %v82
  %2305 = vmatpush1.msra.mxu0 %v81
  %2306 = vmatprep.subr.mxu0 %v90
  %2307 = vmatpush1.msra.mxu0 %v89
  %2308 = vmatprep.subr.mxu0 %v98
  %2309 = vmatpush1.msra.mxu0 %v97
  %2310 = vmatprep.subr.mxu0 %v106
  %2311 = vmatpush1.msra.mxu0 %v105
  %2312 = vmatprep.subr.mxu0 %v114
  %2313 = vmatpush1.msra.mxu0 %v113
  %2314 = vmatprep.subr.mxu0 %v122
  %2315 = vmatpush1.msra.mxu0 %v121
  %2316 = vmatprep.subr.mxu0 %v130
  %2317 = vmatpush1.msra.mxu0 %v129
  %2318 = vmatprep.subr.mxu0 %v138
  %2319 = vmatpush1.msra.mxu0 %v137
  %2320 = vmatprep.subr.mxu0 %v146
  %2321 = vmatpush1.msra.mxu0 %v145
  %2322 = vmatprep.subr.mxu0 %v154
  %2323 = vmatpush1.msra.mxu0 %v153
  %2324 = vmatprep.subr.mxu0 %v162
  %2325 = vmatpush1.msra.mxu0 %v161
  %2326 = vmatprep.subr.mxu0 %v170
  %2327 = vmatpush1.msra.mxu0 %v169
  %2328 = vmatprep.subr.mxu0 %v178
  %2329 = vmatpush1.msra.mxu0 %v177
  %2330 = vmatprep.subr.mxu0 %v186
  %2331 = vmatpush1.msra.mxu0 %v185
  %2332 = vmatprep.subr.mxu0 %v194
  %2333 = vmatpush1.msra.mxu0 %v193
  %2334 = vmatprep.subr.mxu0 %v202
  %2335 = vmatpush1.msra.mxu0 %v201
  %2336 = vmatprep.subr.mxu0 %v210
  %2337 = vmatpush1.msra.mxu0 %v209
  %2338 = vmatprep.subr.mxu0 %v218
  %2339 = vmatpush1.msra.mxu0 %v217
  %2340 = vmatprep.subr.mxu0 %v226
  %2341 = vmatpush1.msra.mxu0 %v225
  %2342 = vmatprep.subr.mxu0 %v234
  %2343 = vmatpush1.msra.mxu0 %v233
  %2344 = vmatprep.subr.mxu0 %v242
  %2345 = vmatpush1.msra.mxu0 %v241
  %2346 = vmatprep.subr.mxu0 %v250
  %2347 = vmatpush1.msra.mxu0 %v249
  %2348 = vmatprep.subr.mxu0 %v258
  %2349 = vmatpush1.msra.mxu0 %v257
  %2350 = vmatprep.subr.mxu0 %v266
  %2351 = vmatpush1.msra.mxu0 %v265
  %2352 = vmatprep.subr.mxu0 %v274
  %2353 = vmatpush1.msra.mxu0 %v273
  %2354 = vmatprep.subr.mxu0 %v282
  %2355 = vmatpush1.msra.mxu0 %v281
  %2356 = vmatprep.subr.mxu0 %v290
  %2357 = vmatpush1.msra.mxu0 %v289
  %2358 = vmatprep.mubr.f32.mxu0 %v27
  %2359 = vmatmul.mubr.f32.gmra.mrb[0].mxu0 %v26
  %v2360 = vpop.f32.mrb[0].mxu0
  %v2361 = vadd.f32 %v1216, %v2360
  %v2362 = vpop.f32.mrb[0].mxu0
  %v2363 = vadd.f32 %v1220, %v2362
  %2364 = vdwg.mxu0
  %2365 = vmatprep.subr.mxu0 %v298
  %2366 = vmatpush1.msra.mxu0 %v297
  %2367 = vmatprep.subr.mxu0 %v306
  %2368 = vmatpush1.msra.mxu0 %v305
  %2369 = vmatprep.subr.mxu0 %v314
  %2370 = vmatpush1.msra.mxu0 %v313
  %2371 = vmatprep.subr.mxu0 %v322
  %2372 = vmatpush1.msra.mxu0 %v321
  %2373 = vmatprep.subr.mxu0 %v330
  %2374 = vmatpush1.msra.mxu0 %v329
  %2375 = vmatprep.subr.mxu0 %v338
  %2376 = vmatpush1.msra.mxu0 %v337
  %2377 = vmatprep.subr.mxu0 %v346
  %2378 = vmatpush1.msra.mxu0 %v345
  %2379 = vmatprep.subr.mxu0 %v354
  %2380 = vmatpush1.msra.mxu0 %v353
  %2381 = vmatprep.subr.mxu0 %v362
  %2382 = vmatpush1.msra.mxu0 %v361
  %2383 = vmatprep.subr.mxu0 %v370
  %2384 = vmatpush1.msra.mxu0 %v369
  %2385 = vmatprep.subr.mxu0 %v378
  %2386 = vmatpush1.msra.mxu0 %v377
  %2387 = vmatprep.subr.mxu0 %v386
  %2388 = vmatpush1.msra.mxu0 %v385
  %2389 = vmatprep.subr.mxu0 %v394
  %2390 = vmatpush1.msra.mxu0 %v393
  %2391 = vmatprep.subr.mxu0 %v402
  %2392 = vmatpush1.msra.mxu0 %v401
  %2393 = vmatprep.subr.mxu0 %v410
  %2394 = vmatpush1.msra.mxu0 %v409
  %2395 = vmatprep.subr.mxu0 %v418
  %2396 = vmatpush1.msra.mxu0 %v417
  %2397 = vmatprep.subr.mxu0 %v426
  %2398 = vmatpush1.msra.mxu0 %v425
  %2399 = vmatprep.subr.mxu0 %v434
  %2400 = vmatpush1.msra.mxu0 %v433
  %2401 = vmatprep.subr.mxu0 %v442
  %2402 = vmatpush1.msra.mxu0 %v441
  %2403 = vmatprep.subr.mxu0 %v450
  %2404 = vmatpush1.msra.mxu0 %v449
  %2405 = vmatprep.subr.mxu0 %v458
  %2406 = vmatpush1.msra.mxu0 %v457
  %2407 = vmatprep.subr.mxu0 %v466
  %2408 = vmatpush1.msra.mxu0 %v465
  %2409 = vmatprep.subr.mxu0 %v474
  %2410 = vmatpush1.msra.mxu0 %v473
  %2411 = vmatprep.subr.mxu0 %v482
  %2412 = vmatpush1.msra.mxu0 %v481
  %2413 = vmatprep.subr.mxu0 %v490
  %2414 = vmatpush1.msra.mxu0 %v489
  %2415 = vmatprep.subr.mxu0 %v498
  %2416 = vmatpush1.msra.mxu0 %v497
  %2417 = vmatprep.subr.mxu0 %v506
  %2418 = vmatpush1.msra.mxu0 %v505
  %2419 = vmatprep.subr.mxu0 %v514
  %2420 = vmatpush1.msra.mxu0 %v513
  %2421 = vmatprep.subr.mxu0 %v522
  %2422 = vmatpush1.msra.mxu0 %v521
  %2423 = vmatprep.subr.mxu0 %v530
  %2424 = vmatpush1.msra.mxu0 %v529
  %2425 = vmatprep.subr.mxu0 %v538
  %2426 = vmatpush1.msra.mxu0 %v537
  %2427 = vmatprep.subr.mxu0 %v546
  %2428 = vmatpush1.msra.mxu0 %v545
  %2429 = vmatprep.mubr.f32.mxu0 %v29
  %2430 = vmatmul.mubr.f32.gmra.mrb[0].mxu0 %v28
  %v2431 = vpop.f32.mrb[0].mxu0
  %v2432 = vadd.f32 %v2361, %v2431
  %v2433 = vpop.f32.mrb[0].mxu0
  %v2434 = vadd.f32 %v2363, %v2433
  %2435 = vdwg.mxu0
  %2436 = vmatprep.subr.mxu0 %v554
  %2437 = vmatpush1.msra.mxu0 %v553
  %2438 = vmatprep.subr.mxu0 %v562
  %2439 = vmatpush1.msra.mxu0 %v561
  %2440 = vmatprep.subr.mxu0 %v570
  %2441 = vmatpush1.msra.mxu0 %v569
  %2442 = vmatprep.subr.mxu0 %v578
  %2443 = vmatpush1.msra.mxu0 %v577
  %2444 = vmatprep.subr.mxu0 %v586
  %2445 = vmatpush1.msra.mxu0 %v585
  %2446 = vmatprep.subr.mxu0 %v594
  %2447 = vmatpush1.msra.mxu0 %v593
  %2448 = vmatprep.subr.mxu0 %v602
  %2449 = vmatpush1.msra.mxu0 %v601
  %2450 = vmatprep.subr.mxu0 %v610
  %2451 = vmatpush1.msra.mxu0 %v609
  %2452 = vmatprep.subr.mxu0 %v618
  %2453 = vmatpush1.msra.mxu0 %v617
  %2454 = vmatprep.subr.mxu0 %v626
  %2455 = vmatpush1.msra.mxu0 %v625
  %2456 = vmatprep.subr.mxu0 %v634
  %2457 = vmatpush1.msra.mxu0 %v633
  %2458 = vmatprep.subr.mxu0 %v642
  %2459 = vmatpush1.msra.mxu0 %v641
  %2460 = vmatprep.subr.mxu0 %v650
  %2461 = vmatpush1.msra.mxu0 %v649
  %2462 = vmatprep.subr.mxu0 %v658
  %2463 = vmatpush1.msra.mxu0 %v657
  %2464 = vmatprep.subr.mxu0 %v666
  %2465 = vmatpush1.msra.mxu0 %v665
  %2466 = vmatprep.subr.mxu0 %v674
  %2467 = vmatpush1.msra.mxu0 %v673
  %2468 = vmatprep.subr.mxu0 %v682
  %2469 = vmatpush1.msra.mxu0 %v681
  %2470 = vmatprep.subr.mxu0 %v690
  %2471 = vmatpush1.msra.mxu0 %v689
  %2472 = vmatprep.subr.mxu0 %v698
  %2473 = vmatpush1.msra.mxu0 %v697
  %2474 = vmatprep.subr.mxu0 %v706
  %2475 = vmatpush1.msra.mxu0 %v705
  %2476 = vmatprep.subr.mxu0 %v714
  %2477 = vmatpush1.msra.mxu0 %v713
  %2478 = vmatprep.subr.mxu0 %v722
  %2479 = vmatpush1.msra.mxu0 %v721
  %2480 = vmatprep.subr.mxu0 %v730
  %2481 = vmatpush1.msra.mxu0 %v729
  %2482 = vmatprep.subr.mxu0 %v738
  %2483 = vmatpush1.msra.mxu0 %v737
  %2484 = vmatprep.subr.mxu0 %v746
  %2485 = vmatpush1.msra.mxu0 %v745
  %2486 = vmatprep.subr.mxu0 %v754
  %2487 = vmatpush1.msra.mxu0 %v753
  %2488 = vmatprep.subr.mxu0 %v762
  %2489 = vmatpush1.msra.mxu0 %v761
  %2490 = vmatprep.subr.mxu0 %v770
  %2491 = vmatpush1.msra.mxu0 %v769
  %2492 = vmatprep.subr.mxu0 %v778
  %2493 = vmatpush1.msra.mxu0 %v777
  %2494 = vmatprep.subr.mxu0 %v786
  %2495 = vmatpush1.msra.mxu0 %v785
  %2496 = vmatprep.subr.mxu0 %v794
  %2497 = vmatpush1.msra.mxu0 %v793
  %2498 = vmatprep.subr.mxu0 %v802
  %2499 = vmatpush1.msra.mxu0 %v801
  %2500 = vmatprep.mubr.f32.mxu0 %v31
  %2501 = vmatmul.mubr.f32.gmra.mrb[0].mxu0 %v30
  %v2502 = vpop.f32.mrb[0].mxu0
  %v2503 = vadd.f32 %v2432, %v2502
  %v2504 = vpop.f32.mrb[0].mxu0
  %v2505 = vadd.f32 %v2434, %v2504
  %2506 = vdwg.mxu0
  %2507 = vmatprep.subr.mxu0 %v810
  %2508 = vmatpush1.msra.mxu0 %v809
  %2509 = vmatprep.subr.mxu0 %v818
  %2510 = vmatpush1.msra.mxu0 %v817
  %2511 = vmatprep.subr.mxu0 %v826
  %2512 = vmatpush1.msra.mxu0 %v825
  %2513 = vmatprep.subr.mxu0 %v834
  %2514 = vmatpush1.msra.mxu0 %v833
  %2515 = vmatprep.subr.mxu0 %v842
  %2516 = vmatpush1.msra.mxu0 %v841
  %2517 = vmatprep.subr.mxu0 %v850
  %2518 = vmatpush1.msra.mxu0 %v849
  %2519 = vmatprep.subr.mxu0 %v858
  %2520 = vmatpush1.msra.mxu0 %v857
  %2521 = vmatprep.subr.mxu0 %v866
  %2522 = vmatpush1.msra.mxu0 %v865
  %2523 = vmatprep.subr.mxu0 %v874
  %2524 = vmatpush1.msra.mxu0 %v873
  %2525 = vmatprep.subr.mxu0 %v882
  %2526 = vmatpush1.msra.mxu0 %v881
  %2527 = vmatprep.subr.mxu0 %v890
  %2528 = vmatpush1.msra.mxu0 %v889
  %2529 = vmatprep.subr.mxu0 %v898
  %2530 = vmatpush1.msra.mxu0 %v897
  %2531 = vmatprep.subr.mxu0 %v906
  %2532 = vmatpush1.msra.mxu0 %v905
  %2533 = vmatprep.subr.mxu0 %v914
  %2534 = vmatpush1.msra.mxu0 %v913
  %2535 = vmatprep.subr.mxu0 %v922
  %2536 = vmatpush1.msra.mxu0 %v921
  %2537 = vmatprep.subr.mxu0 %v930
  %2538 = vmatpush1.msra.mxu0 %v929
  %2539 = vmatprep.subr.mxu0 %v938
  %2540 = vmatpush1.msra.mxu0 %v937
  %2541 = vmatprep.subr.mxu0 %v946
  %2542 = vmatpush1.msra.mxu0 %v945
  %2543 = vmatprep.subr.mxu0 %v954
  %2544 = vmatpush1.msra.mxu0 %v953
  %2545 = vmatprep.subr.mxu0 %v962
  %2546 = vmatpush1.msra.mxu0 %v961
  %2547 = vmatprep.subr.mxu0 %v970
  %2548 = vmatpush1.msra.mxu0 %v969
  %2549 = vmatprep.subr.mxu0 %v978
  %2550 = vmatpush1.msra.mxu0 %v977
  %2551 = vmatprep.subr.mxu0 %v986
  %2552 = vmatpush1.msra.mxu0 %v985
  %2553 = vmatprep.subr.mxu0 %v994
  %2554 = vmatpush1.msra.mxu0 %v993
  %2555 = vmatprep.subr.mxu0 %v1002
  %2556 = vmatpush1.msra.mxu0 %v1001
  %2557 = vmatprep.subr.mxu0 %v1010
  %2558 = vmatpush1.msra.mxu0 %v1009
  %2559 = vmatprep.subr.mxu0 %v1018
  %2560 = vmatpush1.msra.mxu0 %v1017
  %2561 = vmatprep.subr.mxu0 %v1026
  %2562 = vmatpush1.msra.mxu0 %v1025
  %2563 = vmatprep.subr.mxu0 %v1034
  %2564 = vmatpush1.msra.mxu0 %v1033
  %2565 = vmatprep.subr.mxu0 %v1042
  %2566 = vmatpush1.msra.mxu0 %v1041
  %2567 = vmatprep.subr.mxu0 %v1050
  %2568 = vmatpush1.msra.mxu0 %v1049
  %2569 = vmatprep.subr.mxu0 %v1058
  %2570 = vmatpush1.msra.mxu0 %v1057
  %2571 = vmatprep.mubr.f32.mxu0 %v33
  %2572 = vmatmul.mubr.f32.gmra.mrb[0].mxu0 %v32
  %v2573 = vpop.f32.mrb[0].mxu0
  %v2574 = vadd.f32 %v2503, %v2573
  %v2575 = vpop.f32.mrb[0].mxu0
  %v2576 = vadd.f32 %v2505, %v2575
  %2577 = vdwg.mxu0
  %2578 = vmatprep.subr.mxu0 %v1066
  %2579 = vmatpush1.msra.mxu0 %v1065
  %2580 = vmatprep.subr.mxu0 %v1074
  %2581 = vmatpush1.msra.mxu0 %v1073
  %2582 = vmatprep.subr.mxu0 %v1082
  %2583 = vmatpush1.msra.mxu0 %v1081
  %2584 = vmatprep.subr.mxu0 %v1090
  %2585 = vmatpush1.msra.mxu0 %v1089
  %2586 = vmatprep.subr.mxu0 %v1098
  %2587 = vmatpush1.msra.mxu0 %v1097
  %2588 = vmatprep.subr.mxu0 %v1106
  %2589 = vmatpush1.msra.mxu0 %v1105
  %2590 = vmatprep.subr.mxu0 %v1114
  %2591 = vmatpush1.msra.mxu0 %v1113
  %2592 = vmatprep.subr.mxu0 %v1122
  %2593 = vmatpush1.msra.mxu0 %v1121
  %2594 = vmatprep.subr.mxu0 %v1130
  %2595 = vmatpush1.msra.mxu0 %v1129
  %2596 = vmatprep.subr.mxu0 %v1138
  %2597 = vmatpush1.msra.mxu0 %v1137
  %2598 = vmatprep.subr.mxu0 %v1146
  %2599 = vmatpush1.msra.mxu0 %v1145
  %2600 = vmatprep.subr.mxu0 %v1154
  %2601 = vmatpush1.msra.mxu0 %v1153
  %2602 = vmatprep.subr.mxu0 %v1162
  %2603 = vmatpush1.msra.mxu0 %v1161
  %2604 = vmatprep.subr.mxu0 %v1170
  %2605 = vmatpush1.msra.mxu0 %v1169
  %2606 = vmatprep.subr.mxu0 %v1178
  %2607 = vmatpush1.msra.mxu0 %v1177
  %2608 = vmatprep.subr.mxu0 %v1186
  %2609 = vmatpush1.msra.mxu0 %v1185
  %2610 = vmatprep.subr.mxu0 0.0
  %2611 = vmatpush1.msra.mxu0 0.0
  %2612 = vmatprep.subr.mxu0 0.0
  %2613 = vmatpush1.msra.mxu0 0.0
  %2614 = vmatprep.subr.mxu0 0.0
  %2615 = vmatpush1.msra.mxu0 0.0
  %2616 = vmatprep.subr.mxu0 0.0
  %2617 = vmatpush1.msra.mxu0 0.0
  %2618 = vmatprep.subr.mxu0 0.0
  %2619 = vmatpush1.msra.mxu0 0.0
  %2620 = vmatprep.subr.mxu0 0.0
  %2621 = vmatpush1.msra.mxu0 0.0
  %2622 = vmatprep.subr.mxu0 0.0
  %2623 = vmatpush1.msra.mxu0 0.0
  %2624 = vmatprep.subr.mxu0 0.0
  %2625 = vmatpush1.msra.mxu0 0.0
  %2626 = vmatprep.subr.mxu0 0.0
  %2627 = vmatpush1.msra.mxu0 0.0
  %2628 = vmatprep.subr.mxu0 0.0
  %2629 = vmatpush1.msra.mxu0 0.0
  %2630 = vmatprep.subr.mxu0 0.0
  %2631 = vmatpush1.msra.mxu0 0.0
  %2632 = vmatprep.subr.mxu0 0.0
  %2633 = vmatpush1.msra.mxu0 0.0
  %2634 = vmatprep.subr.mxu0 0.0
  %2635 = vmatpush1.msra.mxu0 0.0
  %2636 = vmatprep.subr.mxu0 0.0
  %2637 = vmatpush1.msra.mxu0 0.0
  %2638 = vmatprep.subr.mxu0 0.0
  %2639 = vmatpush1.msra.mxu0 0.0
  %2640 = vmatprep.subr.mxu0 0.0
  %2641 = vmatpush1.msra.mxu0 0.0
  %2642 = vmatprep.mubr.f32.mxu0 0.0
  %2643 = vmatmul.mubr.f32.gmra.mrb[0].mxu0 %v34
  %v2644 = vpop.f32.mrb[0].mxu0
  %v2645 = vadd.f32 %v2574, %v2644
  %v2646 = vpop.f32.mrb[0].mxu0
  %v2647 = vadd.f32 %v2576, %v2646
  %2648 = vdwg.mxu0
  %v2649 = vmax.f32 %v1580, 0.0
  %v2650 = vmax.f32 %v1582, 0.0
  %v2651 = vmax.f32 %v1935, 0.0
  %v2652 = vmax.f32 %v1937, 0.0
  %v2653 = vmax.f32 %v2290, 0.0
  %v2654 = vmax.f32 %v2292, 0.0
  %v2655 = vmax.f32 %v2645, 0.0
  %v2656 = vmax.f32 %v2647, 0.0
  %v2657 = vld [vmem:[%s3] sm:$0xff]
  %v2658 = vld [vmem:[%s3 + $0x8] sm:$0xff]
  %v2659 = vld [vmem:[%s3 + $0x10] sm:$0xff]
  %v2660 = vld [vmem:[%s3 + $0x18] sm:$0xff]
  %v2661 = vld [vmem:[%s3 + $0x20] sm:$0xff]
  %v2662 = vld [vmem:[%s3 + $0x28] sm:$0xff]
  %v2663 = vld [vmem:[%s3 + $0x30] sm:$0xff]
  %v2664 = vld [vmem:[%s3 + $0x38] sm:$0xff]
  %v2665 = vld [vmem:[%s3 + $0x40] sm:$0xff]
  %v2666 = vld [vmem:[%s3 + $0x48] sm:$0xff]
  %v2667 = vld [vmem:[%s3 + $0x50] sm:$0xff]
  %v2668 = vld [vmem:[%s3 + $0x58] sm:$0xff]
  %v2669 = vld [vmem:[%s3 + $0x60] sm:$0xff]
  %v2670 = vld [vmem:[%s3 + $0x68] sm:$0xff]
  %v2671 = vld [vmem:[%s3 + $0x70] sm:$0xff]
  %v2672 = vld [vmem:[%s3 + $0x78] sm:$0xff]
  %v2673 = vld [vmem:[%s3 + $0x80] sm:$0xff]
  %v2674 = vld [vmem:[%s3 + $0x88] sm:$0xff]
  %v2675 = vld [vmem:[%s3 + $0x90] sm:$0xff]
  %v2676 = vld [vmem:[%s3 + $0x98] sm:$0xff]
  %v2677 = vld [vmem:[%s3 + $0xa0] sm:$0xff]
  %v2678 = vld [vmem:[%s3 + $0xa8] sm:$0xff]
  %v2679 = vld [vmem:[%s3 + $0xb0] sm:$0xff]
  %v2680 = vld [vmem:[%s3 + $0xb8] sm:$0xff]
  %v2681 = vld [vmem:[%s3 + $0xc0] sm:$0xff]
  %v2682 = vld [vmem:[%s3 + $0xc8] sm:$0xff]
  %v2683 = vld [vmem:[%s3 + $0xd0] sm:$0xff]
  %v2684 = vld [vmem:[%s3 + $0xd8] sm:$0xff]
  %v2685 = vld [vmem:[%s3 + $0xe0] sm:$0xff]
  %v2686 = vld [vmem:[%s3 + $0xe8] sm:$0xff]
  %v2687 = vld [vmem:[%s3 + $0xf0] sm:$0xff]
  %v2688 = vld [vmem:[%s3 + $0xf8] sm:$0xff]
  %v2689 = vld [vmem:[%s3 + $0x100] sm:$0xff]
  %v2690 = vld [vmem:[%s3 + $0x108] sm:$0xff]
  %v2691 = vld [vmem:[%s3 + $0x110] sm:$0xff]
  %v2692 = vld [vmem:[%s3 + $0x118] sm:$0xff]
  %v2693 = vld [vmem:[%s3 + $0x120] sm:$0xff]
  %v2694 = vld [vmem:[%s3 + $0x128] sm:$0xff]
  %v2695 = vld [vmem:[%s3 + $0x130] sm:$0xff]
  %v2696 = vld [vmem:[%s3 + $0x138] sm:$0xff]
  %v2697 = vld [vmem:[%s3 + $0x140] sm:$0xff]
  %v2698 = vld [vmem:[%s3 + $0x148] sm:$0xff]
  %v2699 = vld [vmem:[%s3 + $0x150] sm:$0xff]
  %v2700 = vld [vmem:[%s3 + $0x158] sm:$0xff]
  %v2701 = vld [vmem:[%s3 + $0x160] sm:$0xff]
  %v2702 = vld [vmem:[%s3 + $0x168] sm:$0xff]
  %v2703 = vld [vmem:[%s3 + $0x170] sm:$0xff]
  %v2704 = vld [vmem:[%s3 + $0x178] sm:$0xff]
  %v2705 = vld [vmem:[%s3 + $0x180] sm:$0xff]
  %v2706 = vld [vmem:[%s3 + $0x188] sm:$0xff]
  %v2707 = vld [vmem:[%s3 + $0x190] sm:$0xff]
  %v2708 = vld [vmem:[%s3 + $0x198] sm:$0xff]
  %v2709 = vld [vmem:[%s3 + $0x1a0] sm:$0xff]
  %v2710 = vld [vmem:[%s3 + $0x1a8] sm:$0xff]
  %v2711 = vld [vmem:[%s3 + $0x1b0] sm:$0xff]
  %v2712 = vld [vmem:[%s3 + $0x1b8] sm:$0xff]
  %v2713 = vld [vmem:[%s3 + $0x1c0] sm:$0xff]
  %v2714 = vld [vmem:[%s3 + $0x1c8] sm:$0xff]
  %v2715 = vld [vmem:[%s3 + $0x1d0] sm:$0xff]
  %v2716 = vld [vmem:[%s3 + $0x1d8] sm:$0xff]
  %v2717 = vld [vmem:[%s3 + $0x1e0] sm:$0xff]
  %v2718 = vld [vmem:[%s3 + $0x1e8] sm:$0xff]
  %v2719 = vld [vmem:[%s3 + $0x1f0] sm:$0xff]
  %v2720 = vld [vmem:[%s3 + $0x1f8] sm:$0xff]
  %v2721 = vld [vmem:[%s3 + $0x200] sm:$0xff]
  %v2722 = vld [vmem:[%s3 + $0x208] sm:$0xff]
  %v2723 = vld [vmem:[%s3 + $0x210] sm:$0xff]
  %v2724 = vld [vmem:[%s3 + $0x218] sm:$0xff]
  %v2725 = vld [vmem:[%s3 + $0x220] sm:$0xff]
  %v2726 = vld [vmem:[%s3 + $0x228] sm:$0xff]
  %v2727 = vld [vmem:[%s3 + $0x230] sm:$0xff]
  %v2728 = vld [vmem:[%s3 + $0x238] sm:$0xff]
  %v2729 = vld [vmem:[%s3 + $0x240] sm:$0xff]
  %v2730 = vld [vmem:[%s3 + $0x248] sm:$0xff]
  %v2731 = vld [vmem:[%s3 + $0x250] sm:$0xff]
  %v2732 = vld [vmem:[%s3 + $0x258] sm:$0xff]
  %v2733 = vld [vmem:[%s3 + $0x260] sm:$0xff]
  %v2734 = vld [vmem:[%s3 + $0x268] sm:$0xff]
  %v2735 = vld [vmem:[%s3 + $0x270] sm:$0xff]
  %v2736 = vld [vmem:[%s3 + $0x278] sm:$0xff]
  %v2737 = vld [vmem:[%s3 + $0x280] sm:$0xff]
  %v2738 = vld [vmem:[%s3 + $0x288] sm:$0xff]
  %v2739 = vld [vmem:[%s3 + $0x290] sm:$0xff]
  %v2740 = vld [vmem:[%s3 + $0x298] sm:$0xff]
  %v2741 = vld [vmem:[%s3 + $0x2a0] sm:$0xff]
  %v2742 = vld [vmem:[%s3 + $0x2a8] sm:$0xff]
  %v2743 = vld [vmem:[%s3 + $0x2b0] sm:$0xff]
  %v2744 = vld [vmem:[%s3 + $0x2b8] sm:$0xff]
  %v2745 = vld [vmem:[%s3 + $0x2c0] sm:$0xff]
  %v2746 = vld [vmem:[%s3 + $0x2c8] sm:$0xff]
  %v2747 = vld [vmem:[%s3 + $0x2d0] sm:$0xff]
  %v2748 = vld [vmem:[%s3 + $0x2d8] sm:$0xff]
  %v2749 = vld [vmem:[%s3 + $0x2e0] sm:$0xff]
  %v2750 = vld [vmem:[%s3 + $0x2e8] sm:$0xff]
  %v2751 = vld [vmem:[%s3 + $0x2f0] sm:$0xff]
  %v2752 = vld [vmem:[%s3 + $0x2f8] sm:$0xff]
  %v2753 = vld [vmem:[%s3 + $0x300] sm:$0xff]
  %v2754 = vld [vmem:[%s3 + $0x308] sm:$0xff]
  %v2755 = vld [vmem:[%s3 + $0x310] sm:$0xff]
  %v2756 = vld [vmem:[%s3 + $0x318] sm:$0xff]
  %v2757 = vld [vmem:[%s3 + $0x320] sm:$0xff]
  %v2758 = vld [vmem:[%s3 + $0x328] sm:$0xff]
  %v2759 = vld [vmem:[%s3 + $0x330] sm:$0xff]
  %v2760 = vld [vmem:[%s3 + $0x338] sm:$0xff]
  %v2761 = vld [vmem:[%s3 + $0x340] sm:$0xff]
  %v2762 = vld [vmem:[%s3 + $0x348] sm:$0xff]
  %v2763 = vld [vmem:[%s3 + $0x350] sm:$0xff]
  %v2764 = vld [vmem:[%s3 + $0x358] sm:$0xff]
  %v2765 = vld [vmem:[%s3 + $0x360] sm:$0xff]
  %v2766 = vld [vmem:[%s3 + $0x368] sm:$0xff]
  %v2767 = vld [vmem:[%s3 + $0x370] sm:$0xff]
  %v2768 = vld [vmem:[%s3 + $0x378] sm:$0xff]
  %v2769 = vld [vmem:[%s3 + $0x380] sm:$0xff]
  %v2770 = vld [vmem:[%s3 + $0x388] sm:$0xff]
  %v2771 = vld [vmem:[%s3 + $0x390] sm:$0xff]
  %v2772 = vld [vmem:[%s3 + $0x398] sm:$0xff]
  %v2773 = vld [vmem:[%s3 + $0x3a0] sm:$0xff]
  %v2774 = vld [vmem:[%s3 + $0x3a8] sm:$0xff]
  %v2775 = vld [vmem:[%s3 + $0x3b0] sm:$0xff]
  %v2776 = vld [vmem:[%s3 + $0x3b8] sm:$0xff]
  %v2777 = vld [vmem:[%s3 + $0x3c0] sm:$0xff]
  %v2778 = vld [vmem:[%s3 + $0x3c8] sm:$0xff]
  %v2779 = vld [vmem:[%s3 + $0x3d0] sm:$0xff]
  %v2780 = vld [vmem:[%s3 + $0x3d8] sm:$0xff]
  %v2781 = vld [vmem:[%s3 + $0x3e0] sm:$0xff]
  %v2782 = vld [vmem:[%s3 + $0x3e8] sm:$0xff]
  %v2783 = vld [vmem:[%s3 + $0x3f0] sm:$0xff]
  %v2784 = vld [vmem:[%s3 + $0x3f8] sm:$0xff]
  %v2785 = vld [vmem:[%s4] sm:$0x1]
  %v2787 = vlaneseq
  %v2788 = vshrl.u32 %v2787, 7
  %v2789 = vsub.s32 0, %v2788
  %v2790 = vrot.slane %v2785, %v2789
  %2792 = vmatprep.subr.mxu0 0.0
  %2793 = vmatpush1.msra.mxu0 %v2657
  %2794 = vmatprep.subr.mxu0 0.0
  %2795 = vmatpush1.msra.mxu0 %v2658
  %2796 = vmatprep.subr.mxu0 0.0
  %2797 = vmatpush1.msra.mxu0 %v2659
  %2798 = vmatprep.subr.mxu0 0.0
  %2799 = vmatpush1.msra.mxu0 %v2660
  %2800 = vmatprep.subr.mxu0 0.0
  %2801 = vmatpush1.msra.mxu0 %v2661
  %2802 = vmatprep.subr.mxu0 0.0
  %2803 = vmatpush1.msra.mxu0 %v2662
  %2804 = vmatprep.subr.mxu0 0.0
  %2805 = vmatpush1.msra.mxu0 %v2663
  %2806 = vmatprep.subr.mxu0 0.0
  %2807 = vmatpush1.msra.mxu0 %v2664
  %2808 = vmatprep.subr.mxu0 0.0
  %2809 = vmatpush1.msra.mxu0 %v2665
  %2810 = vmatprep.subr.mxu0 0.0
  %2811 = vmatpush1.msra.mxu0 %v2666
  %2812 = vmatprep.subr.mxu0 0.0
  %2813 = vmatpush1.msra.mxu0 %v2667
  %2814 = vmatprep.subr.mxu0 0.0
  %2815 = vmatpush1.msra.mxu0 %v2668
  %2816 = vmatprep.subr.mxu0 0.0
  %2817 = vmatpush1.msra.mxu0 %v2669
  %2818 = vmatprep.subr.mxu0 0.0
  %2819 = vmatpush1.msra.mxu0 %v2670
  %2820 = vmatprep.subr.mxu0 0.0
  %2821 = vmatpush1.msra.mxu0 %v2671
  %2822 = vmatprep.subr.mxu0 0.0
  %2823 = vmatpush1.msra.mxu0 %v2672
  %2824 = vmatprep.subr.mxu0 0.0
  %2825 = vmatpush1.msra.mxu0 %v2673
  %2826 = vmatprep.subr.mxu0 0.0
  %2827 = vmatpush1.msra.mxu0 %v2674
  %2828 = vmatprep.subr.mxu0 0.0
  %2829 = vmatpush1.msra.mxu0 %v2675
  %2830 = vmatprep.subr.mxu0 0.0
  %2831 = vmatpush1.msra.mxu0 %v2676
  %2832 = vmatprep.subr.mxu0 0.0
  %2833 = vmatpush1.msra.mxu0 %v2677
  %2834 = vmatprep.subr.mxu0 0.0
  %2835 = vmatpush1.msra.mxu0 %v2678
  %2836 = vmatprep.subr.mxu0 0.0
  %2837 = vmatpush1.msra.mxu0 %v2679
  %2838 = vmatprep.subr.mxu0 0.0
  %2839 = vmatpush1.msra.mxu0 %v2680
  %2840 = vmatprep.subr.mxu0 0.0
  %2841 = vmatpush1.msra.mxu0 %v2681
  %2842 = vmatprep.subr.mxu0 0.0
  %2843 = vmatpush1.msra.mxu0 %v2682
  %2844 = vmatprep.subr.mxu0 0.0
  %2845 = vmatpush1.msra.mxu0 %v2683
  %2846 = vmatprep.subr.mxu0 0.0
  %2847 = vmatpush1.msra.mxu0 %v2684
  %2848 = vmatprep.subr.mxu0 0.0
  %2849 = vmatpush1.msra.mxu0 %v2685
  %2850 = vmatprep.subr.mxu0 0.0
  %2851 = vmatpush1.msra.mxu0 %v2686
  %2852 = vmatprep.subr.mxu0 0.0
  %2853 = vmatpush1.msra.mxu0 %v2687
  %2854 = vmatprep.subr.mxu0 0.0
  %2855 = vmatpush1.msra.mxu0 %v2688
  %2856 = vmatprep.mubr.f32.mxu0 %v2650
  %2857 = vmatmul.mubr.f32.gmra.mrb[0].mxu0 %v2649
  %v2858 = vpop.f32.mrb[0].mxu0
  %v2859 = vadd.f32 %v2790, %v2858
  %v2860 = vpop.f32.mrb[0].mxu0
  %2861 = vdwg.mxu0
  %2862 = vmatprep.subr.mxu0 0.0
  %2863 = vmatpush1.msra.mxu0 %v2689
  %2864 = vmatprep.subr.mxu0 0.0
  %2865 = vmatpush1.msra.mxu0 %v2690
  %2866 = vmatprep.subr.mxu0 0.0
  %2867 = vmatpush1.msra.mxu0 %v2691
  %2868 = vmatprep.subr.mxu0 0.0
  %2869 = vmatpush1.msra.mxu0 %v2692
  %2870 = vmatprep.subr.mxu0 0.0
  %2871 = vmatpush1.msra.mxu0 %v2693
  %2872 = vmatprep.subr.mxu0 0.0
  %2873 = vmatpush1.msra.mxu0 %v2694
  %2874 = vmatprep.subr.mxu0 0.0
  %2875 = vmatpush1.msra.mxu0 %v2695
  %2876 = vmatprep.subr.mxu0 0.0
  %2877 = vmatpush1.msra.mxu0 %v2696
  %2878 = vmatprep.subr.mxu0 0.0
  %2879 = vmatpush1.msra.mxu0 %v2697
  %2880 = vmatprep.subr.mxu0 0.0
  %2881 = vmatpush1.msra.mxu0 %v2698
  %2882 = vmatprep.subr.mxu0 0.0
  %2883 = vmatpush1.msra.mxu0 %v2699
  %2884 = vmatprep.subr.mxu0 0.0
  %2885 = vmatpush1.msra.mxu0 %v2700
  %2886 = vmatprep.subr.mxu0 0.0
  %2887 = vmatpush1.msra.mxu0 %v2701
  %2888 = vmatprep.subr.mxu0 0.0
  %2889 = vmatpush1.msra.mxu0 %v2702
  %2890 = vmatprep.subr.mxu0 0.0
  %2891 = vmatpush1.msra.mxu0 %v2703
  %2892 = vmatprep.subr.mxu0 0.0
  %2893 = vmatpush1.msra.mxu0 %v2704
  %2894 = vmatprep.subr.mxu0 0.0
  %2895 = vmatpush1.msra.mxu0 %v2705
  %2896 = vmatprep.subr.mxu0 0.0
  %2897 = vmatpush1.msra.mxu0 %v2706
  %2898 = vmatprep.subr.mxu0 0.0
  %2899 = vmatpush1.msra.mxu0 %v2707
  %2900 = vmatprep.subr.mxu0 0.0
  %2901 = vmatpush1.msra.mxu0 %v2708
  %2902 = vmatprep.subr.mxu0 0.0
  %2903 = vmatpush1.msra.mxu0 %v2709
  %2904 = vmatprep.subr.mxu0 0.0
  %2905 = vmatpush1.msra.mxu0 %v2710
  %2906 = vmatprep.subr.mxu0 0.0
  %2907 = vmatpush1.msra.mxu0 %v2711
  %2908 = vmatprep.subr.mxu0 0.0
  %2909 = vmatpush1.msra.mxu0 %v2712
  %2910 = vmatprep.subr.mxu0 0.0
  %2911 = vmatpush1.msra.mxu0 %v2713
  %2912 = vmatprep.subr.mxu0 0.0
  %2913 = vmatpush1.msra.mxu0 %v2714
  %2914 = vmatprep.subr.mxu0 0.0
  %2915 = vmatpush1.msra.mxu0 %v2715
  %2916 = vmatprep.subr.mxu0 0.0
  %2917 = vmatpush1.msra.mxu0 %v2716
  %2918 = vmatprep.subr.mxu0 0.0
  %2919 = vmatpush1.msra.mxu0 %v2717
  %2920 = vmatprep.subr.mxu0 0.0
  %2921 = vmatpush1.msra.mxu0 %v2718
  %2922 = vmatprep.subr.mxu0 0.0
  %2923 = vmatpush1.msra.mxu0 %v2719
  %2924 = vmatprep.subr.mxu0 0.0
  %2925 = vmatpush1.msra.mxu0 %v2720
  %2926 = vmatprep.mubr.f32.mxu0 %v2652
  %2927 = vmatmul.mubr.f32.gmra.mrb[0].mxu0 %v2651
  %v2928 = vpop.f32.mrb[0].mxu0
  %v2929 = vadd.f32 %v2859, %v2928
  %v2930 = vpop.f32.mrb[0].mxu0
  %2931 = vdwg.mxu0
  %2932 = vmatprep.subr.mxu0 0.0
  %2933 = vmatpush1.msra.mxu0 %v2721
  %2934 = vmatprep.subr.mxu0 0.0
  %2935 = vmatpush1.msra.mxu0 %v2722
  %2936 = vmatprep.subr.mxu0 0.0
  %2937 = vmatpush1.msra.mxu0 %v2723
  %2938 = vmatprep.subr.mxu0 0.0
  %2939 = vmatpush1.msra.mxu0 %v2724
  %2940 = vmatprep.subr.mxu0 0.0
  %2941 = vmatpush1.msra.mxu0 %v2725
  %2942 = vmatprep.subr.mxu0 0.0
  %2943 = vmatpush1.msra.mxu0 %v2726
  %2944 = vmatprep.subr.mxu0 0.0
  %2945 = vmatpush1.msra.mxu0 %v2727
  %2946 = vmatprep.subr.mxu0 0.0
  %2947 = vmatpush1.msra.mxu0 %v2728
  %2948 = vmatprep.subr.mxu0 0.0
  %2949 = vmatpush1.msra.mxu0 %v2729
  %2950 = vmatprep.subr.mxu0 0.0
  %2951 = vmatpush1.msra.mxu0 %v2730
  %2952 = vmatprep.subr.mxu0 0.0
  %2953 = vmatpush1.msra.mxu0 %v2731
  %2954 = vmatprep.subr.mxu0 0.0
  %2955 = vmatpush1.msra.mxu0 %v2732
  %2956 = vmatprep.subr.mxu0 0.0
  %2957 = vmatpush1.msra.mxu0 %v2733
  %2958 = vmatprep.subr.mxu0 0.0
  %2959 = vmatpush1.msra.mxu0 %v2734
  %2960 = vmatprep.subr.mxu0 0.0
  %2961 = vmatpush1.msra.mxu0 %v2735
  %2962 = vmatprep.subr.mxu0 0.0
  %2963 = vmatpush1.msra.mxu0 %v2736
  %2964 = vmatprep.subr.mxu0 0.0
  %2965 = vmatpush1.msra.mxu0 %v2737
  %2966 = vmatprep.subr.mxu0 0.0
  %2967 = vmatpush1.msra.mxu0 %v2738
  %2968 = vmatprep.subr.mxu0 0.0
  %2969 = vmatpush1.msra.mxu0 %v2739
  %2970 = vmatprep.subr.mxu0 0.0
  %2971 = vmatpush1.msra.mxu0 %v2740
  %2972 = vmatprep.subr.mxu0 0.0
  %2973 = vmatpush1.msra.mxu0 %v2741
  %2974 = vmatprep.subr.mxu0 0.0
  %2975 = vmatpush1.msra.mxu0 %v2742
  %2976 = vmatprep.subr.mxu0 0.0
  %2977 = vmatpush1.msra.mxu0 %v2743
  %2978 = vmatprep.subr.mxu0 0.0
  %2979 = vmatpush1.msra.mxu0 %v2744
  %2980 = vmatprep.subr.mxu0 0.0
  %2981 = vmatpush1.msra.mxu0 %v2745
  %2982 = vmatprep.subr.mxu0 0.0
  %2983 = vmatpush1.msra.mxu0 %v2746
  %2984 = vmatprep.subr.mxu0 0.0
  %2985 = vmatpush1.msra.mxu0 %v2747
  %2986 = vmatprep.subr.mxu0 0.0
  %2987 = vmatpush1.msra.mxu0 %v2748
  %2988 = vmatprep.subr.mxu0 0.0
  %2989 = vmatpush1.msra.mxu0 %v2749
  %2990 = vmatprep.subr.mxu0 0.0
  %2991 = vmatpush1.msra.mxu0 %v2750
  %2992 = vmatprep.subr.mxu0 0.0
  %2993 = vmatpush1.msra.mxu0 %v2751
  %2994 = vmatprep.subr.mxu0 0.0
  %2995 = vmatpush1.msra.mxu0 %v2752
  %2996 = vmatprep.mubr.f32.mxu0 %v2654
  %2997 = vmatmul.mubr.f32.gmra.mrb[0].mxu0 %v2653
  %v2998 = vpop.f32.mrb[0].mxu0
  %v2999 = vadd.f32 %v2929, %v2998
  %v3000 = vpop.f32.mrb[0].mxu0
  %3001 = vdwg.mxu0
  %3002 = vmatprep.subr.mxu0 0.0
  %3003 = vmatpush1.msra.mxu0 %v2753
  %3004 = vmatprep.subr.mxu0 0.0
  %3005 = vmatpush1.msra.mxu0 %v2754
  %3006 = vmatprep.subr.mxu0 0.0
  %3007 = vmatpush1.msra.mxu0 %v2755
  %3008 = vmatprep.subr.mxu0 0.0
  %3009 = vmatpush1.msra.mxu0 %v2756
  %3010 = vmatprep.subr.mxu0 0.0
  %3011 = vmatpush1.msra.mxu0 %v2757
  %3012 = vmatprep.subr.mxu0 0.0
  %3013 = vmatpush1.msra.mxu0 %v2758
  %3014 = vmatprep.subr.mxu0 0.0
  %3015 = vmatpush1.msra.mxu0 %v2759
  %3016 = vmatprep.subr.mxu0 0.0
  %3017 = vmatpush1.msra.mxu0 %v2760
  %3018 = vmatprep.subr.mxu0 0.0
  %3019 = vmatpush1.msra.mxu0 %v2761
  %3020 = vmatprep.subr.mxu0 0.0
  %3021 = vmatpush1.msra.mxu0 %v2762
  %3022 = vmatprep.subr.mxu0 0.0
  %3023 = vmatpush1.msra.mxu0 %v2763
  %3024 = vmatprep.subr.mxu0 0.0
  %3025 = vmatpush1.msra.mxu0 %v2764
  %3026 = vmatprep.subr.mxu0 0.0
  %3027 = vmatpush1.msra.mxu0 %v2765
  %3028 = vmatprep.subr.mxu0 0.0
  %3029 = vmatpush1.msra.mxu0 %v2766
  %3030 = vmatprep.subr.mxu0 0.0
  %3031 = vmatpush1.msra.mxu0 %v2767
  %3032 = vmatprep.subr.mxu0 0.0
  %3033 = vmatpush1.msra.mxu0 %v2768
  %3034 = vmatprep.subr.mxu0 0.0
  %3035 = vmatpush1.msra.mxu0 %v2769
  %3036 = vmatprep.subr.mxu0 0.0
  %3037 = vmatpush1.msra.mxu0 %v2770
  %3038 = vmatprep.subr.mxu0 0.0
  %3039 = vmatpush1.msra.mxu0 %v2771
  %3040 = vmatprep.subr.mxu0 0.0
  %3041 = vmatpush1.msra.mxu0 %v2772
  %3042 = vmatprep.subr.mxu0 0.0
  %3043 = vmatpush1.msra.mxu0 %v2773
  %3044 = vmatprep.subr.mxu0 0.0
  %3045 = vmatpush1.msra.mxu0 %v2774
  %3046 = vmatprep.subr.mxu0 0.0
  %3047 = vmatpush1.msra.mxu0 %v2775
  %3048 = vmatprep.subr.mxu0 0.0
  %3049 = vmatpush1.msra.mxu0 %v2776
  %3050 = vmatprep.subr.mxu0 0.0
  %3051 = vmatpush1.msra.mxu0 %v2777
  %3052 = vmatprep.subr.mxu0 0.0
  %3053 = vmatpush1.msra.mxu0 %v2778
  %3054 = vmatprep.subr.mxu0 0.0
  %3055 = vmatpush1.msra.mxu0 %v2779
  %3056 = vmatprep.subr.mxu0 0.0
  %3057 = vmatpush1.msra.mxu0 %v2780
  %3058 = vmatprep.subr.mxu0 0.0
  %3059 = vmatpush1.msra.mxu0 %v2781
  %3060 = vmatprep.subr.mxu0 0.0
  %3061 = vmatpush1.msra.mxu0 %v2782
  %3062 = vmatprep.subr.mxu0 0.0
  %3063 = vmatpush1.msra.mxu0 %v2783
  %3064 = vmatprep.subr.mxu0 0.0
  %3065 = vmatpush1.msra.mxu0 %v2784
  %3066 = vmatprep.mubr.f32.mxu0 %v2656
  %3067 = vmatmul.mubr.f32.gmra.mrb[0].mxu0 %v2655
  %v3068 = vpop.f32.mrb[0].mxu0
  %v3069 = vadd.f32 %v2999, %v3068
  %v3070 = vpop.f32.mrb[0].mxu0
  %3071 = vdwg.mxu0
  %v3072 = vmax.f32 %v3069, 0.0
  %v3073 = vld [vmem:[%s5] sm:$0xff]
  %v3074 = vld [vmem:[%s5 + $0x8] sm:$0xff]
  %v3075 = vld [vmem:[%s5 + $0x10] sm:$0xff]
  %v3076 = vld [vmem:[%s5 + $0x18] sm:$0xff]
  %v3077 = vld [vmem:[%s5 + $0x20] sm:$0xff]
  %v3078 = vld [vmem:[%s5 + $0x28] sm:$0xff]
  %v3079 = vld [vmem:[%s5 + $0x30] sm:$0xff]
  %v3080 = vld [vmem:[%s5 + $0x38] sm:$0xff]
  %v3081 = vld [vmem:[%s5 + $0x40] sm:$0xff]
  %v3082 = vld [vmem:[%s5 + $0x48] sm:$0xff]
  %v3083 = vld [vmem:[%s5 + $0x50] sm:$0xff]
  %v3084 = vld [vmem:[%s5 + $0x58] sm:$0xff]
  %v3085 = vld [vmem:[%s5 + $0x60] sm:$0xff]
  %v3086 = vld [vmem:[%s5 + $0x68] sm:$0xff]
  %v3087 = vld [vmem:[%s5 + $0x70] sm:$0xff]
  %v3088 = vld [vmem:[%s5 + $0x78] sm:$0xff]
  %v3089 = vld [vmem:[%s6] sm:$0x1]
  %v3091 = vlaneseq
  %v3092 = vshrl.u32 %v3091, 7
  %v3093 = vsub.s32 0, %v3092
  %v3094 = vrot.slane %v3089, %v3093
  %3096 = vmatprep.subr.mxu0 0.0
  %3097 = vmatpush1.msra.mxu0 %v3073
  %3098 = vmatprep.subr.mxu0 0.0
  %3099 = vmatpush1.msra.mxu0 %v3074
  %3100 = vmatprep.subr.mxu0 0.0
  %3101 = vmatpush1.msra.mxu0 %v3075
  %3102 = vmatprep.subr.mxu0 0.0
  %3103 = vmatpush1.msra.mxu0 %v3076
  %3104 = vmatprep.subr.mxu0 0.0
  %3105 = vmatpush1.msra.mxu0 %v3077
  %3106 = vmatprep.subr.mxu0 0.0
  %3107 = vmatpush1.msra.mxu0 %v3078
  %3108 = vmatprep.subr.mxu0 0.0
  %3109 = vmatpush1.msra.mxu0 %v3079
  %3110 = vmatprep.subr.mxu0 0.0
  %3111 = vmatpush1.msra.mxu0 %v3080
  %3112 = vmatprep.subr.mxu0 0.0
  %3113 = vmatpush1.msra.mxu0 %v3081
  %3114 = vmatprep.subr.mxu0 0.0
  %3115 = vmatpush1.msra.mxu0 %v3082
  %3116 = vmatprep.subr.mxu0 0.0
  %3117 = vmatpush1.msra.mxu0 %v3083
  %3118 = vmatprep.subr.mxu0 0.0
  %3119 = vmatpush1.msra.mxu0 %v3084
  %3120 = vmatprep.subr.mxu0 0.0
  %3121 = vmatpush1.msra.mxu0 %v3085
  %3122 = vmatprep.subr.mxu0 0.0
  %3123 = vmatpush1.msra.mxu0 %v3086
  %3124 = vmatprep.subr.mxu0 0.0
  %3125 = vmatpush1.msra.mxu0 %v3087
  %3126 = vmatprep.subr.mxu0 0.0
  %3127 = vmatpush1.msra.mxu0 %v3088
  %3128 = vmatprep.subr.mxu0 0.0
  %3129 = vmatpush1.msra.mxu0 0.0
  %3130 = vmatprep.subr.mxu0 0.0
  %3131 = vmatpush1.msra.mxu0 0.0
  %3132 = vmatprep.subr.mxu0 0.0
  %3133 = vmatpush1.msra.mxu0 0.0
  %3134 = vmatprep.subr.mxu0 0.0
  %3135 = vmatpush1.msra.mxu0 0.0
  %3136 = vmatprep.subr.mxu0 0.0
  %3137 = vmatpush1.msra.mxu0 0.0
  %3138 = vmatprep.subr.mxu0 0.0
  %3139 = vmatpush1.msra.mxu0 0.0
  %3140 = vmatprep.subr.mxu0 0.0
  %3141 = vmatpush1.msra.mxu0 0.0
  %3142 = vmatprep.subr.mxu0 0.0
  %3143 = vmatpush1.msra.mxu0 0.0
  %3144 = vmatprep.subr.mxu0 0.0
  %3145 = vmatpush1.msra.mxu0 0.0
  %3146 = vmatprep.subr.mxu0 0.0
  %3147 = vmatpush1.msra.mxu0 0.0
  %3148 = vmatprep.subr.mxu0 0.0
  %3149 = vmatpush1.msra.mxu0 0.0
  %3150 = vmatprep.subr.mxu0 0.0
  %3151 = vmatpush1.msra.mxu0 0.0
  %3152 = vmatprep.subr.mxu0 0.0
  %3153 = vmatpush1.msra.mxu0 0.0
  %3154 = vmatprep.subr.mxu0 0.0
  %3155 = vmatpush1.msra.mxu0 0.0
  %3156 = vmatprep.subr.mxu0 0.0
  %3157 = vmatpush1.msra.mxu0 0.0
  %3158 = vmatprep.subr.mxu0 0.0
  %3159 = vmatpush1.msra.mxu0 0.0
  %3160 = vmatprep.mubr.f32.mxu0 0.0
  %3161 = vmatmul.mubr.f32.gmra.mrb[0].mxu0 %v3072
  %v3162 = vpop.f32.mrb[0].mxu0
  %v3163 = vadd.f32 %v3094, %v3162
  %v3164 = vpop.f32.mrb[0].mxu0
  %3165 = vdwg.mxu0
  %3166 = vst [vmem:[%s7] sm:$0xff] %v3163
  // Predicated region
  $region30: #{cnn_forward.11} parent=0 // pred_check
    _
  $region31: #{cnn_forward.11} parent=0 // pred_check_branch
    %3168 = sbr.rel (0) target = $region33
  $region32: #{cnn_forward.11} parent=0 // pred_region
    _
  $region33: #{cnn_forward.11} parent=0 // pred_fallthru
    _
  // Predicated region
  $region34: #{cnn_forward.11} parent=0 // pred_check
    _
  $region35: #{cnn_forward.11} parent=0 // pred_check_branch
    %3170 = sbr.rel (0) target = $region37
  $region36: #{cnn_forward.11} parent=0 // pred_region
    _
  $region37: #{cnn_forward.11} parent=0 // pred_fallthru
    _

</llo_original>
